<compile_context>
chip_gen: v6e
topology: v6e:2x2x1
jax: 0.10.0
libtpu: 0.0.40
codegen_flags: <defaults>
</compile_context>

<pallas_src>
import jax
import jax.numpy as jnp
from jax.experimental import pallas as pl
from jax.experimental.pallas import tpu as pltpu

_POOL_OFFSETS = ((0, 0), (0, 1), (1, 0), (1, 1))   # q = ph * 2 + pw
_VMEM_LIMIT = 32 * 1024 * 1024                     # safe on v5e/v6e/v7x


def _compiler_params():
    return pltpu.CompilerParams(
        dimension_semantics=("parallel",),
        vmem_limit_bytes=_VMEM_LIMIT,
    )


# -----------------------------------------------------------------------------
# Pallas kernels
# -----------------------------------------------------------------------------
def conv_pool_kernel(p_ref, w_ref, b_ref, o_ref):
    """Fused 3x3 conv (pad=1) + bias + ReLU + 2x2 max-pool for one row tile.

    p_ref : (MT, 16*Cin)     bf16  stride-2 4x4 patches (one row per pooled px)
    w_ref : (16*Cin, 4*Cout) bf16  window weights, 4 pool offsets stacked on N
    b_ref : (1, Cout)        f32
    o_ref : (MT, Cout)       bf16
    """
    cout = o_ref.shape[-1]
    y = jnp.dot(p_ref[...], w_ref[...], preferred_element_type=jnp.float32)
    pooled = jnp.maximum(
        jnp.maximum(y[:, 0 * cout:1 * cout], y[:, 1 * cout:2 * cout]),
        jnp.maximum(y[:, 2 * cout:3 * cout], y[:, 3 * cout:4 * cout]),
    )
    # bias + ReLU after the max is exact (per-channel bias shared by all 4
    # pool offsets; ReLU monotone).  Do not change without re-deriving.
    o_ref[...] = jnp.maximum(pooled + b_ref[...], 0.0).astype(o_ref.dtype)


def fc_kernel(x_ref, w1_ref, b1_ref, w2_ref, b2_ref, o_ref):
    """Fused fc1 + (dropout = identity, eval mode) + ReLU + fc2."""
    h = jnp.dot(x_ref[...], w1_ref[...], preferred_element_type=jnp.float32)
    h = jnp.maximum(h + b1_ref[...], 0.0)
    y = jnp.dot(h.astype(w2_ref.dtype), w2_ref[...],
                preferred_element_type=jnp.float32)
    o_ref[...] = y + b2_ref[...]


# -----------------------------------------------------------------------------
# Wrappers
# -----------------------------------------------------------------------------
def _extract_patches(x):
    """(N, H, W, C) -> (N*H/2*W/2, 16*C): stride-2 4x4 patches of the 1-padded x.

    Row order is (b, hp, wp); feature order is (a, bb, c) with (a, bb) the
    position inside the 4x4 window.
    """
    n, h, w, c = x.shape
    hp, wp = h // 2, w // 2
    xp = jnp.pad(x, ((0, 0), (1, 1), (1, 1), (0, 0)))
    slabs = []
    for a in range(4):
        for bb in range(4):
            slabs.append(xp[:, a:a + 2 * hp - 1:2, bb:bb + 2 * wp - 1:2, :])
    p = jnp.stack(slabs, axis=3)                   # (n, hp, wp, 16, c)
    return p.reshape(n * hp * wp, 16 * c)


def _pick_bt(n_pad, rows_per_img, target_rows=2048):
    """Images per grid step: keep >=2 grid steps and <= target_rows per tile."""
    bt = 1
    while (2 * bt <= n_pad and n_pad % (2 * bt) == 0
           and 2 * bt * rows_per_img <= target_rows
           and n_pad // (2 * bt) >= 2):
        bt *= 2
    return bt


def conv_relu_pool(patches, wk, bk, cout, mt):
    """One fused conv block.  patches: (M, 16*Cin) bf16, M % mt == 0."""
    m, k = patches.shape
    cost = pl.CostEstimate(
        flops=int(2 * m * k * 4 * cout), transcendentals=0,
        bytes_accessed=int(patches.size * 2 + wk.size * 2 + bk.size * 4
                           + m * cout * 2))
    return pl.pallas_call(
        conv_pool_kernel,
        out_shape=jax.ShapeDtypeStruct((m, cout), jnp.bfloat16),
        grid=(m // mt,),
        in_specs=[
            pl.BlockSpec((mt, k), lambda i: (i, 0)),
            pl.BlockSpec((k, 4 * cout), lambda i: (0, 0)),
            pl.BlockSpec((1, cout), lambda i: (0, 0)),
        ],
        out_specs=pl.BlockSpec((mt, cout), lambda i: (i, 0)),
        compiler_params=_compiler_params(),
        cost_estimate=cost,
    )(patches, wk, bk)


def fc_head(x2d, w1k, b1k, w2k, b2k, mt):
    """Fused fc1 + ReLU + fc2.  x2d: (N, 2048) bf16, rows flattened (h, w, c)."""
    n, k1 = x2d.shape
    h1 = w1k.shape[1]
    c = w2k.shape[1]
    cost = pl.CostEstimate(
        flops=int(2 * n * (k1 * h1 + h1 * c)), transcendentals=0,
        bytes_accessed=int(x2d.size * 2 + w1k.size * 2 + w2k.size * 2
                           + b1k.size * 4 + b2k.size * 4 + n * c * 4))
    return pl.pallas_call(
        fc_kernel,
        out_shape=jax.ShapeDtypeStruct((n, c), jnp.float32),
        grid=(n // mt,),
        in_specs=[
            pl.BlockSpec((mt, k1), lambda i: (i, 0)),
            pl.BlockSpec((k1, h1), lambda i: (0, 0)),
            pl.BlockSpec((1, h1), lambda i: (0, 0)),
            pl.BlockSpec((h1, c), lambda i: (0, 0)),
            pl.BlockSpec((1, c), lambda i: (0, 0)),
        ],
        out_specs=pl.BlockSpec((mt, c), lambda i: (i, 0)),
        compiler_params=_compiler_params(),
        cost_estimate=cost,
    )(x2d, w1k, b1k, w2k, b2k)


# -----------------------------------------------------------------------------
# Parameters: torch-style init + one-time kernel-layout repack
# -----------------------------------------------------------------------------
def init_params(key):
    """Deterministic init mimicking PyTorch default U(-1/sqrt(fan_in), ...)."""
    def uniform(k, shape, fan_in):
        bound = 1.0 / jnp.sqrt(jnp.float32(fan_in))
        return jax.random.uniform(k, shape, jnp.float32, -bound, bound)

    ks = jax.random.split(key, 10)
    return {
        "conv1_w": uniform(ks[0], (32, 3, 3, 3), 3 * 9),
        "conv1_b": uniform(ks[1], (32,), 3 * 9),
        "conv2_w": uniform(ks[2], (64, 32, 3, 3), 32 * 9),
        "conv2_b": uniform(ks[3], (64,), 32 * 9),
        "conv3_w": uniform(ks[4], (128, 64, 3, 3), 64 * 9),
        "conv3_b": uniform(ks[5], (128,), 64 * 9),
        "fc1_w": uniform(ks[6], (512, 128 * 4 * 4), 128 * 4 * 4),
        "fc1_b": uniform(ks[7], (512,), 128 * 4 * 4),
        "fc2_w": uniform(ks[8], (10, 512), 512),
        "fc2_b": uniform(ks[9], (10,), 512),
    }


def _pack_conv_weight(w):
    """(Cout, Cin, 3, 3) torch conv weight -> (16*Cin, 4*Cout) bf16 GEMM weight.

    Row index = (a*4 + b)*Cin + c: position (a, b) inside the 4x4 stride-2
    window.  Column group q = ph*2 + pw holds the conv taps for pool offset
    (ph, pw): W[f, q*Cout + o] = w[o, c, a-ph, b-pw] (zero outside the 3x3).
    """
    wg = jnp.transpose(w, (2, 3, 1, 0))                  # (kh, kw, cin, cout)
    cin, cout = wg.shape[2], wg.shape[3]
    blocks = []
    for ph, pw in _POOL_OFFSETS:
        blocks.append(jnp.pad(wg, ((ph, 1 - ph), (pw, 1 - pw), (0, 0), (0, 0))))
    wk = jnp.stack(blocks, axis=3)                       # (4, 4, cin, 4, cout)
    return wk.reshape(16 * cin, 4 * cout).astype(jnp.bfloat16)


def prepare_params(params):
    """One-time repack of torch-layout weights into kernel layouts (hoisted
    out of forward; build once and reuse across calls)."""
    h1 = params["fc1_w"].shape[0]
    # Fold PyTorch's NCHW flatten (c, h, w) into a permutation of fc1 columns
    # so the kernel consumes the NHWC (h, w, c) flatten directly.
    w1k = (params["fc1_w"].reshape(h1, 128, 4, 4)
           .transpose(2, 3, 1, 0).reshape(128 * 4 * 4, h1).astype(jnp.bfloat16))
    return {
        "conv1_wk": _pack_conv_weight(params["conv1_w"]),
        "conv1_bk": params["conv1_b"].reshape(1, -1).astype(jnp.float32),
        "conv2_wk": _pack_conv_weight(params["conv2_w"]),
        "conv2_bk": params["conv2_b"].reshape(1, -1).astype(jnp.float32),
        "conv3_wk": _pack_conv_weight(params["conv3_w"]),
        "conv3_bk": params["conv3_b"].reshape(1, -1).astype(jnp.float32),
        "fc1_wk": w1k,
        "fc1_bk": params["fc1_b"].reshape(1, -1).astype(jnp.float32),
        "fc2_wk": params["fc2_w"].T.astype(jnp.bfloat16),
        "fc2_bk": params["fc2_b"].reshape(1, -1).astype(jnp.float32),
    }


# -----------------------------------------------------------------------------
# Forward
# -----------------------------------------------------------------------------
@jax.jit
def forward(prepared, x_nchw):
    """Replicates Method_CNN_CIFAR.forward.  x_nchw: (N, 3, 32, 32) float32."""
    n = x_nchw.shape[0]
    n_pad = -(-n // 8) * 8

    x = jnp.transpose(x_nchw, (0, 2, 3, 1)).astype(jnp.bfloat16)   # NCHW->NHWC
    if n_pad != n:
        x = jnp.pad(x, ((0, n_pad - n), (0, 0), (0, 0), (0, 0)))

    # conv1: (Np, 32, 32, 3) -> (Np, 16, 16, 32)
    p1 = _extract_patches(x)                                   # (Np*256, 48)
    y1 = conv_relu_pool(p1, prepared["conv1_wk"], prepared["conv1_bk"],
                        cout=32, mt=_pick_bt(n_pad, 256) * 256)
    y1 = y1.reshape(n_pad, 16, 16, 32)

    # conv2: -> (Np, 8, 8, 64)
    p2 = _extract_patches(y1)                                  # (Np*64, 512)
    y2 = conv_relu_pool(p2, prepared["conv2_wk"], prepared["conv2_bk"],
                        cout=64, mt=_pick_bt(n_pad, 64) * 64)
    y2 = y2.reshape(n_pad, 8, 8, 64)

    # conv3: -> (Np, 4, 4, 128)
    p3 = _extract_patches(y2)                                  # (Np*16, 1024)
    y3 = conv_relu_pool(p3, prepared["conv3_wk"], prepared["conv3_bk"],
                        cout=128, mt=_pick_bt(n_pad, 16) * 16)

    # Flatten (rows already ordered (b, h, w, c)) + fused fc head.
    x2d = y3.reshape(n_pad, 4 * 4 * 128)
    # TODO(synk): Dropout(0.5) is identity here (eval-mode semantics).
    mt_fc = 8
    while 2 * mt_fc <= min(n_pad, 256) and n_pad % (2 * mt_fc) == 0:
        mt_fc *= 2
    logits = fc_head(x2d, prepared["fc1_wk"], prepared["fc1_bk"],
                     prepared["fc2_wk"], prepared["fc2_bk"], mt_fc)
    return logits[:n]


# -----------------------------------------------------------------------------
# Pure-JAX reference (mirrors the kernel's bf16-input / f32-accum math)
# -----------------------------------------------------------------------------
def _reference_forward(params, x_nchw):
    def conv_block(x, w, b):
        y = jax.lax.conv_general_dilated(
            x.astype(jnp.bfloat16), w.astype(jnp.bfloat16),
            window_strides=(1, 1), padding=((1, 1), (1, 1)),
            dimension_numbers=("NHWC", "OIHW", "NHWC"),
            preferred_element_type=jnp.float32)
        y = jnp.maximum(y + b.reshape(1, 1, 1, -1), 0.0)
        y = jax.lax.reduce_window(y, -jnp.inf, jax.lax.max,
                                  (1, 2, 2, 1), (1, 2, 2, 1), "VALID")
        return y.astype(jnp.bfloat16)

    x = jnp.transpose(x_nchw, (0, 2, 3, 1))
    x = conv_block(x, params["conv1_w"], params["conv1_b"])
    x = conv_block(x, params["conv2_w"], params["conv2_b"])
    x = conv_block(x, params["conv3_w"], params["conv3_b"])
    n = x.shape[0]
    x = jnp.transpose(x, (0, 3, 1, 2)).reshape(n, -1)          # PyTorch flatten
    h = jnp.dot(x, params["fc1_w"].T.astype(jnp.bfloat16),
                preferred_element_type=jnp.float32) + params["fc1_b"]
    h = jnp.maximum(h, 0.0).astype(jnp.bfloat16)
    return jnp.dot(h, params["fc2_w"].T.astype(jnp.bfloat16),
                   preferred_element_type=jnp.float32) + params["fc2_b"]


# -----------------------------------------------------------------------------
if __name__ == "__main__":
    key = jax.random.PRNGKey(0)
    pkey, xkey = jax.random.split(key)
    params = init_params(pkey)
    prepared = prepare_params(params)   # one-time weight repack (hoisted)

    # CIFAR-shaped input (required by the 128*4*4 flatten): batch=2, 3x32x32.
    x = jax.random.normal(xkey, (2, 3, 32, 32), jnp.float32)

    logits = jax.block_until_ready(forward(prepared, x))

    assert logits.shape == (2, 10), logits.shape
    assert logits.dtype == jnp.float32
    assert bool(jnp.all(jnp.isfinite(logits)))

    ref = jax.block_until_ready(_reference_forward(params, x))
    max_err = float(jnp.max(jnp.abs(logits - ref)))
    assert bool(jnp.allclose(logits, ref, atol=5e-2, rtol=5e-2)), max_err

    print("KERNEL_OK")
</pallas_src>

<mosaic_0001>
module attributes {stable_mosaic.version = 11 : i64} {
  func.func @conv_pool_kernel(%arg0: i32, %arg1: memref<1024x48xbf16, #tpu.memory_space<vmem>>, %arg2: memref<48x128xbf16, #tpu.memory_space<vmem>>, %arg3: memref<1x32xf32, #tpu.memory_space<vmem>>, %arg4: memref<1024x32xbf16, #tpu.memory_space<vmem>>) attributes {dimension_semantics = [#tpu.dimension_semantics<parallel>], iteration_bounds = array<i64: 2>, scalar_prefetch = 0 : i64, scratch_operands = 0 : i64, tpu.core_type = #tpu.core_type<tc>, window_params = [{transform_indices = @transform_0, window_bounds = array<i64: 1024, 48>}, {pipeline_mode = #tpu.pipeline_mode<synchronous>, transform_indices = @transform_1, window_bounds = array<i64: 48, 128>}, {pipeline_mode = #tpu.pipeline_mode<synchronous>, transform_indices = @transform_2, window_bounds = array<i64: 1, 32>}, {transform_indices = @transform_3, window_bounds = array<i64: 1024, 32>}]} {
    %c0 = arith.constant 0 : index
    %c0_0 = arith.constant 0 : index
    %0 = vector.load %arg1[%c0, %c0_0] : memref<1024x48xbf16, #tpu.memory_space<vmem>>, vector<1024x48xbf16>
    %c0_1 = arith.constant 0 : index
    %c0_2 = arith.constant 0 : index
    %1 = vector.load %arg2[%c0_1, %c0_2] : memref<48x128xbf16, #tpu.memory_space<vmem>>, vector<48x128xbf16>
    %cst = arith.constant dense<0.000000e+00> : vector<1024x128xf32>
    %2 = tpu.matmul %0, %1, %cst {dimension_numbers = #tpu.dot_dimension_numbers<[1], [0], [0], [1], [0, 0, 1, 1], [], []>} : vector<1024x48xbf16>, vector<48x128xbf16>, vector<1024x128xf32> -> vector<1024x128xf32>
    %3 = vector.extract_strided_slice %2 {offsets = [0, 0], sizes = [1024, 32], strides = [1, 1]} : vector<1024x128xf32> to vector<1024x32xf32>
    %4 = vector.extract_strided_slice %2 {offsets = [0, 32], sizes = [1024, 32], strides = [1, 1]} : vector<1024x128xf32> to vector<1024x32xf32>
    %5 = arith.maximumf %3, %4 : vector<1024x32xf32>
    %6 = vector.extract_strided_slice %2 {offsets = [0, 64], sizes = [1024, 32], strides = [1, 1]} : vector<1024x128xf32> to vector<1024x32xf32>
    %7 = vector.extract_strided_slice %2 {offsets = [0, 96], sizes = [1024, 32], strides = [1, 1]} : vector<1024x128xf32> to vector<1024x32xf32>
    %8 = arith.maximumf %6, %7 : vector<1024x32xf32>
    %9 = arith.maximumf %5, %8 : vector<1024x32xf32>
    %c0_3 = arith.constant 0 : index
    %c0_4 = arith.constant 0 : index
    %10 = vector.load %arg3[%c0_3, %c0_4] : memref<1x32xf32, #tpu.memory_space<vmem>>, vector<1x32xf32>
    %11 = vector.broadcast %10 : vector<1x32xf32> to vector<1024x32xf32>
    %12 = arith.addf %9, %11 : vector<1024x32xf32>
    %cst_5 = arith.constant 0.000000e+00 : f32
    %13 = vector.broadcast %cst_5 : f32 to vector<1024x32xf32>
    %14 = arith.maximumf %12, %13 : vector<1024x32xf32>
    %15 = arith.truncf %14 : vector<1024x32xf32> to vector<1024x32xbf16>
    %c0_6 = arith.constant 0 : index
    %c0_7 = arith.constant 0 : index
    %16 = vector.load %arg4[%c0_6, %c0_7] : memref<1024x32xbf16, #tpu.memory_space<vmem>>, vector<1024x32xbf16>
    tpu.vector_store %arg4[%c0_6, %c0_7], %15 {strides = array<i32>} : memref<1024x32xbf16, #tpu.memory_space<vmem>>, vector<1024x32xbf16>,
    return
  }
  func.func @transform_0(%arg0: i32) -> (i32, i32) {
    %c0_i32 = arith.constant 0 : i32
    %c0_i32_0 = arith.constant 0 : i32
    return %arg0, %c0_i32 : i32, i32
  }
  func.func @transform_1(%arg0: i32) -> (i32, i32) {
    %c0_i32 = arith.constant 0 : i32
    %c0_i32_0 = arith.constant 0 : i32
    %c0_i32_1 = arith.constant 0 : i32
    return %c0_i32, %c0_i32_0 : i32, i32
  }
  func.func @transform_2(%arg0: i32) -> (i32, i32) {
    %c0_i32 = arith.constant 0 : i32
    %c0_i32_0 = arith.constant 0 : i32
    %c0_i32_1 = arith.constant 0 : i32
    return %c0_i32, %c0_i32_0 : i32, i32
  }
  func.func @transform_3(%arg0: i32) -> (i32, i32) {
    %c0_i32 = arith.constant 0 : i32
    %c0_i32_0 = arith.constant 0 : i32
    return %arg0, %c0_i32 : i32, i32
  }
}

module attributes {stable_mosaic.version = 11 : i64} {
  func.func @conv_pool_kernel(%arg0: i32, %arg1: memref<256x512xbf16, #tpu.memory_space<vmem>>, %arg2: memref<512x256xbf16, #tpu.memory_space<vmem>>, %arg3: memref<1x64xf32, #tpu.memory_space<vmem>>, %arg4: memref<256x64xbf16, #tpu.memory_space<vmem>>) attributes {dimension_semantics = [#tpu.dimension_semantics<parallel>], iteration_bounds = array<i64: 2>, scalar_prefetch = 0 : i64, scratch_operands = 0 : i64, tpu.core_type = #tpu.core_type<tc>, window_params = [{transform_indices = @transform_0, window_bounds = array<i64: 256, 512>}, {pipeline_mode = #tpu.pipeline_mode<synchronous>, transform_indices = @transform_1, window_bounds = array<i64: 512, 256>}, {pipeline_mode = #tpu.pipeline_mode<synchronous>, transform_indices = @transform_2, window_bounds = array<i64: 1, 64>}, {transform_indices = @transform_3, window_bounds = array<i64: 256, 64>}]} {
    %c0 = arith.constant 0 : index
    %c0_0 = arith.constant 0 : index
    %0 = vector.load %arg1[%c0, %c0_0] : memref<256x512xbf16, #tpu.memory_space<vmem>>, vector<256x512xbf16>
    %c0_1 = arith.constant 0 : index
    %c0_2 = arith.constant 0 : index
    %1 = vector.load %arg2[%c0_1, %c0_2] : memref<512x256xbf16, #tpu.memory_space<vmem>>, vector<512x256xbf16>
    %cst = arith.constant dense<0.000000e+00> : vector<256x256xf32>
    %2 = tpu.matmul %0, %1, %cst {dimension_numbers = #tpu.dot_dimension_numbers<[1], [0], [0], [1], [0, 0, 1, 1], [], []>} : vector<256x512xbf16>, vector<512x256xbf16>, vector<256x256xf32> -> vector<256x256xf32>
    %3 = vector.extract_strided_slice %2 {offsets = [0, 0], sizes = [256, 64], strides = [1, 1]} : vector<256x256xf32> to vector<256x64xf32>
    %4 = vector.extract_strided_slice %2 {offsets = [0, 64], sizes = [256, 64], strides = [1, 1]} : vector<256x256xf32> to vector<256x64xf32>
    %5 = arith.maximumf %3, %4 : vector<256x64xf32>
    %6 = vector.extract_strided_slice %2 {offsets = [0, 128], sizes = [256, 64], strides = [1, 1]} : vector<256x256xf32> to vector<256x64xf32>
    %7 = vector.extract_strided_slice %2 {offsets = [0, 192], sizes = [256, 64], strides = [1, 1]} : vector<256x256xf32> to vector<256x64xf32>
    %8 = arith.maximumf %6, %7 : vector<256x64xf32>
    %9 = arith.maximumf %5, %8 : vector<256x64xf32>
    %c0_3 = arith.constant 0 : index
    %c0_4 = arith.constant 0 : index
    %10 = vector.load %arg3[%c0_3, %c0_4] : memref<1x64xf32, #tpu.memory_space<vmem>>, vector<1x64xf32>
    %11 = vector.broadcast %10 : vector<1x64xf32> to vector<256x64xf32>
    %12 = arith.addf %9, %11 : vector<256x64xf32>
    %cst_5 = arith.constant 0.000000e+00 : f32
    %13 = vector.broadcast %cst_5 : f32 to vector<256x64xf32>
    %14 = arith.maximumf %12, %13 : vector<256x64xf32>
    %15 = arith.truncf %14 : vector<256x64xf32> to vector<256x64xbf16>
    %c0_6 = arith.constant 0 : index
    %c0_7 = arith.constant 0 : index
    %16 = vector.load %arg4[%c0_6, %c0_7] : memref<256x64xbf16, #tpu.memory_space<vmem>>, vector<256x64xbf16>
    tpu.vector_store %arg4[%c0_6, %c0_7], %15 {strides = array<i32>} : memref<256x64xbf16, #tpu.memory_space<vmem>>, vector<256x64xbf16>,
    return
  }
  func.func @transform_0(%arg0: i32) -> (i32, i32) {
    %c0_i32 = arith.constant 0 : i32
    %c0_i32_0 = arith.constant 0 : i32
    return %arg0, %c0_i32 : i32, i32
  }
  func.func @transform_1(%arg0: i32) -> (i32, i32) {
    %c0_i32 = arith.constant 0 : i32
    %c0_i32_0 = arith.constant 0 : i32
    %c0_i32_1 = arith.constant 0 : i32
    return %c0_i32, %c0_i32_0 : i32, i32
  }
  func.func @transform_2(%arg0: i32) -> (i32, i32) {
    %c0_i32 = arith.constant 0 : i32
    %c0_i32_0 = arith.constant 0 : i32
    %c0_i32_1 = arith.constant 0 : i32
    return %c0_i32, %c0_i32_0 : i32, i32
  }
  func.func @transform_3(%arg0: i32) -> (i32, i32) {
    %c0_i32 = arith.constant 0 : i32
    %c0_i32_0 = arith.constant 0 : i32
    return %arg0, %c0_i32 : i32, i32
  }
}

module attributes {stable_mosaic.version = 11 : i64} {
  func.func @conv_pool_kernel(%arg0: i32, %arg1: memref<64x1024xbf16, #tpu.memory_space<vmem>>, %arg2: memref<1024x512xbf16, #tpu.memory_space<vmem>>, %arg3: memref<1x128xf32, #tpu.memory_space<vmem>>, %arg4: memref<64x128xbf16, #tpu.memory_space<vmem>>) attributes {dimension_semantics = [#tpu.dimension_semantics<parallel>], iteration_bounds = array<i64: 2>, scalar_prefetch = 0 : i64, scratch_operands = 0 : i64, tpu.core_type = #tpu.core_type<tc>, window_params = [{transform_indices = @transform_0, window_bounds = array<i64: 64, 1024>}, {pipeline_mode = #tpu.pipeline_mode<synchronous>, transform_indices = @transform_1, window_bounds = array<i64: 1024, 512>}, {pipeline_mode = #tpu.pipeline_mode<synchronous>, transform_indices = @transform_2, window_bounds = array<i64: 1, 128>}, {transform_indices = @transform_3, window_bounds = array<i64: 64, 128>}]} {
    %c0 = arith.constant 0 : index
    %c0_0 = arith.constant 0 : index
    %0 = vector.load %arg1[%c0, %c0_0] : memref<64x1024xbf16, #tpu.memory_space<vmem>>, vector<64x1024xbf16>
    %c0_1 = arith.constant 0 : index
    %c0_2 = arith.constant 0 : index
    %1 = vector.load %arg2[%c0_1, %c0_2] : memref<1024x512xbf16, #tpu.memory_space<vmem>>, vector<1024x512xbf16>
    %cst = arith.constant dense<0.000000e+00> : vector<64x512xf32>
    %2 = tpu.matmul %0, %1, %cst {dimension_numbers = #tpu.dot_dimension_numbers<[1], [0], [0], [1], [0, 0, 1, 1], [], []>} : vector<64x1024xbf16>, vector<1024x512xbf16>, vector<64x512xf32> -> vector<64x512xf32>
    %3 = vector.extract_strided_slice %2 {offsets = [0, 0], sizes = [64, 128], strides = [1, 1]} : vector<64x512xf32> to vector<64x128xf32>
    %4 = vector.extract_strided_slice %2 {offsets = [0, 128], sizes = [64, 128], strides = [1, 1]} : vector<64x512xf32> to vector<64x128xf32>
    %5 = arith.maximumf %3, %4 : vector<64x128xf32>
    %6 = vector.extract_strided_slice %2 {offsets = [0, 256], sizes = [64, 128], strides = [1, 1]} : vector<64x512xf32> to vector<64x128xf32>
    %7 = vector.extract_strided_slice %2 {offsets = [0, 384], sizes = [64, 128], strides = [1, 1]} : vector<64x512xf32> to vector<64x128xf32>
    %8 = arith.maximumf %6, %7 : vector<64x128xf32>
    %9 = arith.maximumf %5, %8 : vector<64x128xf32>
    %c0_3 = arith.constant 0 : index
    %c0_4 = arith.constant 0 : index
    %10 = vector.load %arg3[%c0_3, %c0_4] : memref<1x128xf32, #tpu.memory_space<vmem>>, vector<1x128xf32>
    %11 = vector.broadcast %10 : vector<1x128xf32> to vector<64x128xf32>
    %12 = arith.addf %9, %11 : vector<64x128xf32>
    %cst_5 = arith.constant 0.000000e+00 : f32
    %13 = vector.broadcast %cst_5 : f32 to vector<64x128xf32>
    %14 = arith.maximumf %12, %13 : vector<64x128xf32>
    %15 = arith.truncf %14 : vector<64x128xf32> to vector<64x128xbf16>
    %c0_6 = arith.constant 0 : index
    %c0_7 = arith.constant 0 : index
    %16 = vector.load %arg4[%c0_6, %c0_7] : memref<64x128xbf16, #tpu.memory_space<vmem>>, vector<64x128xbf16>
    tpu.vector_store %arg4[%c0_6, %c0_7], %15 {strides = array<i32>} : memref<64x128xbf16, #tpu.memory_space<vmem>>, vector<64x128xbf16>,
    return
  }
  func.func @transform_0(%arg0: i32) -> (i32, i32) {
    %c0_i32 = arith.constant 0 : i32
    %c0_i32_0 = arith.constant 0 : i32
    return %arg0, %c0_i32 : i32, i32
  }
  func.func @transform_1(%arg0: i32) -> (i32, i32) {
    %c0_i32 = arith.constant 0 : i32
    %c0_i32_0 = arith.constant 0 : i32
    %c0_i32_1 = arith.constant 0 : i32
    return %c0_i32, %c0_i32_0 : i32, i32
  }
  func.func @transform_2(%arg0: i32) -> (i32, i32) {
    %c0_i32 = arith.constant 0 : i32
    %c0_i32_0 = arith.constant 0 : i32
    %c0_i32_1 = arith.constant 0 : i32
    return %c0_i32, %c0_i32_0 : i32, i32
  }
  func.func @transform_3(%arg0: i32) -> (i32, i32) {
    %c0_i32 = arith.constant 0 : i32
    %c0_i32_0 = arith.constant 0 : i32
    return %arg0, %c0_i32 : i32, i32
  }
}

module attributes {stable_mosaic.version = 11 : i64} {
  func.func @fc_kernel(%arg0: i32, %arg1: memref<8x2048xbf16, #tpu.memory_space<vmem>>, %arg2: memref<2048x512xbf16, #tpu.memory_space<vmem>>, %arg3: memref<1x512xf32, #tpu.memory_space<vmem>>, %arg4: memref<512x10xbf16, #tpu.memory_space<vmem>>, %arg5: memref<1x10xf32, #tpu.memory_space<vmem>>, %arg6: memref<8x10xf32, #tpu.memory_space<vmem>>) attributes {dimension_semantics = [#tpu.dimension_semantics<parallel>], iteration_bounds = array<i64: 1>, scalar_prefetch = 0 : i64, scratch_operands = 0 : i64, tpu.core_type = #tpu.core_type<tc>, window_params = [{transform_indices = @transform_0, window_bounds = array<i64: 8, 2048>}, {pipeline_mode = #tpu.pipeline_mode<synchronous>, transform_indices = @transform_1, window_bounds = array<i64: 2048, 512>}, {pipeline_mode = #tpu.pipeline_mode<synchronous>, transform_indices = @transform_2, window_bounds = array<i64: 1, 512>}, {pipeline_mode = #tpu.pipeline_mode<synchronous>, transform_indices = @transform_3, window_bounds = array<i64: 512, 10>}, {pipeline_mode = #tpu.pipeline_mode<synchronous>, transform_indices = @transform_4, window_bounds = array<i64: 1, 10>}, {transform_indices = @transform_5, window_bounds = array<i64: 8, 10>}]} {
    %c0 = arith.constant 0 : index
    %c0_0 = arith.constant 0 : index
    %0 = vector.load %arg1[%c0, %c0_0] : memref<8x2048xbf16, #tpu.memory_space<vmem>>, vector<8x2048xbf16>
    %c0_1 = arith.constant 0 : index
    %c0_2 = arith.constant 0 : index
    %1 = vector.load %arg2[%c0_1, %c0_2] : memref<2048x512xbf16, #tpu.memory_space<vmem>>, vector<2048x512xbf16>
    %cst = arith.constant dense<0.000000e+00> : vector<8x512xf32>
    %2 = tpu.matmul %0, %1, %cst {dimension_numbers = #tpu.dot_dimension_numbers<[1], [0], [0], [1], [0, 0, 1, 1], [], []>} : vector<8x2048xbf16>, vector<2048x512xbf16>, vector<8x512xf32> -> vector<8x512xf32>
    %c0_3 = arith.constant 0 : index
    %c0_4 = arith.constant 0 : index
    %3 = vector.load %arg3[%c0_3, %c0_4] : memref<1x512xf32, #tpu.memory_space<vmem>>, vector<1x512xf32>
    %4 = vector.broadcast %3 : vector<1x512xf32> to vector<8x512xf32>
    %5 = arith.addf %2, %4 : vector<8x512xf32>
    %cst_5 = arith.constant 0.000000e+00 : f32
    %6 = vector.broadcast %cst_5 : f32 to vector<8x512xf32>
    %7 = arith.maximumf %5, %6 : vector<8x512xf32>
    %8 = arith.truncf %7 : vector<8x512xf32> to vector<8x512xbf16>
    %c0_6 = arith.constant 0 : index
    %c0_7 = arith.constant 0 : index
    %9 = vector.load %arg4[%c0_6, %c0_7] : memref<512x10xbf16, #tpu.memory_space<vmem>>, vector<512x10xbf16>
    %cst_8 = arith.constant dense<0.000000e+00> : vector<8x10xf32>
    %10 = tpu.matmul %8, %9, %cst_8 {dimension_numbers = #tpu.dot_dimension_numbers<[1], [0], [0], [1], [0, 0, 1, 1], [], []>} : vector<8x512xbf16>, vector<512x10xbf16>, vector<8x10xf32> -> vector<8x10xf32>
    %c0_9 = arith.constant 0 : index
    %c0_10 = arith.constant 0 : index
    %11 = vector.load %arg5[%c0_9, %c0_10] : memref<1x10xf32, #tpu.memory_space<vmem>>, vector<1x10xf32>
    %12 = vector.broadcast %11 : vector<1x10xf32> to vector<8x10xf32>
    %13 = arith.addf %10, %12 : vector<8x10xf32>
    %c0_11 = arith.constant 0 : index
    %c0_12 = arith.constant 0 : index
    %14 = vector.load %arg6[%c0_11, %c0_12] : memref<8x10xf32, #tpu.memory_space<vmem>>, vector<8x10xf32>
    tpu.vector_store %arg6[%c0_11, %c0_12], %13 {strides = array<i32>} : memref<8x10xf32, #tpu.memory_space<vmem>>, vector<8x10xf32>,
    return
  }
  func.func @transform_0(%arg0: i32) -> (i32, i32) {
    %c0_i32 = arith.constant 0 : i32
    %c0_i32_0 = arith.constant 0 : i32
    return %arg0, %c0_i32 : i32, i32
  }
  func.func @transform_1(%arg0: i32) -> (i32, i32) {
    %c0_i32 = arith.constant 0 : i32
    %c0_i32_0 = arith.constant 0 : i32
    %c0_i32_1 = arith.constant 0 : i32
    return %c0_i32, %c0_i32_0 : i32, i32
  }
  func.func @transform_2(%arg0: i32) -> (i32, i32) {
    %c0_i32 = arith.constant 0 : i32
    %c0_i32_0 = arith.constant 0 : i32
    %c0_i32_1 = arith.constant 0 : i32
    return %c0_i32, %c0_i32_0 : i32, i32
  }
  func.func @transform_3(%arg0: i32) -> (i32, i32) {
    %c0_i32 = arith.constant 0 : i32
    %c0_i32_0 = arith.constant 0 : i32
    %c0_i32_1 = arith.constant 0 : i32
    return %c0_i32, %c0_i32_0 : i32, i32
  }
  func.func @transform_4(%arg0: i32) -> (i32, i32) {
    %c0_i32 = arith.constant 0 : i32
    %c0_i32_0 = arith.constant 0 : i32
    %c0_i32_1 = arith.constant 0 : i32
    return %c0_i32, %c0_i32_0 : i32, i32
  }
  func.func @transform_5(%arg0: i32) -> (i32, i32) {
    %c0_i32 = arith.constant 0 : i32
    %c0_i32_0 = arith.constant 0 : i32
    return %arg0, %c0_i32 : i32, i32
  }
}

</mosaic_0001>

<llo_original>
// kernel: forward.4
$region0: #{forward.4}
  #allocation0 [shape = 'u32[]', space=smem, size = 0x4, offset = 0x4, fixed_abs, tag = 'smem constant byte address 0x4 - core index']
  #allocation1 [shape = 'u32[144,128]{1,0:T(1,128)}', space=vmem, size = 0x12000, scoped, tag = 'internal scratch']
  %s0 = inlined_call_operand.vmem [shape: bf16[2048,48], index: 0, kind: input, shape index: {}]
  %s1 = inlined_call_operand.vmem [shape: bf16[48,128], index: 1, kind: input, shape index: {}]
  %s2 = inlined_call_operand.vmem [shape: f32[1,32], index: 2, kind: input, shape index: {}]
  %s3 = inlined_call_operand.vmem [shape: bf16[2048,32], index: 3, kind: output, shape index: {}]
  %s4 = sld [smem:[#allocation0]]
  $region45: #{forward.4} parent=0
    _
  %s6 = ssub.s32 1, %s4
  %s7 = scalar_select 0, %s6, %s4
  loop: start=0, step=1, limit=4
  $region2: #{forward.4} parent=0 // loop_pre_header
    _
  $region3: #{forward.4} parent=0 // loop_header
    %s9 = sphi 0, %s13
    %p10 = scmp.ge.s32.totalorder %s9, 4
    %s19 = sphi 0, %s21
    %s22 = sphi 0, %s19
    %s23 = sphi 0, %s22
    %s39 = sphi 0, %s23
    %s43 = sphi 0, %s43
    %s45 = sphi 0, %s43
    %s46 = sphi 0, %s45
    %s60 = sphi 0, %s46
    %s64 = sphi 0, %s64
    %s66 = sphi 0, %s64
    %s67 = sphi 0, %s66
    %s81 = sphi 0, %s67
    %s87 = sphi 0, %s89
    %s90 = sphi 0, %s87
    %s91 = sphi 0, %s90
    %s107 = sphi 0, %s91
  $region4: #{forward.4} parent=0 // loop_header_branch
    %12 = sbr.rel (%p10) target = $region8
  $region5: #{forward.4} parent=0 // loop_body
    %s14 = ssub.s32 %s9, 1
    %s15 = ssub.s32 %s9, 2
    %s16 = sadd.s32 %s9, 1
    %s17 = ssub.s32 %s9, %s16
    %p18 = scmp.eq.s32.totalorder %s17, 0
    %s20 = sadd.s32 %s19, 1
    %s21 = scalar_select %p18, %s19, %s20
    %p24 = pneg %p18
    %p25 = scmp.eq.s32.totalorder %s9, 1
    %p26 = por %p24, %p25
    %p27 = scmp.ne.s32.totalorder %s19, %s22
    %p28 = scmp.eq.s32.totalorder %s9, 0
    %p29 = por %p27, %p28
    %p30 = scmp.ne.s32.totalorder %s19, %s22
    %p31 = scmp.eq.s32.totalorder %s14, 1
    %p32 = por %p30, %p31
    %p33 = scmp.ne.s32.totalorder %s22, %s23
    %p34 = scmp.eq.s32.totalorder %s14, 0
    %p35 = por %p33, %p34
    %p36 = scmp.ne.s32.totalorder %s22, %s23
    %p37 = scmp.eq.s32.totalorder %s15, 1
    %p38 = por %p36, %p37
    %p40 = scmp.ne.s32.totalorder %s23, %s39
    %p41 = scmp.eq.s32.totalorder %s15, 0
    %p42 = por %p40, %p41
    %s44 = sadd.s32 %s43, 1
    %p47 = scmp.eq.s32.totalorder %s9, 1
    %p48 = scmp.ne.s32.totalorder %s43, %s45
    %p49 = scmp.eq.s32.totalorder %s9, 0
    %p50 = por %p48, %p49
    %p51 = scmp.ne.s32.totalorder %s43, %s45
    %p52 = scmp.eq.s32.totalorder %s14, 1
    %p53 = por %p51, %p52
    %p54 = scmp.ne.s32.totalorder %s45, %s46
    %p55 = scmp.eq.s32.totalorder %s14, 0
    %p56 = por %p54, %p55
    %p57 = scmp.ne.s32.totalorder %s45, %s46
    %p58 = scmp.eq.s32.totalorder %s15, 1
    %p59 = por %p57, %p58
    %p61 = scmp.ne.s32.totalorder %s46, %s60
    %p62 = scmp.eq.s32.totalorder %s15, 0
    %p63 = por %p61, %p62
    %s65 = sadd.s32 %s64, 1
    %p68 = scmp.eq.s32.totalorder %s9, 1
    %p69 = scmp.ne.s32.totalorder %s64, %s66
    %p70 = scmp.eq.s32.totalorder %s9, 0
    %p71 = por %p69, %p70
    %p72 = scmp.ne.s32.totalorder %s64, %s66
    %p73 = scmp.eq.s32.totalorder %s14, 1
    %p74 = por %p72, %p73
    %p75 = scmp.ne.s32.totalorder %s66, %s67
    %p76 = scmp.eq.s32.totalorder %s14, 0
    %p77 = por %p75, %p76
    %p78 = scmp.ne.s32.totalorder %s66, %s67
    %p79 = scmp.eq.s32.totalorder %s15, 1
    %p80 = por %p78, %p79
    %p82 = scmp.ne.s32.totalorder %s67, %s81
    %p83 = scmp.eq.s32.totalorder %s15, 0
    %p84 = por %p82, %p83
    %s85 = ssub.s32 %s9, %s16
    %p86 = scmp.eq.s32.totalorder %s85, 0
    %s88 = sadd.s32 %s87, 1
    %s89 = scalar_select %p86, %s87, %s88
    %p92 = pneg %p86
    %p93 = scmp.eq.s32.totalorder %s9, 1
    %p94 = por %p92, %p93
    %p95 = scmp.ne.s32.totalorder %s87, %s90
    %p96 = scmp.eq.s32.totalorder %s9, 0
    %p97 = por %p95, %p96
    %p98 = scmp.ne.s32.totalorder %s87, %s90
    %p99 = scmp.eq.s32.totalorder %s14, 1
    %p100 = por %p98, %p99
    %p101 = scmp.ne.s32.totalorder %s90, %s91
    %p102 = scmp.eq.s32.totalorder %s14, 0
    %p103 = por %p101, %p102
    %p104 = scmp.ne.s32.totalorder %s90, %s91
    %p105 = scmp.eq.s32.totalorder %s15, 1
    %p106 = por %p104, %p105
    %p108 = scmp.ne.s32.totalorder %s91, %s107
    %p109 = scmp.eq.s32.totalorder %s15, 0
    %p110 = por %p108, %p109
    %p111 = scmp.le.s32.totalorder 1, %s9
    %p112 = scmp.lt.s32.totalorder %s9, 3
    %p113 = pnand %p111, %p112
    %p114 = pneg %p113
    // Predicated region
    $region9: #{forward.4} parent=5 // pred_check
      _
    $region10: #{forward.4} parent=5 // pred_check_branch
      %116 = sbr.rel (%p113) target = $region12
    $region11: #{forward.4} parent=5 // pred_region
      %s117 = ssub.s32 %s9, 1
      // Predicated region
      $region13: #{forward.4} parent=11 // pred_check
        %p118 = pneg %p56
      $region14: #{forward.4} parent=11 // pred_check_branch
        %120 = sbr.rel (%p118) target = $region16
      $region15: #{forward.4} parent=11 // pred_region
        _
      $region16: #{forward.4} parent=11 // pred_fallthru
        _
      // Predicated region
      $region17: #{forward.4} parent=11 // pred_check
        %p121 = pneg %p77
      $region18: #{forward.4} parent=11 // pred_check_branch
        %123 = sbr.rel (%p121) target = $region20
      $region19: #{forward.4} parent=11 // pred_region
        _
      $region20: #{forward.4} parent=11 // pred_fallthru
        _
    $region12: #{forward.4} parent=5 // pred_fallthru
      _
    %p124 = scmp.lt.s32.totalorder %s9, 2
    // Predicated region
    $region21: #{forward.4} parent=5 // pred_check
      %p125 = pneg %p124
    $region22: #{forward.4} parent=5 // pred_check_branch
      %127 = sbr.rel (%p125) target = $region24
    $region23: #{forward.4} parent=5 // pred_region
      // Predicated region
      $region25: #{forward.4} parent=23 // pred_check
        %p128 = pneg %p29
      $region26: #{forward.4} parent=23 // pred_check_branch
        %130 = sbr.rel (%p128) target = $region28
      $region27: #{forward.4} parent=23 // pred_region
        %s131 = smul.u32 128, %s9
        %p132 = scmp.lt.s32.totalorder %s131, 255
        %s133 = scalar_select %p132, %s131, 255
        %s134 = smul.addr %s133, 4
        %s135 = scalar_lea.vmem %s0, %s134
        %s136 = smul.u32 128, %s9
      $region28: #{forward.4} parent=23 // pred_fallthru
        _
    $region24: #{forward.4} parent=5 // pred_fallthru
      _
    %p137 = scmp.le.s32.totalorder 1, %s9
    %p138 = scmp.lt.s32.totalorder %s9, 3
    %p139 = pnand %p137, %p138
    %p140 = pneg %p139
    // Predicated region
    $region29: #{forward.4} parent=5 // pred_check
      _
    $region30: #{forward.4} parent=5 // pred_check_branch
      %142 = sbr.rel (%p139) target = $region32
    $region31: #{forward.4} parent=5 // pred_region
      %s143 = ssub.s32 %s9, 1
      %s144 = smul.u32 128, %s14
      %p145 = scmp.lt.s32.totalorder %s144, 255
      %s146 = scalar_select %p145, %s144, 255
      %s147 = smul.addr %s146, 4
      %s148 = scalar_lea.vmem %s0, %s147
      %p149 = pneg %p35
      %p150 = pneg %p32
      %p151 = pneg %p56
      %p152 = pneg %p53
      %p153 = pneg %p77
      %p154 = pneg %p74
      %p155 = pneg %p103
      %p156 = pneg %p100
      %s157 = smul.u32 128, %s14
      %p158 = scmp.lt.s32.totalorder %s157, 255
      %s159 = scalar_select %p158, %s157, 255
      %s160 = smul.addr %s159, 4
      %s161 = scalar_lea.vmem %s3, %s160
      %s162 = smul.u32 128, %s14
      %p163 = scmp.lt.s32.totalorder %s162, 255
      %s164 = scalar_select %p163, %s162, 255
      %s165 = smul.addr %s164, 4
      %s166 = scalar_lea.vmem %s0, %s165
      %s167 = smul.u32 128, %s14
      %s168 = smul.u32 128, %s14
      %p169 = scmp.lt.s32.totalorder %s168, 255
      %s170 = scalar_select %p169, %s168, 255
      %s171 = smul.addr %s170, 4
      %s172 = scalar_lea.vmem %s3, %s171
      %s173 = smul.u32 128, %s14
      %v175 = vld [vmem:[%s166] sm:$0xf]
      %v176 = vld [vmem:[%s166 + $0x4] sm:$0xf]
      %v177 = vld [vmem:[%s166 + $0x8] sm:$0xf]
      %v178 = vld [vmem:[%s166 + $0xc] sm:$0xf]
      %v179 = vld [vmem:[%s166 + $0x10] sm:$0xf]
      %v180 = vld [vmem:[%s166 + $0x14] sm:$0xf]
      %v181 = vld [vmem:[%s166 + $0x18] sm:$0xf]
      %v182 = vld [vmem:[%s166 + $0x1c] sm:$0xf]
      %v183 = vld [vmem:[%s166 + $0x20] sm:$0xf]
      %v184 = vld [vmem:[%s166 + $0x24] sm:$0xf]
      %v185 = vld [vmem:[%s166 + $0x28] sm:$0xf]
      %v186 = vld [vmem:[%s166 + $0x2c] sm:$0xf]
      %v187 = vld [vmem:[%s166 + $0x30] sm:$0xf]
      %v188 = vld [vmem:[%s166 + $0x34] sm:$0xf]
      %v189 = vld [vmem:[%s166 + $0x38] sm:$0xf]
      %v190 = vld [vmem:[%s166 + $0x3c] sm:$0xf]
      %v191 = vld [vmem:[%s166 + $0x40] sm:$0xf]
      %v192 = vld [vmem:[%s166 + $0x44] sm:$0xf]
      %v193 = vld [vmem:[%s166 + $0x48] sm:$0xf]
      %v194 = vld [vmem:[%s166 + $0x4c] sm:$0xf]
      %v195 = vld [vmem:[%s166 + $0x50] sm:$0xf]
      %v196 = vld [vmem:[%s166 + $0x54] sm:$0xf]
      %v197 = vld [vmem:[%s166 + $0x58] sm:$0xf]
      %v198 = vld [vmem:[%s166 + $0x5c] sm:$0xf]
      %v199 = vld [vmem:[%s166 + $0x60] sm:$0xf]
      %v200 = vld [vmem:[%s166 + $0x64] sm:$0xf]
      %v201 = vld [vmem:[%s166 + $0x68] sm:$0xf]
      %v202 = vld [vmem:[%s166 + $0x6c] sm:$0xf]
      %v203 = vld [vmem:[%s166 + $0x70] sm:$0xf]
      %v204 = vld [vmem:[%s166 + $0x74] sm:$0xf]
      %v205 = vld [vmem:[%s166 + $0x78] sm:$0xf]
      %v206 = vld [vmem:[%s166 + $0x7c] sm:$0xf]
      %v207 = vld [vmem:[%s166 + $0x80] sm:$0xf]
      %v208 = vld [vmem:[%s166 + $0x84] sm:$0xf]
      %v209 = vld [vmem:[%s166 + $0x88] sm:$0xf]
      %v210 = vld [vmem:[%s166 + $0x8c] sm:$0xf]
      %v211 = vld [vmem:[%s166 + $0x90] sm:$0xf]
      %v212 = vld [vmem:[%s166 + $0x94] sm:$0xf]
      %v213 = vld [vmem:[%s166 + $0x98] sm:$0xf]
      %v214 = vld [vmem:[%s166 + $0x9c] sm:$0xf]
      %v215 = vld [vmem:[%s166 + $0xa0] sm:$0xf]
      %v216 = vld [vmem:[%s166 + $0xa4] sm:$0xf]
      %v217 = vld [vmem:[%s166 + $0xa8] sm:$0xf]
      %v218 = vld [vmem:[%s166 + $0xac] sm:$0xf]
      %v219 = vld [vmem:[%s166 + $0xb0] sm:$0xf]
      %v220 = vld [vmem:[%s166 + $0xb4] sm:$0xf]
      %v221 = vld [vmem:[%s166 + $0xb8] sm:$0xf]
      %v222 = vld [vmem:[%s166 + $0xbc] sm:$0xf]
      %v223 = vld [vmem:[%s166 + $0xc0] sm:$0xf]
      %v224 = vld [vmem:[%s166 + $0xc4] sm:$0xf]
      %v225 = vld [vmem:[%s166 + $0xc8] sm:$0xf]
      %v226 = vld [vmem:[%s166 + $0xcc] sm:$0xf]
      %v227 = vld [vmem:[%s166 + $0xd0] sm:$0xf]
      %v228 = vld [vmem:[%s166 + $0xd4] sm:$0xf]
      %v229 = vld [vmem:[%s166 + $0xd8] sm:$0xf]
      %v230 = vld [vmem:[%s166 + $0xdc] sm:$0xf]
      %v231 = vld [vmem:[%s166 + $0xe0] sm:$0xf]
      %v232 = vld [vmem:[%s166 + $0xe4] sm:$0xf]
      %v233 = vld [vmem:[%s166 + $0xe8] sm:$0xf]
      %v234 = vld [vmem:[%s166 + $0xec] sm:$0xf]
      %v235 = vld [vmem:[%s166 + $0xf0] sm:$0xf]
      %v236 = vld [vmem:[%s166 + $0xf4] sm:$0xf]
      %v237 = vld [vmem:[%s166 + $0xf8] sm:$0xf]
      %v238 = vld [vmem:[%s166 + $0xfc] sm:$0xf]
      %v239 = vld [vmem:[%s166 + $0x100] sm:$0xf]
      %v240 = vld [vmem:[%s166 + $0x104] sm:$0xf]
      %v241 = vld [vmem:[%s166 + $0x108] sm:$0xf]
      %v242 = vld [vmem:[%s166 + $0x10c] sm:$0xf]
      %v243 = vld [vmem:[%s166 + $0x110] sm:$0xf]
      %v244 = vld [vmem:[%s166 + $0x114] sm:$0xf]
      %v245 = vld [vmem:[%s166 + $0x118] sm:$0xf]
      %v246 = vld [vmem:[%s166 + $0x11c] sm:$0xf]
      %v247 = vld [vmem:[%s166 + $0x120] sm:$0xf]
      %v248 = vld [vmem:[%s166 + $0x124] sm:$0xf]
      %v249 = vld [vmem:[%s166 + $0x128] sm:$0xf]
      %v250 = vld [vmem:[%s166 + $0x12c] sm:$0xf]
      %v251 = vld [vmem:[%s166 + $0x130] sm:$0xf]
      %v252 = vld [vmem:[%s166 + $0x134] sm:$0xf]
      %v253 = vld [vmem:[%s166 + $0x138] sm:$0xf]
      %v254 = vld [vmem:[%s166 + $0x13c] sm:$0xf]
      %v255 = vld [vmem:[%s166 + $0x140] sm:$0xf]
      %v256 = vld [vmem:[%s166 + $0x144] sm:$0xf]
      %v257 = vld [vmem:[%s166 + $0x148] sm:$0xf]
      %v258 = vld [vmem:[%s166 + $0x14c] sm:$0xf]
      %v259 = vld [vmem:[%s166 + $0x150] sm:$0xf]
      %v260 = vld [vmem:[%s166 + $0x154] sm:$0xf]
      %v261 = vld [vmem:[%s166 + $0x158] sm:$0xf]
      %v262 = vld [vmem:[%s166 + $0x15c] sm:$0xf]
      %v263 = vld [vmem:[%s166 + $0x160] sm:$0xf]
      %v264 = vld [vmem:[%s166 + $0x164] sm:$0xf]
      %v265 = vld [vmem:[%s166 + $0x168] sm:$0xf]
      %v266 = vld [vmem:[%s166 + $0x16c] sm:$0xf]
      %v267 = vld [vmem:[%s166 + $0x170] sm:$0xf]
      %v268 = vld [vmem:[%s166 + $0x174] sm:$0xf]
      %v269 = vld [vmem:[%s166 + $0x178] sm:$0xf]
      %v270 = vld [vmem:[%s166 + $0x17c] sm:$0xf]
      %v271 = vld [vmem:[%s166 + $0x180] sm:$0xf]
      %v272 = vld [vmem:[%s166 + $0x184] sm:$0xf]
      %v273 = vld [vmem:[%s166 + $0x188] sm:$0xf]
      %v274 = vld [vmem:[%s166 + $0x18c] sm:$0xf]
      %v275 = vld [vmem:[%s166 + $0x190] sm:$0xf]
      %v276 = vld [vmem:[%s166 + $0x194] sm:$0xf]
      %v277 = vld [vmem:[%s166 + $0x198] sm:$0xf]
      %v278 = vld [vmem:[%s166 + $0x19c] sm:$0xf]
      %v279 = vld [vmem:[%s166 + $0x1a0] sm:$0xf]
      %v280 = vld [vmem:[%s166 + $0x1a4] sm:$0xf]
      %v281 = vld [vmem:[%s166 + $0x1a8] sm:$0xf]
      %v282 = vld [vmem:[%s166 + $0x1ac] sm:$0xf]
      %v283 = vld [vmem:[%s166 + $0x1b0] sm:$0xf]
      %v284 = vld [vmem:[%s166 + $0x1b4] sm:$0xf]
      %v285 = vld [vmem:[%s166 + $0x1b8] sm:$0xf]
      %v286 = vld [vmem:[%s166 + $0x1bc] sm:$0xf]
      %v287 = vld [vmem:[%s166 + $0x1c0] sm:$0xf]
      %v288 = vld [vmem:[%s166 + $0x1c4] sm:$0xf]
      %v289 = vld [vmem:[%s166 + $0x1c8] sm:$0xf]
      %v290 = vld [vmem:[%s166 + $0x1cc] sm:$0xf]
      %v291 = vld [vmem:[%s166 + $0x1d0] sm:$0xf]
      %v292 = vld [vmem:[%s166 + $0x1d4] sm:$0xf]
      %v293 = vld [vmem:[%s166 + $0x1d8] sm:$0xf]
      %v294 = vld [vmem:[%s166 + $0x1dc] sm:$0xf]
      %v295 = vld [vmem:[%s166 + $0x1e0] sm:$0xf]
      %v296 = vld [vmem:[%s166 + $0x1e4] sm:$0xf]
      %v297 = vld [vmem:[%s166 + $0x1e8] sm:$0xf]
      %v298 = vld [vmem:[%s166 + $0x1ec] sm:$0xf]
      %v299 = vld [vmem:[%s166 + $0x1f0] sm:$0xf]
      %v300 = vld [vmem:[%s166 + $0x1f4] sm:$0xf]
      %v301 = vld [vmem:[%s166 + $0x1f8] sm:$0xf]
      %v302 = vld [vmem:[%s166 + $0x1fc] sm:$0xf]
      %v303 = vld [vmem:[%s1] sm:$0xf]
      %v304 = vld [vmem:[%s1 + $0x4] sm:$0xf]
      %v305 = vld [vmem:[%s1 + $0x8] sm:$0xf]
      %v306 = vld [vmem:[%s1 + $0xc] sm:$0xf]
      %v307 = vld [vmem:[%s1 + $0x10] sm:$0xf]
      %v308 = vld [vmem:[%s1 + $0x14] sm:$0xf]
      %v437 = vunpack.c.l.b16 %v175
      %v438 = vunpack.c.l.b16 %v176
      %v439 = vunpack.c.l.b16 %v177
      %v440 = vunpack.c.l.b16 %v178
      %v441 = vunpack.c.l.b16 %v179
      %v442 = vunpack.c.l.b16 %v180
      %v443 = vunpack.c.l.b16 %v181
      %v444 = vunpack.c.l.b16 %v182
      %v445 = vunpack.c.l.b16 %v183
      %v446 = vunpack.c.l.b16 %v184
      %v447 = vunpack.c.l.b16 %v185
      %v448 = vunpack.c.l.b16 %v186
      %v449 = vunpack.c.l.b16 %v187
      %v450 = vunpack.c.l.b16 %v188
      %v451 = vunpack.c.l.b16 %v189
      %v452 = vunpack.c.l.b16 %v190
      %v453 = vunpack.c.l.b16 %v191
      %v454 = vunpack.c.l.b16 %v192
      %v455 = vunpack.c.l.b16 %v193
      %v456 = vunpack.c.l.b16 %v194
      %v457 = vunpack.c.l.b16 %v195
      %v458 = vunpack.c.l.b16 %v196
      %v459 = vunpack.c.l.b16 %v197
      %v460 = vunpack.c.l.b16 %v198
      %v461 = vunpack.c.l.b16 %v199
      %v462 = vunpack.c.l.b16 %v200
      %v463 = vunpack.c.l.b16 %v201
      %v464 = vunpack.c.l.b16 %v202
      %v465 = vunpack.c.l.b16 %v203
      %v466 = vunpack.c.l.b16 %v204
      %v467 = vunpack.c.l.b16 %v205
      %v468 = vunpack.c.l.b16 %v206
      %v469 = vunpack.c.l.b16 %v207
      %v470 = vunpack.c.l.b16 %v208
      %v471 = vunpack.c.l.b16 %v209
      %v472 = vunpack.c.l.b16 %v210
      %v473 = vunpack.c.l.b16 %v211
      %v474 = vunpack.c.l.b16 %v212
      %v475 = vunpack.c.l.b16 %v213
      %v476 = vunpack.c.l.b16 %v214
      %v477 = vunpack.c.l.b16 %v215
      %v478 = vunpack.c.l.b16 %v216
      %v479 = vunpack.c.l.b16 %v217
      %v480 = vunpack.c.l.b16 %v218
      %v481 = vunpack.c.l.b16 %v219
      %v482 = vunpack.c.l.b16 %v220
      %v483 = vunpack.c.l.b16 %v221
      %v484 = vunpack.c.l.b16 %v222
      %v485 = vunpack.c.l.b16 %v223
      %v486 = vunpack.c.l.b16 %v224
      %v487 = vunpack.c.l.b16 %v225
      %v488 = vunpack.c.l.b16 %v226
      %v489 = vunpack.c.l.b16 %v227
      %v490 = vunpack.c.l.b16 %v228
      %v491 = vunpack.c.l.b16 %v229
      %v492 = vunpack.c.l.b16 %v230
      %v493 = vunpack.c.l.b16 %v231
      %v494 = vunpack.c.l.b16 %v232
      %v495 = vunpack.c.l.b16 %v233
      %v496 = vunpack.c.l.b16 %v234
      %v497 = vunpack.c.l.b16 %v235
      %v498 = vunpack.c.l.b16 %v236
      %v499 = vunpack.c.l.b16 %v237
      %v500 = vunpack.c.l.b16 %v238
      %v501 = vunpack.c.l.b16 %v239
      %v502 = vunpack.c.l.b16 %v240
      %v503 = vunpack.c.l.b16 %v241
      %v504 = vunpack.c.l.b16 %v242
      %v505 = vunpack.c.l.b16 %v243
      %v506 = vunpack.c.l.b16 %v244
      %v507 = vunpack.c.l.b16 %v245
      %v508 = vunpack.c.l.b16 %v246
      %v509 = vunpack.c.l.b16 %v247
      %v510 = vunpack.c.l.b16 %v248
      %v511 = vunpack.c.l.b16 %v249
      %v512 = vunpack.c.l.b16 %v250
      %v513 = vunpack.c.l.b16 %v251
      %v514 = vunpack.c.l.b16 %v252
      %v515 = vunpack.c.l.b16 %v253
      %v516 = vunpack.c.l.b16 %v254
      %v517 = vunpack.c.l.b16 %v255
      %v518 = vunpack.c.l.b16 %v256
      %v519 = vunpack.c.l.b16 %v257
      %v520 = vunpack.c.l.b16 %v258
      %v521 = vunpack.c.l.b16 %v259
      %v522 = vunpack.c.l.b16 %v260
      %v523 = vunpack.c.l.b16 %v261
      %v524 = vunpack.c.l.b16 %v262
      %v525 = vunpack.c.l.b16 %v263
      %v526 = vunpack.c.l.b16 %v264
      %v527 = vunpack.c.l.b16 %v265
      %v528 = vunpack.c.l.b16 %v266
      %v529 = vunpack.c.l.b16 %v267
      %v530 = vunpack.c.l.b16 %v268
      %v531 = vunpack.c.l.b16 %v269
      %v532 = vunpack.c.l.b16 %v270
      %v533 = vunpack.c.l.b16 %v271
      %v534 = vunpack.c.l.b16 %v272
      %v535 = vunpack.c.l.b16 %v273
      %v536 = vunpack.c.l.b16 %v274
      %v537 = vunpack.c.l.b16 %v275
      %v538 = vunpack.c.l.b16 %v276
      %v539 = vunpack.c.l.b16 %v277
      %v540 = vunpack.c.l.b16 %v278
      %v541 = vunpack.c.l.b16 %v279
      %v542 = vunpack.c.l.b16 %v280
      %v543 = vunpack.c.l.b16 %v281
      %v544 = vunpack.c.l.b16 %v282
      %v545 = vunpack.c.l.b16 %v283
      %v546 = vunpack.c.l.b16 %v284
      %v547 = vunpack.c.l.b16 %v285
      %v548 = vunpack.c.l.b16 %v286
      %v549 = vunpack.c.l.b16 %v287
      %v550 = vunpack.c.l.b16 %v288
      %v551 = vunpack.c.l.b16 %v289
      %v552 = vunpack.c.l.b16 %v290
      %v553 = vunpack.c.l.b16 %v291
      %v554 = vunpack.c.l.b16 %v292
      %v555 = vunpack.c.l.b16 %v293
      %v556 = vunpack.c.l.b16 %v294
      %v557 = vunpack.c.l.b16 %v295
      %v558 = vunpack.c.l.b16 %v296
      %v559 = vunpack.c.l.b16 %v297
      %v560 = vunpack.c.l.b16 %v298
      %v561 = vunpack.c.l.b16 %v299
      %v562 = vunpack.c.l.b16 %v300
      %v563 = vunpack.c.l.b16 %v301
      %v564 = vunpack.c.l.b16 %v302
      %v565 = vpack.c.b16 %v438, %v437
      %v566 = vpack.c.b16 %v440, %v439
      %v567 = vpack.c.b16 %v442, %v441
      %v568 = vpack.c.b16 %v444, %v443
      %v569 = vpack.c.b16 %v446, %v445
      %v570 = vpack.c.b16 %v448, %v447
      %v571 = vpack.c.b16 %v450, %v449
      %v572 = vpack.c.b16 %v452, %v451
      %v573 = vpack.c.b16 %v454, %v453
      %v574 = vpack.c.b16 %v456, %v455
      %v575 = vpack.c.b16 %v458, %v457
      %v576 = vpack.c.b16 %v460, %v459
      %v577 = vpack.c.b16 %v462, %v461
      %v578 = vpack.c.b16 %v464, %v463
      %v579 = vpack.c.b16 %v466, %v465
      %v580 = vpack.c.b16 %v468, %v467
      %v581 = vpack.c.b16 %v470, %v469
      %v582 = vpack.c.b16 %v472, %v471
      %v583 = vpack.c.b16 %v474, %v473
      %v584 = vpack.c.b16 %v476, %v475
      %v585 = vpack.c.b16 %v478, %v477
      %v586 = vpack.c.b16 %v480, %v479
      %v587 = vpack.c.b16 %v482, %v481
      %v588 = vpack.c.b16 %v484, %v483
      %v589 = vpack.c.b16 %v486, %v485
      %v590 = vpack.c.b16 %v488, %v487
      %v591 = vpack.c.b16 %v490, %v489
      %v592 = vpack.c.b16 %v492, %v491
      %v593 = vpack.c.b16 %v494, %v493
      %v594 = vpack.c.b16 %v496, %v495
      %v595 = vpack.c.b16 %v498, %v497
      %v596 = vpack.c.b16 %v500, %v499
      %v597 = vpack.c.b16 %v502, %v501
      %v598 = vpack.c.b16 %v504, %v503
      %v599 = vpack.c.b16 %v506, %v505
      %v600 = vpack.c.b16 %v508, %v507
      %v601 = vpack.c.b16 %v510, %v509
      %v602 = vpack.c.b16 %v512, %v511
      %v603 = vpack.c.b16 %v514, %v513
      %v604 = vpack.c.b16 %v516, %v515
      %v605 = vpack.c.b16 %v518, %v517
      %v606 = vpack.c.b16 %v520, %v519
      %v607 = vpack.c.b16 %v522, %v521
      %v608 = vpack.c.b16 %v524, %v523
      %v609 = vpack.c.b16 %v526, %v525
      %v610 = vpack.c.b16 %v528, %v527
      %v611 = vpack.c.b16 %v530, %v529
      %v612 = vpack.c.b16 %v532, %v531
      %v613 = vpack.c.b16 %v534, %v533
      %v614 = vpack.c.b16 %v536, %v535
      %v615 = vpack.c.b16 %v538, %v537
      %v616 = vpack.c.b16 %v540, %v539
      %v617 = vpack.c.b16 %v542, %v541
      %v618 = vpack.c.b16 %v544, %v543
      %v619 = vpack.c.b16 %v546, %v545
      %v620 = vpack.c.b16 %v548, %v547
      %v621 = vpack.c.b16 %v550, %v549
      %v622 = vpack.c.b16 %v552, %v551
      %v623 = vpack.c.b16 %v554, %v553
      %v624 = vpack.c.b16 %v556, %v555
      %v625 = vpack.c.b16 %v558, %v557
      %v626 = vpack.c.b16 %v560, %v559
      %v627 = vpack.c.b16 %v562, %v561
      %v628 = vpack.c.b16 %v564, %v563
      %v635 = vunpack.c.l.b16 %v303
      %v636 = vunpack.c.l.b16 %v304
      %v637 = vunpack.c.l.b16 %v305
      %v638 = vunpack.c.l.b16 %v306
      %v639 = vunpack.c.l.b16 %v307
      %v640 = vunpack.c.l.b16 %v308
      %v641 = vpack.c.b16 %v636, %v635
      %v642 = vpack.c.b16 %v638, %v637
      %v643 = vpack.c.b16 %v640, %v639
      %vm647 = vcmask 392192
      %v649 = vsel %vm647, %v565, 0
      %v652 = vsel %vm647, %v566, 0
      %v655 = vsel %vm647, %v567, 0
      %v658 = vsel %vm647, %v568, 0
      %v661 = vsel %vm647, %v569, 0
      %v664 = vsel %vm647, %v570, 0
      %v667 = vsel %vm647, %v571, 0
      %v670 = vsel %vm647, %v572, 0
      %v673 = vsel %vm647, %v573, 0
      %v676 = vsel %vm647, %v574, 0
      %v679 = vsel %vm647, %v575, 0
      %v682 = vsel %vm647, %v576, 0
      %v685 = vsel %vm647, %v577, 0
      %v688 = vsel %vm647, %v578, 0
      %v691 = vsel %vm647, %v579, 0
      %v694 = vsel %vm647, %v580, 0
      %v697 = vsel %vm647, %v581, 0
      %v700 = vsel %vm647, %v582, 0
      %v703 = vsel %vm647, %v583, 0
      %v706 = vsel %vm647, %v584, 0
      %v709 = vsel %vm647, %v585, 0
      %v712 = vsel %vm647, %v586, 0
      %v715 = vsel %vm647, %v587, 0
      %v718 = vsel %vm647, %v588, 0
      %v721 = vsel %vm647, %v589, 0
      %v724 = vsel %vm647, %v590, 0
      %v727 = vsel %vm647, %v591, 0
      %v730 = vsel %vm647, %v592, 0
      %v733 = vsel %vm647, %v593, 0
      %v736 = vsel %vm647, %v594, 0
      %v739 = vsel %vm647, %v595, 0
      %v742 = vsel %vm647, %v596, 0
      %v745 = vsel %vm647, %v597, 0
      %v748 = vsel %vm647, %v598, 0
      %v751 = vsel %vm647, %v599, 0
      %v754 = vsel %vm647, %v600, 0
      %v757 = vsel %vm647, %v601, 0
      %v760 = vsel %vm647, %v602, 0
      %v763 = vsel %vm647, %v603, 0
      %v766 = vsel %vm647, %v604, 0
      %v769 = vsel %vm647, %v605, 0
      %v772 = vsel %vm647, %v606, 0
      %v775 = vsel %vm647, %v607, 0
      %v778 = vsel %vm647, %v608, 0
      %v781 = vsel %vm647, %v609, 0
      %v784 = vsel %vm647, %v610, 0
      %v787 = vsel %vm647, %v611, 0
      %v790 = vsel %vm647, %v612, 0
      %v793 = vsel %vm647, %v613, 0
      %v796 = vsel %vm647, %v614, 0
      %v799 = vsel %vm647, %v615, 0
      %v802 = vsel %vm647, %v616, 0
      %v805 = vsel %vm647, %v617, 0
      %v808 = vsel %vm647, %v618, 0
      %v811 = vsel %vm647, %v619, 0
      %v814 = vsel %vm647, %v620, 0
      %v817 = vsel %vm647, %v621, 0
      %v820 = vsel %vm647, %v622, 0
      %v823 = vsel %vm647, %v623, 0
      %v826 = vsel %vm647, %v624, 0
      %v829 = vsel %vm647, %v625, 0
      %v832 = vsel %vm647, %v626, 0
      %v835 = vsel %vm647, %v627, 0
      %v838 = vsel %vm647, %v628, 0
      %840 = vmatprep.subr.bf16.mxu0 0
      %841 = vmatpush1.bf16.msra.mxu0 0
      %842 = vmatprep.subr.bf16.mxu0 0
      %843 = vmatpush1.bf16.msra.mxu0 0
      %844 = vmatprep.subr.bf16.mxu0 0
      %845 = vmatpush1.bf16.msra.mxu0 0
      %846 = vmatprep.subr.bf16.mxu0 0
      %847 = vmatpush1.bf16.msra.mxu0 0
      %848 = vmatprep.subr.bf16.mxu0 0
      %849 = vmatpush1.bf16.msra.mxu0 0
      %850 = vmatprep.subr.bf16.mxu0 0
      %851 = vmatpush1.bf16.msra.mxu0 %v643
      %852 = vmatprep.subr.bf16.mxu0 0
      %853 = vmatpush1.bf16.msra.mxu0 %v642
      %854 = vmatprep.subr.bf16.mxu0 0
      %855 = vmatpush1.bf16.msra.mxu0 %v641
      %856 = vmatprep.subr.bf16.mxu0 0
      %857 = vmatpush2.bf16.msra.mxu0 0
      %858 = vmatprep.subr.bf16.mxu0 0
      %859 = vmatpush2.bf16.msra.mxu0 0
      %860 = vmatprep.subr.bf16.mxu0 0
      %861 = vmatpush2.bf16.msra.mxu0 0
      %862 = vmatprep.subr.bf16.mxu0 0
      %863 = vmatpush2.bf16.msra.mxu0 0
      %864 = vmatprep.subr.bf16.mxu0 0
      %865 = vmatpush2.bf16.msra.mxu0 0
      %866 = vmatprep.subr.bf16.mxu0 0
      %867 = vmatpush2.bf16.msra.mxu0 0
      %868 = vmatprep.subr.bf16.mxu0 0
      %869 = vmatpush2.bf16.msra.mxu0 0
      %870 = vmatprep.subr.bf16.mxu0 0
      %871 = vmatpush2.bf16.msra.mxu0 0
      %872 = vmatprep.mubr.bf16.mxu0 0
      %873 = vmatmul.mubr.bf16.gmra.mxu0 %v649
      %v874 = vpop.f32.mrf.mxu0
      %v875 = vadd.f32 0.0, %v874
      %v876 = vpop.f32.mrf.mxu0
      %v877 = vpop.f32.mrf.mxu0
      %v878 = vadd.f32 0.0, %v877
      %v879 = vpop.f32.mrf.mxu0
      %880 = vmatprep.mubr.bf16.mxu0 0
      %881 = vmatmul.mubr.bf16.gmra.mxu0 %v652
      %v882 = vpop.f32.mrf.mxu0
      %v883 = vadd.f32 0.0, %v882
      %v884 = vpop.f32.mrf.mxu0
      %v885 = vpop.f32.mrf.mxu0
      %v886 = vadd.f32 0.0, %v885
      %v887 = vpop.f32.mrf.mxu0
      %888 = vmatprep.mubr.bf16.mxu0 0
      %889 = vmatmul.mubr.bf16.gmra.mxu0 %v655
      %v890 = vpop.f32.mrf.mxu0
      %v891 = vadd.f32 0.0, %v890
      %v892 = vpop.f32.mrf.mxu0
      %v893 = vpop.f32.mrf.mxu0
      %v894 = vadd.f32 0.0, %v893
      %v895 = vpop.f32.mrf.mxu0
      %896 = vmatprep.mubr.bf16.mxu0 0
      %897 = vmatmul.mubr.bf16.gmra.mxu0 %v658
      %v898 = vpop.f32.mrf.mxu0
      %v899 = vadd.f32 0.0, %v898
      %v900 = vpop.f32.mrf.mxu0
      %v901 = vpop.f32.mrf.mxu0
      %v902 = vadd.f32 0.0, %v901
      %v903 = vpop.f32.mrf.mxu0
      %904 = vmatprep.mubr.bf16.mxu0 0
      %905 = vmatmul.mubr.bf16.gmra.mxu0 %v661
      %v906 = vpop.f32.mrf.mxu0
      %v907 = vadd.f32 0.0, %v906
      %v908 = vpop.f32.mrf.mxu0
      %v909 = vpop.f32.mrf.mxu0
      %v910 = vadd.f32 0.0, %v909
      %v911 = vpop.f32.mrf.mxu0
      %912 = vmatprep.mubr.bf16.mxu0 0
      %913 = vmatmul.mubr.bf16.gmra.mxu0 %v664
      %v914 = vpop.f32.mrf.mxu0
      %v915 = vadd.f32 0.0, %v914
      %v916 = vpop.f32.mrf.mxu0
      %v917 = vpop.f32.mrf.mxu0
      %v918 = vadd.f32 0.0, %v917
      %v919 = vpop.f32.mrf.mxu0
      %920 = vmatprep.mubr.bf16.mxu0 0
      %921 = vmatmul.mubr.bf16.gmra.mxu0 %v667
      %v922 = vpop.f32.mrf.mxu0
      %v923 = vadd.f32 0.0, %v922
      %v924 = vpop.f32.mrf.mxu0
      %v925 = vpop.f32.mrf.mxu0
      %v926 = vadd.f32 0.0, %v925
      %v927 = vpop.f32.mrf.mxu0
      %928 = vmatprep.mubr.bf16.mxu0 0
      %929 = vmatmul.mubr.bf16.gmra.mxu0 %v670
      %v930 = vpop.f32.mrf.mxu0
      %v931 = vadd.f32 0.0, %v930
      %v932 = vpop.f32.mrf.mxu0
      %v933 = vpop.f32.mrf.mxu0
      %v934 = vadd.f32 0.0, %v933
      %v935 = vpop.f32.mrf.mxu0
      %936 = vmatprep.mubr.bf16.mxu0 0
      %937 = vmatmul.mubr.bf16.gmra.mxu0 %v673
      %v938 = vpop.f32.mrf.mxu0
      %v939 = vadd.f32 0.0, %v938
      %v940 = vpop.f32.mrf.mxu0
      %v941 = vpop.f32.mrf.mxu0
      %v942 = vadd.f32 0.0, %v941
      %v943 = vpop.f32.mrf.mxu0
      %944 = vmatprep.mubr.bf16.mxu0 0
      %945 = vmatmul.mubr.bf16.gmra.mxu0 %v676
      %v946 = vpop.f32.mrf.mxu0
      %v947 = vadd.f32 0.0, %v946
      %v948 = vpop.f32.mrf.mxu0
      %v949 = vpop.f32.mrf.mxu0
      %v950 = vadd.f32 0.0, %v949
      %v951 = vpop.f32.mrf.mxu0
      %952 = vmatprep.mubr.bf16.mxu0 0
      %953 = vmatmul.mubr.bf16.gmra.mxu0 %v679
      %v954 = vpop.f32.mrf.mxu0
      %v955 = vadd.f32 0.0, %v954
      %v956 = vpop.f32.mrf.mxu0
      %v957 = vpop.f32.mrf.mxu0
      %v958 = vadd.f32 0.0, %v957
      %v959 = vpop.f32.mrf.mxu0
      %960 = vmatprep.mubr.bf16.mxu0 0
      %961 = vmatmul.mubr.bf16.gmra.mxu0 %v682
      %v962 = vpop.f32.mrf.mxu0
      %v963 = vadd.f32 0.0, %v962
      %v964 = vpop.f32.mrf.mxu0
      %v965 = vpop.f32.mrf.mxu0
      %v966 = vadd.f32 0.0, %v965
      %v967 = vpop.f32.mrf.mxu0
      %968 = vmatprep.mubr.bf16.mxu0 0
      %969 = vmatmul.mubr.bf16.gmra.mxu0 %v685
      %v970 = vpop.f32.mrf.mxu0
      %v971 = vadd.f32 0.0, %v970
      %v972 = vpop.f32.mrf.mxu0
      %v973 = vpop.f32.mrf.mxu0
      %v974 = vadd.f32 0.0, %v973
      %v975 = vpop.f32.mrf.mxu0
      %976 = vmatprep.mubr.bf16.mxu0 0
      %977 = vmatmul.mubr.bf16.gmra.mxu0 %v688
      %v978 = vpop.f32.mrf.mxu0
      %v979 = vadd.f32 0.0, %v978
      %v980 = vpop.f32.mrf.mxu0
      %v981 = vpop.f32.mrf.mxu0
      %v982 = vadd.f32 0.0, %v981
      %v983 = vpop.f32.mrf.mxu0
      %984 = vmatprep.mubr.bf16.mxu0 0
      %985 = vmatmul.mubr.bf16.gmra.mxu0 %v691
      %v986 = vpop.f32.mrf.mxu0
      %v987 = vadd.f32 0.0, %v986
      %v988 = vpop.f32.mrf.mxu0
      %v989 = vpop.f32.mrf.mxu0
      %v990 = vadd.f32 0.0, %v989
      %v991 = vpop.f32.mrf.mxu0
      %992 = vmatprep.mubr.bf16.mxu0 0
      %993 = vmatmul.mubr.bf16.gmra.mxu0 %v694
      %v994 = vpop.f32.mrf.mxu0
      %v995 = vadd.f32 0.0, %v994
      %v996 = vpop.f32.mrf.mxu0
      %v997 = vpop.f32.mrf.mxu0
      %v998 = vadd.f32 0.0, %v997
      %v999 = vpop.f32.mrf.mxu0
      %1000 = vmatprep.mubr.bf16.mxu0 0
      %1001 = vmatmul.mubr.bf16.gmra.mxu0 %v697
      %v1002 = vpop.f32.mrf.mxu0
      %v1003 = vadd.f32 0.0, %v1002
      %v1004 = vpop.f32.mrf.mxu0
      %v1005 = vpop.f32.mrf.mxu0
      %v1006 = vadd.f32 0.0, %v1005
      %v1007 = vpop.f32.mrf.mxu0
      %1008 = vmatprep.mubr.bf16.mxu0 0
      %1009 = vmatmul.mubr.bf16.gmra.mxu0 %v700
      %v1010 = vpop.f32.mrf.mxu0
      %v1011 = vadd.f32 0.0, %v1010
      %v1012 = vpop.f32.mrf.mxu0
      %v1013 = vpop.f32.mrf.mxu0
      %v1014 = vadd.f32 0.0, %v1013
      %v1015 = vpop.f32.mrf.mxu0
      %1016 = vmatprep.mubr.bf16.mxu0 0
      %1017 = vmatmul.mubr.bf16.gmra.mxu0 %v703
      %v1018 = vpop.f32.mrf.mxu0
      %v1019 = vadd.f32 0.0, %v1018
      %v1020 = vpop.f32.mrf.mxu0
      %v1021 = vpop.f32.mrf.mxu0
      %v1022 = vadd.f32 0.0, %v1021
      %v1023 = vpop.f32.mrf.mxu0
      %1024 = vmatprep.mubr.bf16.mxu0 0
      %1025 = vmatmul.mubr.bf16.gmra.mxu0 %v706
      %v1026 = vpop.f32.mrf.mxu0
      %v1027 = vadd.f32 0.0, %v1026
      %v1028 = vpop.f32.mrf.mxu0
      %v1029 = vpop.f32.mrf.mxu0
      %v1030 = vadd.f32 0.0, %v1029
      %v1031 = vpop.f32.mrf.mxu0
      %1032 = vmatprep.mubr.bf16.mxu0 0
      %1033 = vmatmul.mubr.bf16.gmra.mxu0 %v709
      %v1034 = vpop.f32.mrf.mxu0
      %v1035 = vadd.f32 0.0, %v1034
      %v1036 = vpop.f32.mrf.mxu0
      %v1037 = vpop.f32.mrf.mxu0
      %v1038 = vadd.f32 0.0, %v1037
      %v1039 = vpop.f32.mrf.mxu0
      %1040 = vmatprep.mubr.bf16.mxu0 0
      %1041 = vmatmul.mubr.bf16.gmra.mxu0 %v712
      %v1042 = vpop.f32.mrf.mxu0
      %v1043 = vadd.f32 0.0, %v1042
      %v1044 = vpop.f32.mrf.mxu0
      %v1045 = vpop.f32.mrf.mxu0
      %v1046 = vadd.f32 0.0, %v1045
      %v1047 = vpop.f32.mrf.mxu0
      %1048 = vmatprep.mubr.bf16.mxu0 0
      %1049 = vmatmul.mubr.bf16.gmra.mxu0 %v715
      %v1050 = vpop.f32.mrf.mxu0
      %v1051 = vadd.f32 0.0, %v1050
      %v1052 = vpop.f32.mrf.mxu0
      %v1053 = vpop.f32.mrf.mxu0
      %v1054 = vadd.f32 0.0, %v1053
      %v1055 = vpop.f32.mrf.mxu0
      %1056 = vmatprep.mubr.bf16.mxu0 0
      %1057 = vmatmul.mubr.bf16.gmra.mxu0 %v718
      %v1058 = vpop.f32.mrf.mxu0
      %v1059 = vadd.f32 0.0, %v1058
      %v1060 = vpop.f32.mrf.mxu0
      %v1061 = vpop.f32.mrf.mxu0
      %v1062 = vadd.f32 0.0, %v1061
      %v1063 = vpop.f32.mrf.mxu0
      %1064 = vmatprep.mubr.bf16.mxu0 0
      %1065 = vmatmul.mubr.bf16.gmra.mxu0 %v721
      %v1066 = vpop.f32.mrf.mxu0
      %v1067 = vadd.f32 0.0, %v1066
      %v1068 = vpop.f32.mrf.mxu0
      %v1069 = vpop.f32.mrf.mxu0
      %v1070 = vadd.f32 0.0, %v1069
      %v1071 = vpop.f32.mrf.mxu0
      %1072 = vmatprep.mubr.bf16.mxu0 0
      %1073 = vmatmul.mubr.bf16.gmra.mxu0 %v724
      %v1074 = vpop.f32.mrf.mxu0
      %v1075 = vadd.f32 0.0, %v1074
      %v1076 = vpop.f32.mrf.mxu0
      %v1077 = vpop.f32.mrf.mxu0
      %v1078 = vadd.f32 0.0, %v1077
      %v1079 = vpop.f32.mrf.mxu0
      %1080 = vmatprep.mubr.bf16.mxu0 0
      %1081 = vmatmul.mubr.bf16.gmra.mxu0 %v727
      %v1082 = vpop.f32.mrf.mxu0
      %v1083 = vadd.f32 0.0, %v1082
      %v1084 = vpop.f32.mrf.mxu0
      %v1085 = vpop.f32.mrf.mxu0
      %v1086 = vadd.f32 0.0, %v1085
      %v1087 = vpop.f32.mrf.mxu0
      %1088 = vmatprep.mubr.bf16.mxu0 0
      %1089 = vmatmul.mubr.bf16.gmra.mxu0 %v730
      %v1090 = vpop.f32.mrf.mxu0
      %v1091 = vadd.f32 0.0, %v1090
      %v1092 = vpop.f32.mrf.mxu0
      %v1093 = vpop.f32.mrf.mxu0
      %v1094 = vadd.f32 0.0, %v1093
      %v1095 = vpop.f32.mrf.mxu0
      %1096 = vmatprep.mubr.bf16.mxu0 0
      %1097 = vmatmul.mubr.bf16.gmra.mxu0 %v733
      %v1098 = vpop.f32.mrf.mxu0
      %v1099 = vadd.f32 0.0, %v1098
      %v1100 = vpop.f32.mrf.mxu0
      %v1101 = vpop.f32.mrf.mxu0
      %v1102 = vadd.f32 0.0, %v1101
      %v1103 = vpop.f32.mrf.mxu0
      %1104 = vmatprep.mubr.bf16.mxu0 0
      %1105 = vmatmul.mubr.bf16.gmra.mxu0 %v736
      %v1106 = vpop.f32.mrf.mxu0
      %v1107 = vadd.f32 0.0, %v1106
      %v1108 = vpop.f32.mrf.mxu0
      %v1109 = vpop.f32.mrf.mxu0
      %v1110 = vadd.f32 0.0, %v1109
      %v1111 = vpop.f32.mrf.mxu0
      %1112 = vmatprep.mubr.bf16.mxu0 0
      %1113 = vmatmul.mubr.bf16.gmra.mxu0 %v739
      %v1114 = vpop.f32.mrf.mxu0
      %v1115 = vadd.f32 0.0, %v1114
      %v1116 = vpop.f32.mrf.mxu0
      %v1117 = vpop.f32.mrf.mxu0
      %v1118 = vadd.f32 0.0, %v1117
      %v1119 = vpop.f32.mrf.mxu0
      %1120 = vmatprep.mubr.bf16.mxu0 0
      %1121 = vmatmul.mubr.bf16.gmra.mxu0 %v742
      %v1122 = vpop.f32.mrf.mxu0
      %v1123 = vadd.f32 0.0, %v1122
      %v1124 = vpop.f32.mrf.mxu0
      %v1125 = vpop.f32.mrf.mxu0
      %v1126 = vadd.f32 0.0, %v1125
      %v1127 = vpop.f32.mrf.mxu0
      %1128 = vmatprep.mubr.bf16.mxu0 0
      %1129 = vmatmul.mubr.bf16.gmra.mxu0 %v745
      %v1130 = vpop.f32.mrf.mxu0
      %v1131 = vadd.f32 0.0, %v1130
      %v1132 = vpop.f32.mrf.mxu0
      %v1133 = vpop.f32.mrf.mxu0
      %v1134 = vadd.f32 0.0, %v1133
      %v1135 = vpop.f32.mrf.mxu0
      %1136 = vmatprep.mubr.bf16.mxu0 0
      %1137 = vmatmul.mubr.bf16.gmra.mxu0 %v748
      %v1138 = vpop.f32.mrf.mxu0
      %v1139 = vadd.f32 0.0, %v1138
      %v1140 = vpop.f32.mrf.mxu0
      %v1141 = vpop.f32.mrf.mxu0
      %v1142 = vadd.f32 0.0, %v1141
      %v1143 = vpop.f32.mrf.mxu0
      %1144 = vmatprep.mubr.bf16.mxu0 0
      %1145 = vmatmul.mubr.bf16.gmra.mxu0 %v751
      %v1146 = vpop.f32.mrf.mxu0
      %v1147 = vadd.f32 0.0, %v1146
      %v1148 = vpop.f32.mrf.mxu0
      %v1149 = vpop.f32.mrf.mxu0
      %v1150 = vadd.f32 0.0, %v1149
      %v1151 = vpop.f32.mrf.mxu0
      %1152 = vmatprep.mubr.bf16.mxu0 0
      %1153 = vmatmul.mubr.bf16.gmra.mxu0 %v754
      %v1154 = vpop.f32.mrf.mxu0
      %v1155 = vadd.f32 0.0, %v1154
      %v1156 = vpop.f32.mrf.mxu0
      %v1157 = vpop.f32.mrf.mxu0
      %v1158 = vadd.f32 0.0, %v1157
      %v1159 = vpop.f32.mrf.mxu0
      %1160 = vmatprep.mubr.bf16.mxu0 0
      %1161 = vmatmul.mubr.bf16.gmra.mxu0 %v757
      %v1162 = vpop.f32.mrf.mxu0
      %v1163 = vadd.f32 0.0, %v1162
      %v1164 = vpop.f32.mrf.mxu0
      %v1165 = vpop.f32.mrf.mxu0
      %v1166 = vadd.f32 0.0, %v1165
      %v1167 = vpop.f32.mrf.mxu0
      %1168 = vmatprep.mubr.bf16.mxu0 0
      %1169 = vmatmul.mubr.bf16.gmra.mxu0 %v760
      %v1170 = vpop.f32.mrf.mxu0
      %v1171 = vadd.f32 0.0, %v1170
      %v1172 = vpop.f32.mrf.mxu0
      %v1173 = vpop.f32.mrf.mxu0
      %v1174 = vadd.f32 0.0, %v1173
      %v1175 = vpop.f32.mrf.mxu0
      %1176 = vmatprep.mubr.bf16.mxu0 0
      %1177 = vmatmul.mubr.bf16.gmra.mxu0 %v763
      %v1178 = vpop.f32.mrf.mxu0
      %v1179 = vadd.f32 0.0, %v1178
      %v1180 = vpop.f32.mrf.mxu0
      %v1181 = vpop.f32.mrf.mxu0
      %v1182 = vadd.f32 0.0, %v1181
      %v1183 = vpop.f32.mrf.mxu0
      %1184 = vmatprep.mubr.bf16.mxu0 0
      %1185 = vmatmul.mubr.bf16.gmra.mxu0 %v766
      %v1186 = vpop.f32.mrf.mxu0
      %v1187 = vadd.f32 0.0, %v1186
      %v1188 = vpop.f32.mrf.mxu0
      %v1189 = vpop.f32.mrf.mxu0
      %v1190 = vadd.f32 0.0, %v1189
      %v1191 = vpop.f32.mrf.mxu0
      %1192 = vmatprep.mubr.bf16.mxu0 0
      %1193 = vmatmul.mubr.bf16.gmra.mxu0 %v769
      %v1194 = vpop.f32.mrf.mxu0
      %v1195 = vadd.f32 0.0, %v1194
      %v1196 = vpop.f32.mrf.mxu0
      %v1197 = vpop.f32.mrf.mxu0
      %v1198 = vadd.f32 0.0, %v1197
      %v1199 = vpop.f32.mrf.mxu0
      %1200 = vmatprep.mubr.bf16.mxu0 0
      %1201 = vmatmul.mubr.bf16.gmra.mxu0 %v772
      %v1202 = vpop.f32.mrf.mxu0
      %v1203 = vadd.f32 0.0, %v1202
      %v1204 = vpop.f32.mrf.mxu0
      %v1205 = vpop.f32.mrf.mxu0
      %v1206 = vadd.f32 0.0, %v1205
      %v1207 = vpop.f32.mrf.mxu0
      %1208 = vmatprep.mubr.bf16.mxu0 0
      %1209 = vmatmul.mubr.bf16.gmra.mxu0 %v775
      %v1210 = vpop.f32.mrf.mxu0
      %v1211 = vadd.f32 0.0, %v1210
      %v1212 = vpop.f32.mrf.mxu0
      %v1213 = vpop.f32.mrf.mxu0
      %v1214 = vadd.f32 0.0, %v1213
      %v1215 = vpop.f32.mrf.mxu0
      %1216 = vmatprep.mubr.bf16.mxu0 0
      %1217 = vmatmul.mubr.bf16.gmra.mxu0 %v778
      %v1218 = vpop.f32.mrf.mxu0
      %v1219 = vadd.f32 0.0, %v1218
      %v1220 = vpop.f32.mrf.mxu0
      %v1221 = vpop.f32.mrf.mxu0
      %v1222 = vadd.f32 0.0, %v1221
      %v1223 = vpop.f32.mrf.mxu0
      %1224 = vmatprep.mubr.bf16.mxu0 0
      %1225 = vmatmul.mubr.bf16.gmra.mxu0 %v781
      %v1226 = vpop.f32.mrf.mxu0
      %v1227 = vadd.f32 0.0, %v1226
      %v1228 = vpop.f32.mrf.mxu0
      %v1229 = vpop.f32.mrf.mxu0
      %v1230 = vadd.f32 0.0, %v1229
      %v1231 = vpop.f32.mrf.mxu0
      %1232 = vmatprep.mubr.bf16.mxu0 0
      %1233 = vmatmul.mubr.bf16.gmra.mxu0 %v784
      %v1234 = vpop.f32.mrf.mxu0
      %v1235 = vadd.f32 0.0, %v1234
      %v1236 = vpop.f32.mrf.mxu0
      %v1237 = vpop.f32.mrf.mxu0
      %v1238 = vadd.f32 0.0, %v1237
      %v1239 = vpop.f32.mrf.mxu0
      %1240 = vmatprep.mubr.bf16.mxu0 0
      %1241 = vmatmul.mubr.bf16.gmra.mxu0 %v787
      %v1242 = vpop.f32.mrf.mxu0
      %v1243 = vadd.f32 0.0, %v1242
      %v1244 = vpop.f32.mrf.mxu0
      %v1245 = vpop.f32.mrf.mxu0
      %v1246 = vadd.f32 0.0, %v1245
      %v1247 = vpop.f32.mrf.mxu0
      %1248 = vmatprep.mubr.bf16.mxu0 0
      %1249 = vmatmul.mubr.bf16.gmra.mxu0 %v790
      %v1250 = vpop.f32.mrf.mxu0
      %v1251 = vadd.f32 0.0, %v1250
      %v1252 = vpop.f32.mrf.mxu0
      %v1253 = vpop.f32.mrf.mxu0
      %v1254 = vadd.f32 0.0, %v1253
      %v1255 = vpop.f32.mrf.mxu0
      %1256 = vmatprep.mubr.bf16.mxu0 0
      %1257 = vmatmul.mubr.bf16.gmra.mxu0 %v793
      %v1258 = vpop.f32.mrf.mxu0
      %v1259 = vadd.f32 0.0, %v1258
      %v1260 = vpop.f32.mrf.mxu0
      %v1261 = vpop.f32.mrf.mxu0
      %v1262 = vadd.f32 0.0, %v1261
      %v1263 = vpop.f32.mrf.mxu0
      %1264 = vmatprep.mubr.bf16.mxu0 0
      %1265 = vmatmul.mubr.bf16.gmra.mxu0 %v796
      %v1266 = vpop.f32.mrf.mxu0
      %v1267 = vadd.f32 0.0, %v1266
      %v1268 = vpop.f32.mrf.mxu0
      %v1269 = vpop.f32.mrf.mxu0
      %v1270 = vadd.f32 0.0, %v1269
      %v1271 = vpop.f32.mrf.mxu0
      %1272 = vmatprep.mubr.bf16.mxu0 0
      %1273 = vmatmul.mubr.bf16.gmra.mxu0 %v799
      %v1274 = vpop.f32.mrf.mxu0
      %v1275 = vadd.f32 0.0, %v1274
      %v1276 = vpop.f32.mrf.mxu0
      %v1277 = vpop.f32.mrf.mxu0
      %v1278 = vadd.f32 0.0, %v1277
      %v1279 = vpop.f32.mrf.mxu0
      %1280 = vmatprep.mubr.bf16.mxu0 0
      %1281 = vmatmul.mubr.bf16.gmra.mxu0 %v802
      %v1282 = vpop.f32.mrf.mxu0
      %v1283 = vadd.f32 0.0, %v1282
      %v1284 = vpop.f32.mrf.mxu0
      %v1285 = vpop.f32.mrf.mxu0
      %v1286 = vadd.f32 0.0, %v1285
      %v1287 = vpop.f32.mrf.mxu0
      %1288 = vmatprep.mubr.bf16.mxu0 0
      %1289 = vmatmul.mubr.bf16.gmra.mxu0 %v805
      %v1290 = vpop.f32.mrf.mxu0
      %v1291 = vadd.f32 0.0, %v1290
      %v1292 = vpop.f32.mrf.mxu0
      %v1293 = vpop.f32.mrf.mxu0
      %v1294 = vadd.f32 0.0, %v1293
      %v1295 = vpop.f32.mrf.mxu0
      %1296 = vmatprep.mubr.bf16.mxu0 0
      %1297 = vmatmul.mubr.bf16.gmra.mxu0 %v808
      %v1298 = vpop.f32.mrf.mxu0
      %v1299 = vadd.f32 0.0, %v1298
      %v1300 = vpop.f32.mrf.mxu0
      %v1301 = vpop.f32.mrf.mxu0
      %v1302 = vadd.f32 0.0, %v1301
      %v1303 = vpop.f32.mrf.mxu0
      %1304 = vmatprep.mubr.bf16.mxu0 0
      %1305 = vmatmul.mubr.bf16.gmra.mxu0 %v811
      %v1306 = vpop.f32.mrf.mxu0
      %v1307 = vadd.f32 0.0, %v1306
      %v1308 = vpop.f32.mrf.mxu0
      %v1309 = vpop.f32.mrf.mxu0
      %v1310 = vadd.f32 0.0, %v1309
      %v1311 = vpop.f32.mrf.mxu0
      %1312 = vmatprep.mubr.bf16.mxu0 0
      %1313 = vmatmul.mubr.bf16.gmra.mxu0 %v814
      %v1314 = vpop.f32.mrf.mxu0
      %v1315 = vadd.f32 0.0, %v1314
      %v1316 = vpop.f32.mrf.mxu0
      %v1317 = vpop.f32.mrf.mxu0
      %v1318 = vadd.f32 0.0, %v1317
      %v1319 = vpop.f32.mrf.mxu0
      %1320 = vmatprep.mubr.bf16.mxu0 0
      %1321 = vmatmul.mubr.bf16.gmra.mxu0 %v817
      %v1322 = vpop.f32.mrf.mxu0
      %v1323 = vadd.f32 0.0, %v1322
      %v1324 = vpop.f32.mrf.mxu0
      %v1325 = vpop.f32.mrf.mxu0
      %v1326 = vadd.f32 0.0, %v1325
      %v1327 = vpop.f32.mrf.mxu0
      %1328 = vmatprep.mubr.bf16.mxu0 0
      %1329 = vmatmul.mubr.bf16.gmra.mxu0 %v820
      %v1330 = vpop.f32.mrf.mxu0
      %v1331 = vadd.f32 0.0, %v1330
      %v1332 = vpop.f32.mrf.mxu0
      %v1333 = vpop.f32.mrf.mxu0
      %v1334 = vadd.f32 0.0, %v1333
      %v1335 = vpop.f32.mrf.mxu0
      %1336 = vmatprep.mubr.bf16.mxu0 0
      %1337 = vmatmul.mubr.bf16.gmra.mxu0 %v823
      %v1338 = vpop.f32.mrf.mxu0
      %v1339 = vadd.f32 0.0, %v1338
      %v1340 = vpop.f32.mrf.mxu0
      %v1341 = vpop.f32.mrf.mxu0
      %v1342 = vadd.f32 0.0, %v1341
      %v1343 = vpop.f32.mrf.mxu0
      %1344 = vmatprep.mubr.bf16.mxu0 0
      %1345 = vmatmul.mubr.bf16.gmra.mxu0 %v826
      %v1346 = vpop.f32.mrf.mxu0
      %v1347 = vadd.f32 0.0, %v1346
      %v1348 = vpop.f32.mrf.mxu0
      %v1349 = vpop.f32.mrf.mxu0
      %v1350 = vadd.f32 0.0, %v1349
      %v1351 = vpop.f32.mrf.mxu0
      %1352 = vmatprep.mubr.bf16.mxu0 0
      %1353 = vmatmul.mubr.bf16.gmra.mxu0 %v829
      %v1354 = vpop.f32.mrf.mxu0
      %v1355 = vadd.f32 0.0, %v1354
      %v1356 = vpop.f32.mrf.mxu0
      %v1357 = vpop.f32.mrf.mxu0
      %v1358 = vadd.f32 0.0, %v1357
      %v1359 = vpop.f32.mrf.mxu0
      %1360 = vmatprep.mubr.bf16.mxu0 0
      %1361 = vmatmul.mubr.bf16.gmra.mxu0 %v832
      %v1362 = vpop.f32.mrf.mxu0
      %v1363 = vadd.f32 0.0, %v1362
      %v1364 = vpop.f32.mrf.mxu0
      %v1365 = vpop.f32.mrf.mxu0
      %v1366 = vadd.f32 0.0, %v1365
      %v1367 = vpop.f32.mrf.mxu0
      %1368 = vmatprep.mubr.bf16.mxu0 0
      %1369 = vmatmul.mubr.bf16.gmra.mxu0 %v835
      %v1370 = vpop.f32.mrf.mxu0
      %v1371 = vadd.f32 0.0, %v1370
      %v1372 = vpop.f32.mrf.mxu0
      %v1373 = vpop.f32.mrf.mxu0
      %v1374 = vadd.f32 0.0, %v1373
      %v1375 = vpop.f32.mrf.mxu0
      %1376 = vmatprep.mubr.bf16.mxu0 0
      %1377 = vmatmul.mubr.bf16.gmra.mxu0 %v838
      %v1378 = vpop.f32.mrf.mxu0
      %v1379 = vadd.f32 0.0, %v1378
      %v1380 = vpop.f32.mrf.mxu0
      %v1381 = vpop.f32.mrf.mxu0
      %v1382 = vadd.f32 0.0, %v1381
      %v1383 = vpop.f32.mrf.mxu0
      %1384 = vdwg.mxu0
      %1513 = vrot.lane.b32.xlu0 %v875, 96
      %v1514 = vpop.permute.xlu0 %1513
      %1515 = vrot.lane.b32.xlu0 %v878, 96
      %v1516 = vpop.permute.xlu0 %1515
      %1517 = vrot.lane.b32.xlu0 %v883, 96
      %v1518 = vpop.permute.xlu0 %1517
      %1519 = vrot.lane.b32.xlu0 %v886, 96
      %v1520 = vpop.permute.xlu0 %1519
      %1521 = vrot.lane.b32.xlu0 %v891, 96
      %v1522 = vpop.permute.xlu0 %1521
      %1523 = vrot.lane.b32.xlu0 %v894, 96
      %v1524 = vpop.permute.xlu0 %1523
      %1525 = vrot.lane.b32.xlu0 %v899, 96
      %v1526 = vpop.permute.xlu0 %1525
      %1527 = vrot.lane.b32.xlu0 %v902, 96
      %v1528 = vpop.permute.xlu0 %1527
      %1529 = vrot.lane.b32.xlu0 %v907, 96
      %v1530 = vpop.permute.xlu0 %1529
      %1531 = vrot.lane.b32.xlu0 %v910, 96
      %v1532 = vpop.permute.xlu0 %1531
      %1533 = vrot.lane.b32.xlu0 %v915, 96
      %v1534 = vpop.permute.xlu0 %1533
      %1535 = vrot.lane.b32.xlu0 %v918, 96
      %v1536 = vpop.permute.xlu0 %1535
      %1537 = vrot.lane.b32.xlu0 %v923, 96
      %v1538 = vpop.permute.xlu0 %1537
      %1539 = vrot.lane.b32.xlu0 %v926, 96
      %v1540 = vpop.permute.xlu0 %1539
      %1541 = vrot.lane.b32.xlu0 %v931, 96
      %v1542 = vpop.permute.xlu0 %1541
      %1543 = vrot.lane.b32.xlu0 %v934, 96
      %v1544 = vpop.permute.xlu0 %1543
      %1545 = vrot.lane.b32.xlu0 %v939, 96
      %v1546 = vpop.permute.xlu0 %1545
      %1547 = vrot.lane.b32.xlu0 %v942, 96
      %v1548 = vpop.permute.xlu0 %1547
      %1549 = vrot.lane.b32.xlu0 %v947, 96
      %v1550 = vpop.permute.xlu0 %1549
      %1551 = vrot.lane.b32.xlu0 %v950, 96
      %v1552 = vpop.permute.xlu0 %1551
      %1553 = vrot.lane.b32.xlu0 %v955, 96
      %v1554 = vpop.permute.xlu0 %1553
      %1555 = vrot.lane.b32.xlu0 %v958, 96
      %v1556 = vpop.permute.xlu0 %1555
      %1557 = vrot.lane.b32.xlu0 %v963, 96
      %v1558 = vpop.permute.xlu0 %1557
      %1559 = vrot.lane.b32.xlu0 %v966, 96
      %v1560 = vpop.permute.xlu0 %1559
      %1561 = vrot.lane.b32.xlu0 %v971, 96
      %v1562 = vpop.permute.xlu0 %1561
      %1563 = vrot.lane.b32.xlu0 %v974, 96
      %v1564 = vpop.permute.xlu0 %1563
      %1565 = vrot.lane.b32.xlu0 %v979, 96
      %v1566 = vpop.permute.xlu0 %1565
      %1567 = vrot.lane.b32.xlu0 %v982, 96
      %v1568 = vpop.permute.xlu0 %1567
      %1569 = vrot.lane.b32.xlu0 %v987, 96
      %v1570 = vpop.permute.xlu0 %1569
      %1571 = vrot.lane.b32.xlu0 %v990, 96
      %v1572 = vpop.permute.xlu0 %1571
      %1573 = vrot.lane.b32.xlu0 %v995, 96
      %v1574 = vpop.permute.xlu0 %1573
      %1575 = vrot.lane.b32.xlu0 %v998, 96
      %v1576 = vpop.permute.xlu0 %1575
      %1577 = vrot.lane.b32.xlu0 %v1003, 96
      %v1578 = vpop.permute.xlu0 %1577
      %1579 = vrot.lane.b32.xlu0 %v1006, 96
      %v1580 = vpop.permute.xlu0 %1579
      %1581 = vrot.lane.b32.xlu0 %v1011, 96
      %v1582 = vpop.permute.xlu0 %1581
      %1583 = vrot.lane.b32.xlu0 %v1014, 96
      %v1584 = vpop.permute.xlu0 %1583
      %1585 = vrot.lane.b32.xlu0 %v1019, 96
      %v1586 = vpop.permute.xlu0 %1585
      %1587 = vrot.lane.b32.xlu0 %v1022, 96
      %v1588 = vpop.permute.xlu0 %1587
      %1589 = vrot.lane.b32.xlu0 %v1027, 96
      %v1590 = vpop.permute.xlu0 %1589
      %1591 = vrot.lane.b32.xlu0 %v1030, 96
      %v1592 = vpop.permute.xlu0 %1591
      %1593 = vrot.lane.b32.xlu0 %v1035, 96
      %v1594 = vpop.permute.xlu0 %1593
      %1595 = vrot.lane.b32.xlu0 %v1038, 96
      %v1596 = vpop.permute.xlu0 %1595
      %1597 = vrot.lane.b32.xlu0 %v1043, 96
      %v1598 = vpop.permute.xlu0 %1597
      %1599 = vrot.lane.b32.xlu0 %v1046, 96
      %v1600 = vpop.permute.xlu0 %1599
      %1601 = vrot.lane.b32.xlu0 %v1051, 96
      %v1602 = vpop.permute.xlu0 %1601
      %1603 = vrot.lane.b32.xlu0 %v1054, 96
      %v1604 = vpop.permute.xlu0 %1603
      %1605 = vrot.lane.b32.xlu0 %v1059, 96
      %v1606 = vpop.permute.xlu0 %1605
      %1607 = vrot.lane.b32.xlu0 %v1062, 96
      %v1608 = vpop.permute.xlu0 %1607
      %1609 = vrot.lane.b32.xlu0 %v1067, 96
      %v1610 = vpop.permute.xlu0 %1609
      %1611 = vrot.lane.b32.xlu0 %v1070, 96
      %v1612 = vpop.permute.xlu0 %1611
      %1613 = vrot.lane.b32.xlu0 %v1075, 96
      %v1614 = vpop.permute.xlu0 %1613
      %1615 = vrot.lane.b32.xlu0 %v1078, 96
      %v1616 = vpop.permute.xlu0 %1615
      %1617 = vrot.lane.b32.xlu0 %v1083, 96
      %v1618 = vpop.permute.xlu0 %1617
      %1619 = vrot.lane.b32.xlu0 %v1086, 96
      %v1620 = vpop.permute.xlu0 %1619
      %1621 = vrot.lane.b32.xlu0 %v1091, 96
      %v1622 = vpop.permute.xlu0 %1621
      %1623 = vrot.lane.b32.xlu0 %v1094, 96
      %v1624 = vpop.permute.xlu0 %1623
      %1625 = vrot.lane.b32.xlu0 %v1099, 96
      %v1626 = vpop.permute.xlu0 %1625
      %1627 = vrot.lane.b32.xlu0 %v1102, 96
      %v1628 = vpop.permute.xlu0 %1627
      %1629 = vrot.lane.b32.xlu0 %v1107, 96
      %v1630 = vpop.permute.xlu0 %1629
      %1631 = vrot.lane.b32.xlu0 %v1110, 96
      %v1632 = vpop.permute.xlu0 %1631
      %1633 = vrot.lane.b32.xlu0 %v1115, 96
      %v1634 = vpop.permute.xlu0 %1633
      %1635 = vrot.lane.b32.xlu0 %v1118, 96
      %v1636 = vpop.permute.xlu0 %1635
      %1637 = vrot.lane.b32.xlu0 %v1123, 96
      %v1638 = vpop.permute.xlu0 %1637
      %1639 = vrot.lane.b32.xlu0 %v1126, 96
      %v1640 = vpop.permute.xlu0 %1639
      %1641 = vrot.lane.b32.xlu0 %v1131, 96
      %v1642 = vpop.permute.xlu0 %1641
      %1643 = vrot.lane.b32.xlu0 %v1134, 96
      %v1644 = vpop.permute.xlu0 %1643
      %1645 = vrot.lane.b32.xlu0 %v1139, 96
      %v1646 = vpop.permute.xlu0 %1645
      %1647 = vrot.lane.b32.xlu0 %v1142, 96
      %v1648 = vpop.permute.xlu0 %1647
      %1649 = vrot.lane.b32.xlu0 %v1147, 96
      %v1650 = vpop.permute.xlu0 %1649
      %1651 = vrot.lane.b32.xlu0 %v1150, 96
      %v1652 = vpop.permute.xlu0 %1651
      %1653 = vrot.lane.b32.xlu0 %v1155, 96
      %v1654 = vpop.permute.xlu0 %1653
      %1655 = vrot.lane.b32.xlu0 %v1158, 96
      %v1656 = vpop.permute.xlu0 %1655
      %1657 = vrot.lane.b32.xlu0 %v1163, 96
      %v1658 = vpop.permute.xlu0 %1657
      %1659 = vrot.lane.b32.xlu0 %v1166, 96
      %v1660 = vpop.permute.xlu0 %1659
      %1661 = vrot.lane.b32.xlu0 %v1171, 96
      %v1662 = vpop.permute.xlu0 %1661
      %1663 = vrot.lane.b32.xlu0 %v1174, 96
      %v1664 = vpop.permute.xlu0 %1663
      %1665 = vrot.lane.b32.xlu0 %v1179, 96
      %v1666 = vpop.permute.xlu0 %1665
      %1667 = vrot.lane.b32.xlu0 %v1182, 96
      %v1668 = vpop.permute.xlu0 %1667
      %1669 = vrot.lane.b32.xlu0 %v1187, 96
      %v1670 = vpop.permute.xlu0 %1669
      %1671 = vrot.lane.b32.xlu0 %v1190, 96
      %v1672 = vpop.permute.xlu0 %1671
      %1673 = vrot.lane.b32.xlu0 %v1195, 96
      %v1674 = vpop.permute.xlu0 %1673
      %1675 = vrot.lane.b32.xlu0 %v1198, 96
      %v1676 = vpop.permute.xlu0 %1675
      %1677 = vrot.lane.b32.xlu0 %v1203, 96
      %v1678 = vpop.permute.xlu0 %1677
      %1679 = vrot.lane.b32.xlu0 %v1206, 96
      %v1680 = vpop.permute.xlu0 %1679
      %1681 = vrot.lane.b32.xlu0 %v1211, 96
      %v1682 = vpop.permute.xlu0 %1681
      %1683 = vrot.lane.b32.xlu0 %v1214, 96
      %v1684 = vpop.permute.xlu0 %1683
      %1685 = vrot.lane.b32.xlu0 %v1219, 96
      %v1686 = vpop.permute.xlu0 %1685
      %1687 = vrot.lane.b32.xlu0 %v1222, 96
      %v1688 = vpop.permute.xlu0 %1687
      %1689 = vrot.lane.b32.xlu0 %v1227, 96
      %v1690 = vpop.permute.xlu0 %1689
      %1691 = vrot.lane.b32.xlu0 %v1230, 96
      %v1692 = vpop.permute.xlu0 %1691
      %1693 = vrot.lane.b32.xlu0 %v1235, 96
      %v1694 = vpop.permute.xlu0 %1693
      %1695 = vrot.lane.b32.xlu0 %v1238, 96
      %v1696 = vpop.permute.xlu0 %1695
      %1697 = vrot.lane.b32.xlu0 %v1243, 96
      %v1698 = vpop.permute.xlu0 %1697
      %1699 = vrot.lane.b32.xlu0 %v1246, 96
      %v1700 = vpop.permute.xlu0 %1699
      %1701 = vrot.lane.b32.xlu0 %v1251, 96
      %v1702 = vpop.permute.xlu0 %1701
      %1703 = vrot.lane.b32.xlu0 %v1254, 96
      %v1704 = vpop.permute.xlu0 %1703
      %1705 = vrot.lane.b32.xlu0 %v1259, 96
      %v1706 = vpop.permute.xlu0 %1705
      %1707 = vrot.lane.b32.xlu0 %v1262, 96
      %v1708 = vpop.permute.xlu0 %1707
      %1709 = vrot.lane.b32.xlu0 %v1267, 96
      %v1710 = vpop.permute.xlu0 %1709
      %1711 = vrot.lane.b32.xlu0 %v1270, 96
      %v1712 = vpop.permute.xlu0 %1711
      %1713 = vrot.lane.b32.xlu0 %v1275, 96
      %v1714 = vpop.permute.xlu0 %1713
      %1715 = vrot.lane.b32.xlu0 %v1278, 96
      %v1716 = vpop.permute.xlu0 %1715
      %1717 = vrot.lane.b32.xlu0 %v1283, 96
      %v1718 = vpop.permute.xlu0 %1717
      %1719 = vrot.lane.b32.xlu0 %v1286, 96
      %v1720 = vpop.permute.xlu0 %1719
      %1721 = vrot.lane.b32.xlu0 %v1291, 96
      %v1722 = vpop.permute.xlu0 %1721
      %1723 = vrot.lane.b32.xlu0 %v1294, 96
      %v1724 = vpop.permute.xlu0 %1723
      %1725 = vrot.lane.b32.xlu0 %v1299, 96
      %v1726 = vpop.permute.xlu0 %1725
      %1727 = vrot.lane.b32.xlu0 %v1302, 96
      %v1728 = vpop.permute.xlu0 %1727
      %1729 = vrot.lane.b32.xlu0 %v1307, 96
      %v1730 = vpop.permute.xlu0 %1729
      %1731 = vrot.lane.b32.xlu0 %v1310, 96
      %v1732 = vpop.permute.xlu0 %1731
      %1733 = vrot.lane.b32.xlu0 %v1315, 96
      %v1734 = vpop.permute.xlu0 %1733
      %1735 = vrot.lane.b32.xlu0 %v1318, 96
      %v1736 = vpop.permute.xlu0 %1735
      %1737 = vrot.lane.b32.xlu0 %v1323, 96
      %v1738 = vpop.permute.xlu0 %1737
      %1739 = vrot.lane.b32.xlu0 %v1326, 96
      %v1740 = vpop.permute.xlu0 %1739
      %1741 = vrot.lane.b32.xlu0 %v1331, 96
      %v1742 = vpop.permute.xlu0 %1741
      %1743 = vrot.lane.b32.xlu0 %v1334, 96
      %v1744 = vpop.permute.xlu0 %1743
      %1745 = vrot.lane.b32.xlu0 %v1339, 96
      %v1746 = vpop.permute.xlu0 %1745
      %1747 = vrot.lane.b32.xlu0 %v1342, 96
      %v1748 = vpop.permute.xlu0 %1747
      %1749 = vrot.lane.b32.xlu0 %v1347, 96
      %v1750 = vpop.permute.xlu0 %1749
      %1751 = vrot.lane.b32.xlu0 %v1350, 96
      %v1752 = vpop.permute.xlu0 %1751
      %1753 = vrot.lane.b32.xlu0 %v1355, 96
      %v1754 = vpop.permute.xlu0 %1753
      %1755 = vrot.lane.b32.xlu0 %v1358, 96
      %v1756 = vpop.permute.xlu0 %1755
      %1757 = vrot.lane.b32.xlu0 %v1363, 96
      %v1758 = vpop.permute.xlu0 %1757
      %1759 = vrot.lane.b32.xlu0 %v1366, 96
      %v1760 = vpop.permute.xlu0 %1759
      %1761 = vrot.lane.b32.xlu0 %v1371, 96
      %v1762 = vpop.permute.xlu0 %1761
      %1763 = vrot.lane.b32.xlu0 %v1374, 96
      %v1764 = vpop.permute.xlu0 %1763
      %1765 = vrot.lane.b32.xlu0 %v1379, 96
      %v1766 = vpop.permute.xlu0 %1765
      %1767 = vrot.lane.b32.xlu0 %v1382, 96
      %v1768 = vpop.permute.xlu0 %1767
      %v1897 = vmax.f32 %v875, %v1514
      %v1898 = vmax.f32 %v878, %v1516
      %v1899 = vmax.f32 %v883, %v1518
      %v1900 = vmax.f32 %v886, %v1520
      %v1901 = vmax.f32 %v891, %v1522
      %v1902 = vmax.f32 %v894, %v1524
      %v1903 = vmax.f32 %v899, %v1526
      %v1904 = vmax.f32 %v902, %v1528
      %v1905 = vmax.f32 %v907, %v1530
      %v1906 = vmax.f32 %v910, %v1532
      %v1907 = vmax.f32 %v915, %v1534
      %v1908 = vmax.f32 %v918, %v1536
      %v1909 = vmax.f32 %v923, %v1538
      %v1910 = vmax.f32 %v926, %v1540
      %v1911 = vmax.f32 %v931, %v1542
      %v1912 = vmax.f32 %v934, %v1544
      %v1913 = vmax.f32 %v939, %v1546
      %v1914 = vmax.f32 %v942, %v1548
      %v1915 = vmax.f32 %v947, %v1550
      %v1916 = vmax.f32 %v950, %v1552
      %v1917 = vmax.f32 %v955, %v1554
      %v1918 = vmax.f32 %v958, %v1556
      %v1919 = vmax.f32 %v963, %v1558
      %v1920 = vmax.f32 %v966, %v1560
      %v1921 = vmax.f32 %v971, %v1562
      %v1922 = vmax.f32 %v974, %v1564
      %v1923 = vmax.f32 %v979, %v1566
      %v1924 = vmax.f32 %v982, %v1568
      %v1925 = vmax.f32 %v987, %v1570
      %v1926 = vmax.f32 %v990, %v1572
      %v1927 = vmax.f32 %v995, %v1574
      %v1928 = vmax.f32 %v998, %v1576
      %v1929 = vmax.f32 %v1003, %v1578
      %v1930 = vmax.f32 %v1006, %v1580
      %v1931 = vmax.f32 %v1011, %v1582
      %v1932 = vmax.f32 %v1014, %v1584
      %v1933 = vmax.f32 %v1019, %v1586
      %v1934 = vmax.f32 %v1022, %v1588
      %v1935 = vmax.f32 %v1027, %v1590
      %v1936 = vmax.f32 %v1030, %v1592
      %v1937 = vmax.f32 %v1035, %v1594
      %v1938 = vmax.f32 %v1038, %v1596
      %v1939 = vmax.f32 %v1043, %v1598
      %v1940 = vmax.f32 %v1046, %v1600
      %v1941 = vmax.f32 %v1051, %v1602
      %v1942 = vmax.f32 %v1054, %v1604
      %v1943 = vmax.f32 %v1059, %v1606
      %v1944 = vmax.f32 %v1062, %v1608
      %v1945 = vmax.f32 %v1067, %v1610
      %v1946 = vmax.f32 %v1070, %v1612
      %v1947 = vmax.f32 %v1075, %v1614
      %v1948 = vmax.f32 %v1078, %v1616
      %v1949 = vmax.f32 %v1083, %v1618
      %v1950 = vmax.f32 %v1086, %v1620
      %v1951 = vmax.f32 %v1091, %v1622
      %v1952 = vmax.f32 %v1094, %v1624
      %v1953 = vmax.f32 %v1099, %v1626
      %v1954 = vmax.f32 %v1102, %v1628
      %v1955 = vmax.f32 %v1107, %v1630
      %v1956 = vmax.f32 %v1110, %v1632
      %v1957 = vmax.f32 %v1115, %v1634
      %v1958 = vmax.f32 %v1118, %v1636
      %v1959 = vmax.f32 %v1123, %v1638
      %v1960 = vmax.f32 %v1126, %v1640
      %v1961 = vmax.f32 %v1131, %v1642
      %v1962 = vmax.f32 %v1134, %v1644
      %v1963 = vmax.f32 %v1139, %v1646
      %v1964 = vmax.f32 %v1142, %v1648
      %v1965 = vmax.f32 %v1147, %v1650
      %v1966 = vmax.f32 %v1150, %v1652
      %v1967 = vmax.f32 %v1155, %v1654
      %v1968 = vmax.f32 %v1158, %v1656
      %v1969 = vmax.f32 %v1163, %v1658
      %v1970 = vmax.f32 %v1166, %v1660
      %v1971 = vmax.f32 %v1171, %v1662
      %v1972 = vmax.f32 %v1174, %v1664
      %v1973 = vmax.f32 %v1179, %v1666
      %v1974 = vmax.f32 %v1182, %v1668
      %v1975 = vmax.f32 %v1187, %v1670
      %v1976 = vmax.f32 %v1190, %v1672
      %v1977 = vmax.f32 %v1195, %v1674
      %v1978 = vmax.f32 %v1198, %v1676
      %v1979 = vmax.f32 %v1203, %v1678
      %v1980 = vmax.f32 %v1206, %v1680
      %v1981 = vmax.f32 %v1211, %v1682
      %v1982 = vmax.f32 %v1214, %v1684
      %v1983 = vmax.f32 %v1219, %v1686
      %v1984 = vmax.f32 %v1222, %v1688
      %v1985 = vmax.f32 %v1227, %v1690
      %v1986 = vmax.f32 %v1230, %v1692
      %v1987 = vmax.f32 %v1235, %v1694
      %v1988 = vmax.f32 %v1238, %v1696
      %v1989 = vmax.f32 %v1243, %v1698
      %v1990 = vmax.f32 %v1246, %v1700
      %v1991 = vmax.f32 %v1251, %v1702
      %v1992 = vmax.f32 %v1254, %v1704
      %v1993 = vmax.f32 %v1259, %v1706
      %v1994 = vmax.f32 %v1262, %v1708
      %v1995 = vmax.f32 %v1267, %v1710
      %v1996 = vmax.f32 %v1270, %v1712
      %v1997 = vmax.f32 %v1275, %v1714
      %v1998 = vmax.f32 %v1278, %v1716
      %v1999 = vmax.f32 %v1283, %v1718
      %v2000 = vmax.f32 %v1286, %v1720
      %v2001 = vmax.f32 %v1291, %v1722
      %v2002 = vmax.f32 %v1294, %v1724
      %v2003 = vmax.f32 %v1299, %v1726
      %v2004 = vmax.f32 %v1302, %v1728
      %v2005 = vmax.f32 %v1307, %v1730
      %v2006 = vmax.f32 %v1310, %v1732
      %v2007 = vmax.f32 %v1315, %v1734
      %v2008 = vmax.f32 %v1318, %v1736
      %v2009 = vmax.f32 %v1323, %v1738
      %v2010 = vmax.f32 %v1326, %v1740
      %v2011 = vmax.f32 %v1331, %v1742
      %v2012 = vmax.f32 %v1334, %v1744
      %v2013 = vmax.f32 %v1339, %v1746
      %v2014 = vmax.f32 %v1342, %v1748
      %v2015 = vmax.f32 %v1347, %v1750
      %v2016 = vmax.f32 %v1350, %v1752
      %v2017 = vmax.f32 %v1355, %v1754
      %v2018 = vmax.f32 %v1358, %v1756
      %v2019 = vmax.f32 %v1363, %v1758
      %v2020 = vmax.f32 %v1366, %v1760
      %v2021 = vmax.f32 %v1371, %v1762
      %v2022 = vmax.f32 %v1374, %v1764
      %v2023 = vmax.f32 %v1379, %v1766
      %v2024 = vmax.f32 %v1382, %v1768
      %2153 = vrot.lane.b32.xlu0 %v1897, 64
      %v2154 = vpop.permute.xlu0 %2153
      %2155 = vrot.lane.b32.xlu0 %v1898, 64
      %v2156 = vpop.permute.xlu0 %2155
      %2157 = vrot.lane.b32.xlu0 %v1899, 64
      %v2158 = vpop.permute.xlu0 %2157
      %2159 = vrot.lane.b32.xlu0 %v1900, 64
      %v2160 = vpop.permute.xlu0 %2159
      %2161 = vrot.lane.b32.xlu0 %v1901, 64
      %v2162 = vpop.permute.xlu0 %2161
      %2163 = vrot.lane.b32.xlu0 %v1902, 64
      %v2164 = vpop.permute.xlu0 %2163
      %2165 = vrot.lane.b32.xlu0 %v1903, 64
      %v2166 = vpop.permute.xlu0 %2165
      %2167 = vrot.lane.b32.xlu0 %v1904, 64
      %v2168 = vpop.permute.xlu0 %2167
      %2169 = vrot.lane.b32.xlu0 %v1905, 64
      %v2170 = vpop.permute.xlu0 %2169
      %2171 = vrot.lane.b32.xlu0 %v1906, 64
      %v2172 = vpop.permute.xlu0 %2171
      %2173 = vrot.lane.b32.xlu0 %v1907, 64
      %v2174 = vpop.permute.xlu0 %2173
      %2175 = vrot.lane.b32.xlu0 %v1908, 64
      %v2176 = vpop.permute.xlu0 %2175
      %2177 = vrot.lane.b32.xlu0 %v1909, 64
      %v2178 = vpop.permute.xlu0 %2177
      %2179 = vrot.lane.b32.xlu0 %v1910, 64
      %v2180 = vpop.permute.xlu0 %2179
      %2181 = vrot.lane.b32.xlu0 %v1911, 64
      %v2182 = vpop.permute.xlu0 %2181
      %2183 = vrot.lane.b32.xlu0 %v1912, 64
      %v2184 = vpop.permute.xlu0 %2183
      %2185 = vrot.lane.b32.xlu0 %v1913, 64
      %v2186 = vpop.permute.xlu0 %2185
      %2187 = vrot.lane.b32.xlu0 %v1914, 64
      %v2188 = vpop.permute.xlu0 %2187
      %2189 = vrot.lane.b32.xlu0 %v1915, 64
      %v2190 = vpop.permute.xlu0 %2189
      %2191 = vrot.lane.b32.xlu0 %v1916, 64
      %v2192 = vpop.permute.xlu0 %2191
      %2193 = vrot.lane.b32.xlu0 %v1917, 64
      %v2194 = vpop.permute.xlu0 %2193
      %2195 = vrot.lane.b32.xlu0 %v1918, 64
      %v2196 = vpop.permute.xlu0 %2195
      %2197 = vrot.lane.b32.xlu0 %v1919, 64
      %v2198 = vpop.permute.xlu0 %2197
      %2199 = vrot.lane.b32.xlu0 %v1920, 64
      %v2200 = vpop.permute.xlu0 %2199
      %2201 = vrot.lane.b32.xlu0 %v1921, 64
      %v2202 = vpop.permute.xlu0 %2201
      %2203 = vrot.lane.b32.xlu0 %v1922, 64
      %v2204 = vpop.permute.xlu0 %2203
      %2205 = vrot.lane.b32.xlu0 %v1923, 64
      %v2206 = vpop.permute.xlu0 %2205
      %2207 = vrot.lane.b32.xlu0 %v1924, 64
      %v2208 = vpop.permute.xlu0 %2207
      %2209 = vrot.lane.b32.xlu0 %v1925, 64
      %v2210 = vpop.permute.xlu0 %2209
      %2211 = vrot.lane.b32.xlu0 %v1926, 64
      %v2212 = vpop.permute.xlu0 %2211
      %2213 = vrot.lane.b32.xlu0 %v1927, 64
      %v2214 = vpop.permute.xlu0 %2213
      %2215 = vrot.lane.b32.xlu0 %v1928, 64
      %v2216 = vpop.permute.xlu0 %2215
      %2217 = vrot.lane.b32.xlu0 %v1929, 64
      %v2218 = vpop.permute.xlu0 %2217
      %2219 = vrot.lane.b32.xlu0 %v1930, 64
      %v2220 = vpop.permute.xlu0 %2219
      %2221 = vrot.lane.b32.xlu0 %v1931, 64
      %v2222 = vpop.permute.xlu0 %2221
      %2223 = vrot.lane.b32.xlu0 %v1932, 64
      %v2224 = vpop.permute.xlu0 %2223
      %2225 = vrot.lane.b32.xlu0 %v1933, 64
      %v2226 = vpop.permute.xlu0 %2225
      %2227 = vrot.lane.b32.xlu0 %v1934, 64
      %v2228 = vpop.permute.xlu0 %2227
      %2229 = vrot.lane.b32.xlu0 %v1935, 64
      %v2230 = vpop.permute.xlu0 %2229
      %2231 = vrot.lane.b32.xlu0 %v1936, 64
      %v2232 = vpop.permute.xlu0 %2231
      %2233 = vrot.lane.b32.xlu0 %v1937, 64
      %v2234 = vpop.permute.xlu0 %2233
      %2235 = vrot.lane.b32.xlu0 %v1938, 64
      %v2236 = vpop.permute.xlu0 %2235
      %2237 = vrot.lane.b32.xlu0 %v1939, 64
      %v2238 = vpop.permute.xlu0 %2237
      %2239 = vrot.lane.b32.xlu0 %v1940, 64
      %v2240 = vpop.permute.xlu0 %2239
      %2241 = vrot.lane.b32.xlu0 %v1941, 64
      %v2242 = vpop.permute.xlu0 %2241
      %2243 = vrot.lane.b32.xlu0 %v1942, 64
      %v2244 = vpop.permute.xlu0 %2243
      %2245 = vrot.lane.b32.xlu0 %v1943, 64
      %v2246 = vpop.permute.xlu0 %2245
      %2247 = vrot.lane.b32.xlu0 %v1944, 64
      %v2248 = vpop.permute.xlu0 %2247
      %2249 = vrot.lane.b32.xlu0 %v1945, 64
      %v2250 = vpop.permute.xlu0 %2249
      %2251 = vrot.lane.b32.xlu0 %v1946, 64
      %v2252 = vpop.permute.xlu0 %2251
      %2253 = vrot.lane.b32.xlu0 %v1947, 64
      %v2254 = vpop.permute.xlu0 %2253
      %2255 = vrot.lane.b32.xlu0 %v1948, 64
      %v2256 = vpop.permute.xlu0 %2255
      %2257 = vrot.lane.b32.xlu0 %v1949, 64
      %v2258 = vpop.permute.xlu0 %2257
      %2259 = vrot.lane.b32.xlu0 %v1950, 64
      %v2260 = vpop.permute.xlu0 %2259
      %2261 = vrot.lane.b32.xlu0 %v1951, 64
      %v2262 = vpop.permute.xlu0 %2261
      %2263 = vrot.lane.b32.xlu0 %v1952, 64
      %v2264 = vpop.permute.xlu0 %2263
      %2265 = vrot.lane.b32.xlu0 %v1953, 64
      %v2266 = vpop.permute.xlu0 %2265
      %2267 = vrot.lane.b32.xlu0 %v1954, 64
      %v2268 = vpop.permute.xlu0 %2267
      %2269 = vrot.lane.b32.xlu0 %v1955, 64
      %v2270 = vpop.permute.xlu0 %2269
      %2271 = vrot.lane.b32.xlu0 %v1956, 64
      %v2272 = vpop.permute.xlu0 %2271
      %2273 = vrot.lane.b32.xlu0 %v1957, 64
      %v2274 = vpop.permute.xlu0 %2273
      %2275 = vrot.lane.b32.xlu0 %v1958, 64
      %v2276 = vpop.permute.xlu0 %2275
      %2277 = vrot.lane.b32.xlu0 %v1959, 64
      %v2278 = vpop.permute.xlu0 %2277
      %2279 = vrot.lane.b32.xlu0 %v1960, 64
      %v2280 = vpop.permute.xlu0 %2279
      %2281 = vrot.lane.b32.xlu0 %v1961, 64
      %v2282 = vpop.permute.xlu0 %2281
      %2283 = vrot.lane.b32.xlu0 %v1962, 64
      %v2284 = vpop.permute.xlu0 %2283
      %2285 = vrot.lane.b32.xlu0 %v1963, 64
      %v2286 = vpop.permute.xlu0 %2285
      %2287 = vrot.lane.b32.xlu0 %v1964, 64
      %v2288 = vpop.permute.xlu0 %2287
      %2289 = vrot.lane.b32.xlu0 %v1965, 64
      %v2290 = vpop.permute.xlu0 %2289
      %2291 = vrot.lane.b32.xlu0 %v1966, 64
      %v2292 = vpop.permute.xlu0 %2291
      %2293 = vrot.lane.b32.xlu0 %v1967, 64
      %v2294 = vpop.permute.xlu0 %2293
      %2295 = vrot.lane.b32.xlu0 %v1968, 64
      %v2296 = vpop.permute.xlu0 %2295
      %2297 = vrot.lane.b32.xlu0 %v1969, 64
      %v2298 = vpop.permute.xlu0 %2297
      %2299 = vrot.lane.b32.xlu0 %v1970, 64
      %v2300 = vpop.permute.xlu0 %2299
      %2301 = vrot.lane.b32.xlu0 %v1971, 64
      %v2302 = vpop.permute.xlu0 %2301
      %2303 = vrot.lane.b32.xlu0 %v1972, 64
      %v2304 = vpop.permute.xlu0 %2303
      %2305 = vrot.lane.b32.xlu0 %v1973, 64
      %v2306 = vpop.permute.xlu0 %2305
      %2307 = vrot.lane.b32.xlu0 %v1974, 64
      %v2308 = vpop.permute.xlu0 %2307
      %2309 = vrot.lane.b32.xlu0 %v1975, 64
      %v2310 = vpop.permute.xlu0 %2309
      %2311 = vrot.lane.b32.xlu0 %v1976, 64
      %v2312 = vpop.permute.xlu0 %2311
      %2313 = vrot.lane.b32.xlu0 %v1977, 64
      %v2314 = vpop.permute.xlu0 %2313
      %2315 = vrot.lane.b32.xlu0 %v1978, 64
      %v2316 = vpop.permute.xlu0 %2315
      %2317 = vrot.lane.b32.xlu0 %v1979, 64
      %v2318 = vpop.permute.xlu0 %2317
      %2319 = vrot.lane.b32.xlu0 %v1980, 64
      %v2320 = vpop.permute.xlu0 %2319
      %2321 = vrot.lane.b32.xlu0 %v1981, 64
      %v2322 = vpop.permute.xlu0 %2321
      %2323 = vrot.lane.b32.xlu0 %v1982, 64
      %v2324 = vpop.permute.xlu0 %2323
      %2325 = vrot.lane.b32.xlu0 %v1983, 64
      %v2326 = vpop.permute.xlu0 %2325
      %2327 = vrot.lane.b32.xlu0 %v1984, 64
      %v2328 = vpop.permute.xlu0 %2327
      %2329 = vrot.lane.b32.xlu0 %v1985, 64
      %v2330 = vpop.permute.xlu0 %2329
      %2331 = vrot.lane.b32.xlu0 %v1986, 64
      %v2332 = vpop.permute.xlu0 %2331
      %2333 = vrot.lane.b32.xlu0 %v1987, 64
      %v2334 = vpop.permute.xlu0 %2333
      %2335 = vrot.lane.b32.xlu0 %v1988, 64
      %v2336 = vpop.permute.xlu0 %2335
      %2337 = vrot.lane.b32.xlu0 %v1989, 64
      %v2338 = vpop.permute.xlu0 %2337
      %2339 = vrot.lane.b32.xlu0 %v1990, 64
      %v2340 = vpop.permute.xlu0 %2339
      %2341 = vrot.lane.b32.xlu0 %v1991, 64
      %v2342 = vpop.permute.xlu0 %2341
      %2343 = vrot.lane.b32.xlu0 %v1992, 64
      %v2344 = vpop.permute.xlu0 %2343
      %2345 = vrot.lane.b32.xlu0 %v1993, 64
      %v2346 = vpop.permute.xlu0 %2345
      %2347 = vrot.lane.b32.xlu0 %v1994, 64
      %v2348 = vpop.permute.xlu0 %2347
      %2349 = vrot.lane.b32.xlu0 %v1995, 64
      %v2350 = vpop.permute.xlu0 %2349
      %2351 = vrot.lane.b32.xlu0 %v1996, 64
      %v2352 = vpop.permute.xlu0 %2351
      %2353 = vrot.lane.b32.xlu0 %v1997, 64
      %v2354 = vpop.permute.xlu0 %2353
      %2355 = vrot.lane.b32.xlu0 %v1998, 64
      %v2356 = vpop.permute.xlu0 %2355
      %2357 = vrot.lane.b32.xlu0 %v1999, 64
      %v2358 = vpop.permute.xlu0 %2357
      %2359 = vrot.lane.b32.xlu0 %v2000, 64
      %v2360 = vpop.permute.xlu0 %2359
      %2361 = vrot.lane.b32.xlu0 %v2001, 64
      %v2362 = vpop.permute.xlu0 %2361
      %2363 = vrot.lane.b32.xlu0 %v2002, 64
      %v2364 = vpop.permute.xlu0 %2363
      %2365 = vrot.lane.b32.xlu0 %v2003, 64
      %v2366 = vpop.permute.xlu0 %2365
      %2367 = vrot.lane.b32.xlu0 %v2004, 64
      %v2368 = vpop.permute.xlu0 %2367
      %2369 = vrot.lane.b32.xlu0 %v2005, 64
      %v2370 = vpop.permute.xlu0 %2369
      %2371 = vrot.lane.b32.xlu0 %v2006, 64
      %v2372 = vpop.permute.xlu0 %2371
      %2373 = vrot.lane.b32.xlu0 %v2007, 64
      %v2374 = vpop.permute.xlu0 %2373
      %2375 = vrot.lane.b32.xlu0 %v2008, 64
      %v2376 = vpop.permute.xlu0 %2375
      %2377 = vrot.lane.b32.xlu0 %v2009, 64
      %v2378 = vpop.permute.xlu0 %2377
      %2379 = vrot.lane.b32.xlu0 %v2010, 64
      %v2380 = vpop.permute.xlu0 %2379
      %2381 = vrot.lane.b32.xlu0 %v2011, 64
      %v2382 = vpop.permute.xlu0 %2381
      %2383 = vrot.lane.b32.xlu0 %v2012, 64
      %v2384 = vpop.permute.xlu0 %2383
      %2385 = vrot.lane.b32.xlu0 %v2013, 64
      %v2386 = vpop.permute.xlu0 %2385
      %2387 = vrot.lane.b32.xlu0 %v2014, 64
      %v2388 = vpop.permute.xlu0 %2387
      %2389 = vrot.lane.b32.xlu0 %v2015, 64
      %v2390 = vpop.permute.xlu0 %2389
      %2391 = vrot.lane.b32.xlu0 %v2016, 64
      %v2392 = vpop.permute.xlu0 %2391
      %2393 = vrot.lane.b32.xlu0 %v2017, 64
      %v2394 = vpop.permute.xlu0 %2393
      %2395 = vrot.lane.b32.xlu0 %v2018, 64
      %v2396 = vpop.permute.xlu0 %2395
      %2397 = vrot.lane.b32.xlu0 %v2019, 64
      %v2398 = vpop.permute.xlu0 %2397
      %2399 = vrot.lane.b32.xlu0 %v2020, 64
      %v2400 = vpop.permute.xlu0 %2399
      %2401 = vrot.lane.b32.xlu0 %v2021, 64
      %v2402 = vpop.permute.xlu0 %2401
      %2403 = vrot.lane.b32.xlu0 %v2022, 64
      %v2404 = vpop.permute.xlu0 %2403
      %2405 = vrot.lane.b32.xlu0 %v2023, 64
      %v2406 = vpop.permute.xlu0 %2405
      %2407 = vrot.lane.b32.xlu0 %v2024, 64
      %v2408 = vpop.permute.xlu0 %2407
      %v2537 = vmax.f32 %v1897, %v2154
      %v2538 = vmax.f32 %v1898, %v2156
      %v2539 = vmax.f32 %v1899, %v2158
      %v2540 = vmax.f32 %v1900, %v2160
      %v2541 = vmax.f32 %v1901, %v2162
      %v2542 = vmax.f32 %v1902, %v2164
      %v2543 = vmax.f32 %v1903, %v2166
      %v2544 = vmax.f32 %v1904, %v2168
      %v2545 = vmax.f32 %v1905, %v2170
      %v2546 = vmax.f32 %v1906, %v2172
      %v2547 = vmax.f32 %v1907, %v2174
      %v2548 = vmax.f32 %v1908, %v2176
      %v2549 = vmax.f32 %v1909, %v2178
      %v2550 = vmax.f32 %v1910, %v2180
      %v2551 = vmax.f32 %v1911, %v2182
      %v2552 = vmax.f32 %v1912, %v2184
      %v2553 = vmax.f32 %v1913, %v2186
      %v2554 = vmax.f32 %v1914, %v2188
      %v2555 = vmax.f32 %v1915, %v2190
      %v2556 = vmax.f32 %v1916, %v2192
      %v2557 = vmax.f32 %v1917, %v2194
      %v2558 = vmax.f32 %v1918, %v2196
      %v2559 = vmax.f32 %v1919, %v2198
      %v2560 = vmax.f32 %v1920, %v2200
      %v2561 = vmax.f32 %v1921, %v2202
      %v2562 = vmax.f32 %v1922, %v2204
      %v2563 = vmax.f32 %v1923, %v2206
      %v2564 = vmax.f32 %v1924, %v2208
      %v2565 = vmax.f32 %v1925, %v2210
      %v2566 = vmax.f32 %v1926, %v2212
      %v2567 = vmax.f32 %v1927, %v2214
      %v2568 = vmax.f32 %v1928, %v2216
      %v2569 = vmax.f32 %v1929, %v2218
      %v2570 = vmax.f32 %v1930, %v2220
      %v2571 = vmax.f32 %v1931, %v2222
      %v2572 = vmax.f32 %v1932, %v2224
      %v2573 = vmax.f32 %v1933, %v2226
      %v2574 = vmax.f32 %v1934, %v2228
      %v2575 = vmax.f32 %v1935, %v2230
      %v2576 = vmax.f32 %v1936, %v2232
      %v2577 = vmax.f32 %v1937, %v2234
      %v2578 = vmax.f32 %v1938, %v2236
      %v2579 = vmax.f32 %v1939, %v2238
      %v2580 = vmax.f32 %v1940, %v2240
      %v2581 = vmax.f32 %v1941, %v2242
      %v2582 = vmax.f32 %v1942, %v2244
      %v2583 = vmax.f32 %v1943, %v2246
      %v2584 = vmax.f32 %v1944, %v2248
      %v2585 = vmax.f32 %v1945, %v2250
      %v2586 = vmax.f32 %v1946, %v2252
      %v2587 = vmax.f32 %v1947, %v2254
      %v2588 = vmax.f32 %v1948, %v2256
      %v2589 = vmax.f32 %v1949, %v2258
      %v2590 = vmax.f32 %v1950, %v2260
      %v2591 = vmax.f32 %v1951, %v2262
      %v2592 = vmax.f32 %v1952, %v2264
      %v2593 = vmax.f32 %v1953, %v2266
      %v2594 = vmax.f32 %v1954, %v2268
      %v2595 = vmax.f32 %v1955, %v2270
      %v2596 = vmax.f32 %v1956, %v2272
      %v2597 = vmax.f32 %v1957, %v2274
      %v2598 = vmax.f32 %v1958, %v2276
      %v2599 = vmax.f32 %v1959, %v2278
      %v2600 = vmax.f32 %v1960, %v2280
      %v2601 = vmax.f32 %v1961, %v2282
      %v2602 = vmax.f32 %v1962, %v2284
      %v2603 = vmax.f32 %v1963, %v2286
      %v2604 = vmax.f32 %v1964, %v2288
      %v2605 = vmax.f32 %v1965, %v2290
      %v2606 = vmax.f32 %v1966, %v2292
      %v2607 = vmax.f32 %v1967, %v2294
      %v2608 = vmax.f32 %v1968, %v2296
      %v2609 = vmax.f32 %v1969, %v2298
      %v2610 = vmax.f32 %v1970, %v2300
      %v2611 = vmax.f32 %v1971, %v2302
      %v2612 = vmax.f32 %v1972, %v2304
      %v2613 = vmax.f32 %v1973, %v2306
      %v2614 = vmax.f32 %v1974, %v2308
      %v2615 = vmax.f32 %v1975, %v2310
      %v2616 = vmax.f32 %v1976, %v2312
      %v2617 = vmax.f32 %v1977, %v2314
      %v2618 = vmax.f32 %v1978, %v2316
      %v2619 = vmax.f32 %v1979, %v2318
      %v2620 = vmax.f32 %v1980, %v2320
      %v2621 = vmax.f32 %v1981, %v2322
      %v2622 = vmax.f32 %v1982, %v2324
      %v2623 = vmax.f32 %v1983, %v2326
      %v2624 = vmax.f32 %v1984, %v2328
      %v2625 = vmax.f32 %v1985, %v2330
      %v2626 = vmax.f32 %v1986, %v2332
      %v2627 = vmax.f32 %v1987, %v2334
      %v2628 = vmax.f32 %v1988, %v2336
      %v2629 = vmax.f32 %v1989, %v2338
      %v2630 = vmax.f32 %v1990, %v2340
      %v2631 = vmax.f32 %v1991, %v2342
      %v2632 = vmax.f32 %v1992, %v2344
      %v2633 = vmax.f32 %v1993, %v2346
      %v2634 = vmax.f32 %v1994, %v2348
      %v2635 = vmax.f32 %v1995, %v2350
      %v2636 = vmax.f32 %v1996, %v2352
      %v2637 = vmax.f32 %v1997, %v2354
      %v2638 = vmax.f32 %v1998, %v2356
      %v2639 = vmax.f32 %v1999, %v2358
      %v2640 = vmax.f32 %v2000, %v2360
      %v2641 = vmax.f32 %v2001, %v2362
      %v2642 = vmax.f32 %v2002, %v2364
      %v2643 = vmax.f32 %v2003, %v2366
      %v2644 = vmax.f32 %v2004, %v2368
      %v2645 = vmax.f32 %v2005, %v2370
      %v2646 = vmax.f32 %v2006, %v2372
      %v2647 = vmax.f32 %v2007, %v2374
      %v2648 = vmax.f32 %v2008, %v2376
      %v2649 = vmax.f32 %v2009, %v2378
      %v2650 = vmax.f32 %v2010, %v2380
      %v2651 = vmax.f32 %v2011, %v2382
      %v2652 = vmax.f32 %v2012, %v2384
      %v2653 = vmax.f32 %v2013, %v2386
      %v2654 = vmax.f32 %v2014, %v2388
      %v2655 = vmax.f32 %v2015, %v2390
      %v2656 = vmax.f32 %v2016, %v2392
      %v2657 = vmax.f32 %v2017, %v2394
      %v2658 = vmax.f32 %v2018, %v2396
      %v2659 = vmax.f32 %v2019, %v2398
      %v2660 = vmax.f32 %v2020, %v2400
      %v2661 = vmax.f32 %v2021, %v2402
      %v2662 = vmax.f32 %v2022, %v2404
      %v2663 = vmax.f32 %v2023, %v2406
      %v2664 = vmax.f32 %v2024, %v2408
      %v2665 = vld [vmem:[%s2] sm:$0x1]
      %v2667 = vlaneseq
      %v2668 = vshrl.u32 %v2667, 7
      %v2669 = vsub.s32 0, %v2668
      %v2670 = vrot.slane %v2665, %v2669
      %v2672 = vadd.f32 %v2537, %v2670
      %v2673 = vadd.f32 %v2538, %v2670
      %v2674 = vadd.f32 %v2539, %v2670
      %v2675 = vadd.f32 %v2540, %v2670
      %v2676 = vadd.f32 %v2541, %v2670
      %v2677 = vadd.f32 %v2542, %v2670
      %v2678 = vadd.f32 %v2543, %v2670
      %v2679 = vadd.f32 %v2544, %v2670
      %v2680 = vadd.f32 %v2545, %v2670
      %v2681 = vadd.f32 %v2546, %v2670
      %v2682 = vadd.f32 %v2547, %v2670
      %v2683 = vadd.f32 %v2548, %v2670
      %v2684 = vadd.f32 %v2549, %v2670
      %v2685 = vadd.f32 %v2550, %v2670
      %v2686 = vadd.f32 %v2551, %v2670
      %v2687 = vadd.f32 %v2552, %v2670
      %v2688 = vadd.f32 %v2553, %v2670
      %v2689 = vadd.f32 %v2554, %v2670
      %v2690 = vadd.f32 %v2555, %v2670
      %v2691 = vadd.f32 %v2556, %v2670
      %v2692 = vadd.f32 %v2557, %v2670
      %v2693 = vadd.f32 %v2558, %v2670
      %v2694 = vadd.f32 %v2559, %v2670
      %v2695 = vadd.f32 %v2560, %v2670
      %v2696 = vadd.f32 %v2561, %v2670
      %v2697 = vadd.f32 %v2562, %v2670
      %v2698 = vadd.f32 %v2563, %v2670
      %v2699 = vadd.f32 %v2564, %v2670
      %v2700 = vadd.f32 %v2565, %v2670
      %v2701 = vadd.f32 %v2566, %v2670
      %v2702 = vadd.f32 %v2567, %v2670
      %v2703 = vadd.f32 %v2568, %v2670
      %v2704 = vadd.f32 %v2569, %v2670
      %v2705 = vadd.f32 %v2570, %v2670
      %v2706 = vadd.f32 %v2571, %v2670
      %v2707 = vadd.f32 %v2572, %v2670
      %v2708 = vadd.f32 %v2573, %v2670
      %v2709 = vadd.f32 %v2574, %v2670
      %v2710 = vadd.f32 %v2575, %v2670
      %v2711 = vadd.f32 %v2576, %v2670
      %v2712 = vadd.f32 %v2577, %v2670
      %v2713 = vadd.f32 %v2578, %v2670
      %v2714 = vadd.f32 %v2579, %v2670
      %v2715 = vadd.f32 %v2580, %v2670
      %v2716 = vadd.f32 %v2581, %v2670
      %v2717 = vadd.f32 %v2582, %v2670
      %v2718 = vadd.f32 %v2583, %v2670
      %v2719 = vadd.f32 %v2584, %v2670
      %v2720 = vadd.f32 %v2585, %v2670
      %v2721 = vadd.f32 %v2586, %v2670
      %v2722 = vadd.f32 %v2587, %v2670
      %v2723 = vadd.f32 %v2588, %v2670
      %v2724 = vadd.f32 %v2589, %v2670
      %v2725 = vadd.f32 %v2590, %v2670
      %v2726 = vadd.f32 %v2591, %v2670
      %v2727 = vadd.f32 %v2592, %v2670
      %v2728 = vadd.f32 %v2593, %v2670
      %v2729 = vadd.f32 %v2594, %v2670
      %v2730 = vadd.f32 %v2595, %v2670
      %v2731 = vadd.f32 %v2596, %v2670
      %v2732 = vadd.f32 %v2597, %v2670
      %v2733 = vadd.f32 %v2598, %v2670
      %v2734 = vadd.f32 %v2599, %v2670
      %v2735 = vadd.f32 %v2600, %v2670
      %v2736 = vadd.f32 %v2601, %v2670
      %v2737 = vadd.f32 %v2602, %v2670
      %v2738 = vadd.f32 %v2603, %v2670
      %v2739 = vadd.f32 %v2604, %v2670
      %v2740 = vadd.f32 %v2605, %v2670
      %v2741 = vadd.f32 %v2606, %v2670
      %v2742 = vadd.f32 %v2607, %v2670
      %v2743 = vadd.f32 %v2608, %v2670
      %v2744 = vadd.f32 %v2609, %v2670
      %v2745 = vadd.f32 %v2610, %v2670
      %v2746 = vadd.f32 %v2611, %v2670
      %v2747 = vadd.f32 %v2612, %v2670
      %v2748 = vadd.f32 %v2613, %v2670
      %v2749 = vadd.f32 %v2614, %v2670
      %v2750 = vadd.f32 %v2615, %v2670
      %v2751 = vadd.f32 %v2616, %v2670
      %v2752 = vadd.f32 %v2617, %v2670
      %v2753 = vadd.f32 %v2618, %v2670
      %v2754 = vadd.f32 %v2619, %v2670
      %v2755 = vadd.f32 %v2620, %v2670
      %v2756 = vadd.f32 %v2621, %v2670
      %v2757 = vadd.f32 %v2622, %v2670
      %v2758 = vadd.f32 %v2623, %v2670
      %v2759 = vadd.f32 %v2624, %v2670
      %v2760 = vadd.f32 %v2625, %v2670
      %v2761 = vadd.f32 %v2626, %v2670
      %v2762 = vadd.f32 %v2627, %v2670
      %v2763 = vadd.f32 %v2628, %v2670
      %v2764 = vadd.f32 %v2629, %v2670
      %v2765 = vadd.f32 %v2630, %v2670
      %v2766 = vadd.f32 %v2631, %v2670
      %v2767 = vadd.f32 %v2632, %v2670
      %v2768 = vadd.f32 %v2633, %v2670
      %v2769 = vadd.f32 %v2634, %v2670
      %v2770 = vadd.f32 %v2635, %v2670
      %v2771 = vadd.f32 %v2636, %v2670
      %v2772 = vadd.f32 %v2637, %v2670
      %v2773 = vadd.f32 %v2638, %v2670
      %v2774 = vadd.f32 %v2639, %v2670
      %v2775 = vadd.f32 %v2640, %v2670
      %v2776 = vadd.f32 %v2641, %v2670
      %v2777 = vadd.f32 %v2642, %v2670
      %v2778 = vadd.f32 %v2643, %v2670
      %v2779 = vadd.f32 %v2644, %v2670
      %v2780 = vadd.f32 %v2645, %v2670
      %v2781 = vadd.f32 %v2646, %v2670
      %v2782 = vadd.f32 %v2647, %v2670
      %v2783 = vadd.f32 %v2648, %v2670
      %v2784 = vadd.f32 %v2649, %v2670
      %v2785 = vadd.f32 %v2650, %v2670
      %v2786 = vadd.f32 %v2651, %v2670
      %v2787 = vadd.f32 %v2652, %v2670
      %v2788 = vadd.f32 %v2653, %v2670
      %v2789 = vadd.f32 %v2654, %v2670
      %v2790 = vadd.f32 %v2655, %v2670
      %v2791 = vadd.f32 %v2656, %v2670
      %v2792 = vadd.f32 %v2657, %v2670
      %v2793 = vadd.f32 %v2658, %v2670
      %v2794 = vadd.f32 %v2659, %v2670
      %v2795 = vadd.f32 %v2660, %v2670
      %v2796 = vadd.f32 %v2661, %v2670
      %v2797 = vadd.f32 %v2662, %v2670
      %v2798 = vadd.f32 %v2663, %v2670
      %v2799 = vadd.f32 %v2664, %v2670
      %v2800 = vmax.f32 %v2672, 0.0
      %v2801 = vmax.f32 %v2673, 0.0
      %v2802 = vmax.f32 %v2674, 0.0
      %v2803 = vmax.f32 %v2675, 0.0
      %v2804 = vmax.f32 %v2676, 0.0
      %v2805 = vmax.f32 %v2677, 0.0
      %v2806 = vmax.f32 %v2678, 0.0
      %v2807 = vmax.f32 %v2679, 0.0
      %v2808 = vmax.f32 %v2680, 0.0
      %v2809 = vmax.f32 %v2681, 0.0
      %v2810 = vmax.f32 %v2682, 0.0
      %v2811 = vmax.f32 %v2683, 0.0
      %v2812 = vmax.f32 %v2684, 0.0
      %v2813 = vmax.f32 %v2685, 0.0
      %v2814 = vmax.f32 %v2686, 0.0
      %v2815 = vmax.f32 %v2687, 0.0
      %v2816 = vmax.f32 %v2688, 0.0
      %v2817 = vmax.f32 %v2689, 0.0
      %v2818 = vmax.f32 %v2690, 0.0
      %v2819 = vmax.f32 %v2691, 0.0
      %v2820 = vmax.f32 %v2692, 0.0
      %v2821 = vmax.f32 %v2693, 0.0
      %v2822 = vmax.f32 %v2694, 0.0
      %v2823 = vmax.f32 %v2695, 0.0
      %v2824 = vmax.f32 %v2696, 0.0
      %v2825 = vmax.f32 %v2697, 0.0
      %v2826 = vmax.f32 %v2698, 0.0
      %v2827 = vmax.f32 %v2699, 0.0
      %v2828 = vmax.f32 %v2700, 0.0
      %v2829 = vmax.f32 %v2701, 0.0
      %v2830 = vmax.f32 %v2702, 0.0
      %v2831 = vmax.f32 %v2703, 0.0
      %v2832 = vmax.f32 %v2704, 0.0
      %v2833 = vmax.f32 %v2705, 0.0
      %v2834 = vmax.f32 %v2706, 0.0
      %v2835 = vmax.f32 %v2707, 0.0
      %v2836 = vmax.f32 %v2708, 0.0
      %v2837 = vmax.f32 %v2709, 0.0
      %v2838 = vmax.f32 %v2710, 0.0
      %v2839 = vmax.f32 %v2711, 0.0
      %v2840 = vmax.f32 %v2712, 0.0
      %v2841 = vmax.f32 %v2713, 0.0
      %v2842 = vmax.f32 %v2714, 0.0
      %v2843 = vmax.f32 %v2715, 0.0
      %v2844 = vmax.f32 %v2716, 0.0
      %v2845 = vmax.f32 %v2717, 0.0
      %v2846 = vmax.f32 %v2718, 0.0
      %v2847 = vmax.f32 %v2719, 0.0
      %v2848 = vmax.f32 %v2720, 0.0
      %v2849 = vmax.f32 %v2721, 0.0
      %v2850 = vmax.f32 %v2722, 0.0
      %v2851 = vmax.f32 %v2723, 0.0
      %v2852 = vmax.f32 %v2724, 0.0
      %v2853 = vmax.f32 %v2725, 0.0
      %v2854 = vmax.f32 %v2726, 0.0
      %v2855 = vmax.f32 %v2727, 0.0
      %v2856 = vmax.f32 %v2728, 0.0
      %v2857 = vmax.f32 %v2729, 0.0
      %v2858 = vmax.f32 %v2730, 0.0
      %v2859 = vmax.f32 %v2731, 0.0
      %v2860 = vmax.f32 %v2732, 0.0
      %v2861 = vmax.f32 %v2733, 0.0
      %v2862 = vmax.f32 %v2734, 0.0
      %v2863 = vmax.f32 %v2735, 0.0
      %v2864 = vmax.f32 %v2736, 0.0
      %v2865 = vmax.f32 %v2737, 0.0
      %v2866 = vmax.f32 %v2738, 0.0
      %v2867 = vmax.f32 %v2739, 0.0
      %v2868 = vmax.f32 %v2740, 0.0
      %v2869 = vmax.f32 %v2741, 0.0
      %v2870 = vmax.f32 %v2742, 0.0
      %v2871 = vmax.f32 %v2743, 0.0
      %v2872 = vmax.f32 %v2744, 0.0
      %v2873 = vmax.f32 %v2745, 0.0
      %v2874 = vmax.f32 %v2746, 0.0
      %v2875 = vmax.f32 %v2747, 0.0
      %v2876 = vmax.f32 %v2748, 0.0
      %v2877 = vmax.f32 %v2749, 0.0
      %v2878 = vmax.f32 %v2750, 0.0
      %v2879 = vmax.f32 %v2751, 0.0
      %v2880 = vmax.f32 %v2752, 0.0
      %v2881 = vmax.f32 %v2753, 0.0
      %v2882 = vmax.f32 %v2754, 0.0
      %v2883 = vmax.f32 %v2755, 0.0
      %v2884 = vmax.f32 %v2756, 0.0
      %v2885 = vmax.f32 %v2757, 0.0
      %v2886 = vmax.f32 %v2758, 0.0
      %v2887 = vmax.f32 %v2759, 0.0
      %v2888 = vmax.f32 %v2760, 0.0
      %v2889 = vmax.f32 %v2761, 0.0
      %v2890 = vmax.f32 %v2762, 0.0
      %v2891 = vmax.f32 %v2763, 0.0
      %v2892 = vmax.f32 %v2764, 0.0
      %v2893 = vmax.f32 %v2765, 0.0
      %v2894 = vmax.f32 %v2766, 0.0
      %v2895 = vmax.f32 %v2767, 0.0
      %v2896 = vmax.f32 %v2768, 0.0
      %v2897 = vmax.f32 %v2769, 0.0
      %v2898 = vmax.f32 %v2770, 0.0
      %v2899 = vmax.f32 %v2771, 0.0
      %v2900 = vmax.f32 %v2772, 0.0
      %v2901 = vmax.f32 %v2773, 0.0
      %v2902 = vmax.f32 %v2774, 0.0
      %v2903 = vmax.f32 %v2775, 0.0
      %v2904 = vmax.f32 %v2776, 0.0
      %v2905 = vmax.f32 %v2777, 0.0
      %v2906 = vmax.f32 %v2778, 0.0
      %v2907 = vmax.f32 %v2779, 0.0
      %v2908 = vmax.f32 %v2780, 0.0
      %v2909 = vmax.f32 %v2781, 0.0
      %v2910 = vmax.f32 %v2782, 0.0
      %v2911 = vmax.f32 %v2783, 0.0
      %v2912 = vmax.f32 %v2784, 0.0
      %v2913 = vmax.f32 %v2785, 0.0
      %v2914 = vmax.f32 %v2786, 0.0
      %v2915 = vmax.f32 %v2787, 0.0
      %v2916 = vmax.f32 %v2788, 0.0
      %v2917 = vmax.f32 %v2789, 0.0
      %v2918 = vmax.f32 %v2790, 0.0
      %v2919 = vmax.f32 %v2791, 0.0
      %v2920 = vmax.f32 %v2792, 0.0
      %v2921 = vmax.f32 %v2793, 0.0
      %v2922 = vmax.f32 %v2794, 0.0
      %v2923 = vmax.f32 %v2795, 0.0
      %v2924 = vmax.f32 %v2796, 0.0
      %v2925 = vmax.f32 %v2797, 0.0
      %v2926 = vmax.f32 %v2798, 0.0
      %v2927 = vmax.f32 %v2799, 0.0
      %v2928 = vpack.c.bf16 %v2801, %v2800
      %v2929 = vpack.c.bf16 %v2803, %v2802
      %v2930 = vpack.c.bf16 %v2805, %v2804
      %v2931 = vpack.c.bf16 %v2807, %v2806
      %v2932 = vpack.c.bf16 %v2809, %v2808
      %v2933 = vpack.c.bf16 %v2811, %v2810
      %v2934 = vpack.c.bf16 %v2813, %v2812
      %v2935 = vpack.c.bf16 %v2815, %v2814
      %v2936 = vpack.c.bf16 %v2817, %v2816
      %v2937 = vpack.c.bf16 %v2819, %v2818
      %v2938 = vpack.c.bf16 %v2821, %v2820
      %v2939 = vpack.c.bf16 %v2823, %v2822
      %v2940 = vpack.c.bf16 %v2825, %v2824
      %v2941 = vpack.c.bf16 %v2827, %v2826
      %v2942 = vpack.c.bf16 %v2829, %v2828
      %v2943 = vpack.c.bf16 %v2831, %v2830
      %v2944 = vpack.c.bf16 %v2833, %v2832
      %v2945 = vpack.c.bf16 %v2835, %v2834
      %v2946 = vpack.c.bf16 %v2837, %v2836
      %v2947 = vpack.c.bf16 %v2839, %v2838
      %v2948 = vpack.c.bf16 %v2841, %v2840
      %v2949 = vpack.c.bf16 %v2843, %v2842
      %v2950 = vpack.c.bf16 %v2845, %v2844
      %v2951 = vpack.c.bf16 %v2847, %v2846
      %v2952 = vpack.c.bf16 %v2849, %v2848
      %v2953 = vpack.c.bf16 %v2851, %v2850
      %v2954 = vpack.c.bf16 %v2853, %v2852
      %v2955 = vpack.c.bf16 %v2855, %v2854
      %v2956 = vpack.c.bf16 %v2857, %v2856
      %v2957 = vpack.c.bf16 %v2859, %v2858
      %v2958 = vpack.c.bf16 %v2861, %v2860
      %v2959 = vpack.c.bf16 %v2863, %v2862
      %v2960 = vpack.c.bf16 %v2865, %v2864
      %v2961 = vpack.c.bf16 %v2867, %v2866
      %v2962 = vpack.c.bf16 %v2869, %v2868
      %v2963 = vpack.c.bf16 %v2871, %v2870
      %v2964 = vpack.c.bf16 %v2873, %v2872
      %v2965 = vpack.c.bf16 %v2875, %v2874
      %v2966 = vpack.c.bf16 %v2877, %v2876
      %v2967 = vpack.c.bf16 %v2879, %v2878
      %v2968 = vpack.c.bf16 %v2881, %v2880
      %v2969 = vpack.c.bf16 %v2883, %v2882
      %v2970 = vpack.c.bf16 %v2885, %v2884
      %v2971 = vpack.c.bf16 %v2887, %v2886
      %v2972 = vpack.c.bf16 %v2889, %v2888
      %v2973 = vpack.c.bf16 %v2891, %v2890
      %v2974 = vpack.c.bf16 %v2893, %v2892
      %v2975 = vpack.c.bf16 %v2895, %v2894
      %v2976 = vpack.c.bf16 %v2897, %v2896
      %v2977 = vpack.c.bf16 %v2899, %v2898
      %v2978 = vpack.c.bf16 %v2901, %v2900
      %v2979 = vpack.c.bf16 %v2903, %v2902
      %v2980 = vpack.c.bf16 %v2905, %v2904
      %v2981 = vpack.c.bf16 %v2907, %v2906
      %v2982 = vpack.c.bf16 %v2909, %v2908
      %v2983 = vpack.c.bf16 %v2911, %v2910
      %v2984 = vpack.c.bf16 %v2913, %v2912
      %v2985 = vpack.c.bf16 %v2915, %v2914
      %v2986 = vpack.c.bf16 %v2917, %v2916
      %v2987 = vpack.c.bf16 %v2919, %v2918
      %v2988 = vpack.c.bf16 %v2921, %v2920
      %v2989 = vpack.c.bf16 %v2923, %v2922
      %v2990 = vpack.c.bf16 %v2925, %v2924
      %v2991 = vpack.c.bf16 %v2927, %v2926
      %v3056 = vunpack.c.l.b16 %v2928
      %v3057 = vunpack.c.h.b16 %v2928
      %v3058 = vunpack.c.l.b16 %v2929
      %v3059 = vunpack.c.h.b16 %v2929
      %v3060 = vunpack.c.l.b16 %v2930
      %v3061 = vunpack.c.h.b16 %v2930
      %v3062 = vunpack.c.l.b16 %v2931
      %v3063 = vunpack.c.h.b16 %v2931
      %v3064 = vunpack.c.l.b16 %v2932
      %v3065 = vunpack.c.h.b16 %v2932
      %v3066 = vunpack.c.l.b16 %v2933
      %v3067 = vunpack.c.h.b16 %v2933
      %v3068 = vunpack.c.l.b16 %v2934
      %v3069 = vunpack.c.h.b16 %v2934
      %v3070 = vunpack.c.l.b16 %v2935
      %v3071 = vunpack.c.h.b16 %v2935
      %v3072 = vunpack.c.l.b16 %v2936
      %v3073 = vunpack.c.h.b16 %v2936
      %v3074 = vunpack.c.l.b16 %v2937
      %v3075 = vunpack.c.h.b16 %v2937
      %v3076 = vunpack.c.l.b16 %v2938
      %v3077 = vunpack.c.h.b16 %v2938
      %v3078 = vunpack.c.l.b16 %v2939
      %v3079 = vunpack.c.h.b16 %v2939
      %v3080 = vunpack.c.l.b16 %v2940
      %v3081 = vunpack.c.h.b16 %v2940
      %v3082 = vunpack.c.l.b16 %v2941
      %v3083 = vunpack.c.h.b16 %v2941
      %v3084 = vunpack.c.l.b16 %v2942
      %v3085 = vunpack.c.h.b16 %v2942
      %v3086 = vunpack.c.l.b16 %v2943
      %v3087 = vunpack.c.h.b16 %v2943
      %v3088 = vunpack.c.l.b16 %v2944
      %v3089 = vunpack.c.h.b16 %v2944
      %v3090 = vunpack.c.l.b16 %v2945
      %v3091 = vunpack.c.h.b16 %v2945
      %v3092 = vunpack.c.l.b16 %v2946
      %v3093 = vunpack.c.h.b16 %v2946
      %v3094 = vunpack.c.l.b16 %v2947
      %v3095 = vunpack.c.h.b16 %v2947
      %v3096 = vunpack.c.l.b16 %v2948
      %v3097 = vunpack.c.h.b16 %v2948
      %v3098 = vunpack.c.l.b16 %v2949
      %v3099 = vunpack.c.h.b16 %v2949
      %v3100 = vunpack.c.l.b16 %v2950
      %v3101 = vunpack.c.h.b16 %v2950
      %v3102 = vunpack.c.l.b16 %v2951
      %v3103 = vunpack.c.h.b16 %v2951
      %v3104 = vunpack.c.l.b16 %v2952
      %v3105 = vunpack.c.h.b16 %v2952
      %v3106 = vunpack.c.l.b16 %v2953
      %v3107 = vunpack.c.h.b16 %v2953
      %v3108 = vunpack.c.l.b16 %v2954
      %v3109 = vunpack.c.h.b16 %v2954
      %v3110 = vunpack.c.l.b16 %v2955
      %v3111 = vunpack.c.h.b16 %v2955
      %v3112 = vunpack.c.l.b16 %v2956
      %v3113 = vunpack.c.h.b16 %v2956
      %v3114 = vunpack.c.l.b16 %v2957
      %v3115 = vunpack.c.h.b16 %v2957
      %v3116 = vunpack.c.l.b16 %v2958
      %v3117 = vunpack.c.h.b16 %v2958
      %v3118 = vunpack.c.l.b16 %v2959
      %v3119 = vunpack.c.h.b16 %v2959
      %v3120 = vunpack.c.l.b16 %v2960
      %v3121 = vunpack.c.h.b16 %v2960
      %v3122 = vunpack.c.l.b16 %v2961
      %v3123 = vunpack.c.h.b16 %v2961
      %v3124 = vunpack.c.l.b16 %v2962
      %v3125 = vunpack.c.h.b16 %v2962
      %v3126 = vunpack.c.l.b16 %v2963
      %v3127 = vunpack.c.h.b16 %v2963
      %v3128 = vunpack.c.l.b16 %v2964
      %v3129 = vunpack.c.h.b16 %v2964
      %v3130 = vunpack.c.l.b16 %v2965
      %v3131 = vunpack.c.h.b16 %v2965
      %v3132 = vunpack.c.l.b16 %v2966
      %v3133 = vunpack.c.h.b16 %v2966
      %v3134 = vunpack.c.l.b16 %v2967
      %v3135 = vunpack.c.h.b16 %v2967
      %v3136 = vunpack.c.l.b16 %v2968
      %v3137 = vunpack.c.h.b16 %v2968
      %v3138 = vunpack.c.l.b16 %v2969
      %v3139 = vunpack.c.h.b16 %v2969
      %v3140 = vunpack.c.l.b16 %v2970
      %v3141 = vunpack.c.h.b16 %v2970
      %v3142 = vunpack.c.l.b16 %v2971
      %v3143 = vunpack.c.h.b16 %v2971
      %v3144 = vunpack.c.l.b16 %v2972
      %v3145 = vunpack.c.h.b16 %v2972
      %v3146 = vunpack.c.l.b16 %v2973
      %v3147 = vunpack.c.h.b16 %v2973
      %v3148 = vunpack.c.l.b16 %v2974
      %v3149 = vunpack.c.h.b16 %v2974
      %v3150 = vunpack.c.l.b16 %v2975
      %v3151 = vunpack.c.h.b16 %v2975
      %v3152 = vunpack.c.l.b16 %v2976
      %v3153 = vunpack.c.h.b16 %v2976
      %v3154 = vunpack.c.l.b16 %v2977
      %v3155 = vunpack.c.h.b16 %v2977
      %v3156 = vunpack.c.l.b16 %v2978
      %v3157 = vunpack.c.h.b16 %v2978
      %v3158 = vunpack.c.l.b16 %v2979
      %v3159 = vunpack.c.h.b16 %v2979
      %v3160 = vunpack.c.l.b16 %v2980
      %v3161 = vunpack.c.h.b16 %v2980
      %v3162 = vunpack.c.l.b16 %v2981
      %v3163 = vunpack.c.h.b16 %v2981
      %v3164 = vunpack.c.l.b16 %v2982
      %v3165 = vunpack.c.h.b16 %v2982
      %v3166 = vunpack.c.l.b16 %v2983
      %v3167 = vunpack.c.h.b16 %v2983
      %v3168 = vunpack.c.l.b16 %v2984
      %v3169 = vunpack.c.h.b16 %v2984
      %v3170 = vunpack.c.l.b16 %v2985
      %v3171 = vunpack.c.h.b16 %v2985
      %v3172 = vunpack.c.l.b16 %v2986
      %v3173 = vunpack.c.h.b16 %v2986
      %v3174 = vunpack.c.l.b16 %v2987
      %v3175 = vunpack.c.h.b16 %v2987
      %v3176 = vunpack.c.l.b16 %v2988
      %v3177 = vunpack.c.h.b16 %v2988
      %v3178 = vunpack.c.l.b16 %v2989
      %v3179 = vunpack.c.h.b16 %v2989
      %v3180 = vunpack.c.l.b16 %v2990
      %v3181 = vunpack.c.h.b16 %v2990
      %v3182 = vunpack.c.l.b16 %v2991
      %v3183 = vunpack.c.h.b16 %v2991
      %v3184 = vpack.c.b16 %v3056, %v3056
      %v3185 = vpack.c.b16 %v3057, %v3057
      %v3186 = vpack.c.b16 %v3058, %v3058
      %v3187 = vpack.c.b16 %v3059, %v3059
      %v3188 = vpack.c.b16 %v3060, %v3060
      %v3189 = vpack.c.b16 %v3061, %v3061
      %v3190 = vpack.c.b16 %v3062, %v3062
      %v3191 = vpack.c.b16 %v3063, %v3063
      %v3192 = vpack.c.b16 %v3064, %v3064
      %v3193 = vpack.c.b16 %v3065, %v3065
      %v3194 = vpack.c.b16 %v3066, %v3066
      %v3195 = vpack.c.b16 %v3067, %v3067
      %v3196 = vpack.c.b16 %v3068, %v3068
      %v3197 = vpack.c.b16 %v3069, %v3069
      %v3198 = vpack.c.b16 %v3070, %v3070
      %v3199 = vpack.c.b16 %v3071, %v3071
      %v3200 = vpack.c.b16 %v3072, %v3072
      %v3201 = vpack.c.b16 %v3073, %v3073
      %v3202 = vpack.c.b16 %v3074, %v3074
      %v3203 = vpack.c.b16 %v3075, %v3075
      %v3204 = vpack.c.b16 %v3076, %v3076
      %v3205 = vpack.c.b16 %v3077, %v3077
      %v3206 = vpack.c.b16 %v3078, %v3078
      %v3207 = vpack.c.b16 %v3079, %v3079
      %v3208 = vpack.c.b16 %v3080, %v3080
      %v3209 = vpack.c.b16 %v3081, %v3081
      %v3210 = vpack.c.b16 %v3082, %v3082
      %v3211 = vpack.c.b16 %v3083, %v3083
      %v3212 = vpack.c.b16 %v3084, %v3084
      %v3213 = vpack.c.b16 %v3085, %v3085
      %v3214 = vpack.c.b16 %v3086, %v3086
      %v3215 = vpack.c.b16 %v3087, %v3087
      %v3216 = vpack.c.b16 %v3088, %v3088
      %v3217 = vpack.c.b16 %v3089, %v3089
      %v3218 = vpack.c.b16 %v3090, %v3090
      %v3219 = vpack.c.b16 %v3091, %v3091
      %v3220 = vpack.c.b16 %v3092, %v3092
      %v3221 = vpack.c.b16 %v3093, %v3093
      %v3222 = vpack.c.b16 %v3094, %v3094
      %v3223 = vpack.c.b16 %v3095, %v3095
      %v3224 = vpack.c.b16 %v3096, %v3096
      %v3225 = vpack.c.b16 %v3097, %v3097
      %v3226 = vpack.c.b16 %v3098, %v3098
      %v3227 = vpack.c.b16 %v3099, %v3099
      %v3228 = vpack.c.b16 %v3100, %v3100
      %v3229 = vpack.c.b16 %v3101, %v3101
      %v3230 = vpack.c.b16 %v3102, %v3102
      %v3231 = vpack.c.b16 %v3103, %v3103
      %v3232 = vpack.c.b16 %v3104, %v3104
      %v3233 = vpack.c.b16 %v3105, %v3105
      %v3234 = vpack.c.b16 %v3106, %v3106
      %v3235 = vpack.c.b16 %v3107, %v3107
      %v3236 = vpack.c.b16 %v3108, %v3108
      %v3237 = vpack.c.b16 %v3109, %v3109
      %v3238 = vpack.c.b16 %v3110, %v3110
      %v3239 = vpack.c.b16 %v3111, %v3111
      %v3240 = vpack.c.b16 %v3112, %v3112
      %v3241 = vpack.c.b16 %v3113, %v3113
      %v3242 = vpack.c.b16 %v3114, %v3114
      %v3243 = vpack.c.b16 %v3115, %v3115
      %v3244 = vpack.c.b16 %v3116, %v3116
      %v3245 = vpack.c.b16 %v3117, %v3117
      %v3246 = vpack.c.b16 %v3118, %v3118
      %v3247 = vpack.c.b16 %v3119, %v3119
      %v3248 = vpack.c.b16 %v3120, %v3120
      %v3249 = vpack.c.b16 %v3121, %v3121
      %v3250 = vpack.c.b16 %v3122, %v3122
      %v3251 = vpack.c.b16 %v3123, %v3123
      %v3252 = vpack.c.b16 %v3124, %v3124
      %v3253 = vpack.c.b16 %v3125, %v3125
      %v3254 = vpack.c.b16 %v3126, %v3126
      %v3255 = vpack.c.b16 %v3127, %v3127
      %v3256 = vpack.c.b16 %v3128, %v3128
      %v3257 = vpack.c.b16 %v3129, %v3129
      %v3258 = vpack.c.b16 %v3130, %v3130
      %v3259 = vpack.c.b16 %v3131, %v3131
      %v3260 = vpack.c.b16 %v3132, %v3132
      %v3261 = vpack.c.b16 %v3133, %v3133
      %v3262 = vpack.c.b16 %v3134, %v3134
      %v3263 = vpack.c.b16 %v3135, %v3135
      %v3264 = vpack.c.b16 %v3136, %v3136
      %v3265 = vpack.c.b16 %v3137, %v3137
      %v3266 = vpack.c.b16 %v3138, %v3138
      %v3267 = vpack.c.b16 %v3139, %v3139
      %v3268 = vpack.c.b16 %v3140, %v3140
      %v3269 = vpack.c.b16 %v3141, %v3141
      %v3270 = vpack.c.b16 %v3142, %v3142
      %v3271 = vpack.c.b16 %v3143, %v3143
      %v3272 = vpack.c.b16 %v3144, %v3144
      %v3273 = vpack.c.b16 %v3145, %v3145
      %v3274 = vpack.c.b16 %v3146, %v3146
      %v3275 = vpack.c.b16 %v3147, %v3147
      %v3276 = vpack.c.b16 %v3148, %v3148
      %v3277 = vpack.c.b16 %v3149, %v3149
      %v3278 = vpack.c.b16 %v3150, %v3150
      %v3279 = vpack.c.b16 %v3151, %v3151
      %v3280 = vpack.c.b16 %v3152, %v3152
      %v3281 = vpack.c.b16 %v3153, %v3153
      %v3282 = vpack.c.b16 %v3154, %v3154
      %v3283 = vpack.c.b16 %v3155, %v3155
      %v3284 = vpack.c.b16 %v3156, %v3156
      %v3285 = vpack.c.b16 %v3157, %v3157
      %v3286 = vpack.c.b16 %v3158, %v3158
      %v3287 = vpack.c.b16 %v3159, %v3159
      %v3288 = vpack.c.b16 %v3160, %v3160
      %v3289 = vpack.c.b16 %v3161, %v3161
      %v3290 = vpack.c.b16 %v3162, %v3162
      %v3291 = vpack.c.b16 %v3163, %v3163
      %v3292 = vpack.c.b16 %v3164, %v3164
      %v3293 = vpack.c.b16 %v3165, %v3165
      %v3294 = vpack.c.b16 %v3166, %v3166
      %v3295 = vpack.c.b16 %v3167, %v3167
      %v3296 = vpack.c.b16 %v3168, %v3168
      %v3297 = vpack.c.b16 %v3169, %v3169
      %v3298 = vpack.c.b16 %v3170, %v3170
      %v3299 = vpack.c.b16 %v3171, %v3171
      %v3300 = vpack.c.b16 %v3172, %v3172
      %v3301 = vpack.c.b16 %v3173, %v3173
      %v3302 = vpack.c.b16 %v3174, %v3174
      %v3303 = vpack.c.b16 %v3175, %v3175
      %v3304 = vpack.c.b16 %v3176, %v3176
      %v3305 = vpack.c.b16 %v3177, %v3177
      %v3306 = vpack.c.b16 %v3178, %v3178
      %v3307 = vpack.c.b16 %v3179, %v3179
      %v3308 = vpack.c.b16 %v3180, %v3180
      %v3309 = vpack.c.b16 %v3181, %v3181
      %v3310 = vpack.c.b16 %v3182, %v3182
      %v3311 = vpack.c.b16 %v3183, %v3183
      %vm3440 = vcmask 257024
      %3441 = vst.msk [vmem:[%s172] sm:$0xf] %vm3440, %v3184
      %3442 = vst.msk [vmem:[%s172 + $0x4] sm:$0xf] %vm3440, %v3185
      %3443 = vst.msk [vmem:[%s172 + $0x8] sm:$0xf] %vm3440, %v3186
      %3444 = vst.msk [vmem:[%s172 + $0xc] sm:$0xf] %vm3440, %v3187
      %3445 = vst.msk [vmem:[%s172 + $0x10] sm:$0xf] %vm3440, %v3188
      %3446 = vst.msk [vmem:[%s172 + $0x14] sm:$0xf] %vm3440, %v3189
      %3447 = vst.msk [vmem:[%s172 + $0x18] sm:$0xf] %vm3440, %v3190
      %3448 = vst.msk [vmem:[%s172 + $0x1c] sm:$0xf] %vm3440, %v3191
      %3449 = vst.msk [vmem:[%s172 + $0x20] sm:$0xf] %vm3440, %v3192
      %3450 = vst.msk [vmem:[%s172 + $0x24] sm:$0xf] %vm3440, %v3193
      %3451 = vst.msk [vmem:[%s172 + $0x28] sm:$0xf] %vm3440, %v3194
      %3452 = vst.msk [vmem:[%s172 + $0x2c] sm:$0xf] %vm3440, %v3195
      %3453 = vst.msk [vmem:[%s172 + $0x30] sm:$0xf] %vm3440, %v3196
      %3454 = vst.msk [vmem:[%s172 + $0x34] sm:$0xf] %vm3440, %v3197
      %3455 = vst.msk [vmem:[%s172 + $0x38] sm:$0xf] %vm3440, %v3198
      %3456 = vst.msk [vmem:[%s172 + $0x3c] sm:$0xf] %vm3440, %v3199
      %3457 = vst.msk [vmem:[%s172 + $0x40] sm:$0xf] %vm3440, %v3200
      %3458 = vst.msk [vmem:[%s172 + $0x44] sm:$0xf] %vm3440, %v3201
      %3459 = vst.msk [vmem:[%s172 + $0x48] sm:$0xf] %vm3440, %v3202
      %3460 = vst.msk [vmem:[%s172 + $0x4c] sm:$0xf] %vm3440, %v3203
      %3461 = vst.msk [vmem:[%s172 + $0x50] sm:$0xf] %vm3440, %v3204
      %3462 = vst.msk [vmem:[%s172 + $0x54] sm:$0xf] %vm3440, %v3205
      %3463 = vst.msk [vmem:[%s172 + $0x58] sm:$0xf] %vm3440, %v3206
      %3464 = vst.msk [vmem:[%s172 + $0x5c] sm:$0xf] %vm3440, %v3207
      %3465 = vst.msk [vmem:[%s172 + $0x60] sm:$0xf] %vm3440, %v3208
      %3466 = vst.msk [vmem:[%s172 + $0x64] sm:$0xf] %vm3440, %v3209
      %3467 = vst.msk [vmem:[%s172 + $0x68] sm:$0xf] %vm3440, %v3210
      %3468 = vst.msk [vmem:[%s172 + $0x6c] sm:$0xf] %vm3440, %v3211
      %3469 = vst.msk [vmem:[%s172 + $0x70] sm:$0xf] %vm3440, %v3212
      %3470 = vst.msk [vmem:[%s172 + $0x74] sm:$0xf] %vm3440, %v3213
      %3471 = vst.msk [vmem:[%s172 + $0x78] sm:$0xf] %vm3440, %v3214
      %3472 = vst.msk [vmem:[%s172 + $0x7c] sm:$0xf] %vm3440, %v3215
      %3473 = vst.msk [vmem:[%s172 + $0x80] sm:$0xf] %vm3440, %v3216
      %3474 = vst.msk [vmem:[%s172 + $0x84] sm:$0xf] %vm3440, %v3217
      %3475 = vst.msk [vmem:[%s172 + $0x88] sm:$0xf] %vm3440, %v3218
      %3476 = vst.msk [vmem:[%s172 + $0x8c] sm:$0xf] %vm3440, %v3219
      %3477 = vst.msk [vmem:[%s172 + $0x90] sm:$0xf] %vm3440, %v3220
      %3478 = vst.msk [vmem:[%s172 + $0x94] sm:$0xf] %vm3440, %v3221
      %3479 = vst.msk [vmem:[%s172 + $0x98] sm:$0xf] %vm3440, %v3222
      %3480 = vst.msk [vmem:[%s172 + $0x9c] sm:$0xf] %vm3440, %v3223
      %3481 = vst.msk [vmem:[%s172 + $0xa0] sm:$0xf] %vm3440, %v3224
      %3482 = vst.msk [vmem:[%s172 + $0xa4] sm:$0xf] %vm3440, %v3225
      %3483 = vst.msk [vmem:[%s172 + $0xa8] sm:$0xf] %vm3440, %v3226
      %3484 = vst.msk [vmem:[%s172 + $0xac] sm:$0xf] %vm3440, %v3227
      %3485 = vst.msk [vmem:[%s172 + $0xb0] sm:$0xf] %vm3440, %v3228
      %3486 = vst.msk [vmem:[%s172 + $0xb4] sm:$0xf] %vm3440, %v3229
      %3487 = vst.msk [vmem:[%s172 + $0xb8] sm:$0xf] %vm3440, %v3230
      %3488 = vst.msk [vmem:[%s172 + $0xbc] sm:$0xf] %vm3440, %v3231
      %3489 = vst.msk [vmem:[%s172 + $0xc0] sm:$0xf] %vm3440, %v3232
      %3490 = vst.msk [vmem:[%s172 + $0xc4] sm:$0xf] %vm3440, %v3233
      %3491 = vst.msk [vmem:[%s172 + $0xc8] sm:$0xf] %vm3440, %v3234
      %3492 = vst.msk [vmem:[%s172 + $0xcc] sm:$0xf] %vm3440, %v3235
      %3493 = vst.msk [vmem:[%s172 + $0xd0] sm:$0xf] %vm3440, %v3236
      %3494 = vst.msk [vmem:[%s172 + $0xd4] sm:$0xf] %vm3440, %v3237
      %3495 = vst.msk [vmem:[%s172 + $0xd8] sm:$0xf] %vm3440, %v3238
      %3496 = vst.msk [vmem:[%s172 + $0xdc] sm:$0xf] %vm3440, %v3239
      %3497 = vst.msk [vmem:[%s172 + $0xe0] sm:$0xf] %vm3440, %v3240
      %3498 = vst.msk [vmem:[%s172 + $0xe4] sm:$0xf] %vm3440, %v3241
      %3499 = vst.msk [vmem:[%s172 + $0xe8] sm:$0xf] %vm3440, %v3242
      %3500 = vst.msk [vmem:[%s172 + $0xec] sm:$0xf] %vm3440, %v3243
      %3501 = vst.msk [vmem:[%s172 + $0xf0] sm:$0xf] %vm3440, %v3244
      %3502 = vst.msk [vmem:[%s172 + $0xf4] sm:$0xf] %vm3440, %v3245
      %3503 = vst.msk [vmem:[%s172 + $0xf8] sm:$0xf] %vm3440, %v3246
      %3504 = vst.msk [vmem:[%s172 + $0xfc] sm:$0xf] %vm3440, %v3247
      %3505 = vst.msk [vmem:[%s172 + $0x100] sm:$0xf] %vm3440, %v3248
      %3506 = vst.msk [vmem:[%s172 + $0x104] sm:$0xf] %vm3440, %v3249
      %3507 = vst.msk [vmem:[%s172 + $0x108] sm:$0xf] %vm3440, %v3250
      %3508 = vst.msk [vmem:[%s172 + $0x10c] sm:$0xf] %vm3440, %v3251
      %3509 = vst.msk [vmem:[%s172 + $0x110] sm:$0xf] %vm3440, %v3252
      %3510 = vst.msk [vmem:[%s172 + $0x114] sm:$0xf] %vm3440, %v3253
      %3511 = vst.msk [vmem:[%s172 + $0x118] sm:$0xf] %vm3440, %v3254
      %3512 = vst.msk [vmem:[%s172 + $0x11c] sm:$0xf] %vm3440, %v3255
      %3513 = vst.msk [vmem:[%s172 + $0x120] sm:$0xf] %vm3440, %v3256
      %3514 = vst.msk [vmem:[%s172 + $0x124] sm:$0xf] %vm3440, %v3257
      %3515 = vst.msk [vmem:[%s172 + $0x128] sm:$0xf] %vm3440, %v3258
      %3516 = vst.msk [vmem:[%s172 + $0x12c] sm:$0xf] %vm3440, %v3259
      %3517 = vst.msk [vmem:[%s172 + $0x130] sm:$0xf] %vm3440, %v3260
      %3518 = vst.msk [vmem:[%s172 + $0x134] sm:$0xf] %vm3440, %v3261
      %3519 = vst.msk [vmem:[%s172 + $0x138] sm:$0xf] %vm3440, %v3262
      %3520 = vst.msk [vmem:[%s172 + $0x13c] sm:$0xf] %vm3440, %v3263
      %3521 = vst.msk [vmem:[%s172 + $0x140] sm:$0xf] %vm3440, %v3264
      %3522 = vst.msk [vmem:[%s172 + $0x144] sm:$0xf] %vm3440, %v3265
      %3523 = vst.msk [vmem:[%s172 + $0x148] sm:$0xf] %vm3440, %v3266
      %3524 = vst.msk [vmem:[%s172 + $0x14c] sm:$0xf] %vm3440, %v3267
      %3525 = vst.msk [vmem:[%s172 + $0x150] sm:$0xf] %vm3440, %v3268
      %3526 = vst.msk [vmem:[%s172 + $0x154] sm:$0xf] %vm3440, %v3269
      %3527 = vst.msk [vmem:[%s172 + $0x158] sm:$0xf] %vm3440, %v3270
      %3528 = vst.msk [vmem:[%s172 + $0x15c] sm:$0xf] %vm3440, %v3271
      %3529 = vst.msk [vmem:[%s172 + $0x160] sm:$0xf] %vm3440, %v3272
      %3530 = vst.msk [vmem:[%s172 + $0x164] sm:$0xf] %vm3440, %v3273
      %3531 = vst.msk [vmem:[%s172 + $0x168] sm:$0xf] %vm3440, %v3274
      %3532 = vst.msk [vmem:[%s172 + $0x16c] sm:$0xf] %vm3440, %v3275
      %3533 = vst.msk [vmem:[%s172 + $0x170] sm:$0xf] %vm3440, %v3276
      %3534 = vst.msk [vmem:[%s172 + $0x174] sm:$0xf] %vm3440, %v3277
      %3535 = vst.msk [vmem:[%s172 + $0x178] sm:$0xf] %vm3440, %v3278
      %3536 = vst.msk [vmem:[%s172 + $0x17c] sm:$0xf] %vm3440, %v3279
      %3537 = vst.msk [vmem:[%s172 + $0x180] sm:$0xf] %vm3440, %v3280
      %3538 = vst.msk [vmem:[%s172 + $0x184] sm:$0xf] %vm3440, %v3281
      %3539 = vst.msk [vmem:[%s172 + $0x188] sm:$0xf] %vm3440, %v3282
      %3540 = vst.msk [vmem:[%s172 + $0x18c] sm:$0xf] %vm3440, %v3283
      %3541 = vst.msk [vmem:[%s172 + $0x190] sm:$0xf] %vm3440, %v3284
      %3542 = vst.msk [vmem:[%s172 + $0x194] sm:$0xf] %vm3440, %v3285
      %3543 = vst.msk [vmem:[%s172 + $0x198] sm:$0xf] %vm3440, %v3286
      %3544 = vst.msk [vmem:[%s172 + $0x19c] sm:$0xf] %vm3440, %v3287
      %3545 = vst.msk [vmem:[%s172 + $0x1a0] sm:$0xf] %vm3440, %v3288
      %3546 = vst.msk [vmem:[%s172 + $0x1a4] sm:$0xf] %vm3440, %v3289
      %3547 = vst.msk [vmem:[%s172 + $0x1a8] sm:$0xf] %vm3440, %v3290
      %3548 = vst.msk [vmem:[%s172 + $0x1ac] sm:$0xf] %vm3440, %v3291
      %3549 = vst.msk [vmem:[%s172 + $0x1b0] sm:$0xf] %vm3440, %v3292
      %3550 = vst.msk [vmem:[%s172 + $0x1b4] sm:$0xf] %vm3440, %v3293
      %3551 = vst.msk [vmem:[%s172 + $0x1b8] sm:$0xf] %vm3440, %v3294
      %3552 = vst.msk [vmem:[%s172 + $0x1bc] sm:$0xf] %vm3440, %v3295
      %3553 = vst.msk [vmem:[%s172 + $0x1c0] sm:$0xf] %vm3440, %v3296
      %3554 = vst.msk [vmem:[%s172 + $0x1c4] sm:$0xf] %vm3440, %v3297
      %3555 = vst.msk [vmem:[%s172 + $0x1c8] sm:$0xf] %vm3440, %v3298
      %3556 = vst.msk [vmem:[%s172 + $0x1cc] sm:$0xf] %vm3440, %v3299
      %3557 = vst.msk [vmem:[%s172 + $0x1d0] sm:$0xf] %vm3440, %v3300
      %3558 = vst.msk [vmem:[%s172 + $0x1d4] sm:$0xf] %vm3440, %v3301
      %3559 = vst.msk [vmem:[%s172 + $0x1d8] sm:$0xf] %vm3440, %v3302
      %3560 = vst.msk [vmem:[%s172 + $0x1dc] sm:$0xf] %vm3440, %v3303
      %3561 = vst.msk [vmem:[%s172 + $0x1e0] sm:$0xf] %vm3440, %v3304
      %3562 = vst.msk [vmem:[%s172 + $0x1e4] sm:$0xf] %vm3440, %v3305
      %3563 = vst.msk [vmem:[%s172 + $0x1e8] sm:$0xf] %vm3440, %v3306
      %3564 = vst.msk [vmem:[%s172 + $0x1ec] sm:$0xf] %vm3440, %v3307
      %3565 = vst.msk [vmem:[%s172 + $0x1f0] sm:$0xf] %vm3440, %v3308
      %3566 = vst.msk [vmem:[%s172 + $0x1f4] sm:$0xf] %vm3440, %v3309
      %3567 = vst.msk [vmem:[%s172 + $0x1f8] sm:$0xf] %vm3440, %v3310
      %3568 = vst.msk [vmem:[%s172 + $0x1fc] sm:$0xf] %vm3440, %v3311
      %s3569 = smul.u32 128, %s14
      %p3570 = scmp.lt.s32.totalorder %s3569, 255
      %s3571 = scalar_select %p3570, %s3569, 255
      %s3572 = smul.addr %s3571, 4
      %s3573 = scalar_lea.vmem %s3, %s3572
      // Predicated region
      $region33: #{forward.4} parent=31 // pred_check
        %p3574 = pneg %p100
      $region34: #{forward.4} parent=31 // pred_check_branch
        %3576 = sbr.rel (%p3574) target = $region36
      $region35: #{forward.4} parent=31 // pred_region
        %s3577 = smul.u32 128, %s14
      $region36: #{forward.4} parent=31 // pred_fallthru
        _
    $region32: #{forward.4} parent=5 // pred_fallthru
      _
    %p3578 = scmp.le.s32.totalorder 2, %s9
    // Predicated region
    $region37: #{forward.4} parent=5 // pred_check
      %p3579 = pneg %p3578
    $region38: #{forward.4} parent=5 // pred_check_branch
      %3581 = sbr.rel (%p3579) target = $region40
    $region39: #{forward.4} parent=5 // pred_region
      %s3582 = ssub.s32 %s9, 2
      // Predicated region
      $region41: #{forward.4} parent=39 // pred_check
        %p3583 = pneg %p106
      $region42: #{forward.4} parent=39 // pred_check_branch
        %3585 = sbr.rel (%p3583) target = $region44
      $region43: #{forward.4} parent=39 // pred_region
        %s3586 = smul.u32 128, %s15
        %p3587 = scmp.lt.s32.totalorder %s3586, 255
        %s3588 = scalar_select %p3587, %s3586, 255
        %s3589 = smul.addr %s3588, 4
        %s3590 = scalar_lea.vmem %s3, %s3589
      $region44: #{forward.4} parent=39 // pred_fallthru
        _
    $region40: #{forward.4} parent=5 // pred_fallthru
      _
  $region6: #{forward.4} parent=0 // loop_footer
    %s13 = sadd.s32 1, %s9
  $region7: #{forward.4} parent=0 // loop_footer_branch
    %8 = sbr.rel target = $region3
  $region8: #{forward.4} parent=0 // loop_exit
    _

// kernel: forward.5
$region0: #{forward.5}
  #allocation0 [shape = 'u32[]', space=smem, size = 0x4, offset = 0x4, fixed_abs, tag = 'smem constant byte address 0x4 - core index']
  #allocation1 [shape = 'u32[144,128]{1,0:T(1,128)}', space=vmem, size = 0x12000, scoped, tag = 'internal scratch']
  %s0 = inlined_call_operand.vmem [shape: bf16[512,512], index: 0, kind: input, shape index: {}]
  %s1 = inlined_call_operand.vmem [shape: bf16[512,256], index: 1, kind: input, shape index: {}]
  %s2 = inlined_call_operand.vmem [shape: f32[1,64], index: 2, kind: input, shape index: {}]
  %s3 = inlined_call_operand.vmem [shape: bf16[512,64], index: 3, kind: output, shape index: {}]
  %s4 = sld [smem:[#allocation0]]
  $region45: #{forward.5} parent=0
    _
  %s6 = ssub.s32 1, %s4
  %s7 = scalar_select 0, %s6, %s4
  loop: start=0, step=1, limit=4
  $region2: #{forward.5} parent=0 // loop_pre_header
    _
  $region3: #{forward.5} parent=0 // loop_header
    %s9 = sphi 0, %s13
    %p10 = scmp.ge.s32.totalorder %s9, 4
    %s19 = sphi 0, %s21
    %s22 = sphi 0, %s19
    %s23 = sphi 0, %s22
    %s39 = sphi 0, %s23
    %s43 = sphi 0, %s43
    %s45 = sphi 0, %s43
    %s46 = sphi 0, %s45
    %s60 = sphi 0, %s46
    %s64 = sphi 0, %s64
    %s66 = sphi 0, %s64
    %s67 = sphi 0, %s66
    %s81 = sphi 0, %s67
    %s87 = sphi 0, %s89
    %s90 = sphi 0, %s87
    %s91 = sphi 0, %s90
    %s107 = sphi 0, %s91
  $region4: #{forward.5} parent=0 // loop_header_branch
    %12 = sbr.rel (%p10) target = $region8
  $region5: #{forward.5} parent=0 // loop_body
    %s14 = ssub.s32 %s9, 1
    %s15 = ssub.s32 %s9, 2
    %s16 = sadd.s32 %s9, 1
    %s17 = ssub.s32 %s9, %s16
    %p18 = scmp.eq.s32.totalorder %s17, 0
    %s20 = sadd.s32 %s19, 1
    %s21 = scalar_select %p18, %s19, %s20
    %p24 = pneg %p18
    %p25 = scmp.eq.s32.totalorder %s9, 1
    %p26 = por %p24, %p25
    %p27 = scmp.ne.s32.totalorder %s19, %s22
    %p28 = scmp.eq.s32.totalorder %s9, 0
    %p29 = por %p27, %p28
    %p30 = scmp.ne.s32.totalorder %s19, %s22
    %p31 = scmp.eq.s32.totalorder %s14, 1
    %p32 = por %p30, %p31
    %p33 = scmp.ne.s32.totalorder %s22, %s23
    %p34 = scmp.eq.s32.totalorder %s14, 0
    %p35 = por %p33, %p34
    %p36 = scmp.ne.s32.totalorder %s22, %s23
    %p37 = scmp.eq.s32.totalorder %s15, 1
    %p38 = por %p36, %p37
    %p40 = scmp.ne.s32.totalorder %s23, %s39
    %p41 = scmp.eq.s32.totalorder %s15, 0
    %p42 = por %p40, %p41
    %s44 = sadd.s32 %s43, 1
    %p47 = scmp.eq.s32.totalorder %s9, 1
    %p48 = scmp.ne.s32.totalorder %s43, %s45
    %p49 = scmp.eq.s32.totalorder %s9, 0
    %p50 = por %p48, %p49
    %p51 = scmp.ne.s32.totalorder %s43, %s45
    %p52 = scmp.eq.s32.totalorder %s14, 1
    %p53 = por %p51, %p52
    %p54 = scmp.ne.s32.totalorder %s45, %s46
    %p55 = scmp.eq.s32.totalorder %s14, 0
    %p56 = por %p54, %p55
    %p57 = scmp.ne.s32.totalorder %s45, %s46
    %p58 = scmp.eq.s32.totalorder %s15, 1
    %p59 = por %p57, %p58
    %p61 = scmp.ne.s32.totalorder %s46, %s60
    %p62 = scmp.eq.s32.totalorder %s15, 0
    %p63 = por %p61, %p62
    %s65 = sadd.s32 %s64, 1
    %p68 = scmp.eq.s32.totalorder %s9, 1
    %p69 = scmp.ne.s32.totalorder %s64, %s66
    %p70 = scmp.eq.s32.totalorder %s9, 0
    %p71 = por %p69, %p70
    %p72 = scmp.ne.s32.totalorder %s64, %s66
    %p73 = scmp.eq.s32.totalorder %s14, 1
    %p74 = por %p72, %p73
    %p75 = scmp.ne.s32.totalorder %s66, %s67
    %p76 = scmp.eq.s32.totalorder %s14, 0
    %p77 = por %p75, %p76
    %p78 = scmp.ne.s32.totalorder %s66, %s67
    %p79 = scmp.eq.s32.totalorder %s15, 1
    %p80 = por %p78, %p79
    %p82 = scmp.ne.s32.totalorder %s67, %s81
    %p83 = scmp.eq.s32.totalorder %s15, 0
    %p84 = por %p82, %p83
    %s85 = ssub.s32 %s9, %s16
    %p86 = scmp.eq.s32.totalorder %s85, 0
    %s88 = sadd.s32 %s87, 1
    %s89 = scalar_select %p86, %s87, %s88
    %p92 = pneg %p86
    %p93 = scmp.eq.s32.totalorder %s9, 1
    %p94 = por %p92, %p93
    %p95 = scmp.ne.s32.totalorder %s87, %s90
    %p96 = scmp.eq.s32.totalorder %s9, 0
    %p97 = por %p95, %p96
    %p98 = scmp.ne.s32.totalorder %s87, %s90
    %p99 = scmp.eq.s32.totalorder %s14, 1
    %p100 = por %p98, %p99
    %p101 = scmp.ne.s32.totalorder %s90, %s91
    %p102 = scmp.eq.s32.totalorder %s14, 0
    %p103 = por %p101, %p102
    %p104 = scmp.ne.s32.totalorder %s90, %s91
    %p105 = scmp.eq.s32.totalorder %s15, 1
    %p106 = por %p104, %p105
    %p108 = scmp.ne.s32.totalorder %s91, %s107
    %p109 = scmp.eq.s32.totalorder %s15, 0
    %p110 = por %p108, %p109
    %p111 = scmp.le.s32.totalorder 1, %s9
    %p112 = scmp.lt.s32.totalorder %s9, 3
    %p113 = pnand %p111, %p112
    %p114 = pneg %p113
    // Predicated region
    $region9: #{forward.5} parent=5 // pred_check
      _
    $region10: #{forward.5} parent=5 // pred_check_branch
      %116 = sbr.rel (%p113) target = $region12
    $region11: #{forward.5} parent=5 // pred_region
      %s117 = ssub.s32 %s9, 1
      // Predicated region
      $region13: #{forward.5} parent=11 // pred_check
        %p118 = pneg %p56
      $region14: #{forward.5} parent=11 // pred_check_branch
        %120 = sbr.rel (%p118) target = $region16
      $region15: #{forward.5} parent=11 // pred_region
        _
      $region16: #{forward.5} parent=11 // pred_fallthru
        _
      // Predicated region
      $region17: #{forward.5} parent=11 // pred_check
        %p121 = pneg %p77
      $region18: #{forward.5} parent=11 // pred_check_branch
        %123 = sbr.rel (%p121) target = $region20
      $region19: #{forward.5} parent=11 // pred_region
        _
      $region20: #{forward.5} parent=11 // pred_fallthru
        _
    $region12: #{forward.5} parent=5 // pred_fallthru
      _
    %p124 = scmp.lt.s32.totalorder %s9, 2
    // Predicated region
    $region21: #{forward.5} parent=5 // pred_check
      %p125 = pneg %p124
    $region22: #{forward.5} parent=5 // pred_check_branch
      %127 = sbr.rel (%p125) target = $region24
    $region23: #{forward.5} parent=5 // pred_region
      // Predicated region
      $region25: #{forward.5} parent=23 // pred_check
        %p128 = pneg %p29
      $region26: #{forward.5} parent=23 // pred_check_branch
        %130 = sbr.rel (%p128) target = $region28
      $region27: #{forward.5} parent=23 // pred_region
        %s131 = smul.u32 32, %s9
        %p132 = scmp.lt.s32.totalorder %s131, 63
        %s133 = scalar_select %p132, %s131, 63
        %s134 = smul.addr %s133, 4
        %s135 = smul.addr %s134, 4
        %s136 = scalar_lea.vmem %s0, %s135
        %s137 = smul.u32 32, %s9
      $region28: #{forward.5} parent=23 // pred_fallthru
        _
    $region24: #{forward.5} parent=5 // pred_fallthru
      _
    %p138 = scmp.le.s32.totalorder 1, %s9
    %p139 = scmp.lt.s32.totalorder %s9, 3
    %p140 = pnand %p138, %p139
    %p141 = pneg %p140
    // Predicated region
    $region29: #{forward.5} parent=5 // pred_check
      _
    $region30: #{forward.5} parent=5 // pred_check_branch
      %143 = sbr.rel (%p140) target = $region32
    $region31: #{forward.5} parent=5 // pred_region
      %s144 = ssub.s32 %s9, 1
      %s145 = smul.u32 32, %s14
      %p146 = scmp.lt.s32.totalorder %s145, 63
      %s147 = scalar_select %p146, %s145, 63
      %s148 = smul.addr %s147, 4
      %s149 = smul.addr %s148, 4
      %s150 = scalar_lea.vmem %s0, %s149
      %p151 = pneg %p35
      %p152 = pneg %p32
      %p153 = pneg %p56
      %p154 = pneg %p53
      %p155 = pneg %p77
      %p156 = pneg %p74
      %p157 = pneg %p103
      %p158 = pneg %p100
      %s159 = smul.u32 32, %s14
      %p160 = scmp.lt.s32.totalorder %s159, 63
      %s161 = scalar_select %p160, %s159, 63
      %s162 = smul.addr %s161, 4
      %s163 = scalar_lea.vmem %s3, %s162
      %s164 = smul.u32 32, %s14
      %p165 = scmp.lt.s32.totalorder %s164, 63
      %s166 = scalar_select %p165, %s164, 63
      %s167 = smul.addr %s166, 4
      %s168 = smul.addr %s167, 4
      %s169 = scalar_lea.vmem %s0, %s168
      %s170 = smul.u32 32, %s14
      %s171 = smul.u32 32, %s14
      %p172 = scmp.lt.s32.totalorder %s171, 63
      %s173 = scalar_select %p172, %s171, 63
      %s174 = smul.addr %s173, 4
      %s175 = scalar_lea.vmem %s3, %s174
      %s176 = smul.u32 32, %s14
      %v177 = vld [vmem:[%s169] sm:$0xff]
      %v178 = vld [vmem:[%s169 + $0x8] sm:$0xff]
      %v179 = vld [vmem:[%s169 + $0x10] sm:$0xff]
      %v180 = vld [vmem:[%s169 + $0x18] sm:$0xff]
      %v181 = vld [vmem:[%s169 + $0x20] sm:$0xff]
      %v182 = vld [vmem:[%s169 + $0x28] sm:$0xff]
      %v183 = vld [vmem:[%s169 + $0x30] sm:$0xff]
      %v184 = vld [vmem:[%s169 + $0x38] sm:$0xff]
      %v185 = vld [vmem:[%s169 + $0x40] sm:$0xff]
      %v186 = vld [vmem:[%s169 + $0x48] sm:$0xff]
      %v187 = vld [vmem:[%s169 + $0x50] sm:$0xff]
      %v188 = vld [vmem:[%s169 + $0x58] sm:$0xff]
      %v189 = vld [vmem:[%s169 + $0x60] sm:$0xff]
      %v190 = vld [vmem:[%s169 + $0x68] sm:$0xff]
      %v191 = vld [vmem:[%s169 + $0x70] sm:$0xff]
      %v192 = vld [vmem:[%s169 + $0x78] sm:$0xff]
      %v193 = vld [vmem:[%s169 + $0x80] sm:$0xff]
      %v194 = vld [vmem:[%s169 + $0x88] sm:$0xff]
      %v195 = vld [vmem:[%s169 + $0x90] sm:$0xff]
      %v196 = vld [vmem:[%s169 + $0x98] sm:$0xff]
      %v197 = vld [vmem:[%s169 + $0xa0] sm:$0xff]
      %v198 = vld [vmem:[%s169 + $0xa8] sm:$0xff]
      %v199 = vld [vmem:[%s169 + $0xb0] sm:$0xff]
      %v200 = vld [vmem:[%s169 + $0xb8] sm:$0xff]
      %v201 = vld [vmem:[%s169 + $0xc0] sm:$0xff]
      %v202 = vld [vmem:[%s169 + $0xc8] sm:$0xff]
      %v203 = vld [vmem:[%s169 + $0xd0] sm:$0xff]
      %v204 = vld [vmem:[%s169 + $0xd8] sm:$0xff]
      %v205 = vld [vmem:[%s169 + $0xe0] sm:$0xff]
      %v206 = vld [vmem:[%s169 + $0xe8] sm:$0xff]
      %v207 = vld [vmem:[%s169 + $0xf0] sm:$0xff]
      %v208 = vld [vmem:[%s169 + $0xf8] sm:$0xff]
      %v209 = vld [vmem:[%s169 + $0x100] sm:$0xff]
      %v210 = vld [vmem:[%s169 + $0x108] sm:$0xff]
      %v211 = vld [vmem:[%s169 + $0x110] sm:$0xff]
      %v212 = vld [vmem:[%s169 + $0x118] sm:$0xff]
      %v213 = vld [vmem:[%s169 + $0x120] sm:$0xff]
      %v214 = vld [vmem:[%s169 + $0x128] sm:$0xff]
      %v215 = vld [vmem:[%s169 + $0x130] sm:$0xff]
      %v216 = vld [vmem:[%s169 + $0x138] sm:$0xff]
      %v217 = vld [vmem:[%s169 + $0x140] sm:$0xff]
      %v218 = vld [vmem:[%s169 + $0x148] sm:$0xff]
      %v219 = vld [vmem:[%s169 + $0x150] sm:$0xff]
      %v220 = vld [vmem:[%s169 + $0x158] sm:$0xff]
      %v221 = vld [vmem:[%s169 + $0x160] sm:$0xff]
      %v222 = vld [vmem:[%s169 + $0x168] sm:$0xff]
      %v223 = vld [vmem:[%s169 + $0x170] sm:$0xff]
      %v224 = vld [vmem:[%s169 + $0x178] sm:$0xff]
      %v225 = vld [vmem:[%s169 + $0x180] sm:$0xff]
      %v226 = vld [vmem:[%s169 + $0x188] sm:$0xff]
      %v227 = vld [vmem:[%s169 + $0x190] sm:$0xff]
      %v228 = vld [vmem:[%s169 + $0x198] sm:$0xff]
      %v229 = vld [vmem:[%s169 + $0x1a0] sm:$0xff]
      %v230 = vld [vmem:[%s169 + $0x1a8] sm:$0xff]
      %v231 = vld [vmem:[%s169 + $0x1b0] sm:$0xff]
      %v232 = vld [vmem:[%s169 + $0x1b8] sm:$0xff]
      %v233 = vld [vmem:[%s169 + $0x1c0] sm:$0xff]
      %v234 = vld [vmem:[%s169 + $0x1c8] sm:$0xff]
      %v235 = vld [vmem:[%s169 + $0x1d0] sm:$0xff]
      %v236 = vld [vmem:[%s169 + $0x1d8] sm:$0xff]
      %v237 = vld [vmem:[%s169 + $0x1e0] sm:$0xff]
      %v238 = vld [vmem:[%s169 + $0x1e8] sm:$0xff]
      %v239 = vld [vmem:[%s169 + $0x1f0] sm:$0xff]
      %v240 = vld [vmem:[%s169 + $0x1f8] sm:$0xff]
      %v241 = vld [vmem:[%s1] sm:$0xff]
      %v242 = vld [vmem:[%s1 + $0x8] sm:$0xff]
      %v243 = vld [vmem:[%s1 + $0x10] sm:$0xff]
      %v244 = vld [vmem:[%s1 + $0x18] sm:$0xff]
      %v245 = vld [vmem:[%s1 + $0x20] sm:$0xff]
      %v246 = vld [vmem:[%s1 + $0x28] sm:$0xff]
      %v247 = vld [vmem:[%s1 + $0x30] sm:$0xff]
      %v248 = vld [vmem:[%s1 + $0x38] sm:$0xff]
      %v249 = vld [vmem:[%s1 + $0x40] sm:$0xff]
      %v250 = vld [vmem:[%s1 + $0x48] sm:$0xff]
      %v251 = vld [vmem:[%s1 + $0x50] sm:$0xff]
      %v252 = vld [vmem:[%s1 + $0x58] sm:$0xff]
      %v253 = vld [vmem:[%s1 + $0x60] sm:$0xff]
      %v254 = vld [vmem:[%s1 + $0x68] sm:$0xff]
      %v255 = vld [vmem:[%s1 + $0x70] sm:$0xff]
      %v256 = vld [vmem:[%s1 + $0x78] sm:$0xff]
      %v257 = vld [vmem:[%s1 + $0x80] sm:$0xff]
      %v258 = vld [vmem:[%s1 + $0x88] sm:$0xff]
      %v259 = vld [vmem:[%s1 + $0x90] sm:$0xff]
      %v260 = vld [vmem:[%s1 + $0x98] sm:$0xff]
      %v261 = vld [vmem:[%s1 + $0xa0] sm:$0xff]
      %v262 = vld [vmem:[%s1 + $0xa8] sm:$0xff]
      %v263 = vld [vmem:[%s1 + $0xb0] sm:$0xff]
      %v264 = vld [vmem:[%s1 + $0xb8] sm:$0xff]
      %v265 = vld [vmem:[%s1 + $0xc0] sm:$0xff]
      %v266 = vld [vmem:[%s1 + $0xc8] sm:$0xff]
      %v267 = vld [vmem:[%s1 + $0xd0] sm:$0xff]
      %v268 = vld [vmem:[%s1 + $0xd8] sm:$0xff]
      %v269 = vld [vmem:[%s1 + $0xe0] sm:$0xff]
      %v270 = vld [vmem:[%s1 + $0xe8] sm:$0xff]
      %v271 = vld [vmem:[%s1 + $0xf0] sm:$0xff]
      %v272 = vld [vmem:[%s1 + $0xf8] sm:$0xff]
      %v273 = vld [vmem:[%s1 + $0x100] sm:$0xff]
      %v274 = vld [vmem:[%s1 + $0x108] sm:$0xff]
      %v275 = vld [vmem:[%s1 + $0x110] sm:$0xff]
      %v276 = vld [vmem:[%s1 + $0x118] sm:$0xff]
      %v277 = vld [vmem:[%s1 + $0x120] sm:$0xff]
      %v278 = vld [vmem:[%s1 + $0x128] sm:$0xff]
      %v279 = vld [vmem:[%s1 + $0x130] sm:$0xff]
      %v280 = vld [vmem:[%s1 + $0x138] sm:$0xff]
      %v281 = vld [vmem:[%s1 + $0x140] sm:$0xff]
      %v282 = vld [vmem:[%s1 + $0x148] sm:$0xff]
      %v283 = vld [vmem:[%s1 + $0x150] sm:$0xff]
      %v284 = vld [vmem:[%s1 + $0x158] sm:$0xff]
      %v285 = vld [vmem:[%s1 + $0x160] sm:$0xff]
      %v286 = vld [vmem:[%s1 + $0x168] sm:$0xff]
      %v287 = vld [vmem:[%s1 + $0x170] sm:$0xff]
      %v288 = vld [vmem:[%s1 + $0x178] sm:$0xff]
      %v289 = vld [vmem:[%s1 + $0x180] sm:$0xff]
      %v290 = vld [vmem:[%s1 + $0x188] sm:$0xff]
      %v291 = vld [vmem:[%s1 + $0x190] sm:$0xff]
      %v292 = vld [vmem:[%s1 + $0x198] sm:$0xff]
      %v293 = vld [vmem:[%s1 + $0x1a0] sm:$0xff]
      %v294 = vld [vmem:[%s1 + $0x1a8] sm:$0xff]
      %v295 = vld [vmem:[%s1 + $0x1b0] sm:$0xff]
      %v296 = vld [vmem:[%s1 + $0x1b8] sm:$0xff]
      %v297 = vld [vmem:[%s1 + $0x1c0] sm:$0xff]
      %v298 = vld [vmem:[%s1 + $0x1c8] sm:$0xff]
      %v299 = vld [vmem:[%s1 + $0x1d0] sm:$0xff]
      %v300 = vld [vmem:[%s1 + $0x1d8] sm:$0xff]
      %v301 = vld [vmem:[%s1 + $0x1e0] sm:$0xff]
      %v302 = vld [vmem:[%s1 + $0x1e8] sm:$0xff]
      %v303 = vld [vmem:[%s1 + $0x1f0] sm:$0xff]
      %v304 = vld [vmem:[%s1 + $0x1f8] sm:$0xff]
      %v369 = vunpack.c.l.b16 %v177
      %v370 = vunpack.c.h.b16 %v177
      %v371 = vunpack.c.l.b16 %v178
      %v372 = vunpack.c.h.b16 %v178
      %v373 = vunpack.c.l.b16 %v179
      %v374 = vunpack.c.h.b16 %v179
      %v375 = vunpack.c.l.b16 %v180
      %v376 = vunpack.c.h.b16 %v180
      %v377 = vunpack.c.l.b16 %v181
      %v378 = vunpack.c.h.b16 %v181
      %v379 = vunpack.c.l.b16 %v182
      %v380 = vunpack.c.h.b16 %v182
      %v381 = vunpack.c.l.b16 %v183
      %v382 = vunpack.c.h.b16 %v183
      %v383 = vunpack.c.l.b16 %v184
      %v384 = vunpack.c.h.b16 %v184
      %v385 = vunpack.c.l.b16 %v185
      %v386 = vunpack.c.h.b16 %v185
      %v387 = vunpack.c.l.b16 %v186
      %v388 = vunpack.c.h.b16 %v186
      %v389 = vunpack.c.l.b16 %v187
      %v390 = vunpack.c.h.b16 %v187
      %v391 = vunpack.c.l.b16 %v188
      %v392 = vunpack.c.h.b16 %v188
      %v393 = vunpack.c.l.b16 %v189
      %v394 = vunpack.c.h.b16 %v189
      %v395 = vunpack.c.l.b16 %v190
      %v396 = vunpack.c.h.b16 %v190
      %v397 = vunpack.c.l.b16 %v191
      %v398 = vunpack.c.h.b16 %v191
      %v399 = vunpack.c.l.b16 %v192
      %v400 = vunpack.c.h.b16 %v192
      %v401 = vunpack.c.l.b16 %v193
      %v402 = vunpack.c.h.b16 %v193
      %v403 = vunpack.c.l.b16 %v194
      %v404 = vunpack.c.h.b16 %v194
      %v405 = vunpack.c.l.b16 %v195
      %v406 = vunpack.c.h.b16 %v195
      %v407 = vunpack.c.l.b16 %v196
      %v408 = vunpack.c.h.b16 %v196
      %v409 = vunpack.c.l.b16 %v197
      %v410 = vunpack.c.h.b16 %v197
      %v411 = vunpack.c.l.b16 %v198
      %v412 = vunpack.c.h.b16 %v198
      %v413 = vunpack.c.l.b16 %v199
      %v414 = vunpack.c.h.b16 %v199
      %v415 = vunpack.c.l.b16 %v200
      %v416 = vunpack.c.h.b16 %v200
      %v417 = vunpack.c.l.b16 %v201
      %v418 = vunpack.c.h.b16 %v201
      %v419 = vunpack.c.l.b16 %v202
      %v420 = vunpack.c.h.b16 %v202
      %v421 = vunpack.c.l.b16 %v203
      %v422 = vunpack.c.h.b16 %v203
      %v423 = vunpack.c.l.b16 %v204
      %v424 = vunpack.c.h.b16 %v204
      %v425 = vunpack.c.l.b16 %v205
      %v426 = vunpack.c.h.b16 %v205
      %v427 = vunpack.c.l.b16 %v206
      %v428 = vunpack.c.h.b16 %v206
      %v429 = vunpack.c.l.b16 %v207
      %v430 = vunpack.c.h.b16 %v207
      %v431 = vunpack.c.l.b16 %v208
      %v432 = vunpack.c.h.b16 %v208
      %v433 = vunpack.c.l.b16 %v209
      %v434 = vunpack.c.h.b16 %v209
      %v435 = vunpack.c.l.b16 %v210
      %v436 = vunpack.c.h.b16 %v210
      %v437 = vunpack.c.l.b16 %v211
      %v438 = vunpack.c.h.b16 %v211
      %v439 = vunpack.c.l.b16 %v212
      %v440 = vunpack.c.h.b16 %v212
      %v441 = vunpack.c.l.b16 %v213
      %v442 = vunpack.c.h.b16 %v213
      %v443 = vunpack.c.l.b16 %v214
      %v444 = vunpack.c.h.b16 %v214
      %v445 = vunpack.c.l.b16 %v215
      %v446 = vunpack.c.h.b16 %v215
      %v447 = vunpack.c.l.b16 %v216
      %v448 = vunpack.c.h.b16 %v216
      %v449 = vunpack.c.l.b16 %v217
      %v450 = vunpack.c.h.b16 %v217
      %v451 = vunpack.c.l.b16 %v218
      %v452 = vunpack.c.h.b16 %v218
      %v453 = vunpack.c.l.b16 %v219
      %v454 = vunpack.c.h.b16 %v219
      %v455 = vunpack.c.l.b16 %v220
      %v456 = vunpack.c.h.b16 %v220
      %v457 = vunpack.c.l.b16 %v221
      %v458 = vunpack.c.h.b16 %v221
      %v459 = vunpack.c.l.b16 %v222
      %v460 = vunpack.c.h.b16 %v222
      %v461 = vunpack.c.l.b16 %v223
      %v462 = vunpack.c.h.b16 %v223
      %v463 = vunpack.c.l.b16 %v224
      %v464 = vunpack.c.h.b16 %v224
      %v465 = vunpack.c.l.b16 %v225
      %v466 = vunpack.c.h.b16 %v225
      %v467 = vunpack.c.l.b16 %v226
      %v468 = vunpack.c.h.b16 %v226
      %v469 = vunpack.c.l.b16 %v227
      %v470 = vunpack.c.h.b16 %v227
      %v471 = vunpack.c.l.b16 %v228
      %v472 = vunpack.c.h.b16 %v228
      %v473 = vunpack.c.l.b16 %v229
      %v474 = vunpack.c.h.b16 %v229
      %v475 = vunpack.c.l.b16 %v230
      %v476 = vunpack.c.h.b16 %v230
      %v477 = vunpack.c.l.b16 %v231
      %v478 = vunpack.c.h.b16 %v231
      %v479 = vunpack.c.l.b16 %v232
      %v480 = vunpack.c.h.b16 %v232
      %v481 = vunpack.c.l.b16 %v233
      %v482 = vunpack.c.h.b16 %v233
      %v483 = vunpack.c.l.b16 %v234
      %v484 = vunpack.c.h.b16 %v234
      %v485 = vunpack.c.l.b16 %v235
      %v486 = vunpack.c.h.b16 %v235
      %v487 = vunpack.c.l.b16 %v236
      %v488 = vunpack.c.h.b16 %v236
      %v489 = vunpack.c.l.b16 %v237
      %v490 = vunpack.c.h.b16 %v237
      %v491 = vunpack.c.l.b16 %v238
      %v492 = vunpack.c.h.b16 %v238
      %v493 = vunpack.c.l.b16 %v239
      %v494 = vunpack.c.h.b16 %v239
      %v495 = vunpack.c.l.b16 %v240
      %v496 = vunpack.c.h.b16 %v240
      %v497 = vpack.c.b16 %v373, %v369
      %v498 = vpack.c.b16 %v374, %v370
      %v499 = vpack.c.b16 %v375, %v371
      %v500 = vpack.c.b16 %v376, %v372
      %v501 = vpack.c.b16 %v381, %v377
      %v502 = vpack.c.b16 %v382, %v378
      %v503 = vpack.c.b16 %v383, %v379
      %v504 = vpack.c.b16 %v384, %v380
      %v505 = vpack.c.b16 %v389, %v385
      %v506 = vpack.c.b16 %v390, %v386
      %v507 = vpack.c.b16 %v391, %v387
      %v508 = vpack.c.b16 %v392, %v388
      %v509 = vpack.c.b16 %v397, %v393
      %v510 = vpack.c.b16 %v398, %v394
      %v511 = vpack.c.b16 %v399, %v395
      %v512 = vpack.c.b16 %v400, %v396
      %v513 = vpack.c.b16 %v405, %v401
      %v514 = vpack.c.b16 %v406, %v402
      %v515 = vpack.c.b16 %v407, %v403
      %v516 = vpack.c.b16 %v408, %v404
      %v517 = vpack.c.b16 %v413, %v409
      %v518 = vpack.c.b16 %v414, %v410
      %v519 = vpack.c.b16 %v415, %v411
      %v520 = vpack.c.b16 %v416, %v412
      %v521 = vpack.c.b16 %v421, %v417
      %v522 = vpack.c.b16 %v422, %v418
      %v523 = vpack.c.b16 %v423, %v419
      %v524 = vpack.c.b16 %v424, %v420
      %v525 = vpack.c.b16 %v429, %v425
      %v526 = vpack.c.b16 %v430, %v426
      %v527 = vpack.c.b16 %v431, %v427
      %v528 = vpack.c.b16 %v432, %v428
      %v529 = vpack.c.b16 %v437, %v433
      %v530 = vpack.c.b16 %v438, %v434
      %v531 = vpack.c.b16 %v439, %v435
      %v532 = vpack.c.b16 %v440, %v436
      %v533 = vpack.c.b16 %v445, %v441
      %v534 = vpack.c.b16 %v446, %v442
      %v535 = vpack.c.b16 %v447, %v443
      %v536 = vpack.c.b16 %v448, %v444
      %v537 = vpack.c.b16 %v453, %v449
      %v538 = vpack.c.b16 %v454, %v450
      %v539 = vpack.c.b16 %v455, %v451
      %v540 = vpack.c.b16 %v456, %v452
      %v541 = vpack.c.b16 %v461, %v457
      %v542 = vpack.c.b16 %v462, %v458
      %v543 = vpack.c.b16 %v463, %v459
      %v544 = vpack.c.b16 %v464, %v460
      %v545 = vpack.c.b16 %v469, %v465
      %v546 = vpack.c.b16 %v470, %v466
      %v547 = vpack.c.b16 %v471, %v467
      %v548 = vpack.c.b16 %v472, %v468
      %v549 = vpack.c.b16 %v477, %v473
      %v550 = vpack.c.b16 %v478, %v474
      %v551 = vpack.c.b16 %v479, %v475
      %v552 = vpack.c.b16 %v480, %v476
      %v553 = vpack.c.b16 %v485, %v481
      %v554 = vpack.c.b16 %v486, %v482
      %v555 = vpack.c.b16 %v487, %v483
      %v556 = vpack.c.b16 %v488, %v484
      %v557 = vpack.c.b16 %v493, %v489
      %v558 = vpack.c.b16 %v494, %v490
      %v559 = vpack.c.b16 %v495, %v491
      %v560 = vpack.c.b16 %v496, %v492
      %v689 = vunpack.c.l.b16 %v241
      %v690 = vunpack.c.h.b16 %v241
      %v691 = vunpack.c.l.b16 %v242
      %v692 = vunpack.c.h.b16 %v242
      %v693 = vunpack.c.l.b16 %v243
      %v694 = vunpack.c.h.b16 %v243
      %v695 = vunpack.c.l.b16 %v244
      %v696 = vunpack.c.h.b16 %v244
      %v697 = vunpack.c.l.b16 %v245
      %v698 = vunpack.c.h.b16 %v245
      %v699 = vunpack.c.l.b16 %v246
      %v700 = vunpack.c.h.b16 %v246
      %v701 = vunpack.c.l.b16 %v247
      %v702 = vunpack.c.h.b16 %v247
      %v703 = vunpack.c.l.b16 %v248
      %v704 = vunpack.c.h.b16 %v248
      %v705 = vunpack.c.l.b16 %v249
      %v706 = vunpack.c.h.b16 %v249
      %v707 = vunpack.c.l.b16 %v250
      %v708 = vunpack.c.h.b16 %v250
      %v709 = vunpack.c.l.b16 %v251
      %v710 = vunpack.c.h.b16 %v251
      %v711 = vunpack.c.l.b16 %v252
      %v712 = vunpack.c.h.b16 %v252
      %v713 = vunpack.c.l.b16 %v253
      %v714 = vunpack.c.h.b16 %v253
      %v715 = vunpack.c.l.b16 %v254
      %v716 = vunpack.c.h.b16 %v254
      %v717 = vunpack.c.l.b16 %v255
      %v718 = vunpack.c.h.b16 %v255
      %v719 = vunpack.c.l.b16 %v256
      %v720 = vunpack.c.h.b16 %v256
      %v721 = vunpack.c.l.b16 %v257
      %v722 = vunpack.c.h.b16 %v257
      %v723 = vunpack.c.l.b16 %v258
      %v724 = vunpack.c.h.b16 %v258
      %v725 = vunpack.c.l.b16 %v259
      %v726 = vunpack.c.h.b16 %v259
      %v727 = vunpack.c.l.b16 %v260
      %v728 = vunpack.c.h.b16 %v260
      %v729 = vunpack.c.l.b16 %v261
      %v730 = vunpack.c.h.b16 %v261
      %v731 = vunpack.c.l.b16 %v262
      %v732 = vunpack.c.h.b16 %v262
      %v733 = vunpack.c.l.b16 %v263
      %v734 = vunpack.c.h.b16 %v263
      %v735 = vunpack.c.l.b16 %v264
      %v736 = vunpack.c.h.b16 %v264
      %v737 = vunpack.c.l.b16 %v265
      %v738 = vunpack.c.h.b16 %v265
      %v739 = vunpack.c.l.b16 %v266
      %v740 = vunpack.c.h.b16 %v266
      %v741 = vunpack.c.l.b16 %v267
      %v742 = vunpack.c.h.b16 %v267
      %v743 = vunpack.c.l.b16 %v268
      %v744 = vunpack.c.h.b16 %v268
      %v745 = vunpack.c.l.b16 %v269
      %v746 = vunpack.c.h.b16 %v269
      %v747 = vunpack.c.l.b16 %v270
      %v748 = vunpack.c.h.b16 %v270
      %v749 = vunpack.c.l.b16 %v271
      %v750 = vunpack.c.h.b16 %v271
      %v751 = vunpack.c.l.b16 %v272
      %v752 = vunpack.c.h.b16 %v272
      %v753 = vunpack.c.l.b16 %v273
      %v754 = vunpack.c.h.b16 %v273
      %v755 = vunpack.c.l.b16 %v274
      %v756 = vunpack.c.h.b16 %v274
      %v757 = vunpack.c.l.b16 %v275
      %v758 = vunpack.c.h.b16 %v275
      %v759 = vunpack.c.l.b16 %v276
      %v760 = vunpack.c.h.b16 %v276
      %v761 = vunpack.c.l.b16 %v277
      %v762 = vunpack.c.h.b16 %v277
      %v763 = vunpack.c.l.b16 %v278
      %v764 = vunpack.c.h.b16 %v278
      %v765 = vunpack.c.l.b16 %v279
      %v766 = vunpack.c.h.b16 %v279
      %v767 = vunpack.c.l.b16 %v280
      %v768 = vunpack.c.h.b16 %v280
      %v769 = vunpack.c.l.b16 %v281
      %v770 = vunpack.c.h.b16 %v281
      %v771 = vunpack.c.l.b16 %v282
      %v772 = vunpack.c.h.b16 %v282
      %v773 = vunpack.c.l.b16 %v283
      %v774 = vunpack.c.h.b16 %v283
      %v775 = vunpack.c.l.b16 %v284
      %v776 = vunpack.c.h.b16 %v284
      %v777 = vunpack.c.l.b16 %v285
      %v778 = vunpack.c.h.b16 %v285
      %v779 = vunpack.c.l.b16 %v286
      %v780 = vunpack.c.h.b16 %v286
      %v781 = vunpack.c.l.b16 %v287
      %v782 = vunpack.c.h.b16 %v287
      %v783 = vunpack.c.l.b16 %v288
      %v784 = vunpack.c.h.b16 %v288
      %v785 = vunpack.c.l.b16 %v289
      %v786 = vunpack.c.h.b16 %v289
      %v787 = vunpack.c.l.b16 %v290
      %v788 = vunpack.c.h.b16 %v290
      %v789 = vunpack.c.l.b16 %v291
      %v790 = vunpack.c.h.b16 %v291
      %v791 = vunpack.c.l.b16 %v292
      %v792 = vunpack.c.h.b16 %v292
      %v793 = vunpack.c.l.b16 %v293
      %v794 = vunpack.c.h.b16 %v293
      %v795 = vunpack.c.l.b16 %v294
      %v796 = vunpack.c.h.b16 %v294
      %v797 = vunpack.c.l.b16 %v295
      %v798 = vunpack.c.h.b16 %v295
      %v799 = vunpack.c.l.b16 %v296
      %v800 = vunpack.c.h.b16 %v296
      %v801 = vunpack.c.l.b16 %v297
      %v802 = vunpack.c.h.b16 %v297
      %v803 = vunpack.c.l.b16 %v298
      %v804 = vunpack.c.h.b16 %v298
      %v805 = vunpack.c.l.b16 %v299
      %v806 = vunpack.c.h.b16 %v299
      %v807 = vunpack.c.l.b16 %v300
      %v808 = vunpack.c.h.b16 %v300
      %v809 = vunpack.c.l.b16 %v301
      %v810 = vunpack.c.h.b16 %v301
      %v811 = vunpack.c.l.b16 %v302
      %v812 = vunpack.c.h.b16 %v302
      %v813 = vunpack.c.l.b16 %v303
      %v814 = vunpack.c.h.b16 %v303
      %v815 = vunpack.c.l.b16 %v304
      %v816 = vunpack.c.h.b16 %v304
      %v817 = vpack.c.b16 %v691, %v689
      %v818 = vpack.c.b16 %v692, %v690
      %v819 = vpack.c.b16 %v695, %v693
      %v820 = vpack.c.b16 %v696, %v694
      %v821 = vpack.c.b16 %v699, %v697
      %v822 = vpack.c.b16 %v700, %v698
      %v823 = vpack.c.b16 %v703, %v701
      %v824 = vpack.c.b16 %v704, %v702
      %v825 = vpack.c.b16 %v707, %v705
      %v826 = vpack.c.b16 %v708, %v706
      %v827 = vpack.c.b16 %v711, %v709
      %v828 = vpack.c.b16 %v712, %v710
      %v829 = vpack.c.b16 %v715, %v713
      %v830 = vpack.c.b16 %v716, %v714
      %v831 = vpack.c.b16 %v719, %v717
      %v832 = vpack.c.b16 %v720, %v718
      %v833 = vpack.c.b16 %v723, %v721
      %v834 = vpack.c.b16 %v724, %v722
      %v835 = vpack.c.b16 %v727, %v725
      %v836 = vpack.c.b16 %v728, %v726
      %v837 = vpack.c.b16 %v731, %v729
      %v838 = vpack.c.b16 %v732, %v730
      %v839 = vpack.c.b16 %v735, %v733
      %v840 = vpack.c.b16 %v736, %v734
      %v841 = vpack.c.b16 %v739, %v737
      %v842 = vpack.c.b16 %v740, %v738
      %v843 = vpack.c.b16 %v743, %v741
      %v844 = vpack.c.b16 %v744, %v742
      %v845 = vpack.c.b16 %v747, %v745
      %v846 = vpack.c.b16 %v748, %v746
      %v847 = vpack.c.b16 %v751, %v749
      %v848 = vpack.c.b16 %v752, %v750
      %v849 = vpack.c.b16 %v755, %v753
      %v850 = vpack.c.b16 %v756, %v754
      %v851 = vpack.c.b16 %v759, %v757
      %v852 = vpack.c.b16 %v760, %v758
      %v853 = vpack.c.b16 %v763, %v761
      %v854 = vpack.c.b16 %v764, %v762
      %v855 = vpack.c.b16 %v767, %v765
      %v856 = vpack.c.b16 %v768, %v766
      %v857 = vpack.c.b16 %v771, %v769
      %v858 = vpack.c.b16 %v772, %v770
      %v859 = vpack.c.b16 %v775, %v773
      %v860 = vpack.c.b16 %v776, %v774
      %v861 = vpack.c.b16 %v779, %v777
      %v862 = vpack.c.b16 %v780, %v778
      %v863 = vpack.c.b16 %v783, %v781
      %v864 = vpack.c.b16 %v784, %v782
      %v865 = vpack.c.b16 %v787, %v785
      %v866 = vpack.c.b16 %v788, %v786
      %v867 = vpack.c.b16 %v791, %v789
      %v868 = vpack.c.b16 %v792, %v790
      %v869 = vpack.c.b16 %v795, %v793
      %v870 = vpack.c.b16 %v796, %v794
      %v871 = vpack.c.b16 %v799, %v797
      %v872 = vpack.c.b16 %v800, %v798
      %v873 = vpack.c.b16 %v803, %v801
      %v874 = vpack.c.b16 %v804, %v802
      %v875 = vpack.c.b16 %v807, %v805
      %v876 = vpack.c.b16 %v808, %v806
      %v877 = vpack.c.b16 %v811, %v809
      %v878 = vpack.c.b16 %v812, %v810
      %v879 = vpack.c.b16 %v815, %v813
      %v880 = vpack.c.b16 %v816, %v814
      %945 = vmatprep.subr.bf16.mxu0 %v832
      %946 = vmatpush1.bf16.msra.mxu0 %v831
      %947 = vmatprep.subr.bf16.mxu0 %v830
      %948 = vmatpush1.bf16.msra.mxu0 %v829
      %949 = vmatprep.subr.bf16.mxu0 %v828
      %950 = vmatpush1.bf16.msra.mxu0 %v827
      %951 = vmatprep.subr.bf16.mxu0 %v826
      %952 = vmatpush1.bf16.msra.mxu0 %v825
      %953 = vmatprep.subr.bf16.mxu0 %v824
      %954 = vmatpush1.bf16.msra.mxu0 %v823
      %955 = vmatprep.subr.bf16.mxu0 %v822
      %956 = vmatpush1.bf16.msra.mxu0 %v821
      %957 = vmatprep.subr.bf16.mxu0 %v820
      %958 = vmatpush1.bf16.msra.mxu0 %v819
      %959 = vmatprep.subr.bf16.mxu0 %v818
      %960 = vmatpush1.bf16.msra.mxu0 %v817
      %961 = vmatprep.subr.bf16.mxu0 %v848
      %962 = vmatpush2.bf16.msra.mxu0 %v847
      %963 = vmatprep.subr.bf16.mxu0 %v846
      %964 = vmatpush2.bf16.msra.mxu0 %v845
      %965 = vmatprep.subr.bf16.mxu0 %v844
      %966 = vmatpush2.bf16.msra.mxu0 %v843
      %967 = vmatprep.subr.bf16.mxu0 %v842
      %968 = vmatpush2.bf16.msra.mxu0 %v841
      %969 = vmatprep.subr.bf16.mxu0 %v840
      %970 = vmatpush2.bf16.msra.mxu0 %v839
      %971 = vmatprep.subr.bf16.mxu0 %v838
      %972 = vmatpush2.bf16.msra.mxu0 %v837
      %973 = vmatprep.subr.bf16.mxu0 %v836
      %974 = vmatpush2.bf16.msra.mxu0 %v835
      %975 = vmatprep.subr.bf16.mxu0 %v834
      %976 = vmatpush2.bf16.msra.mxu0 %v833
      %977 = vmatprep.mubr.bf16.mxu0 %v498
      %978 = vmatmul.mubr.bf16.gmra.mxu0 %v497
      %v979 = vpop.f32.mrf.mxu0
      %v980 = vadd.f32 0.0, %v979
      %v981 = vpop.f32.mrf.mxu0
      %v982 = vadd.f32 0.0, %v981
      %v983 = vpop.f32.mrf.mxu0
      %v984 = vadd.f32 0.0, %v983
      %v985 = vpop.f32.mrf.mxu0
      %v986 = vadd.f32 0.0, %v985
      %987 = vmatprep.mubr.bf16.mxu0 %v502
      %988 = vmatmul.mubr.bf16.gmra.mxu0 %v501
      %v989 = vpop.f32.mrf.mxu0
      %v990 = vadd.f32 0.0, %v989
      %v991 = vpop.f32.mrf.mxu0
      %v992 = vadd.f32 0.0, %v991
      %v993 = vpop.f32.mrf.mxu0
      %v994 = vadd.f32 0.0, %v993
      %v995 = vpop.f32.mrf.mxu0
      %v996 = vadd.f32 0.0, %v995
      %997 = vmatprep.mubr.bf16.mxu0 %v506
      %998 = vmatmul.mubr.bf16.gmra.mxu0 %v505
      %v999 = vpop.f32.mrf.mxu0
      %v1000 = vadd.f32 0.0, %v999
      %v1001 = vpop.f32.mrf.mxu0
      %v1002 = vadd.f32 0.0, %v1001
      %v1003 = vpop.f32.mrf.mxu0
      %v1004 = vadd.f32 0.0, %v1003
      %v1005 = vpop.f32.mrf.mxu0
      %v1006 = vadd.f32 0.0, %v1005
      %1007 = vmatprep.mubr.bf16.mxu0 %v510
      %1008 = vmatmul.mubr.bf16.gmra.mxu0 %v509
      %v1009 = vpop.f32.mrf.mxu0
      %v1010 = vadd.f32 0.0, %v1009
      %v1011 = vpop.f32.mrf.mxu0
      %v1012 = vadd.f32 0.0, %v1011
      %v1013 = vpop.f32.mrf.mxu0
      %v1014 = vadd.f32 0.0, %v1013
      %v1015 = vpop.f32.mrf.mxu0
      %v1016 = vadd.f32 0.0, %v1015
      %1017 = vmatprep.mubr.bf16.mxu0 %v514
      %1018 = vmatmul.mubr.bf16.gmra.mxu0 %v513
      %v1019 = vpop.f32.mrf.mxu0
      %v1020 = vadd.f32 0.0, %v1019
      %v1021 = vpop.f32.mrf.mxu0
      %v1022 = vadd.f32 0.0, %v1021
      %v1023 = vpop.f32.mrf.mxu0
      %v1024 = vadd.f32 0.0, %v1023
      %v1025 = vpop.f32.mrf.mxu0
      %v1026 = vadd.f32 0.0, %v1025
      %1027 = vmatprep.mubr.bf16.mxu0 %v518
      %1028 = vmatmul.mubr.bf16.gmra.mxu0 %v517
      %v1029 = vpop.f32.mrf.mxu0
      %v1030 = vadd.f32 0.0, %v1029
      %v1031 = vpop.f32.mrf.mxu0
      %v1032 = vadd.f32 0.0, %v1031
      %v1033 = vpop.f32.mrf.mxu0
      %v1034 = vadd.f32 0.0, %v1033
      %v1035 = vpop.f32.mrf.mxu0
      %v1036 = vadd.f32 0.0, %v1035
      %1037 = vmatprep.mubr.bf16.mxu0 %v522
      %1038 = vmatmul.mubr.bf16.gmra.mxu0 %v521
      %v1039 = vpop.f32.mrf.mxu0
      %v1040 = vadd.f32 0.0, %v1039
      %v1041 = vpop.f32.mrf.mxu0
      %v1042 = vadd.f32 0.0, %v1041
      %v1043 = vpop.f32.mrf.mxu0
      %v1044 = vadd.f32 0.0, %v1043
      %v1045 = vpop.f32.mrf.mxu0
      %v1046 = vadd.f32 0.0, %v1045
      %1047 = vmatprep.mubr.bf16.mxu0 %v526
      %1048 = vmatmul.mubr.bf16.gmra.mxu0 %v525
      %v1049 = vpop.f32.mrf.mxu0
      %v1050 = vadd.f32 0.0, %v1049
      %v1051 = vpop.f32.mrf.mxu0
      %v1052 = vadd.f32 0.0, %v1051
      %v1053 = vpop.f32.mrf.mxu0
      %v1054 = vadd.f32 0.0, %v1053
      %v1055 = vpop.f32.mrf.mxu0
      %v1056 = vadd.f32 0.0, %v1055
      %1057 = vmatprep.mubr.bf16.mxu0 %v530
      %1058 = vmatmul.mubr.bf16.gmra.mxu0 %v529
      %v1059 = vpop.f32.mrf.mxu0
      %v1060 = vadd.f32 0.0, %v1059
      %v1061 = vpop.f32.mrf.mxu0
      %v1062 = vadd.f32 0.0, %v1061
      %v1063 = vpop.f32.mrf.mxu0
      %v1064 = vadd.f32 0.0, %v1063
      %v1065 = vpop.f32.mrf.mxu0
      %v1066 = vadd.f32 0.0, %v1065
      %1067 = vmatprep.mubr.bf16.mxu0 %v534
      %1068 = vmatmul.mubr.bf16.gmra.mxu0 %v533
      %v1069 = vpop.f32.mrf.mxu0
      %v1070 = vadd.f32 0.0, %v1069
      %v1071 = vpop.f32.mrf.mxu0
      %v1072 = vadd.f32 0.0, %v1071
      %v1073 = vpop.f32.mrf.mxu0
      %v1074 = vadd.f32 0.0, %v1073
      %v1075 = vpop.f32.mrf.mxu0
      %v1076 = vadd.f32 0.0, %v1075
      %1077 = vmatprep.mubr.bf16.mxu0 %v538
      %1078 = vmatmul.mubr.bf16.gmra.mxu0 %v537
      %v1079 = vpop.f32.mrf.mxu0
      %v1080 = vadd.f32 0.0, %v1079
      %v1081 = vpop.f32.mrf.mxu0
      %v1082 = vadd.f32 0.0, %v1081
      %v1083 = vpop.f32.mrf.mxu0
      %v1084 = vadd.f32 0.0, %v1083
      %v1085 = vpop.f32.mrf.mxu0
      %v1086 = vadd.f32 0.0, %v1085
      %1087 = vmatprep.mubr.bf16.mxu0 %v542
      %1088 = vmatmul.mubr.bf16.gmra.mxu0 %v541
      %v1089 = vpop.f32.mrf.mxu0
      %v1090 = vadd.f32 0.0, %v1089
      %v1091 = vpop.f32.mrf.mxu0
      %v1092 = vadd.f32 0.0, %v1091
      %v1093 = vpop.f32.mrf.mxu0
      %v1094 = vadd.f32 0.0, %v1093
      %v1095 = vpop.f32.mrf.mxu0
      %v1096 = vadd.f32 0.0, %v1095
      %1097 = vmatprep.mubr.bf16.mxu0 %v546
      %1098 = vmatmul.mubr.bf16.gmra.mxu0 %v545
      %v1099 = vpop.f32.mrf.mxu0
      %v1100 = vadd.f32 0.0, %v1099
      %v1101 = vpop.f32.mrf.mxu0
      %v1102 = vadd.f32 0.0, %v1101
      %v1103 = vpop.f32.mrf.mxu0
      %v1104 = vadd.f32 0.0, %v1103
      %v1105 = vpop.f32.mrf.mxu0
      %v1106 = vadd.f32 0.0, %v1105
      %1107 = vmatprep.mubr.bf16.mxu0 %v550
      %1108 = vmatmul.mubr.bf16.gmra.mxu0 %v549
      %v1109 = vpop.f32.mrf.mxu0
      %v1110 = vadd.f32 0.0, %v1109
      %v1111 = vpop.f32.mrf.mxu0
      %v1112 = vadd.f32 0.0, %v1111
      %v1113 = vpop.f32.mrf.mxu0
      %v1114 = vadd.f32 0.0, %v1113
      %v1115 = vpop.f32.mrf.mxu0
      %v1116 = vadd.f32 0.0, %v1115
      %1117 = vmatprep.mubr.bf16.mxu0 %v554
      %1118 = vmatmul.mubr.bf16.gmra.mxu0 %v553
      %v1119 = vpop.f32.mrf.mxu0
      %v1120 = vadd.f32 0.0, %v1119
      %v1121 = vpop.f32.mrf.mxu0
      %v1122 = vadd.f32 0.0, %v1121
      %v1123 = vpop.f32.mrf.mxu0
      %v1124 = vadd.f32 0.0, %v1123
      %v1125 = vpop.f32.mrf.mxu0
      %v1126 = vadd.f32 0.0, %v1125
      %1127 = vmatprep.mubr.bf16.mxu0 %v558
      %1128 = vmatmul.mubr.bf16.gmra.mxu0 %v557
      %v1129 = vpop.f32.mrf.mxu0
      %v1130 = vadd.f32 0.0, %v1129
      %v1131 = vpop.f32.mrf.mxu0
      %v1132 = vadd.f32 0.0, %v1131
      %v1133 = vpop.f32.mrf.mxu0
      %v1134 = vadd.f32 0.0, %v1133
      %v1135 = vpop.f32.mrf.mxu0
      %v1136 = vadd.f32 0.0, %v1135
      %1137 = vdwg.mxu0
      %1138 = vmatprep.subr.bf16.mxu0 %v864
      %1139 = vmatpush1.bf16.msra.mxu0 %v863
      %1140 = vmatprep.subr.bf16.mxu0 %v862
      %1141 = vmatpush1.bf16.msra.mxu0 %v861
      %1142 = vmatprep.subr.bf16.mxu0 %v860
      %1143 = vmatpush1.bf16.msra.mxu0 %v859
      %1144 = vmatprep.subr.bf16.mxu0 %v858
      %1145 = vmatpush1.bf16.msra.mxu0 %v857
      %1146 = vmatprep.subr.bf16.mxu0 %v856
      %1147 = vmatpush1.bf16.msra.mxu0 %v855
      %1148 = vmatprep.subr.bf16.mxu0 %v854
      %1149 = vmatpush1.bf16.msra.mxu0 %v853
      %1150 = vmatprep.subr.bf16.mxu0 %v852
      %1151 = vmatpush1.bf16.msra.mxu0 %v851
      %1152 = vmatprep.subr.bf16.mxu0 %v850
      %1153 = vmatpush1.bf16.msra.mxu0 %v849
      %1154 = vmatprep.subr.bf16.mxu0 %v880
      %1155 = vmatpush2.bf16.msra.mxu0 %v879
      %1156 = vmatprep.subr.bf16.mxu0 %v878
      %1157 = vmatpush2.bf16.msra.mxu0 %v877
      %1158 = vmatprep.subr.bf16.mxu0 %v876
      %1159 = vmatpush2.bf16.msra.mxu0 %v875
      %1160 = vmatprep.subr.bf16.mxu0 %v874
      %1161 = vmatpush2.bf16.msra.mxu0 %v873
      %1162 = vmatprep.subr.bf16.mxu0 %v872
      %1163 = vmatpush2.bf16.msra.mxu0 %v871
      %1164 = vmatprep.subr.bf16.mxu0 %v870
      %1165 = vmatpush2.bf16.msra.mxu0 %v869
      %1166 = vmatprep.subr.bf16.mxu0 %v868
      %1167 = vmatpush2.bf16.msra.mxu0 %v867
      %1168 = vmatprep.subr.bf16.mxu0 %v866
      %1169 = vmatpush2.bf16.msra.mxu0 %v865
      %1170 = vmatprep.mubr.bf16.mxu0 %v500
      %1171 = vmatmul.mubr.bf16.gmra.mxu0 %v499
      %v1172 = vpop.f32.mrf.mxu0
      %v1173 = vadd.f32 %v980, %v1172
      %v1174 = vpop.f32.mrf.mxu0
      %v1175 = vadd.f32 %v982, %v1174
      %v1176 = vpop.f32.mrf.mxu0
      %v1177 = vadd.f32 %v984, %v1176
      %v1178 = vpop.f32.mrf.mxu0
      %v1179 = vadd.f32 %v986, %v1178
      %1180 = vmatprep.mubr.bf16.mxu0 %v504
      %1181 = vmatmul.mubr.bf16.gmra.mxu0 %v503
      %v1182 = vpop.f32.mrf.mxu0
      %v1183 = vadd.f32 %v990, %v1182
      %v1184 = vpop.f32.mrf.mxu0
      %v1185 = vadd.f32 %v992, %v1184
      %v1186 = vpop.f32.mrf.mxu0
      %v1187 = vadd.f32 %v994, %v1186
      %v1188 = vpop.f32.mrf.mxu0
      %v1189 = vadd.f32 %v996, %v1188
      %1190 = vmatprep.mubr.bf16.mxu0 %v508
      %1191 = vmatmul.mubr.bf16.gmra.mxu0 %v507
      %v1192 = vpop.f32.mrf.mxu0
      %v1193 = vadd.f32 %v1000, %v1192
      %v1194 = vpop.f32.mrf.mxu0
      %v1195 = vadd.f32 %v1002, %v1194
      %v1196 = vpop.f32.mrf.mxu0
      %v1197 = vadd.f32 %v1004, %v1196
      %v1198 = vpop.f32.mrf.mxu0
      %v1199 = vadd.f32 %v1006, %v1198
      %1200 = vmatprep.mubr.bf16.mxu0 %v512
      %1201 = vmatmul.mubr.bf16.gmra.mxu0 %v511
      %v1202 = vpop.f32.mrf.mxu0
      %v1203 = vadd.f32 %v1010, %v1202
      %v1204 = vpop.f32.mrf.mxu0
      %v1205 = vadd.f32 %v1012, %v1204
      %v1206 = vpop.f32.mrf.mxu0
      %v1207 = vadd.f32 %v1014, %v1206
      %v1208 = vpop.f32.mrf.mxu0
      %v1209 = vadd.f32 %v1016, %v1208
      %1210 = vmatprep.mubr.bf16.mxu0 %v516
      %1211 = vmatmul.mubr.bf16.gmra.mxu0 %v515
      %v1212 = vpop.f32.mrf.mxu0
      %v1213 = vadd.f32 %v1020, %v1212
      %v1214 = vpop.f32.mrf.mxu0
      %v1215 = vadd.f32 %v1022, %v1214
      %v1216 = vpop.f32.mrf.mxu0
      %v1217 = vadd.f32 %v1024, %v1216
      %v1218 = vpop.f32.mrf.mxu0
      %v1219 = vadd.f32 %v1026, %v1218
      %1220 = vmatprep.mubr.bf16.mxu0 %v520
      %1221 = vmatmul.mubr.bf16.gmra.mxu0 %v519
      %v1222 = vpop.f32.mrf.mxu0
      %v1223 = vadd.f32 %v1030, %v1222
      %v1224 = vpop.f32.mrf.mxu0
      %v1225 = vadd.f32 %v1032, %v1224
      %v1226 = vpop.f32.mrf.mxu0
      %v1227 = vadd.f32 %v1034, %v1226
      %v1228 = vpop.f32.mrf.mxu0
      %v1229 = vadd.f32 %v1036, %v1228
      %1230 = vmatprep.mubr.bf16.mxu0 %v524
      %1231 = vmatmul.mubr.bf16.gmra.mxu0 %v523
      %v1232 = vpop.f32.mrf.mxu0
      %v1233 = vadd.f32 %v1040, %v1232
      %v1234 = vpop.f32.mrf.mxu0
      %v1235 = vadd.f32 %v1042, %v1234
      %v1236 = vpop.f32.mrf.mxu0
      %v1237 = vadd.f32 %v1044, %v1236
      %v1238 = vpop.f32.mrf.mxu0
      %v1239 = vadd.f32 %v1046, %v1238
      %1240 = vmatprep.mubr.bf16.mxu0 %v528
      %1241 = vmatmul.mubr.bf16.gmra.mxu0 %v527
      %v1242 = vpop.f32.mrf.mxu0
      %v1243 = vadd.f32 %v1050, %v1242
      %v1244 = vpop.f32.mrf.mxu0
      %v1245 = vadd.f32 %v1052, %v1244
      %v1246 = vpop.f32.mrf.mxu0
      %v1247 = vadd.f32 %v1054, %v1246
      %v1248 = vpop.f32.mrf.mxu0
      %v1249 = vadd.f32 %v1056, %v1248
      %1250 = vmatprep.mubr.bf16.mxu0 %v532
      %1251 = vmatmul.mubr.bf16.gmra.mxu0 %v531
      %v1252 = vpop.f32.mrf.mxu0
      %v1253 = vadd.f32 %v1060, %v1252
      %v1254 = vpop.f32.mrf.mxu0
      %v1255 = vadd.f32 %v1062, %v1254
      %v1256 = vpop.f32.mrf.mxu0
      %v1257 = vadd.f32 %v1064, %v1256
      %v1258 = vpop.f32.mrf.mxu0
      %v1259 = vadd.f32 %v1066, %v1258
      %1260 = vmatprep.mubr.bf16.mxu0 %v536
      %1261 = vmatmul.mubr.bf16.gmra.mxu0 %v535
      %v1262 = vpop.f32.mrf.mxu0
      %v1263 = vadd.f32 %v1070, %v1262
      %v1264 = vpop.f32.mrf.mxu0
      %v1265 = vadd.f32 %v1072, %v1264
      %v1266 = vpop.f32.mrf.mxu0
      %v1267 = vadd.f32 %v1074, %v1266
      %v1268 = vpop.f32.mrf.mxu0
      %v1269 = vadd.f32 %v1076, %v1268
      %1270 = vmatprep.mubr.bf16.mxu0 %v540
      %1271 = vmatmul.mubr.bf16.gmra.mxu0 %v539
      %v1272 = vpop.f32.mrf.mxu0
      %v1273 = vadd.f32 %v1080, %v1272
      %v1274 = vpop.f32.mrf.mxu0
      %v1275 = vadd.f32 %v1082, %v1274
      %v1276 = vpop.f32.mrf.mxu0
      %v1277 = vadd.f32 %v1084, %v1276
      %v1278 = vpop.f32.mrf.mxu0
      %v1279 = vadd.f32 %v1086, %v1278
      %1280 = vmatprep.mubr.bf16.mxu0 %v544
      %1281 = vmatmul.mubr.bf16.gmra.mxu0 %v543
      %v1282 = vpop.f32.mrf.mxu0
      %v1283 = vadd.f32 %v1090, %v1282
      %v1284 = vpop.f32.mrf.mxu0
      %v1285 = vadd.f32 %v1092, %v1284
      %v1286 = vpop.f32.mrf.mxu0
      %v1287 = vadd.f32 %v1094, %v1286
      %v1288 = vpop.f32.mrf.mxu0
      %v1289 = vadd.f32 %v1096, %v1288
      %1290 = vmatprep.mubr.bf16.mxu0 %v548
      %1291 = vmatmul.mubr.bf16.gmra.mxu0 %v547
      %v1292 = vpop.f32.mrf.mxu0
      %v1293 = vadd.f32 %v1100, %v1292
      %v1294 = vpop.f32.mrf.mxu0
      %v1295 = vadd.f32 %v1102, %v1294
      %v1296 = vpop.f32.mrf.mxu0
      %v1297 = vadd.f32 %v1104, %v1296
      %v1298 = vpop.f32.mrf.mxu0
      %v1299 = vadd.f32 %v1106, %v1298
      %1300 = vmatprep.mubr.bf16.mxu0 %v552
      %1301 = vmatmul.mubr.bf16.gmra.mxu0 %v551
      %v1302 = vpop.f32.mrf.mxu0
      %v1303 = vadd.f32 %v1110, %v1302
      %v1304 = vpop.f32.mrf.mxu0
      %v1305 = vadd.f32 %v1112, %v1304
      %v1306 = vpop.f32.mrf.mxu0
      %v1307 = vadd.f32 %v1114, %v1306
      %v1308 = vpop.f32.mrf.mxu0
      %v1309 = vadd.f32 %v1116, %v1308
      %1310 = vmatprep.mubr.bf16.mxu0 %v556
      %1311 = vmatmul.mubr.bf16.gmra.mxu0 %v555
      %v1312 = vpop.f32.mrf.mxu0
      %v1313 = vadd.f32 %v1120, %v1312
      %v1314 = vpop.f32.mrf.mxu0
      %v1315 = vadd.f32 %v1122, %v1314
      %v1316 = vpop.f32.mrf.mxu0
      %v1317 = vadd.f32 %v1124, %v1316
      %v1318 = vpop.f32.mrf.mxu0
      %v1319 = vadd.f32 %v1126, %v1318
      %1320 = vmatprep.mubr.bf16.mxu0 %v560
      %1321 = vmatmul.mubr.bf16.gmra.mxu0 %v559
      %v1322 = vpop.f32.mrf.mxu0
      %v1323 = vadd.f32 %v1130, %v1322
      %v1324 = vpop.f32.mrf.mxu0
      %v1325 = vadd.f32 %v1132, %v1324
      %v1326 = vpop.f32.mrf.mxu0
      %v1327 = vadd.f32 %v1134, %v1326
      %v1328 = vpop.f32.mrf.mxu0
      %v1329 = vadd.f32 %v1136, %v1328
      %1330 = vdwg.mxu0
      %1363 = vrot.lane.b32.xlu0 %v1173, 64
      %v1364 = vpop.permute.xlu0 %1363
      %1365 = vrot.lane.b32.xlu0 %v1177, 64
      %v1366 = vpop.permute.xlu0 %1365
      %1367 = vrot.lane.b32.xlu0 %v1183, 64
      %v1368 = vpop.permute.xlu0 %1367
      %1369 = vrot.lane.b32.xlu0 %v1187, 64
      %v1370 = vpop.permute.xlu0 %1369
      %1371 = vrot.lane.b32.xlu0 %v1193, 64
      %v1372 = vpop.permute.xlu0 %1371
      %1373 = vrot.lane.b32.xlu0 %v1197, 64
      %v1374 = vpop.permute.xlu0 %1373
      %1375 = vrot.lane.b32.xlu0 %v1203, 64
      %v1376 = vpop.permute.xlu0 %1375
      %1377 = vrot.lane.b32.xlu0 %v1207, 64
      %v1378 = vpop.permute.xlu0 %1377
      %1379 = vrot.lane.b32.xlu0 %v1213, 64
      %v1380 = vpop.permute.xlu0 %1379
      %1381 = vrot.lane.b32.xlu0 %v1217, 64
      %v1382 = vpop.permute.xlu0 %1381
      %1383 = vrot.lane.b32.xlu0 %v1223, 64
      %v1384 = vpop.permute.xlu0 %1383
      %1385 = vrot.lane.b32.xlu0 %v1227, 64
      %v1386 = vpop.permute.xlu0 %1385
      %1387 = vrot.lane.b32.xlu0 %v1233, 64
      %v1388 = vpop.permute.xlu0 %1387
      %1389 = vrot.lane.b32.xlu0 %v1237, 64
      %v1390 = vpop.permute.xlu0 %1389
      %1391 = vrot.lane.b32.xlu0 %v1243, 64
      %v1392 = vpop.permute.xlu0 %1391
      %1393 = vrot.lane.b32.xlu0 %v1247, 64
      %v1394 = vpop.permute.xlu0 %1393
      %1395 = vrot.lane.b32.xlu0 %v1253, 64
      %v1396 = vpop.permute.xlu0 %1395
      %1397 = vrot.lane.b32.xlu0 %v1257, 64
      %v1398 = vpop.permute.xlu0 %1397
      %1399 = vrot.lane.b32.xlu0 %v1263, 64
      %v1400 = vpop.permute.xlu0 %1399
      %1401 = vrot.lane.b32.xlu0 %v1267, 64
      %v1402 = vpop.permute.xlu0 %1401
      %1403 = vrot.lane.b32.xlu0 %v1273, 64
      %v1404 = vpop.permute.xlu0 %1403
      %1405 = vrot.lane.b32.xlu0 %v1277, 64
      %v1406 = vpop.permute.xlu0 %1405
      %1407 = vrot.lane.b32.xlu0 %v1283, 64
      %v1408 = vpop.permute.xlu0 %1407
      %1409 = vrot.lane.b32.xlu0 %v1287, 64
      %v1410 = vpop.permute.xlu0 %1409
      %1411 = vrot.lane.b32.xlu0 %v1293, 64
      %v1412 = vpop.permute.xlu0 %1411
      %1413 = vrot.lane.b32.xlu0 %v1297, 64
      %v1414 = vpop.permute.xlu0 %1413
      %1415 = vrot.lane.b32.xlu0 %v1303, 64
      %v1416 = vpop.permute.xlu0 %1415
      %1417 = vrot.lane.b32.xlu0 %v1307, 64
      %v1418 = vpop.permute.xlu0 %1417
      %1419 = vrot.lane.b32.xlu0 %v1313, 64
      %v1420 = vpop.permute.xlu0 %1419
      %1421 = vrot.lane.b32.xlu0 %v1317, 64
      %v1422 = vpop.permute.xlu0 %1421
      %1423 = vrot.lane.b32.xlu0 %v1323, 64
      %v1424 = vpop.permute.xlu0 %1423
      %1425 = vrot.lane.b32.xlu0 %v1327, 64
      %v1426 = vpop.permute.xlu0 %1425
      %v1459 = vmax.f32 %v1173, %v1364
      %v1460 = vmax.f32 %v1177, %v1366
      %v1461 = vmax.f32 %v1183, %v1368
      %v1462 = vmax.f32 %v1187, %v1370
      %v1463 = vmax.f32 %v1193, %v1372
      %v1464 = vmax.f32 %v1197, %v1374
      %v1465 = vmax.f32 %v1203, %v1376
      %v1466 = vmax.f32 %v1207, %v1378
      %v1467 = vmax.f32 %v1213, %v1380
      %v1468 = vmax.f32 %v1217, %v1382
      %v1469 = vmax.f32 %v1223, %v1384
      %v1470 = vmax.f32 %v1227, %v1386
      %v1471 = vmax.f32 %v1233, %v1388
      %v1472 = vmax.f32 %v1237, %v1390
      %v1473 = vmax.f32 %v1243, %v1392
      %v1474 = vmax.f32 %v1247, %v1394
      %v1475 = vmax.f32 %v1253, %v1396
      %v1476 = vmax.f32 %v1257, %v1398
      %v1477 = vmax.f32 %v1263, %v1400
      %v1478 = vmax.f32 %v1267, %v1402
      %v1479 = vmax.f32 %v1273, %v1404
      %v1480 = vmax.f32 %v1277, %v1406
      %v1481 = vmax.f32 %v1283, %v1408
      %v1482 = vmax.f32 %v1287, %v1410
      %v1483 = vmax.f32 %v1293, %v1412
      %v1484 = vmax.f32 %v1297, %v1414
      %v1485 = vmax.f32 %v1303, %v1416
      %v1486 = vmax.f32 %v1307, %v1418
      %v1487 = vmax.f32 %v1313, %v1420
      %v1488 = vmax.f32 %v1317, %v1422
      %v1489 = vmax.f32 %v1323, %v1424
      %v1490 = vmax.f32 %v1327, %v1426
      %1523 = vrot.lane.b32.xlu0 %v1175, 64
      %v1524 = vpop.permute.xlu0 %1523
      %1525 = vrot.lane.b32.xlu0 %v1179, 64
      %v1526 = vpop.permute.xlu0 %1525
      %1527 = vrot.lane.b32.xlu0 %v1185, 64
      %v1528 = vpop.permute.xlu0 %1527
      %1529 = vrot.lane.b32.xlu0 %v1189, 64
      %v1530 = vpop.permute.xlu0 %1529
      %1531 = vrot.lane.b32.xlu0 %v1195, 64
      %v1532 = vpop.permute.xlu0 %1531
      %1533 = vrot.lane.b32.xlu0 %v1199, 64
      %v1534 = vpop.permute.xlu0 %1533
      %1535 = vrot.lane.b32.xlu0 %v1205, 64
      %v1536 = vpop.permute.xlu0 %1535
      %1537 = vrot.lane.b32.xlu0 %v1209, 64
      %v1538 = vpop.permute.xlu0 %1537
      %1539 = vrot.lane.b32.xlu0 %v1215, 64
      %v1540 = vpop.permute.xlu0 %1539
      %1541 = vrot.lane.b32.xlu0 %v1219, 64
      %v1542 = vpop.permute.xlu0 %1541
      %1543 = vrot.lane.b32.xlu0 %v1225, 64
      %v1544 = vpop.permute.xlu0 %1543
      %1545 = vrot.lane.b32.xlu0 %v1229, 64
      %v1546 = vpop.permute.xlu0 %1545
      %1547 = vrot.lane.b32.xlu0 %v1235, 64
      %v1548 = vpop.permute.xlu0 %1547
      %1549 = vrot.lane.b32.xlu0 %v1239, 64
      %v1550 = vpop.permute.xlu0 %1549
      %1551 = vrot.lane.b32.xlu0 %v1245, 64
      %v1552 = vpop.permute.xlu0 %1551
      %1553 = vrot.lane.b32.xlu0 %v1249, 64
      %v1554 = vpop.permute.xlu0 %1553
      %1555 = vrot.lane.b32.xlu0 %v1255, 64
      %v1556 = vpop.permute.xlu0 %1555
      %1557 = vrot.lane.b32.xlu0 %v1259, 64
      %v1558 = vpop.permute.xlu0 %1557
      %1559 = vrot.lane.b32.xlu0 %v1265, 64
      %v1560 = vpop.permute.xlu0 %1559
      %1561 = vrot.lane.b32.xlu0 %v1269, 64
      %v1562 = vpop.permute.xlu0 %1561
      %1563 = vrot.lane.b32.xlu0 %v1275, 64
      %v1564 = vpop.permute.xlu0 %1563
      %1565 = vrot.lane.b32.xlu0 %v1279, 64
      %v1566 = vpop.permute.xlu0 %1565
      %1567 = vrot.lane.b32.xlu0 %v1285, 64
      %v1568 = vpop.permute.xlu0 %1567
      %1569 = vrot.lane.b32.xlu0 %v1289, 64
      %v1570 = vpop.permute.xlu0 %1569
      %1571 = vrot.lane.b32.xlu0 %v1295, 64
      %v1572 = vpop.permute.xlu0 %1571
      %1573 = vrot.lane.b32.xlu0 %v1299, 64
      %v1574 = vpop.permute.xlu0 %1573
      %1575 = vrot.lane.b32.xlu0 %v1305, 64
      %v1576 = vpop.permute.xlu0 %1575
      %1577 = vrot.lane.b32.xlu0 %v1309, 64
      %v1578 = vpop.permute.xlu0 %1577
      %1579 = vrot.lane.b32.xlu0 %v1315, 64
      %v1580 = vpop.permute.xlu0 %1579
      %1581 = vrot.lane.b32.xlu0 %v1319, 64
      %v1582 = vpop.permute.xlu0 %1581
      %1583 = vrot.lane.b32.xlu0 %v1325, 64
      %v1584 = vpop.permute.xlu0 %1583
      %1585 = vrot.lane.b32.xlu0 %v1329, 64
      %v1586 = vpop.permute.xlu0 %1585
      %v1619 = vmax.f32 %v1175, %v1524
      %v1620 = vmax.f32 %v1179, %v1526
      %v1621 = vmax.f32 %v1185, %v1528
      %v1622 = vmax.f32 %v1189, %v1530
      %v1623 = vmax.f32 %v1195, %v1532
      %v1624 = vmax.f32 %v1199, %v1534
      %v1625 = vmax.f32 %v1205, %v1536
      %v1626 = vmax.f32 %v1209, %v1538
      %v1627 = vmax.f32 %v1215, %v1540
      %v1628 = vmax.f32 %v1219, %v1542
      %v1629 = vmax.f32 %v1225, %v1544
      %v1630 = vmax.f32 %v1229, %v1546
      %v1631 = vmax.f32 %v1235, %v1548
      %v1632 = vmax.f32 %v1239, %v1550
      %v1633 = vmax.f32 %v1245, %v1552
      %v1634 = vmax.f32 %v1249, %v1554
      %v1635 = vmax.f32 %v1255, %v1556
      %v1636 = vmax.f32 %v1259, %v1558
      %v1637 = vmax.f32 %v1265, %v1560
      %v1638 = vmax.f32 %v1269, %v1562
      %v1639 = vmax.f32 %v1275, %v1564
      %v1640 = vmax.f32 %v1279, %v1566
      %v1641 = vmax.f32 %v1285, %v1568
      %v1642 = vmax.f32 %v1289, %v1570
      %v1643 = vmax.f32 %v1295, %v1572
      %v1644 = vmax.f32 %v1299, %v1574
      %v1645 = vmax.f32 %v1305, %v1576
      %v1646 = vmax.f32 %v1309, %v1578
      %v1647 = vmax.f32 %v1315, %v1580
      %v1648 = vmax.f32 %v1319, %v1582
      %v1649 = vmax.f32 %v1325, %v1584
      %v1650 = vmax.f32 %v1329, %v1586
      %v1651 = vmax.f32 %v1459, %v1619
      %v1652 = vmax.f32 %v1460, %v1620
      %v1653 = vmax.f32 %v1461, %v1621
      %v1654 = vmax.f32 %v1462, %v1622
      %v1655 = vmax.f32 %v1463, %v1623
      %v1656 = vmax.f32 %v1464, %v1624
      %v1657 = vmax.f32 %v1465, %v1625
      %v1658 = vmax.f32 %v1466, %v1626
      %v1659 = vmax.f32 %v1467, %v1627
      %v1660 = vmax.f32 %v1468, %v1628
      %v1661 = vmax.f32 %v1469, %v1629
      %v1662 = vmax.f32 %v1470, %v1630
      %v1663 = vmax.f32 %v1471, %v1631
      %v1664 = vmax.f32 %v1472, %v1632
      %v1665 = vmax.f32 %v1473, %v1633
      %v1666 = vmax.f32 %v1474, %v1634
      %v1667 = vmax.f32 %v1475, %v1635
      %v1668 = vmax.f32 %v1476, %v1636
      %v1669 = vmax.f32 %v1477, %v1637
      %v1670 = vmax.f32 %v1478, %v1638
      %v1671 = vmax.f32 %v1479, %v1639
      %v1672 = vmax.f32 %v1480, %v1640
      %v1673 = vmax.f32 %v1481, %v1641
      %v1674 = vmax.f32 %v1482, %v1642
      %v1675 = vmax.f32 %v1483, %v1643
      %v1676 = vmax.f32 %v1484, %v1644
      %v1677 = vmax.f32 %v1485, %v1645
      %v1678 = vmax.f32 %v1486, %v1646
      %v1679 = vmax.f32 %v1487, %v1647
      %v1680 = vmax.f32 %v1488, %v1648
      %v1681 = vmax.f32 %v1489, %v1649
      %v1682 = vmax.f32 %v1490, %v1650
      %v1683 = vld [vmem:[%s2] sm:$0x1]
      %v1685 = vlaneseq
      %v1686 = vshrl.u32 %v1685, 7
      %v1687 = vsub.s32 0, %v1686
      %v1688 = vrot.slane %v1683, %v1687
      %v1690 = vadd.f32 %v1651, %v1688
      %v1691 = vadd.f32 %v1652, %v1688
      %v1692 = vadd.f32 %v1653, %v1688
      %v1693 = vadd.f32 %v1654, %v1688
      %v1694 = vadd.f32 %v1655, %v1688
      %v1695 = vadd.f32 %v1656, %v1688
      %v1696 = vadd.f32 %v1657, %v1688
      %v1697 = vadd.f32 %v1658, %v1688
      %v1698 = vadd.f32 %v1659, %v1688
      %v1699 = vadd.f32 %v1660, %v1688
      %v1700 = vadd.f32 %v1661, %v1688
      %v1701 = vadd.f32 %v1662, %v1688
      %v1702 = vadd.f32 %v1663, %v1688
      %v1703 = vadd.f32 %v1664, %v1688
      %v1704 = vadd.f32 %v1665, %v1688
      %v1705 = vadd.f32 %v1666, %v1688
      %v1706 = vadd.f32 %v1667, %v1688
      %v1707 = vadd.f32 %v1668, %v1688
      %v1708 = vadd.f32 %v1669, %v1688
      %v1709 = vadd.f32 %v1670, %v1688
      %v1710 = vadd.f32 %v1671, %v1688
      %v1711 = vadd.f32 %v1672, %v1688
      %v1712 = vadd.f32 %v1673, %v1688
      %v1713 = vadd.f32 %v1674, %v1688
      %v1714 = vadd.f32 %v1675, %v1688
      %v1715 = vadd.f32 %v1676, %v1688
      %v1716 = vadd.f32 %v1677, %v1688
      %v1717 = vadd.f32 %v1678, %v1688
      %v1718 = vadd.f32 %v1679, %v1688
      %v1719 = vadd.f32 %v1680, %v1688
      %v1720 = vadd.f32 %v1681, %v1688
      %v1721 = vadd.f32 %v1682, %v1688
      %v1722 = vmax.f32 %v1690, 0.0
      %v1723 = vmax.f32 %v1691, 0.0
      %v1724 = vmax.f32 %v1692, 0.0
      %v1725 = vmax.f32 %v1693, 0.0
      %v1726 = vmax.f32 %v1694, 0.0
      %v1727 = vmax.f32 %v1695, 0.0
      %v1728 = vmax.f32 %v1696, 0.0
      %v1729 = vmax.f32 %v1697, 0.0
      %v1730 = vmax.f32 %v1698, 0.0
      %v1731 = vmax.f32 %v1699, 0.0
      %v1732 = vmax.f32 %v1700, 0.0
      %v1733 = vmax.f32 %v1701, 0.0
      %v1734 = vmax.f32 %v1702, 0.0
      %v1735 = vmax.f32 %v1703, 0.0
      %v1736 = vmax.f32 %v1704, 0.0
      %v1737 = vmax.f32 %v1705, 0.0
      %v1738 = vmax.f32 %v1706, 0.0
      %v1739 = vmax.f32 %v1707, 0.0
      %v1740 = vmax.f32 %v1708, 0.0
      %v1741 = vmax.f32 %v1709, 0.0
      %v1742 = vmax.f32 %v1710, 0.0
      %v1743 = vmax.f32 %v1711, 0.0
      %v1744 = vmax.f32 %v1712, 0.0
      %v1745 = vmax.f32 %v1713, 0.0
      %v1746 = vmax.f32 %v1714, 0.0
      %v1747 = vmax.f32 %v1715, 0.0
      %v1748 = vmax.f32 %v1716, 0.0
      %v1749 = vmax.f32 %v1717, 0.0
      %v1750 = vmax.f32 %v1718, 0.0
      %v1751 = vmax.f32 %v1719, 0.0
      %v1752 = vmax.f32 %v1720, 0.0
      %v1753 = vmax.f32 %v1721, 0.0
      %v1754 = vpack.c.bf16 %v1723, %v1722
      %v1755 = vpack.c.bf16 %v1725, %v1724
      %v1756 = vpack.c.bf16 %v1727, %v1726
      %v1757 = vpack.c.bf16 %v1729, %v1728
      %v1758 = vpack.c.bf16 %v1731, %v1730
      %v1759 = vpack.c.bf16 %v1733, %v1732
      %v1760 = vpack.c.bf16 %v1735, %v1734
      %v1761 = vpack.c.bf16 %v1737, %v1736
      %v1762 = vpack.c.bf16 %v1739, %v1738
      %v1763 = vpack.c.bf16 %v1741, %v1740
      %v1764 = vpack.c.bf16 %v1743, %v1742
      %v1765 = vpack.c.bf16 %v1745, %v1744
      %v1766 = vpack.c.bf16 %v1747, %v1746
      %v1767 = vpack.c.bf16 %v1749, %v1748
      %v1768 = vpack.c.bf16 %v1751, %v1750
      %v1769 = vpack.c.bf16 %v1753, %v1752
      %v1786 = vunpack.c.l.b16 %v1754
      %v1787 = vunpack.c.h.b16 %v1754
      %v1788 = vunpack.c.l.b16 %v1755
      %v1789 = vunpack.c.h.b16 %v1755
      %v1790 = vunpack.c.l.b16 %v1756
      %v1791 = vunpack.c.h.b16 %v1756
      %v1792 = vunpack.c.l.b16 %v1757
      %v1793 = vunpack.c.h.b16 %v1757
      %v1794 = vunpack.c.l.b16 %v1758
      %v1795 = vunpack.c.h.b16 %v1758
      %v1796 = vunpack.c.l.b16 %v1759
      %v1797 = vunpack.c.h.b16 %v1759
      %v1798 = vunpack.c.l.b16 %v1760
      %v1799 = vunpack.c.h.b16 %v1760
      %v1800 = vunpack.c.l.b16 %v1761
      %v1801 = vunpack.c.h.b16 %v1761
      %v1802 = vunpack.c.l.b16 %v1762
      %v1803 = vunpack.c.h.b16 %v1762
      %v1804 = vunpack.c.l.b16 %v1763
      %v1805 = vunpack.c.h.b16 %v1763
      %v1806 = vunpack.c.l.b16 %v1764
      %v1807 = vunpack.c.h.b16 %v1764
      %v1808 = vunpack.c.l.b16 %v1765
      %v1809 = vunpack.c.h.b16 %v1765
      %v1810 = vunpack.c.l.b16 %v1766
      %v1811 = vunpack.c.h.b16 %v1766
      %v1812 = vunpack.c.l.b16 %v1767
      %v1813 = vunpack.c.h.b16 %v1767
      %v1814 = vunpack.c.l.b16 %v1768
      %v1815 = vunpack.c.h.b16 %v1768
      %v1816 = vunpack.c.l.b16 %v1769
      %v1817 = vunpack.c.h.b16 %v1769
      %v1818 = vpack.c.b16 %v1786, %v1786
      %v1819 = vpack.c.b16 %v1787, %v1787
      %v1820 = vpack.c.b16 %v1788, %v1788
      %v1821 = vpack.c.b16 %v1789, %v1789
      %v1822 = vpack.c.b16 %v1790, %v1790
      %v1823 = vpack.c.b16 %v1791, %v1791
      %v1824 = vpack.c.b16 %v1792, %v1792
      %v1825 = vpack.c.b16 %v1793, %v1793
      %v1826 = vpack.c.b16 %v1794, %v1794
      %v1827 = vpack.c.b16 %v1795, %v1795
      %v1828 = vpack.c.b16 %v1796, %v1796
      %v1829 = vpack.c.b16 %v1797, %v1797
      %v1830 = vpack.c.b16 %v1798, %v1798
      %v1831 = vpack.c.b16 %v1799, %v1799
      %v1832 = vpack.c.b16 %v1800, %v1800
      %v1833 = vpack.c.b16 %v1801, %v1801
      %v1834 = vpack.c.b16 %v1802, %v1802
      %v1835 = vpack.c.b16 %v1803, %v1803
      %v1836 = vpack.c.b16 %v1804, %v1804
      %v1837 = vpack.c.b16 %v1805, %v1805
      %v1838 = vpack.c.b16 %v1806, %v1806
      %v1839 = vpack.c.b16 %v1807, %v1807
      %v1840 = vpack.c.b16 %v1808, %v1808
      %v1841 = vpack.c.b16 %v1809, %v1809
      %v1842 = vpack.c.b16 %v1810, %v1810
      %v1843 = vpack.c.b16 %v1811, %v1811
      %v1844 = vpack.c.b16 %v1812, %v1812
      %v1845 = vpack.c.b16 %v1813, %v1813
      %v1846 = vpack.c.b16 %v1814, %v1814
      %v1847 = vpack.c.b16 %v1815, %v1815
      %v1848 = vpack.c.b16 %v1816, %v1816
      %v1849 = vpack.c.b16 %v1817, %v1817
      %vm1882 = vcmask 519168
      %1883 = vst.msk [vmem:[%s175] sm:$0xf] %vm1882, %v1818
      %1884 = vst.msk [vmem:[%s175 + $0x4] sm:$0xf] %vm1882, %v1819
      %1885 = vst.msk [vmem:[%s175 + $0x8] sm:$0xf] %vm1882, %v1820
      %1886 = vst.msk [vmem:[%s175 + $0xc] sm:$0xf] %vm1882, %v1821
      %1887 = vst.msk [vmem:[%s175 + $0x10] sm:$0xf] %vm1882, %v1822
      %1888 = vst.msk [vmem:[%s175 + $0x14] sm:$0xf] %vm1882, %v1823
      %1889 = vst.msk [vmem:[%s175 + $0x18] sm:$0xf] %vm1882, %v1824
      %1890 = vst.msk [vmem:[%s175 + $0x1c] sm:$0xf] %vm1882, %v1825
      %1891 = vst.msk [vmem:[%s175 + $0x20] sm:$0xf] %vm1882, %v1826
      %1892 = vst.msk [vmem:[%s175 + $0x24] sm:$0xf] %vm1882, %v1827
      %1893 = vst.msk [vmem:[%s175 + $0x28] sm:$0xf] %vm1882, %v1828
      %1894 = vst.msk [vmem:[%s175 + $0x2c] sm:$0xf] %vm1882, %v1829
      %1895 = vst.msk [vmem:[%s175 + $0x30] sm:$0xf] %vm1882, %v1830
      %1896 = vst.msk [vmem:[%s175 + $0x34] sm:$0xf] %vm1882, %v1831
      %1897 = vst.msk [vmem:[%s175 + $0x38] sm:$0xf] %vm1882, %v1832
      %1898 = vst.msk [vmem:[%s175 + $0x3c] sm:$0xf] %vm1882, %v1833
      %1899 = vst.msk [vmem:[%s175 + $0x40] sm:$0xf] %vm1882, %v1834
      %1900 = vst.msk [vmem:[%s175 + $0x44] sm:$0xf] %vm1882, %v1835
      %1901 = vst.msk [vmem:[%s175 + $0x48] sm:$0xf] %vm1882, %v1836
      %1902 = vst.msk [vmem:[%s175 + $0x4c] sm:$0xf] %vm1882, %v1837
      %1903 = vst.msk [vmem:[%s175 + $0x50] sm:$0xf] %vm1882, %v1838
      %1904 = vst.msk [vmem:[%s175 + $0x54] sm:$0xf] %vm1882, %v1839
      %1905 = vst.msk [vmem:[%s175 + $0x58] sm:$0xf] %vm1882, %v1840
      %1906 = vst.msk [vmem:[%s175 + $0x5c] sm:$0xf] %vm1882, %v1841
      %1907 = vst.msk [vmem:[%s175 + $0x60] sm:$0xf] %vm1882, %v1842
      %1908 = vst.msk [vmem:[%s175 + $0x64] sm:$0xf] %vm1882, %v1843
      %1909 = vst.msk [vmem:[%s175 + $0x68] sm:$0xf] %vm1882, %v1844
      %1910 = vst.msk [vmem:[%s175 + $0x6c] sm:$0xf] %vm1882, %v1845
      %1911 = vst.msk [vmem:[%s175 + $0x70] sm:$0xf] %vm1882, %v1846
      %1912 = vst.msk [vmem:[%s175 + $0x74] sm:$0xf] %vm1882, %v1847
      %1913 = vst.msk [vmem:[%s175 + $0x78] sm:$0xf] %vm1882, %v1848
      %1914 = vst.msk [vmem:[%s175 + $0x7c] sm:$0xf] %vm1882, %v1849
      %s1915 = smul.u32 32, %s14
      %p1916 = scmp.lt.s32.totalorder %s1915, 63
      %s1917 = scalar_select %p1916, %s1915, 63
      %s1918 = smul.addr %s1917, 4
      %s1919 = scalar_lea.vmem %s3, %s1918
      // Predicated region
      $region33: #{forward.5} parent=31 // pred_check
        %p1920 = pneg %p100
      $region34: #{forward.5} parent=31 // pred_check_branch
        %1922 = sbr.rel (%p1920) target = $region36
      $region35: #{forward.5} parent=31 // pred_region
        %s1923 = smul.u32 32, %s14
      $region36: #{forward.5} parent=31 // pred_fallthru
        _
    $region32: #{forward.5} parent=5 // pred_fallthru
      _
    %p1924 = scmp.le.s32.totalorder 2, %s9
    // Predicated region
    $region37: #{forward.5} parent=5 // pred_check
      %p1925 = pneg %p1924
    $region38: #{forward.5} parent=5 // pred_check_branch
      %1927 = sbr.rel (%p1925) target = $region40
    $region39: #{forward.5} parent=5 // pred_region
      %s1928 = ssub.s32 %s9, 2
      // Predicated region
      $region41: #{forward.5} parent=39 // pred_check
        %p1929 = pneg %p106
      $region42: #{forward.5} parent=39 // pred_check_branch
        %1931 = sbr.rel (%p1929) target = $region44
      $region43: #{forward.5} parent=39 // pred_region
        %s1932 = smul.u32 32, %s15
        %p1933 = scmp.lt.s32.totalorder %s1932, 63
        %s1934 = scalar_select %p1933, %s1932, 63
        %s1935 = smul.addr %s1934, 4
        %s1936 = scalar_lea.vmem %s3, %s1935
      $region44: #{forward.5} parent=39 // pred_fallthru
        _
    $region40: #{forward.5} parent=5 // pred_fallthru
      _
  $region6: #{forward.5} parent=0 // loop_footer
    %s13 = sadd.s32 1, %s9
  $region7: #{forward.5} parent=0 // loop_footer_branch
    %8 = sbr.rel target = $region3
  $region8: #{forward.5} parent=0 // loop_exit
    _

// kernel: forward.6
$region0: #{forward.6}
  #allocation0 [shape = 'u32[]', space=smem, size = 0x4, offset = 0x4, fixed_abs, tag = 'smem constant byte address 0x4 - core index']
  #allocation1 [shape = 'u32[144,128]{1,0:T(1,128)}', space=vmem, size = 0x12000, scoped, tag = 'internal scratch']
  %s0 = inlined_call_operand.vmem [shape: bf16[128,1024], index: 0, kind: input, shape index: {}]
  %s1 = inlined_call_operand.vmem [shape: bf16[1024,512], index: 1, kind: input, shape index: {}]
  %s2 = inlined_call_operand.vmem [shape: f32[1,128], index: 2, kind: input, shape index: {}]
  %s3 = inlined_call_operand.vmem [shape: bf16[128,128], index: 3, kind: output, shape index: {}]
  %s4 = sld [smem:[#allocation0]]
  $region45: #{forward.6} parent=0
    _
  %s6 = ssub.s32 1, %s4
  %s7 = scalar_select 0, %s6, %s4
  loop: start=0, step=1, limit=4
  $region2: #{forward.6} parent=0 // loop_pre_header
    _
  $region3: #{forward.6} parent=0 // loop_header
    %s9 = sphi 0, %s13
    %p10 = scmp.ge.s32.totalorder %s9, 4
    %s19 = sphi 0, %s21
    %s22 = sphi 0, %s19
    %s23 = sphi 0, %s22
    %s39 = sphi 0, %s23
    %s43 = sphi 0, %s43
    %s45 = sphi 0, %s43
    %s46 = sphi 0, %s45
    %s60 = sphi 0, %s46
    %s64 = sphi 0, %s64
    %s66 = sphi 0, %s64
    %s67 = sphi 0, %s66
    %s81 = sphi 0, %s67
    %s87 = sphi 0, %s89
    %s90 = sphi 0, %s87
    %s91 = sphi 0, %s90
    %s107 = sphi 0, %s91
  $region4: #{forward.6} parent=0 // loop_header_branch
    %12 = sbr.rel (%p10) target = $region8
  $region5: #{forward.6} parent=0 // loop_body
    %s14 = ssub.s32 %s9, 1
    %s15 = ssub.s32 %s9, 2
    %s16 = sadd.s32 %s9, 1
    %s17 = ssub.s32 %s9, %s16
    %p18 = scmp.eq.s32.totalorder %s17, 0
    %s20 = sadd.s32 %s19, 1
    %s21 = scalar_select %p18, %s19, %s20
    %p24 = pneg %p18
    %p25 = scmp.eq.s32.totalorder %s9, 1
    %p26 = por %p24, %p25
    %p27 = scmp.ne.s32.totalorder %s19, %s22
    %p28 = scmp.eq.s32.totalorder %s9, 0
    %p29 = por %p27, %p28
    %p30 = scmp.ne.s32.totalorder %s19, %s22
    %p31 = scmp.eq.s32.totalorder %s14, 1
    %p32 = por %p30, %p31
    %p33 = scmp.ne.s32.totalorder %s22, %s23
    %p34 = scmp.eq.s32.totalorder %s14, 0
    %p35 = por %p33, %p34
    %p36 = scmp.ne.s32.totalorder %s22, %s23
    %p37 = scmp.eq.s32.totalorder %s15, 1
    %p38 = por %p36, %p37
    %p40 = scmp.ne.s32.totalorder %s23, %s39
    %p41 = scmp.eq.s32.totalorder %s15, 0
    %p42 = por %p40, %p41
    %s44 = sadd.s32 %s43, 1
    %p47 = scmp.eq.s32.totalorder %s9, 1
    %p48 = scmp.ne.s32.totalorder %s43, %s45
    %p49 = scmp.eq.s32.totalorder %s9, 0
    %p50 = por %p48, %p49
    %p51 = scmp.ne.s32.totalorder %s43, %s45
    %p52 = scmp.eq.s32.totalorder %s14, 1
    %p53 = por %p51, %p52
    %p54 = scmp.ne.s32.totalorder %s45, %s46
    %p55 = scmp.eq.s32.totalorder %s14, 0
    %p56 = por %p54, %p55
    %p57 = scmp.ne.s32.totalorder %s45, %s46
    %p58 = scmp.eq.s32.totalorder %s15, 1
    %p59 = por %p57, %p58
    %p61 = scmp.ne.s32.totalorder %s46, %s60
    %p62 = scmp.eq.s32.totalorder %s15, 0
    %p63 = por %p61, %p62
    %s65 = sadd.s32 %s64, 1
    %p68 = scmp.eq.s32.totalorder %s9, 1
    %p69 = scmp.ne.s32.totalorder %s64, %s66
    %p70 = scmp.eq.s32.totalorder %s9, 0
    %p71 = por %p69, %p70
    %p72 = scmp.ne.s32.totalorder %s64, %s66
    %p73 = scmp.eq.s32.totalorder %s14, 1
    %p74 = por %p72, %p73
    %p75 = scmp.ne.s32.totalorder %s66, %s67
    %p76 = scmp.eq.s32.totalorder %s14, 0
    %p77 = por %p75, %p76
    %p78 = scmp.ne.s32.totalorder %s66, %s67
    %p79 = scmp.eq.s32.totalorder %s15, 1
    %p80 = por %p78, %p79
    %p82 = scmp.ne.s32.totalorder %s67, %s81
    %p83 = scmp.eq.s32.totalorder %s15, 0
    %p84 = por %p82, %p83
    %s85 = ssub.s32 %s9, %s16
    %p86 = scmp.eq.s32.totalorder %s85, 0
    %s88 = sadd.s32 %s87, 1
    %s89 = scalar_select %p86, %s87, %s88
    %p92 = pneg %p86
    %p93 = scmp.eq.s32.totalorder %s9, 1
    %p94 = por %p92, %p93
    %p95 = scmp.ne.s32.totalorder %s87, %s90
    %p96 = scmp.eq.s32.totalorder %s9, 0
    %p97 = por %p95, %p96
    %p98 = scmp.ne.s32.totalorder %s87, %s90
    %p99 = scmp.eq.s32.totalorder %s14, 1
    %p100 = por %p98, %p99
    %p101 = scmp.ne.s32.totalorder %s90, %s91
    %p102 = scmp.eq.s32.totalorder %s14, 0
    %p103 = por %p101, %p102
    %p104 = scmp.ne.s32.totalorder %s90, %s91
    %p105 = scmp.eq.s32.totalorder %s15, 1
    %p106 = por %p104, %p105
    %p108 = scmp.ne.s32.totalorder %s91, %s107
    %p109 = scmp.eq.s32.totalorder %s15, 0
    %p110 = por %p108, %p109
    %p111 = scmp.le.s32.totalorder 1, %s9
    %p112 = scmp.lt.s32.totalorder %s9, 3
    %p113 = pnand %p111, %p112
    %p114 = pneg %p113
    // Predicated region
    $region9: #{forward.6} parent=5 // pred_check
      _
    $region10: #{forward.6} parent=5 // pred_check_branch
      %116 = sbr.rel (%p113) target = $region12
    $region11: #{forward.6} parent=5 // pred_region
      %s117 = ssub.s32 %s9, 1
      // Predicated region
      $region13: #{forward.6} parent=11 // pred_check
        %p118 = pneg %p56
      $region14: #{forward.6} parent=11 // pred_check_branch
        %120 = sbr.rel (%p118) target = $region16
      $region15: #{forward.6} parent=11 // pred_region
        _
      $region16: #{forward.6} parent=11 // pred_fallthru
        _
      // Predicated region
      $region17: #{forward.6} parent=11 // pred_check
        %p121 = pneg %p77
      $region18: #{forward.6} parent=11 // pred_check_branch
        %123 = sbr.rel (%p121) target = $region20
      $region19: #{forward.6} parent=11 // pred_region
        _
      $region20: #{forward.6} parent=11 // pred_fallthru
        _
    $region12: #{forward.6} parent=5 // pred_fallthru
      _
    %p124 = scmp.lt.s32.totalorder %s9, 2
    // Predicated region
    $region21: #{forward.6} parent=5 // pred_check
      %p125 = pneg %p124
    $region22: #{forward.6} parent=5 // pred_check_branch
      %127 = sbr.rel (%p125) target = $region24
    $region23: #{forward.6} parent=5 // pred_region
      // Predicated region
      $region25: #{forward.6} parent=23 // pred_check
        %p128 = pneg %p29
      $region26: #{forward.6} parent=23 // pred_check_branch
        %130 = sbr.rel (%p128) target = $region28
      $region27: #{forward.6} parent=23 // pred_region
        %s131 = smul.u32 8, %s9
        %p132 = scmp.lt.s32.totalorder %s131, 15
        %s133 = scalar_select %p132, %s131, 15
        %s134 = smul.addr %s133, 8
        %s135 = smul.addr %s134, 4
        %s136 = scalar_lea.vmem %s0, %s135
        %s137 = smul.u32 8, %s9
      $region28: #{forward.6} parent=23 // pred_fallthru
        _
    $region24: #{forward.6} parent=5 // pred_fallthru
      _
    %p138 = scmp.le.s32.totalorder 1, %s9
    %p139 = scmp.lt.s32.totalorder %s9, 3
    %p140 = pnand %p138, %p139
    %p141 = pneg %p140
    // Predicated region
    $region29: #{forward.6} parent=5 // pred_check
      _
    $region30: #{forward.6} parent=5 // pred_check_branch
      %143 = sbr.rel (%p140) target = $region32
    $region31: #{forward.6} parent=5 // pred_region
      %s144 = ssub.s32 %s9, 1
      %s145 = smul.u32 8, %s14
      %p146 = scmp.lt.s32.totalorder %s145, 15
      %s147 = scalar_select %p146, %s145, 15
      %s148 = smul.addr %s147, 8
      %s149 = smul.addr %s148, 4
      %s150 = scalar_lea.vmem %s0, %s149
      %p151 = pneg %p35
      %p152 = pneg %p32
      %p153 = pneg %p56
      %p154 = pneg %p53
      %p155 = pneg %p77
      %p156 = pneg %p74
      %p157 = pneg %p103
      %p158 = pneg %p100
      %s159 = smul.u32 8, %s14
      %p160 = scmp.lt.s32.totalorder %s159, 15
      %s161 = scalar_select %p160, %s159, 15
      %s162 = smul.addr %s161, 4
      %s163 = scalar_lea.vmem %s3, %s162
      %s164 = smul.u32 8, %s14
      %p165 = scmp.lt.s32.totalorder %s164, 15
      %s166 = scalar_select %p165, %s164, 15
      %s167 = smul.addr %s166, 8
      %s168 = smul.addr %s167, 4
      %s169 = scalar_lea.vmem %s0, %s168
      %s170 = smul.u32 8, %s14
      %s171 = smul.u32 8, %s14
      %p172 = scmp.lt.s32.totalorder %s171, 15
      %s173 = scalar_select %p172, %s171, 15
      %s174 = smul.addr %s173, 4
      %s175 = scalar_lea.vmem %s3, %s174
      %s176 = smul.u32 8, %s14
      %v177 = vld [vmem:[%s169] sm:$0xff]
      %v178 = vld [vmem:[%s169 + $0x8] sm:$0xff]
      %v179 = vld [vmem:[%s169 + $0x10] sm:$0xff]
      %v180 = vld [vmem:[%s169 + $0x18] sm:$0xff]
      %v181 = vld [vmem:[%s169 + $0x20] sm:$0xff]
      %v182 = vld [vmem:[%s169 + $0x28] sm:$0xff]
      %v183 = vld [vmem:[%s169 + $0x30] sm:$0xff]
      %v184 = vld [vmem:[%s169 + $0x38] sm:$0xff]
      %v185 = vld [vmem:[%s169 + $0x40] sm:$0xff]
      %v186 = vld [vmem:[%s169 + $0x48] sm:$0xff]
      %v187 = vld [vmem:[%s169 + $0x50] sm:$0xff]
      %v188 = vld [vmem:[%s169 + $0x58] sm:$0xff]
      %v189 = vld [vmem:[%s169 + $0x60] sm:$0xff]
      %v190 = vld [vmem:[%s169 + $0x68] sm:$0xff]
      %v191 = vld [vmem:[%s169 + $0x70] sm:$0xff]
      %v192 = vld [vmem:[%s169 + $0x78] sm:$0xff]
      %v193 = vld [vmem:[%s169 + $0x80] sm:$0xff]
      %v194 = vld [vmem:[%s169 + $0x88] sm:$0xff]
      %v195 = vld [vmem:[%s169 + $0x90] sm:$0xff]
      %v196 = vld [vmem:[%s169 + $0x98] sm:$0xff]
      %v197 = vld [vmem:[%s169 + $0xa0] sm:$0xff]
      %v198 = vld [vmem:[%s169 + $0xa8] sm:$0xff]
      %v199 = vld [vmem:[%s169 + $0xb0] sm:$0xff]
      %v200 = vld [vmem:[%s169 + $0xb8] sm:$0xff]
      %v201 = vld [vmem:[%s169 + $0xc0] sm:$0xff]
      %v202 = vld [vmem:[%s169 + $0xc8] sm:$0xff]
      %v203 = vld [vmem:[%s169 + $0xd0] sm:$0xff]
      %v204 = vld [vmem:[%s169 + $0xd8] sm:$0xff]
      %v205 = vld [vmem:[%s169 + $0xe0] sm:$0xff]
      %v206 = vld [vmem:[%s169 + $0xe8] sm:$0xff]
      %v207 = vld [vmem:[%s169 + $0xf0] sm:$0xff]
      %v208 = vld [vmem:[%s169 + $0xf8] sm:$0xff]
      %v209 = vld [vmem:[%s1] sm:$0xff]
      %v210 = vld [vmem:[%s1 + $0x8] sm:$0xff]
      %v211 = vld [vmem:[%s1 + $0x10] sm:$0xff]
      %v212 = vld [vmem:[%s1 + $0x18] sm:$0xff]
      %v213 = vld [vmem:[%s1 + $0x20] sm:$0xff]
      %v214 = vld [vmem:[%s1 + $0x28] sm:$0xff]
      %v215 = vld [vmem:[%s1 + $0x30] sm:$0xff]
      %v216 = vld [vmem:[%s1 + $0x38] sm:$0xff]
      %v217 = vld [vmem:[%s1 + $0x40] sm:$0xff]
      %v218 = vld [vmem:[%s1 + $0x48] sm:$0xff]
      %v219 = vld [vmem:[%s1 + $0x50] sm:$0xff]
      %v220 = vld [vmem:[%s1 + $0x58] sm:$0xff]
      %v221 = vld [vmem:[%s1 + $0x60] sm:$0xff]
      %v222 = vld [vmem:[%s1 + $0x68] sm:$0xff]
      %v223 = vld [vmem:[%s1 + $0x70] sm:$0xff]
      %v224 = vld [vmem:[%s1 + $0x78] sm:$0xff]
      %v225 = vld [vmem:[%s1 + $0x80] sm:$0xff]
      %v226 = vld [vmem:[%s1 + $0x88] sm:$0xff]
      %v227 = vld [vmem:[%s1 + $0x90] sm:$0xff]
      %v228 = vld [vmem:[%s1 + $0x98] sm:$0xff]
      %v229 = vld [vmem:[%s1 + $0xa0] sm:$0xff]
      %v230 = vld [vmem:[%s1 + $0xa8] sm:$0xff]
      %v231 = vld [vmem:[%s1 + $0xb0] sm:$0xff]
      %v232 = vld [vmem:[%s1 + $0xb8] sm:$0xff]
      %v233 = vld [vmem:[%s1 + $0xc0] sm:$0xff]
      %v234 = vld [vmem:[%s1 + $0xc8] sm:$0xff]
      %v235 = vld [vmem:[%s1 + $0xd0] sm:$0xff]
      %v236 = vld [vmem:[%s1 + $0xd8] sm:$0xff]
      %v237 = vld [vmem:[%s1 + $0xe0] sm:$0xff]
      %v238 = vld [vmem:[%s1 + $0xe8] sm:$0xff]
      %v239 = vld [vmem:[%s1 + $0xf0] sm:$0xff]
      %v240 = vld [vmem:[%s1 + $0xf8] sm:$0xff]
      %v241 = vld [vmem:[%s1 + $0x100] sm:$0xff]
      %v242 = vld [vmem:[%s1 + $0x108] sm:$0xff]
      %v243 = vld [vmem:[%s1 + $0x110] sm:$0xff]
      %v244 = vld [vmem:[%s1 + $0x118] sm:$0xff]
      %v245 = vld [vmem:[%s1 + $0x120] sm:$0xff]
      %v246 = vld [vmem:[%s1 + $0x128] sm:$0xff]
      %v247 = vld [vmem:[%s1 + $0x130] sm:$0xff]
      %v248 = vld [vmem:[%s1 + $0x138] sm:$0xff]
      %v249 = vld [vmem:[%s1 + $0x140] sm:$0xff]
      %v250 = vld [vmem:[%s1 + $0x148] sm:$0xff]
      %v251 = vld [vmem:[%s1 + $0x150] sm:$0xff]
      %v252 = vld [vmem:[%s1 + $0x158] sm:$0xff]
      %v253 = vld [vmem:[%s1 + $0x160] sm:$0xff]
      %v254 = vld [vmem:[%s1 + $0x168] sm:$0xff]
      %v255 = vld [vmem:[%s1 + $0x170] sm:$0xff]
      %v256 = vld [vmem:[%s1 + $0x178] sm:$0xff]
      %v257 = vld [vmem:[%s1 + $0x180] sm:$0xff]
      %v258 = vld [vmem:[%s1 + $0x188] sm:$0xff]
      %v259 = vld [vmem:[%s1 + $0x190] sm:$0xff]
      %v260 = vld [vmem:[%s1 + $0x198] sm:$0xff]
      %v261 = vld [vmem:[%s1 + $0x1a0] sm:$0xff]
      %v262 = vld [vmem:[%s1 + $0x1a8] sm:$0xff]
      %v263 = vld [vmem:[%s1 + $0x1b0] sm:$0xff]
      %v264 = vld [vmem:[%s1 + $0x1b8] sm:$0xff]
      %v265 = vld [vmem:[%s1 + $0x1c0] sm:$0xff]
      %v266 = vld [vmem:[%s1 + $0x1c8] sm:$0xff]
      %v267 = vld [vmem:[%s1 + $0x1d0] sm:$0xff]
      %v268 = vld [vmem:[%s1 + $0x1d8] sm:$0xff]
      %v269 = vld [vmem:[%s1 + $0x1e0] sm:$0xff]
      %v270 = vld [vmem:[%s1 + $0x1e8] sm:$0xff]
      %v271 = vld [vmem:[%s1 + $0x1f0] sm:$0xff]
      %v272 = vld [vmem:[%s1 + $0x1f8] sm:$0xff]
      %v273 = vld [vmem:[%s1 + $0x200] sm:$0xff]
      %v274 = vld [vmem:[%s1 + $0x208] sm:$0xff]
      %v275 = vld [vmem:[%s1 + $0x210] sm:$0xff]
      %v276 = vld [vmem:[%s1 + $0x218] sm:$0xff]
      %v277 = vld [vmem:[%s1 + $0x220] sm:$0xff]
      %v278 = vld [vmem:[%s1 + $0x228] sm:$0xff]
      %v279 = vld [vmem:[%s1 + $0x230] sm:$0xff]
      %v280 = vld [vmem:[%s1 + $0x238] sm:$0xff]
      %v281 = vld [vmem:[%s1 + $0x240] sm:$0xff]
      %v282 = vld [vmem:[%s1 + $0x248] sm:$0xff]
      %v283 = vld [vmem:[%s1 + $0x250] sm:$0xff]
      %v284 = vld [vmem:[%s1 + $0x258] sm:$0xff]
      %v285 = vld [vmem:[%s1 + $0x260] sm:$0xff]
      %v286 = vld [vmem:[%s1 + $0x268] sm:$0xff]
      %v287 = vld [vmem:[%s1 + $0x270] sm:$0xff]
      %v288 = vld [vmem:[%s1 + $0x278] sm:$0xff]
      %v289 = vld [vmem:[%s1 + $0x280] sm:$0xff]
      %v290 = vld [vmem:[%s1 + $0x288] sm:$0xff]
      %v291 = vld [vmem:[%s1 + $0x290] sm:$0xff]
      %v292 = vld [vmem:[%s1 + $0x298] sm:$0xff]
      %v293 = vld [vmem:[%s1 + $0x2a0] sm:$0xff]
      %v294 = vld [vmem:[%s1 + $0x2a8] sm:$0xff]
      %v295 = vld [vmem:[%s1 + $0x2b0] sm:$0xff]
      %v296 = vld [vmem:[%s1 + $0x2b8] sm:$0xff]
      %v297 = vld [vmem:[%s1 + $0x2c0] sm:$0xff]
      %v298 = vld [vmem:[%s1 + $0x2c8] sm:$0xff]
      %v299 = vld [vmem:[%s1 + $0x2d0] sm:$0xff]
      %v300 = vld [vmem:[%s1 + $0x2d8] sm:$0xff]
      %v301 = vld [vmem:[%s1 + $0x2e0] sm:$0xff]
      %v302 = vld [vmem:[%s1 + $0x2e8] sm:$0xff]
      %v303 = vld [vmem:[%s1 + $0x2f0] sm:$0xff]
      %v304 = vld [vmem:[%s1 + $0x2f8] sm:$0xff]
      %v305 = vld [vmem:[%s1 + $0x300] sm:$0xff]
      %v306 = vld [vmem:[%s1 + $0x308] sm:$0xff]
      %v307 = vld [vmem:[%s1 + $0x310] sm:$0xff]
      %v308 = vld [vmem:[%s1 + $0x318] sm:$0xff]
      %v309 = vld [vmem:[%s1 + $0x320] sm:$0xff]
      %v310 = vld [vmem:[%s1 + $0x328] sm:$0xff]
      %v311 = vld [vmem:[%s1 + $0x330] sm:$0xff]
      %v312 = vld [vmem:[%s1 + $0x338] sm:$0xff]
      %v313 = vld [vmem:[%s1 + $0x340] sm:$0xff]
      %v314 = vld [vmem:[%s1 + $0x348] sm:$0xff]
      %v315 = vld [vmem:[%s1 + $0x350] sm:$0xff]
      %v316 = vld [vmem:[%s1 + $0x358] sm:$0xff]
      %v317 = vld [vmem:[%s1 + $0x360] sm:$0xff]
      %v318 = vld [vmem:[%s1 + $0x368] sm:$0xff]
      %v319 = vld [vmem:[%s1 + $0x370] sm:$0xff]
      %v320 = vld [vmem:[%s1 + $0x378] sm:$0xff]
      %v321 = vld [vmem:[%s1 + $0x380] sm:$0xff]
      %v322 = vld [vmem:[%s1 + $0x388] sm:$0xff]
      %v323 = vld [vmem:[%s1 + $0x390] sm:$0xff]
      %v324 = vld [vmem:[%s1 + $0x398] sm:$0xff]
      %v325 = vld [vmem:[%s1 + $0x3a0] sm:$0xff]
      %v326 = vld [vmem:[%s1 + $0x3a8] sm:$0xff]
      %v327 = vld [vmem:[%s1 + $0x3b0] sm:$0xff]
      %v328 = vld [vmem:[%s1 + $0x3b8] sm:$0xff]
      %v329 = vld [vmem:[%s1 + $0x3c0] sm:$0xff]
      %v330 = vld [vmem:[%s1 + $0x3c8] sm:$0xff]
      %v331 = vld [vmem:[%s1 + $0x3d0] sm:$0xff]
      %v332 = vld [vmem:[%s1 + $0x3d8] sm:$0xff]
      %v333 = vld [vmem:[%s1 + $0x3e0] sm:$0xff]
      %v334 = vld [vmem:[%s1 + $0x3e8] sm:$0xff]
      %v335 = vld [vmem:[%s1 + $0x3f0] sm:$0xff]
      %v336 = vld [vmem:[%s1 + $0x3f8] sm:$0xff]
      %v337 = vld [vmem:[%s1 + $0x400] sm:$0xff]
      %v338 = vld [vmem:[%s1 + $0x408] sm:$0xff]
      %v339 = vld [vmem:[%s1 + $0x410] sm:$0xff]
      %v340 = vld [vmem:[%s1 + $0x418] sm:$0xff]
      %v341 = vld [vmem:[%s1 + $0x420] sm:$0xff]
      %v342 = vld [vmem:[%s1 + $0x428] sm:$0xff]
      %v343 = vld [vmem:[%s1 + $0x430] sm:$0xff]
      %v344 = vld [vmem:[%s1 + $0x438] sm:$0xff]
      %v345 = vld [vmem:[%s1 + $0x440] sm:$0xff]
      %v346 = vld [vmem:[%s1 + $0x448] sm:$0xff]
      %v347 = vld [vmem:[%s1 + $0x450] sm:$0xff]
      %v348 = vld [vmem:[%s1 + $0x458] sm:$0xff]
      %v349 = vld [vmem:[%s1 + $0x460] sm:$0xff]
      %v350 = vld [vmem:[%s1 + $0x468] sm:$0xff]
      %v351 = vld [vmem:[%s1 + $0x470] sm:$0xff]
      %v352 = vld [vmem:[%s1 + $0x478] sm:$0xff]
      %v353 = vld [vmem:[%s1 + $0x480] sm:$0xff]
      %v354 = vld [vmem:[%s1 + $0x488] sm:$0xff]
      %v355 = vld [vmem:[%s1 + $0x490] sm:$0xff]
      %v356 = vld [vmem:[%s1 + $0x498] sm:$0xff]
      %v357 = vld [vmem:[%s1 + $0x4a0] sm:$0xff]
      %v358 = vld [vmem:[%s1 + $0x4a8] sm:$0xff]
      %v359 = vld [vmem:[%s1 + $0x4b0] sm:$0xff]
      %v360 = vld [vmem:[%s1 + $0x4b8] sm:$0xff]
      %v361 = vld [vmem:[%s1 + $0x4c0] sm:$0xff]
      %v362 = vld [vmem:[%s1 + $0x4c8] sm:$0xff]
      %v363 = vld [vmem:[%s1 + $0x4d0] sm:$0xff]
      %v364 = vld [vmem:[%s1 + $0x4d8] sm:$0xff]
      %v365 = vld [vmem:[%s1 + $0x4e0] sm:$0xff]
      %v366 = vld [vmem:[%s1 + $0x4e8] sm:$0xff]
      %v367 = vld [vmem:[%s1 + $0x4f0] sm:$0xff]
      %v368 = vld [vmem:[%s1 + $0x4f8] sm:$0xff]
      %v369 = vld [vmem:[%s1 + $0x500] sm:$0xff]
      %v370 = vld [vmem:[%s1 + $0x508] sm:$0xff]
      %v371 = vld [vmem:[%s1 + $0x510] sm:$0xff]
      %v372 = vld [vmem:[%s1 + $0x518] sm:$0xff]
      %v373 = vld [vmem:[%s1 + $0x520] sm:$0xff]
      %v374 = vld [vmem:[%s1 + $0x528] sm:$0xff]
      %v375 = vld [vmem:[%s1 + $0x530] sm:$0xff]
      %v376 = vld [vmem:[%s1 + $0x538] sm:$0xff]
      %v377 = vld [vmem:[%s1 + $0x540] sm:$0xff]
      %v378 = vld [vmem:[%s1 + $0x548] sm:$0xff]
      %v379 = vld [vmem:[%s1 + $0x550] sm:$0xff]
      %v380 = vld [vmem:[%s1 + $0x558] sm:$0xff]
      %v381 = vld [vmem:[%s1 + $0x560] sm:$0xff]
      %v382 = vld [vmem:[%s1 + $0x568] sm:$0xff]
      %v383 = vld [vmem:[%s1 + $0x570] sm:$0xff]
      %v384 = vld [vmem:[%s1 + $0x578] sm:$0xff]
      %v385 = vld [vmem:[%s1 + $0x580] sm:$0xff]
      %v386 = vld [vmem:[%s1 + $0x588] sm:$0xff]
      %v387 = vld [vmem:[%s1 + $0x590] sm:$0xff]
      %v388 = vld [vmem:[%s1 + $0x598] sm:$0xff]
      %v389 = vld [vmem:[%s1 + $0x5a0] sm:$0xff]
      %v390 = vld [vmem:[%s1 + $0x5a8] sm:$0xff]
      %v391 = vld [vmem:[%s1 + $0x5b0] sm:$0xff]
      %v392 = vld [vmem:[%s1 + $0x5b8] sm:$0xff]
      %v393 = vld [vmem:[%s1 + $0x5c0] sm:$0xff]
      %v394 = vld [vmem:[%s1 + $0x5c8] sm:$0xff]
      %v395 = vld [vmem:[%s1 + $0x5d0] sm:$0xff]
      %v396 = vld [vmem:[%s1 + $0x5d8] sm:$0xff]
      %v397 = vld [vmem:[%s1 + $0x5e0] sm:$0xff]
      %v398 = vld [vmem:[%s1 + $0x5e8] sm:$0xff]
      %v399 = vld [vmem:[%s1 + $0x5f0] sm:$0xff]
      %v400 = vld [vmem:[%s1 + $0x5f8] sm:$0xff]
      %v401 = vld [vmem:[%s1 + $0x600] sm:$0xff]
      %v402 = vld [vmem:[%s1 + $0x608] sm:$0xff]
      %v403 = vld [vmem:[%s1 + $0x610] sm:$0xff]
      %v404 = vld [vmem:[%s1 + $0x618] sm:$0xff]
      %v405 = vld [vmem:[%s1 + $0x620] sm:$0xff]
      %v406 = vld [vmem:[%s1 + $0x628] sm:$0xff]
      %v407 = vld [vmem:[%s1 + $0x630] sm:$0xff]
      %v408 = vld [vmem:[%s1 + $0x638] sm:$0xff]
      %v409 = vld [vmem:[%s1 + $0x640] sm:$0xff]
      %v410 = vld [vmem:[%s1 + $0x648] sm:$0xff]
      %v411 = vld [vmem:[%s1 + $0x650] sm:$0xff]
      %v412 = vld [vmem:[%s1 + $0x658] sm:$0xff]
      %v413 = vld [vmem:[%s1 + $0x660] sm:$0xff]
      %v414 = vld [vmem:[%s1 + $0x668] sm:$0xff]
      %v415 = vld [vmem:[%s1 + $0x670] sm:$0xff]
      %v416 = vld [vmem:[%s1 + $0x678] sm:$0xff]
      %v417 = vld [vmem:[%s1 + $0x680] sm:$0xff]
      %v418 = vld [vmem:[%s1 + $0x688] sm:$0xff]
      %v419 = vld [vmem:[%s1 + $0x690] sm:$0xff]
      %v420 = vld [vmem:[%s1 + $0x698] sm:$0xff]
      %v421 = vld [vmem:[%s1 + $0x6a0] sm:$0xff]
      %v422 = vld [vmem:[%s1 + $0x6a8] sm:$0xff]
      %v423 = vld [vmem:[%s1 + $0x6b0] sm:$0xff]
      %v424 = vld [vmem:[%s1 + $0x6b8] sm:$0xff]
      %v425 = vld [vmem:[%s1 + $0x6c0] sm:$0xff]
      %v426 = vld [vmem:[%s1 + $0x6c8] sm:$0xff]
      %v427 = vld [vmem:[%s1 + $0x6d0] sm:$0xff]
      %v428 = vld [vmem:[%s1 + $0x6d8] sm:$0xff]
      %v429 = vld [vmem:[%s1 + $0x6e0] sm:$0xff]
      %v430 = vld [vmem:[%s1 + $0x6e8] sm:$0xff]
      %v431 = vld [vmem:[%s1 + $0x6f0] sm:$0xff]
      %v432 = vld [vmem:[%s1 + $0x6f8] sm:$0xff]
      %v433 = vld [vmem:[%s1 + $0x700] sm:$0xff]
      %v434 = vld [vmem:[%s1 + $0x708] sm:$0xff]
      %v435 = vld [vmem:[%s1 + $0x710] sm:$0xff]
      %v436 = vld [vmem:[%s1 + $0x718] sm:$0xff]
      %v437 = vld [vmem:[%s1 + $0x720] sm:$0xff]
      %v438 = vld [vmem:[%s1 + $0x728] sm:$0xff]
      %v439 = vld [vmem:[%s1 + $0x730] sm:$0xff]
      %v440 = vld [vmem:[%s1 + $0x738] sm:$0xff]
      %v441 = vld [vmem:[%s1 + $0x740] sm:$0xff]
      %v442 = vld [vmem:[%s1 + $0x748] sm:$0xff]
      %v443 = vld [vmem:[%s1 + $0x750] sm:$0xff]
      %v444 = vld [vmem:[%s1 + $0x758] sm:$0xff]
      %v445 = vld [vmem:[%s1 + $0x760] sm:$0xff]
      %v446 = vld [vmem:[%s1 + $0x768] sm:$0xff]
      %v447 = vld [vmem:[%s1 + $0x770] sm:$0xff]
      %v448 = vld [vmem:[%s1 + $0x778] sm:$0xff]
      %v449 = vld [vmem:[%s1 + $0x780] sm:$0xff]
      %v450 = vld [vmem:[%s1 + $0x788] sm:$0xff]
      %v451 = vld [vmem:[%s1 + $0x790] sm:$0xff]
      %v452 = vld [vmem:[%s1 + $0x798] sm:$0xff]
      %v453 = vld [vmem:[%s1 + $0x7a0] sm:$0xff]
      %v454 = vld [vmem:[%s1 + $0x7a8] sm:$0xff]
      %v455 = vld [vmem:[%s1 + $0x7b0] sm:$0xff]
      %v456 = vld [vmem:[%s1 + $0x7b8] sm:$0xff]
      %v457 = vld [vmem:[%s1 + $0x7c0] sm:$0xff]
      %v458 = vld [vmem:[%s1 + $0x7c8] sm:$0xff]
      %v459 = vld [vmem:[%s1 + $0x7d0] sm:$0xff]
      %v460 = vld [vmem:[%s1 + $0x7d8] sm:$0xff]
      %v461 = vld [vmem:[%s1 + $0x7e0] sm:$0xff]
      %v462 = vld [vmem:[%s1 + $0x7e8] sm:$0xff]
      %v463 = vld [vmem:[%s1 + $0x7f0] sm:$0xff]
      %v464 = vld [vmem:[%s1 + $0x7f8] sm:$0xff]
      %v497 = vunpack.c.l.b16 %v177
      %v498 = vunpack.c.h.b16 %v177
      %v499 = vunpack.c.l.b16 %v178
      %v500 = vunpack.c.h.b16 %v178
      %v501 = vunpack.c.l.b16 %v179
      %v502 = vunpack.c.h.b16 %v179
      %v503 = vunpack.c.l.b16 %v180
      %v504 = vunpack.c.h.b16 %v180
      %v505 = vunpack.c.l.b16 %v181
      %v506 = vunpack.c.h.b16 %v181
      %v507 = vunpack.c.l.b16 %v182
      %v508 = vunpack.c.h.b16 %v182
      %v509 = vunpack.c.l.b16 %v183
      %v510 = vunpack.c.h.b16 %v183
      %v511 = vunpack.c.l.b16 %v184
      %v512 = vunpack.c.h.b16 %v184
      %v513 = vunpack.c.l.b16 %v185
      %v514 = vunpack.c.h.b16 %v185
      %v515 = vunpack.c.l.b16 %v186
      %v516 = vunpack.c.h.b16 %v186
      %v517 = vunpack.c.l.b16 %v187
      %v518 = vunpack.c.h.b16 %v187
      %v519 = vunpack.c.l.b16 %v188
      %v520 = vunpack.c.h.b16 %v188
      %v521 = vunpack.c.l.b16 %v189
      %v522 = vunpack.c.h.b16 %v189
      %v523 = vunpack.c.l.b16 %v190
      %v524 = vunpack.c.h.b16 %v190
      %v525 = vunpack.c.l.b16 %v191
      %v526 = vunpack.c.h.b16 %v191
      %v527 = vunpack.c.l.b16 %v192
      %v528 = vunpack.c.h.b16 %v192
      %v529 = vunpack.c.l.b16 %v193
      %v530 = vunpack.c.h.b16 %v193
      %v531 = vunpack.c.l.b16 %v194
      %v532 = vunpack.c.h.b16 %v194
      %v533 = vunpack.c.l.b16 %v195
      %v534 = vunpack.c.h.b16 %v195
      %v535 = vunpack.c.l.b16 %v196
      %v536 = vunpack.c.h.b16 %v196
      %v537 = vunpack.c.l.b16 %v197
      %v538 = vunpack.c.h.b16 %v197
      %v539 = vunpack.c.l.b16 %v198
      %v540 = vunpack.c.h.b16 %v198
      %v541 = vunpack.c.l.b16 %v199
      %v542 = vunpack.c.h.b16 %v199
      %v543 = vunpack.c.l.b16 %v200
      %v544 = vunpack.c.h.b16 %v200
      %v545 = vunpack.c.l.b16 %v201
      %v546 = vunpack.c.h.b16 %v201
      %v547 = vunpack.c.l.b16 %v202
      %v548 = vunpack.c.h.b16 %v202
      %v549 = vunpack.c.l.b16 %v203
      %v550 = vunpack.c.h.b16 %v203
      %v551 = vunpack.c.l.b16 %v204
      %v552 = vunpack.c.h.b16 %v204
      %v553 = vunpack.c.l.b16 %v205
      %v554 = vunpack.c.h.b16 %v205
      %v555 = vunpack.c.l.b16 %v206
      %v556 = vunpack.c.h.b16 %v206
      %v557 = vunpack.c.l.b16 %v207
      %v558 = vunpack.c.h.b16 %v207
      %v559 = vunpack.c.l.b16 %v208
      %v560 = vunpack.c.h.b16 %v208
      %v561 = vpack.c.b16 %v505, %v497
      %v562 = vpack.c.b16 %v506, %v498
      %v563 = vpack.c.b16 %v507, %v499
      %v564 = vpack.c.b16 %v508, %v500
      %v565 = vpack.c.b16 %v509, %v501
      %v566 = vpack.c.b16 %v510, %v502
      %v567 = vpack.c.b16 %v511, %v503
      %v568 = vpack.c.b16 %v512, %v504
      %v569 = vpack.c.b16 %v521, %v513
      %v570 = vpack.c.b16 %v522, %v514
      %v571 = vpack.c.b16 %v523, %v515
      %v572 = vpack.c.b16 %v524, %v516
      %v573 = vpack.c.b16 %v525, %v517
      %v574 = vpack.c.b16 %v526, %v518
      %v575 = vpack.c.b16 %v527, %v519
      %v576 = vpack.c.b16 %v528, %v520
      %v577 = vpack.c.b16 %v537, %v529
      %v578 = vpack.c.b16 %v538, %v530
      %v579 = vpack.c.b16 %v539, %v531
      %v580 = vpack.c.b16 %v540, %v532
      %v581 = vpack.c.b16 %v541, %v533
      %v582 = vpack.c.b16 %v542, %v534
      %v583 = vpack.c.b16 %v543, %v535
      %v584 = vpack.c.b16 %v544, %v536
      %v585 = vpack.c.b16 %v553, %v545
      %v586 = vpack.c.b16 %v554, %v546
      %v587 = vpack.c.b16 %v555, %v547
      %v588 = vpack.c.b16 %v556, %v548
      %v589 = vpack.c.b16 %v557, %v549
      %v590 = vpack.c.b16 %v558, %v550
      %v591 = vpack.c.b16 %v559, %v551
      %v592 = vpack.c.b16 %v560, %v552
      %v881 = vunpack.c.l.b16 %v209
      %v882 = vunpack.c.h.b16 %v209
      %v883 = vunpack.c.l.b16 %v210
      %v884 = vunpack.c.h.b16 %v210
      %v885 = vunpack.c.l.b16 %v211
      %v886 = vunpack.c.h.b16 %v211
      %v887 = vunpack.c.l.b16 %v212
      %v888 = vunpack.c.h.b16 %v212
      %v889 = vunpack.c.l.b16 %v213
      %v890 = vunpack.c.h.b16 %v213
      %v891 = vunpack.c.l.b16 %v214
      %v892 = vunpack.c.h.b16 %v214
      %v893 = vunpack.c.l.b16 %v215
      %v894 = vunpack.c.h.b16 %v215
      %v895 = vunpack.c.l.b16 %v216
      %v896 = vunpack.c.h.b16 %v216
      %v897 = vunpack.c.l.b16 %v217
      %v898 = vunpack.c.h.b16 %v217
      %v899 = vunpack.c.l.b16 %v218
      %v900 = vunpack.c.h.b16 %v218
      %v901 = vunpack.c.l.b16 %v219
      %v902 = vunpack.c.h.b16 %v219
      %v903 = vunpack.c.l.b16 %v220
      %v904 = vunpack.c.h.b16 %v220
      %v905 = vunpack.c.l.b16 %v221
      %v906 = vunpack.c.h.b16 %v221
      %v907 = vunpack.c.l.b16 %v222
      %v908 = vunpack.c.h.b16 %v222
      %v909 = vunpack.c.l.b16 %v223
      %v910 = vunpack.c.h.b16 %v223
      %v911 = vunpack.c.l.b16 %v224
      %v912 = vunpack.c.h.b16 %v224
      %v913 = vunpack.c.l.b16 %v225
      %v914 = vunpack.c.h.b16 %v225
      %v915 = vunpack.c.l.b16 %v226
      %v916 = vunpack.c.h.b16 %v226
      %v917 = vunpack.c.l.b16 %v227
      %v918 = vunpack.c.h.b16 %v227
      %v919 = vunpack.c.l.b16 %v228
      %v920 = vunpack.c.h.b16 %v228
      %v921 = vunpack.c.l.b16 %v229
      %v922 = vunpack.c.h.b16 %v229
      %v923 = vunpack.c.l.b16 %v230
      %v924 = vunpack.c.h.b16 %v230
      %v925 = vunpack.c.l.b16 %v231
      %v926 = vunpack.c.h.b16 %v231
      %v927 = vunpack.c.l.b16 %v232
      %v928 = vunpack.c.h.b16 %v232
      %v929 = vunpack.c.l.b16 %v233
      %v930 = vunpack.c.h.b16 %v233
      %v931 = vunpack.c.l.b16 %v234
      %v932 = vunpack.c.h.b16 %v234
      %v933 = vunpack.c.l.b16 %v235
      %v934 = vunpack.c.h.b16 %v235
      %v935 = vunpack.c.l.b16 %v236
      %v936 = vunpack.c.h.b16 %v236
      %v937 = vunpack.c.l.b16 %v237
      %v938 = vunpack.c.h.b16 %v237
      %v939 = vunpack.c.l.b16 %v238
      %v940 = vunpack.c.h.b16 %v238
      %v941 = vunpack.c.l.b16 %v239
      %v942 = vunpack.c.h.b16 %v239
      %v943 = vunpack.c.l.b16 %v240
      %v944 = vunpack.c.h.b16 %v240
      %v945 = vunpack.c.l.b16 %v241
      %v946 = vunpack.c.h.b16 %v241
      %v947 = vunpack.c.l.b16 %v242
      %v948 = vunpack.c.h.b16 %v242
      %v949 = vunpack.c.l.b16 %v243
      %v950 = vunpack.c.h.b16 %v243
      %v951 = vunpack.c.l.b16 %v244
      %v952 = vunpack.c.h.b16 %v244
      %v953 = vunpack.c.l.b16 %v245
      %v954 = vunpack.c.h.b16 %v245
      %v955 = vunpack.c.l.b16 %v246
      %v956 = vunpack.c.h.b16 %v246
      %v957 = vunpack.c.l.b16 %v247
      %v958 = vunpack.c.h.b16 %v247
      %v959 = vunpack.c.l.b16 %v248
      %v960 = vunpack.c.h.b16 %v248
      %v961 = vunpack.c.l.b16 %v249
      %v962 = vunpack.c.h.b16 %v249
      %v963 = vunpack.c.l.b16 %v250
      %v964 = vunpack.c.h.b16 %v250
      %v965 = vunpack.c.l.b16 %v251
      %v966 = vunpack.c.h.b16 %v251
      %v967 = vunpack.c.l.b16 %v252
      %v968 = vunpack.c.h.b16 %v252
      %v969 = vunpack.c.l.b16 %v253
      %v970 = vunpack.c.h.b16 %v253
      %v971 = vunpack.c.l.b16 %v254
      %v972 = vunpack.c.h.b16 %v254
      %v973 = vunpack.c.l.b16 %v255
      %v974 = vunpack.c.h.b16 %v255
      %v975 = vunpack.c.l.b16 %v256
      %v976 = vunpack.c.h.b16 %v256
      %v977 = vunpack.c.l.b16 %v257
      %v978 = vunpack.c.h.b16 %v257
      %v979 = vunpack.c.l.b16 %v258
      %v980 = vunpack.c.h.b16 %v258
      %v981 = vunpack.c.l.b16 %v259
      %v982 = vunpack.c.h.b16 %v259
      %v983 = vunpack.c.l.b16 %v260
      %v984 = vunpack.c.h.b16 %v260
      %v985 = vunpack.c.l.b16 %v261
      %v986 = vunpack.c.h.b16 %v261
      %v987 = vunpack.c.l.b16 %v262
      %v988 = vunpack.c.h.b16 %v262
      %v989 = vunpack.c.l.b16 %v263
      %v990 = vunpack.c.h.b16 %v263
      %v991 = vunpack.c.l.b16 %v264
      %v992 = vunpack.c.h.b16 %v264
      %v993 = vunpack.c.l.b16 %v265
      %v994 = vunpack.c.h.b16 %v265
      %v995 = vunpack.c.l.b16 %v266
      %v996 = vunpack.c.h.b16 %v266
      %v997 = vunpack.c.l.b16 %v267
      %v998 = vunpack.c.h.b16 %v267
      %v999 = vunpack.c.l.b16 %v268
      %v1000 = vunpack.c.h.b16 %v268
      %v1001 = vunpack.c.l.b16 %v269
      %v1002 = vunpack.c.h.b16 %v269
      %v1003 = vunpack.c.l.b16 %v270
      %v1004 = vunpack.c.h.b16 %v270
      %v1005 = vunpack.c.l.b16 %v271
      %v1006 = vunpack.c.h.b16 %v271
      %v1007 = vunpack.c.l.b16 %v272
      %v1008 = vunpack.c.h.b16 %v272
      %v1009 = vunpack.c.l.b16 %v273
      %v1010 = vunpack.c.h.b16 %v273
      %v1011 = vunpack.c.l.b16 %v274
      %v1012 = vunpack.c.h.b16 %v274
      %v1013 = vunpack.c.l.b16 %v275
      %v1014 = vunpack.c.h.b16 %v275
      %v1015 = vunpack.c.l.b16 %v276
      %v1016 = vunpack.c.h.b16 %v276
      %v1017 = vunpack.c.l.b16 %v277
      %v1018 = vunpack.c.h.b16 %v277
      %v1019 = vunpack.c.l.b16 %v278
      %v1020 = vunpack.c.h.b16 %v278
      %v1021 = vunpack.c.l.b16 %v279
      %v1022 = vunpack.c.h.b16 %v279
      %v1023 = vunpack.c.l.b16 %v280
      %v1024 = vunpack.c.h.b16 %v280
      %v1025 = vunpack.c.l.b16 %v281
      %v1026 = vunpack.c.h.b16 %v281
      %v1027 = vunpack.c.l.b16 %v282
      %v1028 = vunpack.c.h.b16 %v282
      %v1029 = vunpack.c.l.b16 %v283
      %v1030 = vunpack.c.h.b16 %v283
      %v1031 = vunpack.c.l.b16 %v284
      %v1032 = vunpack.c.h.b16 %v284
      %v1033 = vunpack.c.l.b16 %v285
      %v1034 = vunpack.c.h.b16 %v285
      %v1035 = vunpack.c.l.b16 %v286
      %v1036 = vunpack.c.h.b16 %v286
      %v1037 = vunpack.c.l.b16 %v287
      %v1038 = vunpack.c.h.b16 %v287
      %v1039 = vunpack.c.l.b16 %v288
      %v1040 = vunpack.c.h.b16 %v288
      %v1041 = vunpack.c.l.b16 %v289
      %v1042 = vunpack.c.h.b16 %v289
      %v1043 = vunpack.c.l.b16 %v290
      %v1044 = vunpack.c.h.b16 %v290
      %v1045 = vunpack.c.l.b16 %v291
      %v1046 = vunpack.c.h.b16 %v291
      %v1047 = vunpack.c.l.b16 %v292
      %v1048 = vunpack.c.h.b16 %v292
      %v1049 = vunpack.c.l.b16 %v293
      %v1050 = vunpack.c.h.b16 %v293
      %v1051 = vunpack.c.l.b16 %v294
      %v1052 = vunpack.c.h.b16 %v294
      %v1053 = vunpack.c.l.b16 %v295
      %v1054 = vunpack.c.h.b16 %v295
      %v1055 = vunpack.c.l.b16 %v296
      %v1056 = vunpack.c.h.b16 %v296
      %v1057 = vunpack.c.l.b16 %v297
      %v1058 = vunpack.c.h.b16 %v297
      %v1059 = vunpack.c.l.b16 %v298
      %v1060 = vunpack.c.h.b16 %v298
      %v1061 = vunpack.c.l.b16 %v299
      %v1062 = vunpack.c.h.b16 %v299
      %v1063 = vunpack.c.l.b16 %v300
      %v1064 = vunpack.c.h.b16 %v300
      %v1065 = vunpack.c.l.b16 %v301
      %v1066 = vunpack.c.h.b16 %v301
      %v1067 = vunpack.c.l.b16 %v302
      %v1068 = vunpack.c.h.b16 %v302
      %v1069 = vunpack.c.l.b16 %v303
      %v1070 = vunpack.c.h.b16 %v303
      %v1071 = vunpack.c.l.b16 %v304
      %v1072 = vunpack.c.h.b16 %v304
      %v1073 = vunpack.c.l.b16 %v305
      %v1074 = vunpack.c.h.b16 %v305
      %v1075 = vunpack.c.l.b16 %v306
      %v1076 = vunpack.c.h.b16 %v306
      %v1077 = vunpack.c.l.b16 %v307
      %v1078 = vunpack.c.h.b16 %v307
      %v1079 = vunpack.c.l.b16 %v308
      %v1080 = vunpack.c.h.b16 %v308
      %v1081 = vunpack.c.l.b16 %v309
      %v1082 = vunpack.c.h.b16 %v309
      %v1083 = vunpack.c.l.b16 %v310
      %v1084 = vunpack.c.h.b16 %v310
      %v1085 = vunpack.c.l.b16 %v311
      %v1086 = vunpack.c.h.b16 %v311
      %v1087 = vunpack.c.l.b16 %v312
      %v1088 = vunpack.c.h.b16 %v312
      %v1089 = vunpack.c.l.b16 %v313
      %v1090 = vunpack.c.h.b16 %v313
      %v1091 = vunpack.c.l.b16 %v314
      %v1092 = vunpack.c.h.b16 %v314
      %v1093 = vunpack.c.l.b16 %v315
      %v1094 = vunpack.c.h.b16 %v315
      %v1095 = vunpack.c.l.b16 %v316
      %v1096 = vunpack.c.h.b16 %v316
      %v1097 = vunpack.c.l.b16 %v317
      %v1098 = vunpack.c.h.b16 %v317
      %v1099 = vunpack.c.l.b16 %v318
      %v1100 = vunpack.c.h.b16 %v318
      %v1101 = vunpack.c.l.b16 %v319
      %v1102 = vunpack.c.h.b16 %v319
      %v1103 = vunpack.c.l.b16 %v320
      %v1104 = vunpack.c.h.b16 %v320
      %v1105 = vunpack.c.l.b16 %v321
      %v1106 = vunpack.c.h.b16 %v321
      %v1107 = vunpack.c.l.b16 %v322
      %v1108 = vunpack.c.h.b16 %v322
      %v1109 = vunpack.c.l.b16 %v323
      %v1110 = vunpack.c.h.b16 %v323
      %v1111 = vunpack.c.l.b16 %v324
      %v1112 = vunpack.c.h.b16 %v324
      %v1113 = vunpack.c.l.b16 %v325
      %v1114 = vunpack.c.h.b16 %v325
      %v1115 = vunpack.c.l.b16 %v326
      %v1116 = vunpack.c.h.b16 %v326
      %v1117 = vunpack.c.l.b16 %v327
      %v1118 = vunpack.c.h.b16 %v327
      %v1119 = vunpack.c.l.b16 %v328
      %v1120 = vunpack.c.h.b16 %v328
      %v1121 = vunpack.c.l.b16 %v329
      %v1122 = vunpack.c.h.b16 %v329
      %v1123 = vunpack.c.l.b16 %v330
      %v1124 = vunpack.c.h.b16 %v330
      %v1125 = vunpack.c.l.b16 %v331
      %v1126 = vunpack.c.h.b16 %v331
      %v1127 = vunpack.c.l.b16 %v332
      %v1128 = vunpack.c.h.b16 %v332
      %v1129 = vunpack.c.l.b16 %v333
      %v1130 = vunpack.c.h.b16 %v333
      %v1131 = vunpack.c.l.b16 %v334
      %v1132 = vunpack.c.h.b16 %v334
      %v1133 = vunpack.c.l.b16 %v335
      %v1134 = vunpack.c.h.b16 %v335
      %v1135 = vunpack.c.l.b16 %v336
      %v1136 = vunpack.c.h.b16 %v336
      %v1137 = vunpack.c.l.b16 %v337
      %v1138 = vunpack.c.h.b16 %v337
      %v1139 = vunpack.c.l.b16 %v338
      %v1140 = vunpack.c.h.b16 %v338
      %v1141 = vunpack.c.l.b16 %v339
      %v1142 = vunpack.c.h.b16 %v339
      %v1143 = vunpack.c.l.b16 %v340
      %v1144 = vunpack.c.h.b16 %v340
      %v1145 = vunpack.c.l.b16 %v341
      %v1146 = vunpack.c.h.b16 %v341
      %v1147 = vunpack.c.l.b16 %v342
      %v1148 = vunpack.c.h.b16 %v342
      %v1149 = vunpack.c.l.b16 %v343
      %v1150 = vunpack.c.h.b16 %v343
      %v1151 = vunpack.c.l.b16 %v344
      %v1152 = vunpack.c.h.b16 %v344
      %v1153 = vunpack.c.l.b16 %v345
      %v1154 = vunpack.c.h.b16 %v345
      %v1155 = vunpack.c.l.b16 %v346
      %v1156 = vunpack.c.h.b16 %v346
      %v1157 = vunpack.c.l.b16 %v347
      %v1158 = vunpack.c.h.b16 %v347
      %v1159 = vunpack.c.l.b16 %v348
      %v1160 = vunpack.c.h.b16 %v348
      %v1161 = vunpack.c.l.b16 %v349
      %v1162 = vunpack.c.h.b16 %v349
      %v1163 = vunpack.c.l.b16 %v350
      %v1164 = vunpack.c.h.b16 %v350
      %v1165 = vunpack.c.l.b16 %v351
      %v1166 = vunpack.c.h.b16 %v351
      %v1167 = vunpack.c.l.b16 %v352
      %v1168 = vunpack.c.h.b16 %v352
      %v1169 = vunpack.c.l.b16 %v353
      %v1170 = vunpack.c.h.b16 %v353
      %v1171 = vunpack.c.l.b16 %v354
      %v1172 = vunpack.c.h.b16 %v354
      %v1173 = vunpack.c.l.b16 %v355
      %v1174 = vunpack.c.h.b16 %v355
      %v1175 = vunpack.c.l.b16 %v356
      %v1176 = vunpack.c.h.b16 %v356
      %v1177 = vunpack.c.l.b16 %v357
      %v1178 = vunpack.c.h.b16 %v357
      %v1179 = vunpack.c.l.b16 %v358
      %v1180 = vunpack.c.h.b16 %v358
      %v1181 = vunpack.c.l.b16 %v359
      %v1182 = vunpack.c.h.b16 %v359
      %v1183 = vunpack.c.l.b16 %v360
      %v1184 = vunpack.c.h.b16 %v360
      %v1185 = vunpack.c.l.b16 %v361
      %v1186 = vunpack.c.h.b16 %v361
      %v1187 = vunpack.c.l.b16 %v362
      %v1188 = vunpack.c.h.b16 %v362
      %v1189 = vunpack.c.l.b16 %v363
      %v1190 = vunpack.c.h.b16 %v363
      %v1191 = vunpack.c.l.b16 %v364
      %v1192 = vunpack.c.h.b16 %v364
      %v1193 = vunpack.c.l.b16 %v365
      %v1194 = vunpack.c.h.b16 %v365
      %v1195 = vunpack.c.l.b16 %v366
      %v1196 = vunpack.c.h.b16 %v366
      %v1197 = vunpack.c.l.b16 %v367
      %v1198 = vunpack.c.h.b16 %v367
      %v1199 = vunpack.c.l.b16 %v368
      %v1200 = vunpack.c.h.b16 %v368
      %v1201 = vunpack.c.l.b16 %v369
      %v1202 = vunpack.c.h.b16 %v369
      %v1203 = vunpack.c.l.b16 %v370
      %v1204 = vunpack.c.h.b16 %v370
      %v1205 = vunpack.c.l.b16 %v371
      %v1206 = vunpack.c.h.b16 %v371
      %v1207 = vunpack.c.l.b16 %v372
      %v1208 = vunpack.c.h.b16 %v372
      %v1209 = vunpack.c.l.b16 %v373
      %v1210 = vunpack.c.h.b16 %v373
      %v1211 = vunpack.c.l.b16 %v374
      %v1212 = vunpack.c.h.b16 %v374
      %v1213 = vunpack.c.l.b16 %v375
      %v1214 = vunpack.c.h.b16 %v375
      %v1215 = vunpack.c.l.b16 %v376
      %v1216 = vunpack.c.h.b16 %v376
      %v1217 = vunpack.c.l.b16 %v377
      %v1218 = vunpack.c.h.b16 %v377
      %v1219 = vunpack.c.l.b16 %v378
      %v1220 = vunpack.c.h.b16 %v378
      %v1221 = vunpack.c.l.b16 %v379
      %v1222 = vunpack.c.h.b16 %v379
      %v1223 = vunpack.c.l.b16 %v380
      %v1224 = vunpack.c.h.b16 %v380
      %v1225 = vunpack.c.l.b16 %v381
      %v1226 = vunpack.c.h.b16 %v381
      %v1227 = vunpack.c.l.b16 %v382
      %v1228 = vunpack.c.h.b16 %v382
      %v1229 = vunpack.c.l.b16 %v383
      %v1230 = vunpack.c.h.b16 %v383
      %v1231 = vunpack.c.l.b16 %v384
      %v1232 = vunpack.c.h.b16 %v384
      %v1233 = vunpack.c.l.b16 %v385
      %v1234 = vunpack.c.h.b16 %v385
      %v1235 = vunpack.c.l.b16 %v386
      %v1236 = vunpack.c.h.b16 %v386
      %v1237 = vunpack.c.l.b16 %v387
      %v1238 = vunpack.c.h.b16 %v387
      %v1239 = vunpack.c.l.b16 %v388
      %v1240 = vunpack.c.h.b16 %v388
      %v1241 = vunpack.c.l.b16 %v389
      %v1242 = vunpack.c.h.b16 %v389
      %v1243 = vunpack.c.l.b16 %v390
      %v1244 = vunpack.c.h.b16 %v390
      %v1245 = vunpack.c.l.b16 %v391
      %v1246 = vunpack.c.h.b16 %v391
      %v1247 = vunpack.c.l.b16 %v392
      %v1248 = vunpack.c.h.b16 %v392
      %v1249 = vunpack.c.l.b16 %v393
      %v1250 = vunpack.c.h.b16 %v393
      %v1251 = vunpack.c.l.b16 %v394
      %v1252 = vunpack.c.h.b16 %v394
      %v1253 = vunpack.c.l.b16 %v395
      %v1254 = vunpack.c.h.b16 %v395
      %v1255 = vunpack.c.l.b16 %v396
      %v1256 = vunpack.c.h.b16 %v396
      %v1257 = vunpack.c.l.b16 %v397
      %v1258 = vunpack.c.h.b16 %v397
      %v1259 = vunpack.c.l.b16 %v398
      %v1260 = vunpack.c.h.b16 %v398
      %v1261 = vunpack.c.l.b16 %v399
      %v1262 = vunpack.c.h.b16 %v399
      %v1263 = vunpack.c.l.b16 %v400
      %v1264 = vunpack.c.h.b16 %v400
      %v1265 = vunpack.c.l.b16 %v401
      %v1266 = vunpack.c.h.b16 %v401
      %v1267 = vunpack.c.l.b16 %v402
      %v1268 = vunpack.c.h.b16 %v402
      %v1269 = vunpack.c.l.b16 %v403
      %v1270 = vunpack.c.h.b16 %v403
      %v1271 = vunpack.c.l.b16 %v404
      %v1272 = vunpack.c.h.b16 %v404
      %v1273 = vunpack.c.l.b16 %v405
      %v1274 = vunpack.c.h.b16 %v405
      %v1275 = vunpack.c.l.b16 %v406
      %v1276 = vunpack.c.h.b16 %v406
      %v1277 = vunpack.c.l.b16 %v407
      %v1278 = vunpack.c.h.b16 %v407
      %v1279 = vunpack.c.l.b16 %v408
      %v1280 = vunpack.c.h.b16 %v408
      %v1281 = vunpack.c.l.b16 %v409
      %v1282 = vunpack.c.h.b16 %v409
      %v1283 = vunpack.c.l.b16 %v410
      %v1284 = vunpack.c.h.b16 %v410
      %v1285 = vunpack.c.l.b16 %v411
      %v1286 = vunpack.c.h.b16 %v411
      %v1287 = vunpack.c.l.b16 %v412
      %v1288 = vunpack.c.h.b16 %v412
      %v1289 = vunpack.c.l.b16 %v413
      %v1290 = vunpack.c.h.b16 %v413
      %v1291 = vunpack.c.l.b16 %v414
      %v1292 = vunpack.c.h.b16 %v414
      %v1293 = vunpack.c.l.b16 %v415
      %v1294 = vunpack.c.h.b16 %v415
      %v1295 = vunpack.c.l.b16 %v416
      %v1296 = vunpack.c.h.b16 %v416
      %v1297 = vunpack.c.l.b16 %v417
      %v1298 = vunpack.c.h.b16 %v417
      %v1299 = vunpack.c.l.b16 %v418
      %v1300 = vunpack.c.h.b16 %v418
      %v1301 = vunpack.c.l.b16 %v419
      %v1302 = vunpack.c.h.b16 %v419
      %v1303 = vunpack.c.l.b16 %v420
      %v1304 = vunpack.c.h.b16 %v420
      %v1305 = vunpack.c.l.b16 %v421
      %v1306 = vunpack.c.h.b16 %v421
      %v1307 = vunpack.c.l.b16 %v422
      %v1308 = vunpack.c.h.b16 %v422
      %v1309 = vunpack.c.l.b16 %v423
      %v1310 = vunpack.c.h.b16 %v423
      %v1311 = vunpack.c.l.b16 %v424
      %v1312 = vunpack.c.h.b16 %v424
      %v1313 = vunpack.c.l.b16 %v425
      %v1314 = vunpack.c.h.b16 %v425
      %v1315 = vunpack.c.l.b16 %v426
      %v1316 = vunpack.c.h.b16 %v426
      %v1317 = vunpack.c.l.b16 %v427
      %v1318 = vunpack.c.h.b16 %v427
      %v1319 = vunpack.c.l.b16 %v428
      %v1320 = vunpack.c.h.b16 %v428
      %v1321 = vunpack.c.l.b16 %v429
      %v1322 = vunpack.c.h.b16 %v429
      %v1323 = vunpack.c.l.b16 %v430
      %v1324 = vunpack.c.h.b16 %v430
      %v1325 = vunpack.c.l.b16 %v431
      %v1326 = vunpack.c.h.b16 %v431
      %v1327 = vunpack.c.l.b16 %v432
      %v1328 = vunpack.c.h.b16 %v432
      %v1329 = vunpack.c.l.b16 %v433
      %v1330 = vunpack.c.h.b16 %v433
      %v1331 = vunpack.c.l.b16 %v434
      %v1332 = vunpack.c.h.b16 %v434
      %v1333 = vunpack.c.l.b16 %v435
      %v1334 = vunpack.c.h.b16 %v435
      %v1335 = vunpack.c.l.b16 %v436
      %v1336 = vunpack.c.h.b16 %v436
      %v1337 = vunpack.c.l.b16 %v437
      %v1338 = vunpack.c.h.b16 %v437
      %v1339 = vunpack.c.l.b16 %v438
      %v1340 = vunpack.c.h.b16 %v438
      %v1341 = vunpack.c.l.b16 %v439
      %v1342 = vunpack.c.h.b16 %v439
      %v1343 = vunpack.c.l.b16 %v440
      %v1344 = vunpack.c.h.b16 %v440
      %v1345 = vunpack.c.l.b16 %v441
      %v1346 = vunpack.c.h.b16 %v441
      %v1347 = vunpack.c.l.b16 %v442
      %v1348 = vunpack.c.h.b16 %v442
      %v1349 = vunpack.c.l.b16 %v443
      %v1350 = vunpack.c.h.b16 %v443
      %v1351 = vunpack.c.l.b16 %v444
      %v1352 = vunpack.c.h.b16 %v444
      %v1353 = vunpack.c.l.b16 %v445
      %v1354 = vunpack.c.h.b16 %v445
      %v1355 = vunpack.c.l.b16 %v446
      %v1356 = vunpack.c.h.b16 %v446
      %v1357 = vunpack.c.l.b16 %v447
      %v1358 = vunpack.c.h.b16 %v447
      %v1359 = vunpack.c.l.b16 %v448
      %v1360 = vunpack.c.h.b16 %v448
      %v1361 = vunpack.c.l.b16 %v449
      %v1362 = vunpack.c.h.b16 %v449
      %v1363 = vunpack.c.l.b16 %v450
      %v1364 = vunpack.c.h.b16 %v450
      %v1365 = vunpack.c.l.b16 %v451
      %v1366 = vunpack.c.h.b16 %v451
      %v1367 = vunpack.c.l.b16 %v452
      %v1368 = vunpack.c.h.b16 %v452
      %v1369 = vunpack.c.l.b16 %v453
      %v1370 = vunpack.c.h.b16 %v453
      %v1371 = vunpack.c.l.b16 %v454
      %v1372 = vunpack.c.h.b16 %v454
      %v1373 = vunpack.c.l.b16 %v455
      %v1374 = vunpack.c.h.b16 %v455
      %v1375 = vunpack.c.l.b16 %v456
      %v1376 = vunpack.c.h.b16 %v456
      %v1377 = vunpack.c.l.b16 %v457
      %v1378 = vunpack.c.h.b16 %v457
      %v1379 = vunpack.c.l.b16 %v458
      %v1380 = vunpack.c.h.b16 %v458
      %v1381 = vunpack.c.l.b16 %v459
      %v1382 = vunpack.c.h.b16 %v459
      %v1383 = vunpack.c.l.b16 %v460
      %v1384 = vunpack.c.h.b16 %v460
      %v1385 = vunpack.c.l.b16 %v461
      %v1386 = vunpack.c.h.b16 %v461
      %v1387 = vunpack.c.l.b16 %v462
      %v1388 = vunpack.c.h.b16 %v462
      %v1389 = vunpack.c.l.b16 %v463
      %v1390 = vunpack.c.h.b16 %v463
      %v1391 = vunpack.c.l.b16 %v464
      %v1392 = vunpack.c.h.b16 %v464
      %v1393 = vpack.c.b16 %v885, %v881
      %v1394 = vpack.c.b16 %v886, %v882
      %v1395 = vpack.c.b16 %v887, %v883
      %v1396 = vpack.c.b16 %v888, %v884
      %v1397 = vpack.c.b16 %v893, %v889
      %v1398 = vpack.c.b16 %v894, %v890
      %v1399 = vpack.c.b16 %v895, %v891
      %v1400 = vpack.c.b16 %v896, %v892
      %v1401 = vpack.c.b16 %v901, %v897
      %v1402 = vpack.c.b16 %v902, %v898
      %v1403 = vpack.c.b16 %v903, %v899
      %v1404 = vpack.c.b16 %v904, %v900
      %v1405 = vpack.c.b16 %v909, %v905
      %v1406 = vpack.c.b16 %v910, %v906
      %v1407 = vpack.c.b16 %v911, %v907
      %v1408 = vpack.c.b16 %v912, %v908
      %v1409 = vpack.c.b16 %v917, %v913
      %v1410 = vpack.c.b16 %v918, %v914
      %v1411 = vpack.c.b16 %v919, %v915
      %v1412 = vpack.c.b16 %v920, %v916
      %v1413 = vpack.c.b16 %v925, %v921
      %v1414 = vpack.c.b16 %v926, %v922
      %v1415 = vpack.c.b16 %v927, %v923
      %v1416 = vpack.c.b16 %v928, %v924
      %v1417 = vpack.c.b16 %v933, %v929
      %v1418 = vpack.c.b16 %v934, %v930
      %v1419 = vpack.c.b16 %v935, %v931
      %v1420 = vpack.c.b16 %v936, %v932
      %v1421 = vpack.c.b16 %v941, %v937
      %v1422 = vpack.c.b16 %v942, %v938
      %v1423 = vpack.c.b16 %v943, %v939
      %v1424 = vpack.c.b16 %v944, %v940
      %v1425 = vpack.c.b16 %v949, %v945
      %v1426 = vpack.c.b16 %v950, %v946
      %v1427 = vpack.c.b16 %v951, %v947
      %v1428 = vpack.c.b16 %v952, %v948
      %v1429 = vpack.c.b16 %v957, %v953
      %v1430 = vpack.c.b16 %v958, %v954
      %v1431 = vpack.c.b16 %v959, %v955
      %v1432 = vpack.c.b16 %v960, %v956
      %v1433 = vpack.c.b16 %v965, %v961
      %v1434 = vpack.c.b16 %v966, %v962
      %v1435 = vpack.c.b16 %v967, %v963
      %v1436 = vpack.c.b16 %v968, %v964
      %v1437 = vpack.c.b16 %v973, %v969
      %v1438 = vpack.c.b16 %v974, %v970
      %v1439 = vpack.c.b16 %v975, %v971
      %v1440 = vpack.c.b16 %v976, %v972
      %v1441 = vpack.c.b16 %v981, %v977
      %v1442 = vpack.c.b16 %v982, %v978
      %v1443 = vpack.c.b16 %v983, %v979
      %v1444 = vpack.c.b16 %v984, %v980
      %v1445 = vpack.c.b16 %v989, %v985
      %v1446 = vpack.c.b16 %v990, %v986
      %v1447 = vpack.c.b16 %v991, %v987
      %v1448 = vpack.c.b16 %v992, %v988
      %v1449 = vpack.c.b16 %v997, %v993
      %v1450 = vpack.c.b16 %v998, %v994
      %v1451 = vpack.c.b16 %v999, %v995
      %v1452 = vpack.c.b16 %v1000, %v996
      %v1453 = vpack.c.b16 %v1005, %v1001
      %v1454 = vpack.c.b16 %v1006, %v1002
      %v1455 = vpack.c.b16 %v1007, %v1003
      %v1456 = vpack.c.b16 %v1008, %v1004
      %v1457 = vpack.c.b16 %v1013, %v1009
      %v1458 = vpack.c.b16 %v1014, %v1010
      %v1459 = vpack.c.b16 %v1015, %v1011
      %v1460 = vpack.c.b16 %v1016, %v1012
      %v1461 = vpack.c.b16 %v1021, %v1017
      %v1462 = vpack.c.b16 %v1022, %v1018
      %v1463 = vpack.c.b16 %v1023, %v1019
      %v1464 = vpack.c.b16 %v1024, %v1020
      %v1465 = vpack.c.b16 %v1029, %v1025
      %v1466 = vpack.c.b16 %v1030, %v1026
      %v1467 = vpack.c.b16 %v1031, %v1027
      %v1468 = vpack.c.b16 %v1032, %v1028
      %v1469 = vpack.c.b16 %v1037, %v1033
      %v1470 = vpack.c.b16 %v1038, %v1034
      %v1471 = vpack.c.b16 %v1039, %v1035
      %v1472 = vpack.c.b16 %v1040, %v1036
      %v1473 = vpack.c.b16 %v1045, %v1041
      %v1474 = vpack.c.b16 %v1046, %v1042
      %v1475 = vpack.c.b16 %v1047, %v1043
      %v1476 = vpack.c.b16 %v1048, %v1044
      %v1477 = vpack.c.b16 %v1053, %v1049
      %v1478 = vpack.c.b16 %v1054, %v1050
      %v1479 = vpack.c.b16 %v1055, %v1051
      %v1480 = vpack.c.b16 %v1056, %v1052
      %v1481 = vpack.c.b16 %v1061, %v1057
      %v1482 = vpack.c.b16 %v1062, %v1058
      %v1483 = vpack.c.b16 %v1063, %v1059
      %v1484 = vpack.c.b16 %v1064, %v1060
      %v1485 = vpack.c.b16 %v1069, %v1065
      %v1486 = vpack.c.b16 %v1070, %v1066
      %v1487 = vpack.c.b16 %v1071, %v1067
      %v1488 = vpack.c.b16 %v1072, %v1068
      %v1489 = vpack.c.b16 %v1077, %v1073
      %v1490 = vpack.c.b16 %v1078, %v1074
      %v1491 = vpack.c.b16 %v1079, %v1075
      %v1492 = vpack.c.b16 %v1080, %v1076
      %v1493 = vpack.c.b16 %v1085, %v1081
      %v1494 = vpack.c.b16 %v1086, %v1082
      %v1495 = vpack.c.b16 %v1087, %v1083
      %v1496 = vpack.c.b16 %v1088, %v1084
      %v1497 = vpack.c.b16 %v1093, %v1089
      %v1498 = vpack.c.b16 %v1094, %v1090
      %v1499 = vpack.c.b16 %v1095, %v1091
      %v1500 = vpack.c.b16 %v1096, %v1092
      %v1501 = vpack.c.b16 %v1101, %v1097
      %v1502 = vpack.c.b16 %v1102, %v1098
      %v1503 = vpack.c.b16 %v1103, %v1099
      %v1504 = vpack.c.b16 %v1104, %v1100
      %v1505 = vpack.c.b16 %v1109, %v1105
      %v1506 = vpack.c.b16 %v1110, %v1106
      %v1507 = vpack.c.b16 %v1111, %v1107
      %v1508 = vpack.c.b16 %v1112, %v1108
      %v1509 = vpack.c.b16 %v1117, %v1113
      %v1510 = vpack.c.b16 %v1118, %v1114
      %v1511 = vpack.c.b16 %v1119, %v1115
      %v1512 = vpack.c.b16 %v1120, %v1116
      %v1513 = vpack.c.b16 %v1125, %v1121
      %v1514 = vpack.c.b16 %v1126, %v1122
      %v1515 = vpack.c.b16 %v1127, %v1123
      %v1516 = vpack.c.b16 %v1128, %v1124
      %v1517 = vpack.c.b16 %v1133, %v1129
      %v1518 = vpack.c.b16 %v1134, %v1130
      %v1519 = vpack.c.b16 %v1135, %v1131
      %v1520 = vpack.c.b16 %v1136, %v1132
      %v1521 = vpack.c.b16 %v1141, %v1137
      %v1522 = vpack.c.b16 %v1142, %v1138
      %v1523 = vpack.c.b16 %v1143, %v1139
      %v1524 = vpack.c.b16 %v1144, %v1140
      %v1525 = vpack.c.b16 %v1149, %v1145
      %v1526 = vpack.c.b16 %v1150, %v1146
      %v1527 = vpack.c.b16 %v1151, %v1147
      %v1528 = vpack.c.b16 %v1152, %v1148
      %v1529 = vpack.c.b16 %v1157, %v1153
      %v1530 = vpack.c.b16 %v1158, %v1154
      %v1531 = vpack.c.b16 %v1159, %v1155
      %v1532 = vpack.c.b16 %v1160, %v1156
      %v1533 = vpack.c.b16 %v1165, %v1161
      %v1534 = vpack.c.b16 %v1166, %v1162
      %v1535 = vpack.c.b16 %v1167, %v1163
      %v1536 = vpack.c.b16 %v1168, %v1164
      %v1537 = vpack.c.b16 %v1173, %v1169
      %v1538 = vpack.c.b16 %v1174, %v1170
      %v1539 = vpack.c.b16 %v1175, %v1171
      %v1540 = vpack.c.b16 %v1176, %v1172
      %v1541 = vpack.c.b16 %v1181, %v1177
      %v1542 = vpack.c.b16 %v1182, %v1178
      %v1543 = vpack.c.b16 %v1183, %v1179
      %v1544 = vpack.c.b16 %v1184, %v1180
      %v1545 = vpack.c.b16 %v1189, %v1185
      %v1546 = vpack.c.b16 %v1190, %v1186
      %v1547 = vpack.c.b16 %v1191, %v1187
      %v1548 = vpack.c.b16 %v1192, %v1188
      %v1549 = vpack.c.b16 %v1197, %v1193
      %v1550 = vpack.c.b16 %v1198, %v1194
      %v1551 = vpack.c.b16 %v1199, %v1195
      %v1552 = vpack.c.b16 %v1200, %v1196
      %v1553 = vpack.c.b16 %v1205, %v1201
      %v1554 = vpack.c.b16 %v1206, %v1202
      %v1555 = vpack.c.b16 %v1207, %v1203
      %v1556 = vpack.c.b16 %v1208, %v1204
      %v1557 = vpack.c.b16 %v1213, %v1209
      %v1558 = vpack.c.b16 %v1214, %v1210
      %v1559 = vpack.c.b16 %v1215, %v1211
      %v1560 = vpack.c.b16 %v1216, %v1212
      %v1561 = vpack.c.b16 %v1221, %v1217
      %v1562 = vpack.c.b16 %v1222, %v1218
      %v1563 = vpack.c.b16 %v1223, %v1219
      %v1564 = vpack.c.b16 %v1224, %v1220
      %v1565 = vpack.c.b16 %v1229, %v1225
      %v1566 = vpack.c.b16 %v1230, %v1226
      %v1567 = vpack.c.b16 %v1231, %v1227
      %v1568 = vpack.c.b16 %v1232, %v1228
      %v1569 = vpack.c.b16 %v1237, %v1233
      %v1570 = vpack.c.b16 %v1238, %v1234
      %v1571 = vpack.c.b16 %v1239, %v1235
      %v1572 = vpack.c.b16 %v1240, %v1236
      %v1573 = vpack.c.b16 %v1245, %v1241
      %v1574 = vpack.c.b16 %v1246, %v1242
      %v1575 = vpack.c.b16 %v1247, %v1243
      %v1576 = vpack.c.b16 %v1248, %v1244
      %v1577 = vpack.c.b16 %v1253, %v1249
      %v1578 = vpack.c.b16 %v1254, %v1250
      %v1579 = vpack.c.b16 %v1255, %v1251
      %v1580 = vpack.c.b16 %v1256, %v1252
      %v1581 = vpack.c.b16 %v1261, %v1257
      %v1582 = vpack.c.b16 %v1262, %v1258
      %v1583 = vpack.c.b16 %v1263, %v1259
      %v1584 = vpack.c.b16 %v1264, %v1260
      %v1585 = vpack.c.b16 %v1269, %v1265
      %v1586 = vpack.c.b16 %v1270, %v1266
      %v1587 = vpack.c.b16 %v1271, %v1267
      %v1588 = vpack.c.b16 %v1272, %v1268
      %v1589 = vpack.c.b16 %v1277, %v1273
      %v1590 = vpack.c.b16 %v1278, %v1274
      %v1591 = vpack.c.b16 %v1279, %v1275
      %v1592 = vpack.c.b16 %v1280, %v1276
      %v1593 = vpack.c.b16 %v1285, %v1281
      %v1594 = vpack.c.b16 %v1286, %v1282
      %v1595 = vpack.c.b16 %v1287, %v1283
      %v1596 = vpack.c.b16 %v1288, %v1284
      %v1597 = vpack.c.b16 %v1293, %v1289
      %v1598 = vpack.c.b16 %v1294, %v1290
      %v1599 = vpack.c.b16 %v1295, %v1291
      %v1600 = vpack.c.b16 %v1296, %v1292
      %v1601 = vpack.c.b16 %v1301, %v1297
      %v1602 = vpack.c.b16 %v1302, %v1298
      %v1603 = vpack.c.b16 %v1303, %v1299
      %v1604 = vpack.c.b16 %v1304, %v1300
      %v1605 = vpack.c.b16 %v1309, %v1305
      %v1606 = vpack.c.b16 %v1310, %v1306
      %v1607 = vpack.c.b16 %v1311, %v1307
      %v1608 = vpack.c.b16 %v1312, %v1308
      %v1609 = vpack.c.b16 %v1317, %v1313
      %v1610 = vpack.c.b16 %v1318, %v1314
      %v1611 = vpack.c.b16 %v1319, %v1315
      %v1612 = vpack.c.b16 %v1320, %v1316
      %v1613 = vpack.c.b16 %v1325, %v1321
      %v1614 = vpack.c.b16 %v1326, %v1322
      %v1615 = vpack.c.b16 %v1327, %v1323
      %v1616 = vpack.c.b16 %v1328, %v1324
      %v1617 = vpack.c.b16 %v1333, %v1329
      %v1618 = vpack.c.b16 %v1334, %v1330
      %v1619 = vpack.c.b16 %v1335, %v1331
      %v1620 = vpack.c.b16 %v1336, %v1332
      %v1621 = vpack.c.b16 %v1341, %v1337
      %v1622 = vpack.c.b16 %v1342, %v1338
      %v1623 = vpack.c.b16 %v1343, %v1339
      %v1624 = vpack.c.b16 %v1344, %v1340
      %v1625 = vpack.c.b16 %v1349, %v1345
      %v1626 = vpack.c.b16 %v1350, %v1346
      %v1627 = vpack.c.b16 %v1351, %v1347
      %v1628 = vpack.c.b16 %v1352, %v1348
      %v1629 = vpack.c.b16 %v1357, %v1353
      %v1630 = vpack.c.b16 %v1358, %v1354
      %v1631 = vpack.c.b16 %v1359, %v1355
      %v1632 = vpack.c.b16 %v1360, %v1356
      %v1633 = vpack.c.b16 %v1365, %v1361
      %v1634 = vpack.c.b16 %v1366, %v1362
      %v1635 = vpack.c.b16 %v1367, %v1363
      %v1636 = vpack.c.b16 %v1368, %v1364
      %v1637 = vpack.c.b16 %v1373, %v1369
      %v1638 = vpack.c.b16 %v1374, %v1370
      %v1639 = vpack.c.b16 %v1375, %v1371
      %v1640 = vpack.c.b16 %v1376, %v1372
      %v1641 = vpack.c.b16 %v1381, %v1377
      %v1642 = vpack.c.b16 %v1382, %v1378
      %v1643 = vpack.c.b16 %v1383, %v1379
      %v1644 = vpack.c.b16 %v1384, %v1380
      %v1645 = vpack.c.b16 %v1389, %v1385
      %v1646 = vpack.c.b16 %v1390, %v1386
      %v1647 = vpack.c.b16 %v1391, %v1387
      %v1648 = vpack.c.b16 %v1392, %v1388
      %1905 = vmatprep.subr.bf16.mxu0 %v1422
      %1906 = vmatpush1.bf16.msra.mxu0 %v1421
      %1907 = vmatprep.subr.bf16.mxu0 %v1418
      %1908 = vmatpush1.bf16.msra.mxu0 %v1417
      %1909 = vmatprep.subr.bf16.mxu0 %v1414
      %1910 = vmatpush1.bf16.msra.mxu0 %v1413
      %1911 = vmatprep.subr.bf16.mxu0 %v1410
      %1912 = vmatpush1.bf16.msra.mxu0 %v1409
      %1913 = vmatprep.subr.bf16.mxu0 %v1406
      %1914 = vmatpush1.bf16.msra.mxu0 %v1405
      %1915 = vmatprep.subr.bf16.mxu0 %v1402
      %1916 = vmatpush1.bf16.msra.mxu0 %v1401
      %1917 = vmatprep.subr.bf16.mxu0 %v1398
      %1918 = vmatpush1.bf16.msra.mxu0 %v1397
      %1919 = vmatprep.subr.bf16.mxu0 %v1394
      %1920 = vmatpush1.bf16.msra.mxu0 %v1393
      %1921 = vmatprep.subr.bf16.mxu0 %v1454
      %1922 = vmatpush2.bf16.msra.mxu0 %v1453
      %1923 = vmatprep.subr.bf16.mxu0 %v1450
      %1924 = vmatpush2.bf16.msra.mxu0 %v1449
      %1925 = vmatprep.subr.bf16.mxu0 %v1446
      %1926 = vmatpush2.bf16.msra.mxu0 %v1445
      %1927 = vmatprep.subr.bf16.mxu0 %v1442
      %1928 = vmatpush2.bf16.msra.mxu0 %v1441
      %1929 = vmatprep.subr.bf16.mxu0 %v1438
      %1930 = vmatpush2.bf16.msra.mxu0 %v1437
      %1931 = vmatprep.subr.bf16.mxu0 %v1434
      %1932 = vmatpush2.bf16.msra.mxu0 %v1433
      %1933 = vmatprep.subr.bf16.mxu0 %v1430
      %1934 = vmatpush2.bf16.msra.mxu0 %v1429
      %1935 = vmatprep.subr.bf16.mxu0 %v1426
      %1936 = vmatpush2.bf16.msra.mxu0 %v1425
      %1937 = vmatprep.mubr.bf16.mxu0 %v562
      %1938 = vmatmul.mubr.bf16.gmra.mxu0 %v561
      %v1939 = vpop.f32.mrf.mxu0
      %v1940 = vadd.f32 0.0, %v1939
      %v1941 = vpop.f32.mrf.mxu0
      %v1942 = vadd.f32 0.0, %v1941
      %v1943 = vpop.f32.mrf.mxu0
      %v1944 = vadd.f32 0.0, %v1943
      %v1945 = vpop.f32.mrf.mxu0
      %v1946 = vadd.f32 0.0, %v1945
      %1947 = vmatprep.mubr.bf16.mxu0 %v570
      %1948 = vmatmul.mubr.bf16.gmra.mxu0 %v569
      %v1949 = vpop.f32.mrf.mxu0
      %v1950 = vadd.f32 0.0, %v1949
      %v1951 = vpop.f32.mrf.mxu0
      %v1952 = vadd.f32 0.0, %v1951
      %v1953 = vpop.f32.mrf.mxu0
      %v1954 = vadd.f32 0.0, %v1953
      %v1955 = vpop.f32.mrf.mxu0
      %v1956 = vadd.f32 0.0, %v1955
      %1957 = vmatprep.mubr.bf16.mxu0 %v578
      %1958 = vmatmul.mubr.bf16.gmra.mxu0 %v577
      %v1959 = vpop.f32.mrf.mxu0
      %v1960 = vadd.f32 0.0, %v1959
      %v1961 = vpop.f32.mrf.mxu0
      %v1962 = vadd.f32 0.0, %v1961
      %v1963 = vpop.f32.mrf.mxu0
      %v1964 = vadd.f32 0.0, %v1963
      %v1965 = vpop.f32.mrf.mxu0
      %v1966 = vadd.f32 0.0, %v1965
      %1967 = vmatprep.mubr.bf16.mxu0 %v586
      %1968 = vmatmul.mubr.bf16.gmra.mxu0 %v585
      %v1969 = vpop.f32.mrf.mxu0
      %v1970 = vadd.f32 0.0, %v1969
      %v1971 = vpop.f32.mrf.mxu0
      %v1972 = vadd.f32 0.0, %v1971
      %v1973 = vpop.f32.mrf.mxu0
      %v1974 = vadd.f32 0.0, %v1973
      %v1975 = vpop.f32.mrf.mxu0
      %v1976 = vadd.f32 0.0, %v1975
      %1977 = vdwg.mxu0
      %1978 = vmatprep.subr.bf16.mxu0 %v1486
      %1979 = vmatpush1.bf16.msra.mxu0 %v1485
      %1980 = vmatprep.subr.bf16.mxu0 %v1482
      %1981 = vmatpush1.bf16.msra.mxu0 %v1481
      %1982 = vmatprep.subr.bf16.mxu0 %v1478
      %1983 = vmatpush1.bf16.msra.mxu0 %v1477
      %1984 = vmatprep.subr.bf16.mxu0 %v1474
      %1985 = vmatpush1.bf16.msra.mxu0 %v1473
      %1986 = vmatprep.subr.bf16.mxu0 %v1470
      %1987 = vmatpush1.bf16.msra.mxu0 %v1469
      %1988 = vmatprep.subr.bf16.mxu0 %v1466
      %1989 = vmatpush1.bf16.msra.mxu0 %v1465
      %1990 = vmatprep.subr.bf16.mxu0 %v1462
      %1991 = vmatpush1.bf16.msra.mxu0 %v1461
      %1992 = vmatprep.subr.bf16.mxu0 %v1458
      %1993 = vmatpush1.bf16.msra.mxu0 %v1457
      %1994 = vmatprep.subr.bf16.mxu0 %v1518
      %1995 = vmatpush2.bf16.msra.mxu0 %v1517
      %1996 = vmatprep.subr.bf16.mxu0 %v1514
      %1997 = vmatpush2.bf16.msra.mxu0 %v1513
      %1998 = vmatprep.subr.bf16.mxu0 %v1510
      %1999 = vmatpush2.bf16.msra.mxu0 %v1509
      %2000 = vmatprep.subr.bf16.mxu0 %v1506
      %2001 = vmatpush2.bf16.msra.mxu0 %v1505
      %2002 = vmatprep.subr.bf16.mxu0 %v1502
      %2003 = vmatpush2.bf16.msra.mxu0 %v1501
      %2004 = vmatprep.subr.bf16.mxu0 %v1498
      %2005 = vmatpush2.bf16.msra.mxu0 %v1497
      %2006 = vmatprep.subr.bf16.mxu0 %v1494
      %2007 = vmatpush2.bf16.msra.mxu0 %v1493
      %2008 = vmatprep.subr.bf16.mxu0 %v1490
      %2009 = vmatpush2.bf16.msra.mxu0 %v1489
      %2010 = vmatprep.mubr.bf16.mxu0 %v564
      %2011 = vmatmul.mubr.bf16.gmra.mxu0 %v563
      %v2012 = vpop.f32.mrf.mxu0
      %v2013 = vadd.f32 %v1940, %v2012
      %v2014 = vpop.f32.mrf.mxu0
      %v2015 = vadd.f32 %v1942, %v2014
      %v2016 = vpop.f32.mrf.mxu0
      %v2017 = vadd.f32 %v1944, %v2016
      %v2018 = vpop.f32.mrf.mxu0
      %v2019 = vadd.f32 %v1946, %v2018
      %2020 = vmatprep.mubr.bf16.mxu0 %v572
      %2021 = vmatmul.mubr.bf16.gmra.mxu0 %v571
      %v2022 = vpop.f32.mrf.mxu0
      %v2023 = vadd.f32 %v1950, %v2022
      %v2024 = vpop.f32.mrf.mxu0
      %v2025 = vadd.f32 %v1952, %v2024
      %v2026 = vpop.f32.mrf.mxu0
      %v2027 = vadd.f32 %v1954, %v2026
      %v2028 = vpop.f32.mrf.mxu0
      %v2029 = vadd.f32 %v1956, %v2028
      %2030 = vmatprep.mubr.bf16.mxu0 %v580
      %2031 = vmatmul.mubr.bf16.gmra.mxu0 %v579
      %v2032 = vpop.f32.mrf.mxu0
      %v2033 = vadd.f32 %v1960, %v2032
      %v2034 = vpop.f32.mrf.mxu0
      %v2035 = vadd.f32 %v1962, %v2034
      %v2036 = vpop.f32.mrf.mxu0
      %v2037 = vadd.f32 %v1964, %v2036
      %v2038 = vpop.f32.mrf.mxu0
      %v2039 = vadd.f32 %v1966, %v2038
      %2040 = vmatprep.mubr.bf16.mxu0 %v588
      %2041 = vmatmul.mubr.bf16.gmra.mxu0 %v587
      %v2042 = vpop.f32.mrf.mxu0
      %v2043 = vadd.f32 %v1970, %v2042
      %v2044 = vpop.f32.mrf.mxu0
      %v2045 = vadd.f32 %v1972, %v2044
      %v2046 = vpop.f32.mrf.mxu0
      %v2047 = vadd.f32 %v1974, %v2046
      %v2048 = vpop.f32.mrf.mxu0
      %v2049 = vadd.f32 %v1976, %v2048
      %2050 = vdwg.mxu0
      %2051 = vmatprep.subr.bf16.mxu0 %v1550
      %2052 = vmatpush1.bf16.msra.mxu0 %v1549
      %2053 = vmatprep.subr.bf16.mxu0 %v1546
      %2054 = vmatpush1.bf16.msra.mxu0 %v1545
      %2055 = vmatprep.subr.bf16.mxu0 %v1542
      %2056 = vmatpush1.bf16.msra.mxu0 %v1541
      %2057 = vmatprep.subr.bf16.mxu0 %v1538
      %2058 = vmatpush1.bf16.msra.mxu0 %v1537
      %2059 = vmatprep.subr.bf16.mxu0 %v1534
      %2060 = vmatpush1.bf16.msra.mxu0 %v1533
      %2061 = vmatprep.subr.bf16.mxu0 %v1530
      %2062 = vmatpush1.bf16.msra.mxu0 %v1529
      %2063 = vmatprep.subr.bf16.mxu0 %v1526
      %2064 = vmatpush1.bf16.msra.mxu0 %v1525
      %2065 = vmatprep.subr.bf16.mxu0 %v1522
      %2066 = vmatpush1.bf16.msra.mxu0 %v1521
      %2067 = vmatprep.subr.bf16.mxu0 %v1582
      %2068 = vmatpush2.bf16.msra.mxu0 %v1581
      %2069 = vmatprep.subr.bf16.mxu0 %v1578
      %2070 = vmatpush2.bf16.msra.mxu0 %v1577
      %2071 = vmatprep.subr.bf16.mxu0 %v1574
      %2072 = vmatpush2.bf16.msra.mxu0 %v1573
      %2073 = vmatprep.subr.bf16.mxu0 %v1570
      %2074 = vmatpush2.bf16.msra.mxu0 %v1569
      %2075 = vmatprep.subr.bf16.mxu0 %v1566
      %2076 = vmatpush2.bf16.msra.mxu0 %v1565
      %2077 = vmatprep.subr.bf16.mxu0 %v1562
      %2078 = vmatpush2.bf16.msra.mxu0 %v1561
      %2079 = vmatprep.subr.bf16.mxu0 %v1558
      %2080 = vmatpush2.bf16.msra.mxu0 %v1557
      %2081 = vmatprep.subr.bf16.mxu0 %v1554
      %2082 = vmatpush2.bf16.msra.mxu0 %v1553
      %2083 = vmatprep.mubr.bf16.mxu0 %v566
      %2084 = vmatmul.mubr.bf16.gmra.mxu0 %v565
      %v2085 = vpop.f32.mrf.mxu0
      %v2086 = vadd.f32 %v2013, %v2085
      %v2087 = vpop.f32.mrf.mxu0
      %v2088 = vadd.f32 %v2015, %v2087
      %v2089 = vpop.f32.mrf.mxu0
      %v2090 = vadd.f32 %v2017, %v2089
      %v2091 = vpop.f32.mrf.mxu0
      %v2092 = vadd.f32 %v2019, %v2091
      %2093 = vmatprep.mubr.bf16.mxu0 %v574
      %2094 = vmatmul.mubr.bf16.gmra.mxu0 %v573
      %v2095 = vpop.f32.mrf.mxu0
      %v2096 = vadd.f32 %v2023, %v2095
      %v2097 = vpop.f32.mrf.mxu0
      %v2098 = vadd.f32 %v2025, %v2097
      %v2099 = vpop.f32.mrf.mxu0
      %v2100 = vadd.f32 %v2027, %v2099
      %v2101 = vpop.f32.mrf.mxu0
      %v2102 = vadd.f32 %v2029, %v2101
      %2103 = vmatprep.mubr.bf16.mxu0 %v582
      %2104 = vmatmul.mubr.bf16.gmra.mxu0 %v581
      %v2105 = vpop.f32.mrf.mxu0
      %v2106 = vadd.f32 %v2033, %v2105
      %v2107 = vpop.f32.mrf.mxu0
      %v2108 = vadd.f32 %v2035, %v2107
      %v2109 = vpop.f32.mrf.mxu0
      %v2110 = vadd.f32 %v2037, %v2109
      %v2111 = vpop.f32.mrf.mxu0
      %v2112 = vadd.f32 %v2039, %v2111
      %2113 = vmatprep.mubr.bf16.mxu0 %v590
      %2114 = vmatmul.mubr.bf16.gmra.mxu0 %v589
      %v2115 = vpop.f32.mrf.mxu0
      %v2116 = vadd.f32 %v2043, %v2115
      %v2117 = vpop.f32.mrf.mxu0
      %v2118 = vadd.f32 %v2045, %v2117
      %v2119 = vpop.f32.mrf.mxu0
      %v2120 = vadd.f32 %v2047, %v2119
      %v2121 = vpop.f32.mrf.mxu0
      %v2122 = vadd.f32 %v2049, %v2121
      %2123 = vdwg.mxu0
      %2124 = vmatprep.subr.bf16.mxu0 %v1614
      %2125 = vmatpush1.bf16.msra.mxu0 %v1613
      %2126 = vmatprep.subr.bf16.mxu0 %v1610
      %2127 = vmatpush1.bf16.msra.mxu0 %v1609
      %2128 = vmatprep.subr.bf16.mxu0 %v1606
      %2129 = vmatpush1.bf16.msra.mxu0 %v1605
      %2130 = vmatprep.subr.bf16.mxu0 %v1602
      %2131 = vmatpush1.bf16.msra.mxu0 %v1601
      %2132 = vmatprep.subr.bf16.mxu0 %v1598
      %2133 = vmatpush1.bf16.msra.mxu0 %v1597
      %2134 = vmatprep.subr.bf16.mxu0 %v1594
      %2135 = vmatpush1.bf16.msra.mxu0 %v1593
      %2136 = vmatprep.subr.bf16.mxu0 %v1590
      %2137 = vmatpush1.bf16.msra.mxu0 %v1589
      %2138 = vmatprep.subr.bf16.mxu0 %v1586
      %2139 = vmatpush1.bf16.msra.mxu0 %v1585
      %2140 = vmatprep.subr.bf16.mxu0 %v1646
      %2141 = vmatpush2.bf16.msra.mxu0 %v1645
      %2142 = vmatprep.subr.bf16.mxu0 %v1642
      %2143 = vmatpush2.bf16.msra.mxu0 %v1641
      %2144 = vmatprep.subr.bf16.mxu0 %v1638
      %2145 = vmatpush2.bf16.msra.mxu0 %v1637
      %2146 = vmatprep.subr.bf16.mxu0 %v1634
      %2147 = vmatpush2.bf16.msra.mxu0 %v1633
      %2148 = vmatprep.subr.bf16.mxu0 %v1630
      %2149 = vmatpush2.bf16.msra.mxu0 %v1629
      %2150 = vmatprep.subr.bf16.mxu0 %v1626
      %2151 = vmatpush2.bf16.msra.mxu0 %v1625
      %2152 = vmatprep.subr.bf16.mxu0 %v1622
      %2153 = vmatpush2.bf16.msra.mxu0 %v1621
      %2154 = vmatprep.subr.bf16.mxu0 %v1618
      %2155 = vmatpush2.bf16.msra.mxu0 %v1617
      %2156 = vmatprep.mubr.bf16.mxu0 %v568
      %2157 = vmatmul.mubr.bf16.gmra.mxu0 %v567
      %v2158 = vpop.f32.mrf.mxu0
      %v2159 = vadd.f32 %v2086, %v2158
      %v2160 = vpop.f32.mrf.mxu0
      %v2161 = vadd.f32 %v2088, %v2160
      %v2162 = vpop.f32.mrf.mxu0
      %v2163 = vadd.f32 %v2090, %v2162
      %v2164 = vpop.f32.mrf.mxu0
      %v2165 = vadd.f32 %v2092, %v2164
      %2166 = vmatprep.mubr.bf16.mxu0 %v576
      %2167 = vmatmul.mubr.bf16.gmra.mxu0 %v575
      %v2168 = vpop.f32.mrf.mxu0
      %v2169 = vadd.f32 %v2096, %v2168
      %v2170 = vpop.f32.mrf.mxu0
      %v2171 = vadd.f32 %v2098, %v2170
      %v2172 = vpop.f32.mrf.mxu0
      %v2173 = vadd.f32 %v2100, %v2172
      %v2174 = vpop.f32.mrf.mxu0
      %v2175 = vadd.f32 %v2102, %v2174
      %2176 = vmatprep.mubr.bf16.mxu0 %v584
      %2177 = vmatmul.mubr.bf16.gmra.mxu0 %v583
      %v2178 = vpop.f32.mrf.mxu0
      %v2179 = vadd.f32 %v2106, %v2178
      %v2180 = vpop.f32.mrf.mxu0
      %v2181 = vadd.f32 %v2108, %v2180
      %v2182 = vpop.f32.mrf.mxu0
      %v2183 = vadd.f32 %v2110, %v2182
      %v2184 = vpop.f32.mrf.mxu0
      %v2185 = vadd.f32 %v2112, %v2184
      %2186 = vmatprep.mubr.bf16.mxu0 %v592
      %2187 = vmatmul.mubr.bf16.gmra.mxu0 %v591
      %v2188 = vpop.f32.mrf.mxu0
      %v2189 = vadd.f32 %v2116, %v2188
      %v2190 = vpop.f32.mrf.mxu0
      %v2191 = vadd.f32 %v2118, %v2190
      %v2192 = vpop.f32.mrf.mxu0
      %v2193 = vadd.f32 %v2120, %v2192
      %v2194 = vpop.f32.mrf.mxu0
      %v2195 = vadd.f32 %v2122, %v2194
      %2196 = vdwg.mxu0
      %2197 = vmatprep.subr.bf16.mxu0 %v1424
      %2198 = vmatpush1.bf16.msra.mxu0 %v1423
      %2199 = vmatprep.subr.bf16.mxu0 %v1420
      %2200 = vmatpush1.bf16.msra.mxu0 %v1419
      %2201 = vmatprep.subr.bf16.mxu0 %v1416
      %2202 = vmatpush1.bf16.msra.mxu0 %v1415
      %2203 = vmatprep.subr.bf16.mxu0 %v1412
      %2204 = vmatpush1.bf16.msra.mxu0 %v1411
      %2205 = vmatprep.subr.bf16.mxu0 %v1408
      %2206 = vmatpush1.bf16.msra.mxu0 %v1407
      %2207 = vmatprep.subr.bf16.mxu0 %v1404
      %2208 = vmatpush1.bf16.msra.mxu0 %v1403
      %2209 = vmatprep.subr.bf16.mxu0 %v1400
      %2210 = vmatpush1.bf16.msra.mxu0 %v1399
      %2211 = vmatprep.subr.bf16.mxu0 %v1396
      %2212 = vmatpush1.bf16.msra.mxu0 %v1395
      %2213 = vmatprep.subr.bf16.mxu0 %v1456
      %2214 = vmatpush2.bf16.msra.mxu0 %v1455
      %2215 = vmatprep.subr.bf16.mxu0 %v1452
      %2216 = vmatpush2.bf16.msra.mxu0 %v1451
      %2217 = vmatprep.subr.bf16.mxu0 %v1448
      %2218 = vmatpush2.bf16.msra.mxu0 %v1447
      %2219 = vmatprep.subr.bf16.mxu0 %v1444
      %2220 = vmatpush2.bf16.msra.mxu0 %v1443
      %2221 = vmatprep.subr.bf16.mxu0 %v1440
      %2222 = vmatpush2.bf16.msra.mxu0 %v1439
      %2223 = vmatprep.subr.bf16.mxu0 %v1436
      %2224 = vmatpush2.bf16.msra.mxu0 %v1435
      %2225 = vmatprep.subr.bf16.mxu0 %v1432
      %2226 = vmatpush2.bf16.msra.mxu0 %v1431
      %2227 = vmatprep.subr.bf16.mxu0 %v1428
      %2228 = vmatpush2.bf16.msra.mxu0 %v1427
      %2229 = vmatprep.mubr.bf16.mxu0 %v562
      %2230 = vmatmul.mubr.bf16.gmra.mxu0 %v561
      %v2231 = vpop.f32.mrf.mxu0
      %v2232 = vadd.f32 0.0, %v2231
      %v2233 = vpop.f32.mrf.mxu0
      %v2234 = vadd.f32 0.0, %v2233
      %v2235 = vpop.f32.mrf.mxu0
      %v2236 = vadd.f32 0.0, %v2235
      %v2237 = vpop.f32.mrf.mxu0
      %v2238 = vadd.f32 0.0, %v2237
      %2239 = vmatprep.mubr.bf16.mxu0 %v570
      %2240 = vmatmul.mubr.bf16.gmra.mxu0 %v569
      %v2241 = vpop.f32.mrf.mxu0
      %v2242 = vadd.f32 0.0, %v2241
      %v2243 = vpop.f32.mrf.mxu0
      %v2244 = vadd.f32 0.0, %v2243
      %v2245 = vpop.f32.mrf.mxu0
      %v2246 = vadd.f32 0.0, %v2245
      %v2247 = vpop.f32.mrf.mxu0
      %v2248 = vadd.f32 0.0, %v2247
      %2249 = vmatprep.mubr.bf16.mxu0 %v578
      %2250 = vmatmul.mubr.bf16.gmra.mxu0 %v577
      %v2251 = vpop.f32.mrf.mxu0
      %v2252 = vadd.f32 0.0, %v2251
      %v2253 = vpop.f32.mrf.mxu0
      %v2254 = vadd.f32 0.0, %v2253
      %v2255 = vpop.f32.mrf.mxu0
      %v2256 = vadd.f32 0.0, %v2255
      %v2257 = vpop.f32.mrf.mxu0
      %v2258 = vadd.f32 0.0, %v2257
      %2259 = vmatprep.mubr.bf16.mxu0 %v586
      %2260 = vmatmul.mubr.bf16.gmra.mxu0 %v585
      %v2261 = vpop.f32.mrf.mxu0
      %v2262 = vadd.f32 0.0, %v2261
      %v2263 = vpop.f32.mrf.mxu0
      %v2264 = vadd.f32 0.0, %v2263
      %v2265 = vpop.f32.mrf.mxu0
      %v2266 = vadd.f32 0.0, %v2265
      %v2267 = vpop.f32.mrf.mxu0
      %v2268 = vadd.f32 0.0, %v2267
      %2269 = vdwg.mxu0
      %2270 = vmatprep.subr.bf16.mxu0 %v1488
      %2271 = vmatpush1.bf16.msra.mxu0 %v1487
      %2272 = vmatprep.subr.bf16.mxu0 %v1484
      %2273 = vmatpush1.bf16.msra.mxu0 %v1483
      %2274 = vmatprep.subr.bf16.mxu0 %v1480
      %2275 = vmatpush1.bf16.msra.mxu0 %v1479
      %2276 = vmatprep.subr.bf16.mxu0 %v1476
      %2277 = vmatpush1.bf16.msra.mxu0 %v1475
      %2278 = vmatprep.subr.bf16.mxu0 %v1472
      %2279 = vmatpush1.bf16.msra.mxu0 %v1471
      %2280 = vmatprep.subr.bf16.mxu0 %v1468
      %2281 = vmatpush1.bf16.msra.mxu0 %v1467
      %2282 = vmatprep.subr.bf16.mxu0 %v1464
      %2283 = vmatpush1.bf16.msra.mxu0 %v1463
      %2284 = vmatprep.subr.bf16.mxu0 %v1460
      %2285 = vmatpush1.bf16.msra.mxu0 %v1459
      %2286 = vmatprep.subr.bf16.mxu0 %v1520
      %2287 = vmatpush2.bf16.msra.mxu0 %v1519
      %2288 = vmatprep.subr.bf16.mxu0 %v1516
      %2289 = vmatpush2.bf16.msra.mxu0 %v1515
      %2290 = vmatprep.subr.bf16.mxu0 %v1512
      %2291 = vmatpush2.bf16.msra.mxu0 %v1511
      %2292 = vmatprep.subr.bf16.mxu0 %v1508
      %2293 = vmatpush2.bf16.msra.mxu0 %v1507
      %2294 = vmatprep.subr.bf16.mxu0 %v1504
      %2295 = vmatpush2.bf16.msra.mxu0 %v1503
      %2296 = vmatprep.subr.bf16.mxu0 %v1500
      %2297 = vmatpush2.bf16.msra.mxu0 %v1499
      %2298 = vmatprep.subr.bf16.mxu0 %v1496
      %2299 = vmatpush2.bf16.msra.mxu0 %v1495
      %2300 = vmatprep.subr.bf16.mxu0 %v1492
      %2301 = vmatpush2.bf16.msra.mxu0 %v1491
      %2302 = vmatprep.mubr.bf16.mxu0 %v564
      %2303 = vmatmul.mubr.bf16.gmra.mxu0 %v563
      %v2304 = vpop.f32.mrf.mxu0
      %v2305 = vadd.f32 %v2232, %v2304
      %v2306 = vpop.f32.mrf.mxu0
      %v2307 = vadd.f32 %v2234, %v2306
      %v2308 = vpop.f32.mrf.mxu0
      %v2309 = vadd.f32 %v2236, %v2308
      %v2310 = vpop.f32.mrf.mxu0
      %v2311 = vadd.f32 %v2238, %v2310
      %2312 = vmatprep.mubr.bf16.mxu0 %v572
      %2313 = vmatmul.mubr.bf16.gmra.mxu0 %v571
      %v2314 = vpop.f32.mrf.mxu0
      %v2315 = vadd.f32 %v2242, %v2314
      %v2316 = vpop.f32.mrf.mxu0
      %v2317 = vadd.f32 %v2244, %v2316
      %v2318 = vpop.f32.mrf.mxu0
      %v2319 = vadd.f32 %v2246, %v2318
      %v2320 = vpop.f32.mrf.mxu0
      %v2321 = vadd.f32 %v2248, %v2320
      %2322 = vmatprep.mubr.bf16.mxu0 %v580
      %2323 = vmatmul.mubr.bf16.gmra.mxu0 %v579
      %v2324 = vpop.f32.mrf.mxu0
      %v2325 = vadd.f32 %v2252, %v2324
      %v2326 = vpop.f32.mrf.mxu0
      %v2327 = vadd.f32 %v2254, %v2326
      %v2328 = vpop.f32.mrf.mxu0
      %v2329 = vadd.f32 %v2256, %v2328
      %v2330 = vpop.f32.mrf.mxu0
      %v2331 = vadd.f32 %v2258, %v2330
      %2332 = vmatprep.mubr.bf16.mxu0 %v588
      %2333 = vmatmul.mubr.bf16.gmra.mxu0 %v587
      %v2334 = vpop.f32.mrf.mxu0
      %v2335 = vadd.f32 %v2262, %v2334
      %v2336 = vpop.f32.mrf.mxu0
      %v2337 = vadd.f32 %v2264, %v2336
      %v2338 = vpop.f32.mrf.mxu0
      %v2339 = vadd.f32 %v2266, %v2338
      %v2340 = vpop.f32.mrf.mxu0
      %v2341 = vadd.f32 %v2268, %v2340
      %2342 = vdwg.mxu0
      %2343 = vmatprep.subr.bf16.mxu0 %v1552
      %2344 = vmatpush1.bf16.msra.mxu0 %v1551
      %2345 = vmatprep.subr.bf16.mxu0 %v1548
      %2346 = vmatpush1.bf16.msra.mxu0 %v1547
      %2347 = vmatprep.subr.bf16.mxu0 %v1544
      %2348 = vmatpush1.bf16.msra.mxu0 %v1543
      %2349 = vmatprep.subr.bf16.mxu0 %v1540
      %2350 = vmatpush1.bf16.msra.mxu0 %v1539
      %2351 = vmatprep.subr.bf16.mxu0 %v1536
      %2352 = vmatpush1.bf16.msra.mxu0 %v1535
      %2353 = vmatprep.subr.bf16.mxu0 %v1532
      %2354 = vmatpush1.bf16.msra.mxu0 %v1531
      %2355 = vmatprep.subr.bf16.mxu0 %v1528
      %2356 = vmatpush1.bf16.msra.mxu0 %v1527
      %2357 = vmatprep.subr.bf16.mxu0 %v1524
      %2358 = vmatpush1.bf16.msra.mxu0 %v1523
      %2359 = vmatprep.subr.bf16.mxu0 %v1584
      %2360 = vmatpush2.bf16.msra.mxu0 %v1583
      %2361 = vmatprep.subr.bf16.mxu0 %v1580
      %2362 = vmatpush2.bf16.msra.mxu0 %v1579
      %2363 = vmatprep.subr.bf16.mxu0 %v1576
      %2364 = vmatpush2.bf16.msra.mxu0 %v1575
      %2365 = vmatprep.subr.bf16.mxu0 %v1572
      %2366 = vmatpush2.bf16.msra.mxu0 %v1571
      %2367 = vmatprep.subr.bf16.mxu0 %v1568
      %2368 = vmatpush2.bf16.msra.mxu0 %v1567
      %2369 = vmatprep.subr.bf16.mxu0 %v1564
      %2370 = vmatpush2.bf16.msra.mxu0 %v1563
      %2371 = vmatprep.subr.bf16.mxu0 %v1560
      %2372 = vmatpush2.bf16.msra.mxu0 %v1559
      %2373 = vmatprep.subr.bf16.mxu0 %v1556
      %2374 = vmatpush2.bf16.msra.mxu0 %v1555
      %2375 = vmatprep.mubr.bf16.mxu0 %v566
      %2376 = vmatmul.mubr.bf16.gmra.mxu0 %v565
      %v2377 = vpop.f32.mrf.mxu0
      %v2378 = vadd.f32 %v2305, %v2377
      %v2379 = vpop.f32.mrf.mxu0
      %v2380 = vadd.f32 %v2307, %v2379
      %v2381 = vpop.f32.mrf.mxu0
      %v2382 = vadd.f32 %v2309, %v2381
      %v2383 = vpop.f32.mrf.mxu0
      %v2384 = vadd.f32 %v2311, %v2383
      %2385 = vmatprep.mubr.bf16.mxu0 %v574
      %2386 = vmatmul.mubr.bf16.gmra.mxu0 %v573
      %v2387 = vpop.f32.mrf.mxu0
      %v2388 = vadd.f32 %v2315, %v2387
      %v2389 = vpop.f32.mrf.mxu0
      %v2390 = vadd.f32 %v2317, %v2389
      %v2391 = vpop.f32.mrf.mxu0
      %v2392 = vadd.f32 %v2319, %v2391
      %v2393 = vpop.f32.mrf.mxu0
      %v2394 = vadd.f32 %v2321, %v2393
      %2395 = vmatprep.mubr.bf16.mxu0 %v582
      %2396 = vmatmul.mubr.bf16.gmra.mxu0 %v581
      %v2397 = vpop.f32.mrf.mxu0
      %v2398 = vadd.f32 %v2325, %v2397
      %v2399 = vpop.f32.mrf.mxu0
      %v2400 = vadd.f32 %v2327, %v2399
      %v2401 = vpop.f32.mrf.mxu0
      %v2402 = vadd.f32 %v2329, %v2401
      %v2403 = vpop.f32.mrf.mxu0
      %v2404 = vadd.f32 %v2331, %v2403
      %2405 = vmatprep.mubr.bf16.mxu0 %v590
      %2406 = vmatmul.mubr.bf16.gmra.mxu0 %v589
      %v2407 = vpop.f32.mrf.mxu0
      %v2408 = vadd.f32 %v2335, %v2407
      %v2409 = vpop.f32.mrf.mxu0
      %v2410 = vadd.f32 %v2337, %v2409
      %v2411 = vpop.f32.mrf.mxu0
      %v2412 = vadd.f32 %v2339, %v2411
      %v2413 = vpop.f32.mrf.mxu0
      %v2414 = vadd.f32 %v2341, %v2413
      %2415 = vdwg.mxu0
      %2416 = vmatprep.subr.bf16.mxu0 %v1616
      %2417 = vmatpush1.bf16.msra.mxu0 %v1615
      %2418 = vmatprep.subr.bf16.mxu0 %v1612
      %2419 = vmatpush1.bf16.msra.mxu0 %v1611
      %2420 = vmatprep.subr.bf16.mxu0 %v1608
      %2421 = vmatpush1.bf16.msra.mxu0 %v1607
      %2422 = vmatprep.subr.bf16.mxu0 %v1604
      %2423 = vmatpush1.bf16.msra.mxu0 %v1603
      %2424 = vmatprep.subr.bf16.mxu0 %v1600
      %2425 = vmatpush1.bf16.msra.mxu0 %v1599
      %2426 = vmatprep.subr.bf16.mxu0 %v1596
      %2427 = vmatpush1.bf16.msra.mxu0 %v1595
      %2428 = vmatprep.subr.bf16.mxu0 %v1592
      %2429 = vmatpush1.bf16.msra.mxu0 %v1591
      %2430 = vmatprep.subr.bf16.mxu0 %v1588
      %2431 = vmatpush1.bf16.msra.mxu0 %v1587
      %2432 = vmatprep.subr.bf16.mxu0 %v1648
      %2433 = vmatpush2.bf16.msra.mxu0 %v1647
      %2434 = vmatprep.subr.bf16.mxu0 %v1644
      %2435 = vmatpush2.bf16.msra.mxu0 %v1643
      %2436 = vmatprep.subr.bf16.mxu0 %v1640
      %2437 = vmatpush2.bf16.msra.mxu0 %v1639
      %2438 = vmatprep.subr.bf16.mxu0 %v1636
      %2439 = vmatpush2.bf16.msra.mxu0 %v1635
      %2440 = vmatprep.subr.bf16.mxu0 %v1632
      %2441 = vmatpush2.bf16.msra.mxu0 %v1631
      %2442 = vmatprep.subr.bf16.mxu0 %v1628
      %2443 = vmatpush2.bf16.msra.mxu0 %v1627
      %2444 = vmatprep.subr.bf16.mxu0 %v1624
      %2445 = vmatpush2.bf16.msra.mxu0 %v1623
      %2446 = vmatprep.subr.bf16.mxu0 %v1620
      %2447 = vmatpush2.bf16.msra.mxu0 %v1619
      %2448 = vmatprep.mubr.bf16.mxu0 %v568
      %2449 = vmatmul.mubr.bf16.gmra.mxu0 %v567
      %v2450 = vpop.f32.mrf.mxu0
      %v2451 = vadd.f32 %v2378, %v2450
      %v2452 = vpop.f32.mrf.mxu0
      %v2453 = vadd.f32 %v2380, %v2452
      %v2454 = vpop.f32.mrf.mxu0
      %v2455 = vadd.f32 %v2382, %v2454
      %v2456 = vpop.f32.mrf.mxu0
      %v2457 = vadd.f32 %v2384, %v2456
      %2458 = vmatprep.mubr.bf16.mxu0 %v576
      %2459 = vmatmul.mubr.bf16.gmra.mxu0 %v575
      %v2460 = vpop.f32.mrf.mxu0
      %v2461 = vadd.f32 %v2388, %v2460
      %v2462 = vpop.f32.mrf.mxu0
      %v2463 = vadd.f32 %v2390, %v2462
      %v2464 = vpop.f32.mrf.mxu0
      %v2465 = vadd.f32 %v2392, %v2464
      %v2466 = vpop.f32.mrf.mxu0
      %v2467 = vadd.f32 %v2394, %v2466
      %2468 = vmatprep.mubr.bf16.mxu0 %v584
      %2469 = vmatmul.mubr.bf16.gmra.mxu0 %v583
      %v2470 = vpop.f32.mrf.mxu0
      %v2471 = vadd.f32 %v2398, %v2470
      %v2472 = vpop.f32.mrf.mxu0
      %v2473 = vadd.f32 %v2400, %v2472
      %v2474 = vpop.f32.mrf.mxu0
      %v2475 = vadd.f32 %v2402, %v2474
      %v2476 = vpop.f32.mrf.mxu0
      %v2477 = vadd.f32 %v2404, %v2476
      %2478 = vmatprep.mubr.bf16.mxu0 %v592
      %2479 = vmatmul.mubr.bf16.gmra.mxu0 %v591
      %v2480 = vpop.f32.mrf.mxu0
      %v2481 = vadd.f32 %v2408, %v2480
      %v2482 = vpop.f32.mrf.mxu0
      %v2483 = vadd.f32 %v2410, %v2482
      %v2484 = vpop.f32.mrf.mxu0
      %v2485 = vadd.f32 %v2412, %v2484
      %v2486 = vpop.f32.mrf.mxu0
      %v2487 = vadd.f32 %v2414, %v2486
      %2488 = vdwg.mxu0
      %v2489 = vmax.f32 %v2159, %v2161
      %v2490 = vmax.f32 %v2163, %v2165
      %v2491 = vmax.f32 %v2169, %v2171
      %v2492 = vmax.f32 %v2173, %v2175
      %v2493 = vmax.f32 %v2179, %v2181
      %v2494 = vmax.f32 %v2183, %v2185
      %v2495 = vmax.f32 %v2189, %v2191
      %v2496 = vmax.f32 %v2193, %v2195
      %v2497 = vmax.f32 %v2451, %v2453
      %v2498 = vmax.f32 %v2455, %v2457
      %v2499 = vmax.f32 %v2461, %v2463
      %v2500 = vmax.f32 %v2465, %v2467
      %v2501 = vmax.f32 %v2471, %v2473
      %v2502 = vmax.f32 %v2475, %v2477
      %v2503 = vmax.f32 %v2481, %v2483
      %v2504 = vmax.f32 %v2485, %v2487
      %v2505 = vmax.f32 %v2489, %v2497
      %v2506 = vmax.f32 %v2490, %v2498
      %v2507 = vmax.f32 %v2491, %v2499
      %v2508 = vmax.f32 %v2492, %v2500
      %v2509 = vmax.f32 %v2493, %v2501
      %v2510 = vmax.f32 %v2494, %v2502
      %v2511 = vmax.f32 %v2495, %v2503
      %v2512 = vmax.f32 %v2496, %v2504
      %v2513 = vld [vmem:[%s2] sm:$0x1]
      %v2515 = vlaneseq
      %v2516 = vshrl.u32 %v2515, 7
      %v2517 = vsub.s32 0, %v2516
      %v2518 = vrot.slane %v2513, %v2517
      %v2520 = vadd.f32 %v2505, %v2518
      %v2521 = vadd.f32 %v2506, %v2518
      %v2522 = vadd.f32 %v2507, %v2518
      %v2523 = vadd.f32 %v2508, %v2518
      %v2524 = vadd.f32 %v2509, %v2518
      %v2525 = vadd.f32 %v2510, %v2518
      %v2526 = vadd.f32 %v2511, %v2518
      %v2527 = vadd.f32 %v2512, %v2518
      %v2528 = vmax.f32 %v2520, 0.0
      %v2529 = vmax.f32 %v2521, 0.0
      %v2530 = vmax.f32 %v2522, 0.0
      %v2531 = vmax.f32 %v2523, 0.0
      %v2532 = vmax.f32 %v2524, 0.0
      %v2533 = vmax.f32 %v2525, 0.0
      %v2534 = vmax.f32 %v2526, 0.0
      %v2535 = vmax.f32 %v2527, 0.0
      %v2536 = vpack.c.bf16 %v2529, %v2528
      %v2537 = vpack.c.bf16 %v2531, %v2530
      %v2538 = vpack.c.bf16 %v2533, %v2532
      %v2539 = vpack.c.bf16 %v2535, %v2534
      %v2544 = vunpack.c.l.b16 %v2536
      %v2545 = vunpack.c.h.b16 %v2536
      %v2546 = vunpack.c.l.b16 %v2537
      %v2547 = vunpack.c.h.b16 %v2537
      %v2548 = vunpack.c.l.b16 %v2538
      %v2549 = vunpack.c.h.b16 %v2538
      %v2550 = vunpack.c.l.b16 %v2539
      %v2551 = vunpack.c.h.b16 %v2539
      %v2552 = vpack.c.b16 %v2544, %v2544
      %v2553 = vpack.c.b16 %v2545, %v2545
      %v2554 = vpack.c.b16 %v2546, %v2546
      %v2555 = vpack.c.b16 %v2547, %v2547
      %v2556 = vpack.c.b16 %v2548, %v2548
      %v2557 = vpack.c.b16 %v2549, %v2549
      %v2558 = vpack.c.b16 %v2550, %v2550
      %v2559 = vpack.c.b16 %v2551, %v2551
      %2568 = vst [vmem:[%s175] sm:$0xf] %v2552
      %2569 = vst [vmem:[%s175 + $0x4] sm:$0xf] %v2553
      %2570 = vst [vmem:[%s175 + $0x8] sm:$0xf] %v2554
      %2571 = vst [vmem:[%s175 + $0xc] sm:$0xf] %v2555
      %2572 = vst [vmem:[%s175 + $0x10] sm:$0xf] %v2556
      %2573 = vst [vmem:[%s175 + $0x14] sm:$0xf] %v2557
      %2574 = vst [vmem:[%s175 + $0x18] sm:$0xf] %v2558
      %2575 = vst [vmem:[%s175 + $0x1c] sm:$0xf] %v2559
      %s2576 = smul.u32 8, %s14
      %p2577 = scmp.lt.s32.totalorder %s2576, 15
      %s2578 = scalar_select %p2577, %s2576, 15
      %s2579 = smul.addr %s2578, 4
      %s2580 = scalar_lea.vmem %s3, %s2579
      // Predicated region
      $region33: #{forward.6} parent=31 // pred_check
        %p2581 = pneg %p100
      $region34: #{forward.6} parent=31 // pred_check_branch
        %2583 = sbr.rel (%p2581) target = $region36
      $region35: #{forward.6} parent=31 // pred_region
        %s2584 = smul.u32 8, %s14
      $region36: #{forward.6} parent=31 // pred_fallthru
        _
    $region32: #{forward.6} parent=5 // pred_fallthru
      _
    %p2585 = scmp.le.s32.totalorder 2, %s9
    // Predicated region
    $region37: #{forward.6} parent=5 // pred_check
      %p2586 = pneg %p2585
    $region38: #{forward.6} parent=5 // pred_check_branch
      %2588 = sbr.rel (%p2586) target = $region40
    $region39: #{forward.6} parent=5 // pred_region
      %s2589 = ssub.s32 %s9, 2
      // Predicated region
      $region41: #{forward.6} parent=39 // pred_check
        %p2590 = pneg %p106
      $region42: #{forward.6} parent=39 // pred_check_branch
        %2592 = sbr.rel (%p2590) target = $region44
      $region43: #{forward.6} parent=39 // pred_region
        %s2593 = smul.u32 8, %s15
        %p2594 = scmp.lt.s32.totalorder %s2593, 15
        %s2595 = scalar_select %p2594, %s2593, 15
        %s2596 = smul.addr %s2595, 4
        %s2597 = scalar_lea.vmem %s3, %s2596
      $region44: #{forward.6} parent=39 // pred_fallthru
        _
    $region40: #{forward.6} parent=5 // pred_fallthru
      _
  $region6: #{forward.6} parent=0 // loop_footer
    %s13 = sadd.s32 1, %s9
  $region7: #{forward.6} parent=0 // loop_footer_branch
    %8 = sbr.rel target = $region3
  $region8: #{forward.6} parent=0 // loop_exit
    _

// kernel: forward.7
$region0: #{forward.7}
  #allocation0 [shape = 'u32[]', space=smem, size = 0x4, offset = 0x4, fixed_abs, tag = 'smem constant byte address 0x4 - core index']
  #allocation1 [shape = 'u32[144,128]{1,0:T(1,128)}', space=vmem, size = 0x12000, scoped, tag = 'internal scratch']
  %s0 = inlined_call_operand.vmem [shape: bf16[8,2048], index: 0, kind: input, shape index: {}]
  %s1 = inlined_call_operand.vmem [shape: bf16[2048,512], index: 1, kind: input, shape index: {}]
  %s2 = inlined_call_operand.vmem [shape: f32[1,512], index: 2, kind: input, shape index: {}]
  %s3 = inlined_call_operand.vmem [shape: bf16[512,10], index: 3, kind: input, shape index: {}]
  %s4 = inlined_call_operand.vmem [shape: f32[1,10], index: 4, kind: input, shape index: {}]
  %s5 = inlined_call_operand.vmem [shape: f32[8,10], index: 5, kind: output, shape index: {}]
  %s6 = sld [smem:[#allocation0]]
  $region30: #{forward.7} parent=0
    _
  %s8 = ssub.s32 1, %s6
  %s9 = scalar_select 0, %s8, %s6
  // Predicated region
  $region2: #{forward.7} parent=0 // pred_check
    _
  $region3: #{forward.7} parent=0 // pred_check_branch
    %11 = sbr.rel (0) target = $region5
  $region4: #{forward.7} parent=0 // pred_region
    _
  $region5: #{forward.7} parent=0 // pred_fallthru
    _
  // Predicated region
  $region6: #{forward.7} parent=0 // pred_check
    _
  $region7: #{forward.7} parent=0 // pred_check_branch
    %13 = sbr.rel (0) target = $region9
  $region8: #{forward.7} parent=0 // pred_region
    _
  $region9: #{forward.7} parent=0 // pred_fallthru
    _
  // Predicated region
  $region10: #{forward.7} parent=0 // pred_check
    _
  $region11: #{forward.7} parent=0 // pred_check_branch
    %15 = sbr.rel (0) target = $region13
  $region12: #{forward.7} parent=0 // pred_region
    _
  $region13: #{forward.7} parent=0 // pred_fallthru
    _
  // Predicated region
  $region14: #{forward.7} parent=0 // pred_check
    _
  $region15: #{forward.7} parent=0 // pred_check_branch
    %17 = sbr.rel (0) target = $region17
  $region16: #{forward.7} parent=0 // pred_region
    _
  $region17: #{forward.7} parent=0 // pred_fallthru
    _
  // Predicated region
  $region18: #{forward.7} parent=0 // pred_check
    _
  $region19: #{forward.7} parent=0 // pred_check_branch
    %19 = sbr.rel (0) target = $region21
  $region20: #{forward.7} parent=0 // pred_region
    _
  $region21: #{forward.7} parent=0 // pred_fallthru
    _
  %v21 = vld [vmem:[%s0] sm:$0xff]
  %v22 = vld [vmem:[%s0 + $0x8] sm:$0xff]
  %v23 = vld [vmem:[%s0 + $0x10] sm:$0xff]
  %v24 = vld [vmem:[%s0 + $0x18] sm:$0xff]
  %v25 = vld [vmem:[%s0 + $0x20] sm:$0xff]
  %v26 = vld [vmem:[%s0 + $0x28] sm:$0xff]
  %v27 = vld [vmem:[%s0 + $0x30] sm:$0xff]
  %v28 = vld [vmem:[%s0 + $0x38] sm:$0xff]
  %v29 = vld [vmem:[%s1] sm:$0xff]
  %v30 = vld [vmem:[%s1 + $0x8] sm:$0xff]
  %v31 = vld [vmem:[%s1 + $0x10] sm:$0xff]
  %v32 = vld [vmem:[%s1 + $0x18] sm:$0xff]
  %v33 = vld [vmem:[%s1 + $0x20] sm:$0xff]
  %v34 = vld [vmem:[%s1 + $0x28] sm:$0xff]
  %v35 = vld [vmem:[%s1 + $0x30] sm:$0xff]
  %v36 = vld [vmem:[%s1 + $0x38] sm:$0xff]
  %v37 = vld [vmem:[%s1 + $0x40] sm:$0xff]
  %v38 = vld [vmem:[%s1 + $0x48] sm:$0xff]
  %v39 = vld [vmem:[%s1 + $0x50] sm:$0xff]
  %v40 = vld [vmem:[%s1 + $0x58] sm:$0xff]
  %v41 = vld [vmem:[%s1 + $0x60] sm:$0xff]
  %v42 = vld [vmem:[%s1 + $0x68] sm:$0xff]
  %v43 = vld [vmem:[%s1 + $0x70] sm:$0xff]
  %v44 = vld [vmem:[%s1 + $0x78] sm:$0xff]
  %v45 = vld [vmem:[%s1 + $0x80] sm:$0xff]
  %v46 = vld [vmem:[%s1 + $0x88] sm:$0xff]
  %v47 = vld [vmem:[%s1 + $0x90] sm:$0xff]
  %v48 = vld [vmem:[%s1 + $0x98] sm:$0xff]
  %v49 = vld [vmem:[%s1 + $0xa0] sm:$0xff]
  %v50 = vld [vmem:[%s1 + $0xa8] sm:$0xff]
  %v51 = vld [vmem:[%s1 + $0xb0] sm:$0xff]
  %v52 = vld [vmem:[%s1 + $0xb8] sm:$0xff]
  %v53 = vld [vmem:[%s1 + $0xc0] sm:$0xff]
  %v54 = vld [vmem:[%s1 + $0xc8] sm:$0xff]
  %v55 = vld [vmem:[%s1 + $0xd0] sm:$0xff]
  %v56 = vld [vmem:[%s1 + $0xd8] sm:$0xff]
  %v57 = vld [vmem:[%s1 + $0xe0] sm:$0xff]
  %v58 = vld [vmem:[%s1 + $0xe8] sm:$0xff]
  %v59 = vld [vmem:[%s1 + $0xf0] sm:$0xff]
  %v60 = vld [vmem:[%s1 + $0xf8] sm:$0xff]
  %v61 = vld [vmem:[%s1 + $0x100] sm:$0xff]
  %v62 = vld [vmem:[%s1 + $0x108] sm:$0xff]
  %v63 = vld [vmem:[%s1 + $0x110] sm:$0xff]
  %v64 = vld [vmem:[%s1 + $0x118] sm:$0xff]
  %v65 = vld [vmem:[%s1 + $0x120] sm:$0xff]
  %v66 = vld [vmem:[%s1 + $0x128] sm:$0xff]
  %v67 = vld [vmem:[%s1 + $0x130] sm:$0xff]
  %v68 = vld [vmem:[%s1 + $0x138] sm:$0xff]
  %v69 = vld [vmem:[%s1 + $0x140] sm:$0xff]
  %v70 = vld [vmem:[%s1 + $0x148] sm:$0xff]
  %v71 = vld [vmem:[%s1 + $0x150] sm:$0xff]
  %v72 = vld [vmem:[%s1 + $0x158] sm:$0xff]
  %v73 = vld [vmem:[%s1 + $0x160] sm:$0xff]
  %v74 = vld [vmem:[%s1 + $0x168] sm:$0xff]
  %v75 = vld [vmem:[%s1 + $0x170] sm:$0xff]
  %v76 = vld [vmem:[%s1 + $0x178] sm:$0xff]
  %v77 = vld [vmem:[%s1 + $0x180] sm:$0xff]
  %v78 = vld [vmem:[%s1 + $0x188] sm:$0xff]
  %v79 = vld [vmem:[%s1 + $0x190] sm:$0xff]
  %v80 = vld [vmem:[%s1 + $0x198] sm:$0xff]
  %v81 = vld [vmem:[%s1 + $0x1a0] sm:$0xff]
  %v82 = vld [vmem:[%s1 + $0x1a8] sm:$0xff]
  %v83 = vld [vmem:[%s1 + $0x1b0] sm:$0xff]
  %v84 = vld [vmem:[%s1 + $0x1b8] sm:$0xff]
  %v85 = vld [vmem:[%s1 + $0x1c0] sm:$0xff]
  %v86 = vld [vmem:[%s1 + $0x1c8] sm:$0xff]
  %v87 = vld [vmem:[%s1 + $0x1d0] sm:$0xff]
  %v88 = vld [vmem:[%s1 + $0x1d8] sm:$0xff]
  %v89 = vld [vmem:[%s1 + $0x1e0] sm:$0xff]
  %v90 = vld [vmem:[%s1 + $0x1e8] sm:$0xff]
  %v91 = vld [vmem:[%s1 + $0x1f0] sm:$0xff]
  %v92 = vld [vmem:[%s1 + $0x1f8] sm:$0xff]
  %v93 = vld [vmem:[%s1 + $0x200] sm:$0xff]
  %v94 = vld [vmem:[%s1 + $0x208] sm:$0xff]
  %v95 = vld [vmem:[%s1 + $0x210] sm:$0xff]
  %v96 = vld [vmem:[%s1 + $0x218] sm:$0xff]
  %v97 = vld [vmem:[%s1 + $0x220] sm:$0xff]
  %v98 = vld [vmem:[%s1 + $0x228] sm:$0xff]
  %v99 = vld [vmem:[%s1 + $0x230] sm:$0xff]
  %v100 = vld [vmem:[%s1 + $0x238] sm:$0xff]
  %v101 = vld [vmem:[%s1 + $0x240] sm:$0xff]
  %v102 = vld [vmem:[%s1 + $0x248] sm:$0xff]
  %v103 = vld [vmem:[%s1 + $0x250] sm:$0xff]
  %v104 = vld [vmem:[%s1 + $0x258] sm:$0xff]
  %v105 = vld [vmem:[%s1 + $0x260] sm:$0xff]
  %v106 = vld [vmem:[%s1 + $0x268] sm:$0xff]
  %v107 = vld [vmem:[%s1 + $0x270] sm:$0xff]
  %v108 = vld [vmem:[%s1 + $0x278] sm:$0xff]
  %v109 = vld [vmem:[%s1 + $0x280] sm:$0xff]
  %v110 = vld [vmem:[%s1 + $0x288] sm:$0xff]
  %v111 = vld [vmem:[%s1 + $0x290] sm:$0xff]
  %v112 = vld [vmem:[%s1 + $0x298] sm:$0xff]
  %v113 = vld [vmem:[%s1 + $0x2a0] sm:$0xff]
  %v114 = vld [vmem:[%s1 + $0x2a8] sm:$0xff]
  %v115 = vld [vmem:[%s1 + $0x2b0] sm:$0xff]
  %v116 = vld [vmem:[%s1 + $0x2b8] sm:$0xff]
  %v117 = vld [vmem:[%s1 + $0x2c0] sm:$0xff]
  %v118 = vld [vmem:[%s1 + $0x2c8] sm:$0xff]
  %v119 = vld [vmem:[%s1 + $0x2d0] sm:$0xff]
  %v120 = vld [vmem:[%s1 + $0x2d8] sm:$0xff]
  %v121 = vld [vmem:[%s1 + $0x2e0] sm:$0xff]
  %v122 = vld [vmem:[%s1 + $0x2e8] sm:$0xff]
  %v123 = vld [vmem:[%s1 + $0x2f0] sm:$0xff]
  %v124 = vld [vmem:[%s1 + $0x2f8] sm:$0xff]
  %v125 = vld [vmem:[%s1 + $0x300] sm:$0xff]
  %v126 = vld [vmem:[%s1 + $0x308] sm:$0xff]
  %v127 = vld [vmem:[%s1 + $0x310] sm:$0xff]
  %v128 = vld [vmem:[%s1 + $0x318] sm:$0xff]
  %v129 = vld [vmem:[%s1 + $0x320] sm:$0xff]
  %v130 = vld [vmem:[%s1 + $0x328] sm:$0xff]
  %v131 = vld [vmem:[%s1 + $0x330] sm:$0xff]
  %v132 = vld [vmem:[%s1 + $0x338] sm:$0xff]
  %v133 = vld [vmem:[%s1 + $0x340] sm:$0xff]
  %v134 = vld [vmem:[%s1 + $0x348] sm:$0xff]
  %v135 = vld [vmem:[%s1 + $0x350] sm:$0xff]
  %v136 = vld [vmem:[%s1 + $0x358] sm:$0xff]
  %v137 = vld [vmem:[%s1 + $0x360] sm:$0xff]
  %v138 = vld [vmem:[%s1 + $0x368] sm:$0xff]
  %v139 = vld [vmem:[%s1 + $0x370] sm:$0xff]
  %v140 = vld [vmem:[%s1 + $0x378] sm:$0xff]
  %v141 = vld [vmem:[%s1 + $0x380] sm:$0xff]
  %v142 = vld [vmem:[%s1 + $0x388] sm:$0xff]
  %v143 = vld [vmem:[%s1 + $0x390] sm:$0xff]
  %v144 = vld [vmem:[%s1 + $0x398] sm:$0xff]
  %v145 = vld [vmem:[%s1 + $0x3a0] sm:$0xff]
  %v146 = vld [vmem:[%s1 + $0x3a8] sm:$0xff]
  %v147 = vld [vmem:[%s1 + $0x3b0] sm:$0xff]
  %v148 = vld [vmem:[%s1 + $0x3b8] sm:$0xff]
  %v149 = vld [vmem:[%s1 + $0x3c0] sm:$0xff]
  %v150 = vld [vmem:[%s1 + $0x3c8] sm:$0xff]
  %v151 = vld [vmem:[%s1 + $0x3d0] sm:$0xff]
  %v152 = vld [vmem:[%s1 + $0x3d8] sm:$0xff]
  %v153 = vld [vmem:[%s1 + $0x3e0] sm:$0xff]
  %v154 = vld [vmem:[%s1 + $0x3e8] sm:$0xff]
  %v155 = vld [vmem:[%s1 + $0x3f0] sm:$0xff]
  %v156 = vld [vmem:[%s1 + $0x3f8] sm:$0xff]
  %v157 = vld [vmem:[%s1 + $0x400] sm:$0xff]
  %v158 = vld [vmem:[%s1 + $0x408] sm:$0xff]
  %v159 = vld [vmem:[%s1 + $0x410] sm:$0xff]
  %v160 = vld [vmem:[%s1 + $0x418] sm:$0xff]
  %v161 = vld [vmem:[%s1 + $0x420] sm:$0xff]
  %v162 = vld [vmem:[%s1 + $0x428] sm:$0xff]
  %v163 = vld [vmem:[%s1 + $0x430] sm:$0xff]
  %v164 = vld [vmem:[%s1 + $0x438] sm:$0xff]
  %v165 = vld [vmem:[%s1 + $0x440] sm:$0xff]
  %v166 = vld [vmem:[%s1 + $0x448] sm:$0xff]
  %v167 = vld [vmem:[%s1 + $0x450] sm:$0xff]
  %v168 = vld [vmem:[%s1 + $0x458] sm:$0xff]
  %v169 = vld [vmem:[%s1 + $0x460] sm:$0xff]
  %v170 = vld [vmem:[%s1 + $0x468] sm:$0xff]
  %v171 = vld [vmem:[%s1 + $0x470] sm:$0xff]
  %v172 = vld [vmem:[%s1 + $0x478] sm:$0xff]
  %v173 = vld [vmem:[%s1 + $0x480] sm:$0xff]
  %v174 = vld [vmem:[%s1 + $0x488] sm:$0xff]
  %v175 = vld [vmem:[%s1 + $0x490] sm:$0xff]
  %v176 = vld [vmem:[%s1 + $0x498] sm:$0xff]
  %v177 = vld [vmem:[%s1 + $0x4a0] sm:$0xff]
  %v178 = vld [vmem:[%s1 + $0x4a8] sm:$0xff]
  %v179 = vld [vmem:[%s1 + $0x4b0] sm:$0xff]
  %v180 = vld [vmem:[%s1 + $0x4b8] sm:$0xff]
  %v181 = vld [vmem:[%s1 + $0x4c0] sm:$0xff]
  %v182 = vld [vmem:[%s1 + $0x4c8] sm:$0xff]
  %v183 = vld [vmem:[%s1 + $0x4d0] sm:$0xff]
  %v184 = vld [vmem:[%s1 + $0x4d8] sm:$0xff]
  %v185 = vld [vmem:[%s1 + $0x4e0] sm:$0xff]
  %v186 = vld [vmem:[%s1 + $0x4e8] sm:$0xff]
  %v187 = vld [vmem:[%s1 + $0x4f0] sm:$0xff]
  %v188 = vld [vmem:[%s1 + $0x4f8] sm:$0xff]
  %v189 = vld [vmem:[%s1 + $0x500] sm:$0xff]
  %v190 = vld [vmem:[%s1 + $0x508] sm:$0xff]
  %v191 = vld [vmem:[%s1 + $0x510] sm:$0xff]
  %v192 = vld [vmem:[%s1 + $0x518] sm:$0xff]
  %v193 = vld [vmem:[%s1 + $0x520] sm:$0xff]
  %v194 = vld [vmem:[%s1 + $0x528] sm:$0xff]
  %v195 = vld [vmem:[%s1 + $0x530] sm:$0xff]
  %v196 = vld [vmem:[%s1 + $0x538] sm:$0xff]
  %v197 = vld [vmem:[%s1 + $0x540] sm:$0xff]
  %v198 = vld [vmem:[%s1 + $0x548] sm:$0xff]
  %v199 = vld [vmem:[%s1 + $0x550] sm:$0xff]
  %v200 = vld [vmem:[%s1 + $0x558] sm:$0xff]
  %v201 = vld [vmem:[%s1 + $0x560] sm:$0xff]
  %v202 = vld [vmem:[%s1 + $0x568] sm:$0xff]
  %v203 = vld [vmem:[%s1 + $0x570] sm:$0xff]
  %v204 = vld [vmem:[%s1 + $0x578] sm:$0xff]
  %v205 = vld [vmem:[%s1 + $0x580] sm:$0xff]
  %v206 = vld [vmem:[%s1 + $0x588] sm:$0xff]
  %v207 = vld [vmem:[%s1 + $0x590] sm:$0xff]
  %v208 = vld [vmem:[%s1 + $0x598] sm:$0xff]
  %v209 = vld [vmem:[%s1 + $0x5a0] sm:$0xff]
  %v210 = vld [vmem:[%s1 + $0x5a8] sm:$0xff]
  %v211 = vld [vmem:[%s1 + $0x5b0] sm:$0xff]
  %v212 = vld [vmem:[%s1 + $0x5b8] sm:$0xff]
  %v213 = vld [vmem:[%s1 + $0x5c0] sm:$0xff]
  %v214 = vld [vmem:[%s1 + $0x5c8] sm:$0xff]
  %v215 = vld [vmem:[%s1 + $0x5d0] sm:$0xff]
  %v216 = vld [vmem:[%s1 + $0x5d8] sm:$0xff]
  %v217 = vld [vmem:[%s1 + $0x5e0] sm:$0xff]
  %v218 = vld [vmem:[%s1 + $0x5e8] sm:$0xff]
  %v219 = vld [vmem:[%s1 + $0x5f0] sm:$0xff]
  %v220 = vld [vmem:[%s1 + $0x5f8] sm:$0xff]
  %v221 = vld [vmem:[%s1 + $0x600] sm:$0xff]
  %v222 = vld [vmem:[%s1 + $0x608] sm:$0xff]
  %v223 = vld [vmem:[%s1 + $0x610] sm:$0xff]
  %v224 = vld [vmem:[%s1 + $0x618] sm:$0xff]
  %v225 = vld [vmem:[%s1 + $0x620] sm:$0xff]
  %v226 = vld [vmem:[%s1 + $0x628] sm:$0xff]
  %v227 = vld [vmem:[%s1 + $0x630] sm:$0xff]
  %v228 = vld [vmem:[%s1 + $0x638] sm:$0xff]
  %v229 = vld [vmem:[%s1 + $0x640] sm:$0xff]
  %v230 = vld [vmem:[%s1 + $0x648] sm:$0xff]
  %v231 = vld [vmem:[%s1 + $0x650] sm:$0xff]
  %v232 = vld [vmem:[%s1 + $0x658] sm:$0xff]
  %v233 = vld [vmem:[%s1 + $0x660] sm:$0xff]
  %v234 = vld [vmem:[%s1 + $0x668] sm:$0xff]
  %v235 = vld [vmem:[%s1 + $0x670] sm:$0xff]
  %v236 = vld [vmem:[%s1 + $0x678] sm:$0xff]
  %v237 = vld [vmem:[%s1 + $0x680] sm:$0xff]
  %v238 = vld [vmem:[%s1 + $0x688] sm:$0xff]
  %v239 = vld [vmem:[%s1 + $0x690] sm:$0xff]
  %v240 = vld [vmem:[%s1 + $0x698] sm:$0xff]
  %v241 = vld [vmem:[%s1 + $0x6a0] sm:$0xff]
  %v242 = vld [vmem:[%s1 + $0x6a8] sm:$0xff]
  %v243 = vld [vmem:[%s1 + $0x6b0] sm:$0xff]
  %v244 = vld [vmem:[%s1 + $0x6b8] sm:$0xff]
  %v245 = vld [vmem:[%s1 + $0x6c0] sm:$0xff]
  %v246 = vld [vmem:[%s1 + $0x6c8] sm:$0xff]
  %v247 = vld [vmem:[%s1 + $0x6d0] sm:$0xff]
  %v248 = vld [vmem:[%s1 + $0x6d8] sm:$0xff]
  %v249 = vld [vmem:[%s1 + $0x6e0] sm:$0xff]
  %v250 = vld [vmem:[%s1 + $0x6e8] sm:$0xff]
  %v251 = vld [vmem:[%s1 + $0x6f0] sm:$0xff]
  %v252 = vld [vmem:[%s1 + $0x6f8] sm:$0xff]
  %v253 = vld [vmem:[%s1 + $0x700] sm:$0xff]
  %v254 = vld [vmem:[%s1 + $0x708] sm:$0xff]
  %v255 = vld [vmem:[%s1 + $0x710] sm:$0xff]
  %v256 = vld [vmem:[%s1 + $0x718] sm:$0xff]
  %v257 = vld [vmem:[%s1 + $0x720] sm:$0xff]
  %v258 = vld [vmem:[%s1 + $0x728] sm:$0xff]
  %v259 = vld [vmem:[%s1 + $0x730] sm:$0xff]
  %v260 = vld [vmem:[%s1 + $0x738] sm:$0xff]
  %v261 = vld [vmem:[%s1 + $0x740] sm:$0xff]
  %v262 = vld [vmem:[%s1 + $0x748] sm:$0xff]
  %v263 = vld [vmem:[%s1 + $0x750] sm:$0xff]
  %v264 = vld [vmem:[%s1 + $0x758] sm:$0xff]
  %v265 = vld [vmem:[%s1 + $0x760] sm:$0xff]
  %v266 = vld [vmem:[%s1 + $0x768] sm:$0xff]
  %v267 = vld [vmem:[%s1 + $0x770] sm:$0xff]
  %v268 = vld [vmem:[%s1 + $0x778] sm:$0xff]
  %v269 = vld [vmem:[%s1 + $0x780] sm:$0xff]
  %v270 = vld [vmem:[%s1 + $0x788] sm:$0xff]
  %v271 = vld [vmem:[%s1 + $0x790] sm:$0xff]
  %v272 = vld [vmem:[%s1 + $0x798] sm:$0xff]
  %v273 = vld [vmem:[%s1 + $0x7a0] sm:$0xff]
  %v274 = vld [vmem:[%s1 + $0x7a8] sm:$0xff]
  %v275 = vld [vmem:[%s1 + $0x7b0] sm:$0xff]
  %v276 = vld [vmem:[%s1 + $0x7b8] sm:$0xff]
  %v277 = vld [vmem:[%s1 + $0x7c0] sm:$0xff]
  %v278 = vld [vmem:[%s1 + $0x7c8] sm:$0xff]
  %v279 = vld [vmem:[%s1 + $0x7d0] sm:$0xff]
  %v280 = vld [vmem:[%s1 + $0x7d8] sm:$0xff]
  %v281 = vld [vmem:[%s1 + $0x7e0] sm:$0xff]
  %v282 = vld [vmem:[%s1 + $0x7e8] sm:$0xff]
  %v283 = vld [vmem:[%s1 + $0x7f0] sm:$0xff]
  %v284 = vld [vmem:[%s1 + $0x7f8] sm:$0xff]
  %v285 = vld [vmem:[%s1 + $0x800] sm:$0xff]
  %v286 = vld [vmem:[%s1 + $0x808] sm:$0xff]
  %v287 = vld [vmem:[%s1 + $0x810] sm:$0xff]
  %v288 = vld [vmem:[%s1 + $0x818] sm:$0xff]
  %v289 = vld [vmem:[%s1 + $0x820] sm:$0xff]
  %v290 = vld [vmem:[%s1 + $0x828] sm:$0xff]
  %v291 = vld [vmem:[%s1 + $0x830] sm:$0xff]
  %v292 = vld [vmem:[%s1 + $0x838] sm:$0xff]
  %v293 = vld [vmem:[%s1 + $0x840] sm:$0xff]
  %v294 = vld [vmem:[%s1 + $0x848] sm:$0xff]
  %v295 = vld [vmem:[%s1 + $0x850] sm:$0xff]
  %v296 = vld [vmem:[%s1 + $0x858] sm:$0xff]
  %v297 = vld [vmem:[%s1 + $0x860] sm:$0xff]
  %v298 = vld [vmem:[%s1 + $0x868] sm:$0xff]
  %v299 = vld [vmem:[%s1 + $0x870] sm:$0xff]
  %v300 = vld [vmem:[%s1 + $0x878] sm:$0xff]
  %v301 = vld [vmem:[%s1 + $0x880] sm:$0xff]
  %v302 = vld [vmem:[%s1 + $0x888] sm:$0xff]
  %v303 = vld [vmem:[%s1 + $0x890] sm:$0xff]
  %v304 = vld [vmem:[%s1 + $0x898] sm:$0xff]
  %v305 = vld [vmem:[%s1 + $0x8a0] sm:$0xff]
  %v306 = vld [vmem:[%s1 + $0x8a8] sm:$0xff]
  %v307 = vld [vmem:[%s1 + $0x8b0] sm:$0xff]
  %v308 = vld [vmem:[%s1 + $0x8b8] sm:$0xff]
  %v309 = vld [vmem:[%s1 + $0x8c0] sm:$0xff]
  %v310 = vld [vmem:[%s1 + $0x8c8] sm:$0xff]
  %v311 = vld [vmem:[%s1 + $0x8d0] sm:$0xff]
  %v312 = vld [vmem:[%s1 + $0x8d8] sm:$0xff]
  %v313 = vld [vmem:[%s1 + $0x8e0] sm:$0xff]
  %v314 = vld [vmem:[%s1 + $0x8e8] sm:$0xff]
  %v315 = vld [vmem:[%s1 + $0x8f0] sm:$0xff]
  %v316 = vld [vmem:[%s1 + $0x8f8] sm:$0xff]
  %v317 = vld [vmem:[%s1 + $0x900] sm:$0xff]
  %v318 = vld [vmem:[%s1 + $0x908] sm:$0xff]
  %v319 = vld [vmem:[%s1 + $0x910] sm:$0xff]
  %v320 = vld [vmem:[%s1 + $0x918] sm:$0xff]
  %v321 = vld [vmem:[%s1 + $0x920] sm:$0xff]
  %v322 = vld [vmem:[%s1 + $0x928] sm:$0xff]
  %v323 = vld [vmem:[%s1 + $0x930] sm:$0xff]
  %v324 = vld [vmem:[%s1 + $0x938] sm:$0xff]
  %v325 = vld [vmem:[%s1 + $0x940] sm:$0xff]
  %v326 = vld [vmem:[%s1 + $0x948] sm:$0xff]
  %v327 = vld [vmem:[%s1 + $0x950] sm:$0xff]
  %v328 = vld [vmem:[%s1 + $0x958] sm:$0xff]
  %v329 = vld [vmem:[%s1 + $0x960] sm:$0xff]
  %v330 = vld [vmem:[%s1 + $0x968] sm:$0xff]
  %v331 = vld [vmem:[%s1 + $0x970] sm:$0xff]
  %v332 = vld [vmem:[%s1 + $0x978] sm:$0xff]
  %v333 = vld [vmem:[%s1 + $0x980] sm:$0xff]
  %v334 = vld [vmem:[%s1 + $0x988] sm:$0xff]
  %v335 = vld [vmem:[%s1 + $0x990] sm:$0xff]
  %v336 = vld [vmem:[%s1 + $0x998] sm:$0xff]
  %v337 = vld [vmem:[%s1 + $0x9a0] sm:$0xff]
  %v338 = vld [vmem:[%s1 + $0x9a8] sm:$0xff]
  %v339 = vld [vmem:[%s1 + $0x9b0] sm:$0xff]
  %v340 = vld [vmem:[%s1 + $0x9b8] sm:$0xff]
  %v341 = vld [vmem:[%s1 + $0x9c0] sm:$0xff]
  %v342 = vld [vmem:[%s1 + $0x9c8] sm:$0xff]
  %v343 = vld [vmem:[%s1 + $0x9d0] sm:$0xff]
  %v344 = vld [vmem:[%s1 + $0x9d8] sm:$0xff]
  %v345 = vld [vmem:[%s1 + $0x9e0] sm:$0xff]
  %v346 = vld [vmem:[%s1 + $0x9e8] sm:$0xff]
  %v347 = vld [vmem:[%s1 + $0x9f0] sm:$0xff]
  %v348 = vld [vmem:[%s1 + $0x9f8] sm:$0xff]
  %v349 = vld [vmem:[%s1 + $0xa00] sm:$0xff]
  %v350 = vld [vmem:[%s1 + $0xa08] sm:$0xff]
  %v351 = vld [vmem:[%s1 + $0xa10] sm:$0xff]
  %v352 = vld [vmem:[%s1 + $0xa18] sm:$0xff]
  %v353 = vld [vmem:[%s1 + $0xa20] sm:$0xff]
  %v354 = vld [vmem:[%s1 + $0xa28] sm:$0xff]
  %v355 = vld [vmem:[%s1 + $0xa30] sm:$0xff]
  %v356 = vld [vmem:[%s1 + $0xa38] sm:$0xff]
  %v357 = vld [vmem:[%s1 + $0xa40] sm:$0xff]
  %v358 = vld [vmem:[%s1 + $0xa48] sm:$0xff]
  %v359 = vld [vmem:[%s1 + $0xa50] sm:$0xff]
  %v360 = vld [vmem:[%s1 + $0xa58] sm:$0xff]
  %v361 = vld [vmem:[%s1 + $0xa60] sm:$0xff]
  %v362 = vld [vmem:[%s1 + $0xa68] sm:$0xff]
  %v363 = vld [vmem:[%s1 + $0xa70] sm:$0xff]
  %v364 = vld [vmem:[%s1 + $0xa78] sm:$0xff]
  %v365 = vld [vmem:[%s1 + $0xa80] sm:$0xff]
  %v366 = vld [vmem:[%s1 + $0xa88] sm:$0xff]
  %v367 = vld [vmem:[%s1 + $0xa90] sm:$0xff]
  %v368 = vld [vmem:[%s1 + $0xa98] sm:$0xff]
  %v369 = vld [vmem:[%s1 + $0xaa0] sm:$0xff]
  %v370 = vld [vmem:[%s1 + $0xaa8] sm:$0xff]
  %v371 = vld [vmem:[%s1 + $0xab0] sm:$0xff]
  %v372 = vld [vmem:[%s1 + $0xab8] sm:$0xff]
  %v373 = vld [vmem:[%s1 + $0xac0] sm:$0xff]
  %v374 = vld [vmem:[%s1 + $0xac8] sm:$0xff]
  %v375 = vld [vmem:[%s1 + $0xad0] sm:$0xff]
  %v376 = vld [vmem:[%s1 + $0xad8] sm:$0xff]
  %v377 = vld [vmem:[%s1 + $0xae0] sm:$0xff]
  %v378 = vld [vmem:[%s1 + $0xae8] sm:$0xff]
  %v379 = vld [vmem:[%s1 + $0xaf0] sm:$0xff]
  %v380 = vld [vmem:[%s1 + $0xaf8] sm:$0xff]
  %v381 = vld [vmem:[%s1 + $0xb00] sm:$0xff]
  %v382 = vld [vmem:[%s1 + $0xb08] sm:$0xff]
  %v383 = vld [vmem:[%s1 + $0xb10] sm:$0xff]
  %v384 = vld [vmem:[%s1 + $0xb18] sm:$0xff]
  %v385 = vld [vmem:[%s1 + $0xb20] sm:$0xff]
  %v386 = vld [vmem:[%s1 + $0xb28] sm:$0xff]
  %v387 = vld [vmem:[%s1 + $0xb30] sm:$0xff]
  %v388 = vld [vmem:[%s1 + $0xb38] sm:$0xff]
  %v389 = vld [vmem:[%s1 + $0xb40] sm:$0xff]
  %v390 = vld [vmem:[%s1 + $0xb48] sm:$0xff]
  %v391 = vld [vmem:[%s1 + $0xb50] sm:$0xff]
  %v392 = vld [vmem:[%s1 + $0xb58] sm:$0xff]
  %v393 = vld [vmem:[%s1 + $0xb60] sm:$0xff]
  %v394 = vld [vmem:[%s1 + $0xb68] sm:$0xff]
  %v395 = vld [vmem:[%s1 + $0xb70] sm:$0xff]
  %v396 = vld [vmem:[%s1 + $0xb78] sm:$0xff]
  %v397 = vld [vmem:[%s1 + $0xb80] sm:$0xff]
  %v398 = vld [vmem:[%s1 + $0xb88] sm:$0xff]
  %v399 = vld [vmem:[%s1 + $0xb90] sm:$0xff]
  %v400 = vld [vmem:[%s1 + $0xb98] sm:$0xff]
  %v401 = vld [vmem:[%s1 + $0xba0] sm:$0xff]
  %v402 = vld [vmem:[%s1 + $0xba8] sm:$0xff]
  %v403 = vld [vmem:[%s1 + $0xbb0] sm:$0xff]
  %v404 = vld [vmem:[%s1 + $0xbb8] sm:$0xff]
  %v405 = vld [vmem:[%s1 + $0xbc0] sm:$0xff]
  %v406 = vld [vmem:[%s1 + $0xbc8] sm:$0xff]
  %v407 = vld [vmem:[%s1 + $0xbd0] sm:$0xff]
  %v408 = vld [vmem:[%s1 + $0xbd8] sm:$0xff]
  %v409 = vld [vmem:[%s1 + $0xbe0] sm:$0xff]
  %v410 = vld [vmem:[%s1 + $0xbe8] sm:$0xff]
  %v411 = vld [vmem:[%s1 + $0xbf0] sm:$0xff]
  %v412 = vld [vmem:[%s1 + $0xbf8] sm:$0xff]
  %v413 = vld [vmem:[%s1 + $0xc00] sm:$0xff]
  %v414 = vld [vmem:[%s1 + $0xc08] sm:$0xff]
  %v415 = vld [vmem:[%s1 + $0xc10] sm:$0xff]
  %v416 = vld [vmem:[%s1 + $0xc18] sm:$0xff]
  %v417 = vld [vmem:[%s1 + $0xc20] sm:$0xff]
  %v418 = vld [vmem:[%s1 + $0xc28] sm:$0xff]
  %v419 = vld [vmem:[%s1 + $0xc30] sm:$0xff]
  %v420 = vld [vmem:[%s1 + $0xc38] sm:$0xff]
  %v421 = vld [vmem:[%s1 + $0xc40] sm:$0xff]
  %v422 = vld [vmem:[%s1 + $0xc48] sm:$0xff]
  %v423 = vld [vmem:[%s1 + $0xc50] sm:$0xff]
  %v424 = vld [vmem:[%s1 + $0xc58] sm:$0xff]
  %v425 = vld [vmem:[%s1 + $0xc60] sm:$0xff]
  %v426 = vld [vmem:[%s1 + $0xc68] sm:$0xff]
  %v427 = vld [vmem:[%s1 + $0xc70] sm:$0xff]
  %v428 = vld [vmem:[%s1 + $0xc78] sm:$0xff]
  %v429 = vld [vmem:[%s1 + $0xc80] sm:$0xff]
  %v430 = vld [vmem:[%s1 + $0xc88] sm:$0xff]
  %v431 = vld [vmem:[%s1 + $0xc90] sm:$0xff]
  %v432 = vld [vmem:[%s1 + $0xc98] sm:$0xff]
  %v433 = vld [vmem:[%s1 + $0xca0] sm:$0xff]
  %v434 = vld [vmem:[%s1 + $0xca8] sm:$0xff]
  %v435 = vld [vmem:[%s1 + $0xcb0] sm:$0xff]
  %v436 = vld [vmem:[%s1 + $0xcb8] sm:$0xff]
  %v437 = vld [vmem:[%s1 + $0xcc0] sm:$0xff]
  %v438 = vld [vmem:[%s1 + $0xcc8] sm:$0xff]
  %v439 = vld [vmem:[%s1 + $0xcd0] sm:$0xff]
  %v440 = vld [vmem:[%s1 + $0xcd8] sm:$0xff]
  %v441 = vld [vmem:[%s1 + $0xce0] sm:$0xff]
  %v442 = vld [vmem:[%s1 + $0xce8] sm:$0xff]
  %v443 = vld [vmem:[%s1 + $0xcf0] sm:$0xff]
  %v444 = vld [vmem:[%s1 + $0xcf8] sm:$0xff]
  %v445 = vld [vmem:[%s1 + $0xd00] sm:$0xff]
  %v446 = vld [vmem:[%s1 + $0xd08] sm:$0xff]
  %v447 = vld [vmem:[%s1 + $0xd10] sm:$0xff]
  %v448 = vld [vmem:[%s1 + $0xd18] sm:$0xff]
  %v449 = vld [vmem:[%s1 + $0xd20] sm:$0xff]
  %v450 = vld [vmem:[%s1 + $0xd28] sm:$0xff]
  %v451 = vld [vmem:[%s1 + $0xd30] sm:$0xff]
  %v452 = vld [vmem:[%s1 + $0xd38] sm:$0xff]
  %v453 = vld [vmem:[%s1 + $0xd40] sm:$0xff]
  %v454 = vld [vmem:[%s1 + $0xd48] sm:$0xff]
  %v455 = vld [vmem:[%s1 + $0xd50] sm:$0xff]
  %v456 = vld [vmem:[%s1 + $0xd58] sm:$0xff]
  %v457 = vld [vmem:[%s1 + $0xd60] sm:$0xff]
  %v458 = vld [vmem:[%s1 + $0xd68] sm:$0xff]
  %v459 = vld [vmem:[%s1 + $0xd70] sm:$0xff]
  %v460 = vld [vmem:[%s1 + $0xd78] sm:$0xff]
  %v461 = vld [vmem:[%s1 + $0xd80] sm:$0xff]
  %v462 = vld [vmem:[%s1 + $0xd88] sm:$0xff]
  %v463 = vld [vmem:[%s1 + $0xd90] sm:$0xff]
  %v464 = vld [vmem:[%s1 + $0xd98] sm:$0xff]
  %v465 = vld [vmem:[%s1 + $0xda0] sm:$0xff]
  %v466 = vld [vmem:[%s1 + $0xda8] sm:$0xff]
  %v467 = vld [vmem:[%s1 + $0xdb0] sm:$0xff]
  %v468 = vld [vmem:[%s1 + $0xdb8] sm:$0xff]
  %v469 = vld [vmem:[%s1 + $0xdc0] sm:$0xff]
  %v470 = vld [vmem:[%s1 + $0xdc8] sm:$0xff]
  %v471 = vld [vmem:[%s1 + $0xdd0] sm:$0xff]
  %v472 = vld [vmem:[%s1 + $0xdd8] sm:$0xff]
  %v473 = vld [vmem:[%s1 + $0xde0] sm:$0xff]
  %v474 = vld [vmem:[%s1 + $0xde8] sm:$0xff]
  %v475 = vld [vmem:[%s1 + $0xdf0] sm:$0xff]
  %v476 = vld [vmem:[%s1 + $0xdf8] sm:$0xff]
  %v477 = vld [vmem:[%s1 + $0xe00] sm:$0xff]
  %v478 = vld [vmem:[%s1 + $0xe08] sm:$0xff]
  %v479 = vld [vmem:[%s1 + $0xe10] sm:$0xff]
  %v480 = vld [vmem:[%s1 + $0xe18] sm:$0xff]
  %v481 = vld [vmem:[%s1 + $0xe20] sm:$0xff]
  %v482 = vld [vmem:[%s1 + $0xe28] sm:$0xff]
  %v483 = vld [vmem:[%s1 + $0xe30] sm:$0xff]
  %v484 = vld [vmem:[%s1 + $0xe38] sm:$0xff]
  %v485 = vld [vmem:[%s1 + $0xe40] sm:$0xff]
  %v486 = vld [vmem:[%s1 + $0xe48] sm:$0xff]
  %v487 = vld [vmem:[%s1 + $0xe50] sm:$0xff]
  %v488 = vld [vmem:[%s1 + $0xe58] sm:$0xff]
  %v489 = vld [vmem:[%s1 + $0xe60] sm:$0xff]
  %v490 = vld [vmem:[%s1 + $0xe68] sm:$0xff]
  %v491 = vld [vmem:[%s1 + $0xe70] sm:$0xff]
  %v492 = vld [vmem:[%s1 + $0xe78] sm:$0xff]
  %v493 = vld [vmem:[%s1 + $0xe80] sm:$0xff]
  %v494 = vld [vmem:[%s1 + $0xe88] sm:$0xff]
  %v495 = vld [vmem:[%s1 + $0xe90] sm:$0xff]
  %v496 = vld [vmem:[%s1 + $0xe98] sm:$0xff]
  %v497 = vld [vmem:[%s1 + $0xea0] sm:$0xff]
  %v498 = vld [vmem:[%s1 + $0xea8] sm:$0xff]
  %v499 = vld [vmem:[%s1 + $0xeb0] sm:$0xff]
  %v500 = vld [vmem:[%s1 + $0xeb8] sm:$0xff]
  %v501 = vld [vmem:[%s1 + $0xec0] sm:$0xff]
  %v502 = vld [vmem:[%s1 + $0xec8] sm:$0xff]
  %v503 = vld [vmem:[%s1 + $0xed0] sm:$0xff]
  %v504 = vld [vmem:[%s1 + $0xed8] sm:$0xff]
  %v505 = vld [vmem:[%s1 + $0xee0] sm:$0xff]
  %v506 = vld [vmem:[%s1 + $0xee8] sm:$0xff]
  %v507 = vld [vmem:[%s1 + $0xef0] sm:$0xff]
  %v508 = vld [vmem:[%s1 + $0xef8] sm:$0xff]
  %v509 = vld [vmem:[%s1 + $0xf00] sm:$0xff]
  %v510 = vld [vmem:[%s1 + $0xf08] sm:$0xff]
  %v511 = vld [vmem:[%s1 + $0xf10] sm:$0xff]
  %v512 = vld [vmem:[%s1 + $0xf18] sm:$0xff]
  %v513 = vld [vmem:[%s1 + $0xf20] sm:$0xff]
  %v514 = vld [vmem:[%s1 + $0xf28] sm:$0xff]
  %v515 = vld [vmem:[%s1 + $0xf30] sm:$0xff]
  %v516 = vld [vmem:[%s1 + $0xf38] sm:$0xff]
  %v517 = vld [vmem:[%s1 + $0xf40] sm:$0xff]
  %v518 = vld [vmem:[%s1 + $0xf48] sm:$0xff]
  %v519 = vld [vmem:[%s1 + $0xf50] sm:$0xff]
  %v520 = vld [vmem:[%s1 + $0xf58] sm:$0xff]
  %v521 = vld [vmem:[%s1 + $0xf60] sm:$0xff]
  %v522 = vld [vmem:[%s1 + $0xf68] sm:$0xff]
  %v523 = vld [vmem:[%s1 + $0xf70] sm:$0xff]
  %v524 = vld [vmem:[%s1 + $0xf78] sm:$0xff]
  %v525 = vld [vmem:[%s1 + $0xf80] sm:$0xff]
  %v526 = vld [vmem:[%s1 + $0xf88] sm:$0xff]
  %v527 = vld [vmem:[%s1 + $0xf90] sm:$0xff]
  %v528 = vld [vmem:[%s1 + $0xf98] sm:$0xff]
  %v529 = vld [vmem:[%s1 + $0xfa0] sm:$0xff]
  %v530 = vld [vmem:[%s1 + $0xfa8] sm:$0xff]
  %v531 = vld [vmem:[%s1 + $0xfb0] sm:$0xff]
  %v532 = vld [vmem:[%s1 + $0xfb8] sm:$0xff]
  %v533 = vld [vmem:[%s1 + $0xfc0] sm:$0xff]
  %v534 = vld [vmem:[%s1 + $0xfc8] sm:$0xff]
  %v535 = vld [vmem:[%s1 + $0xfd0] sm:$0xff]
  %v536 = vld [vmem:[%s1 + $0xfd8] sm:$0xff]
  %v537 = vld [vmem:[%s1 + $0xfe0] sm:$0xff]
  %v538 = vld [vmem:[%s1 + $0xfe8] sm:$0xff]
  %v539 = vld [vmem:[%s1 + $0xff0] sm:$0xff]
  %v540 = vld [vmem:[%s1 + $0xff8] sm:$0xff]
  %v541 = vld [vmem:[%s2] sm:$0xf]
  %v543 = vlaneseq
  %v544 = vshrl.u32 %v543, 7
  %v545 = vsub.s32 0, %v544
  %v546 = vrot.slane %v541, %v545
  %v547 = vlaneseq
  %v548 = vshrl.u32 %v547, 7
  %v549 = vsub.s32 1, %v548
  %v550 = vrot.slane %v541, %v549
  %v551 = vlaneseq
  %v552 = vshrl.u32 %v551, 7
  %v553 = vsub.s32 2, %v552
  %v554 = vrot.slane %v541, %v553
  %v555 = vlaneseq
  %v556 = vshrl.u32 %v555, 7
  %v557 = vsub.s32 3, %v556
  %v558 = vrot.slane %v541, %v557
  %v571 = vunpack.c.l.b16 %v21
  %v572 = vunpack.c.h.b16 %v21
  %v573 = vunpack.c.l.b16 %v22
  %v574 = vunpack.c.h.b16 %v22
  %v575 = vunpack.c.l.b16 %v23
  %v576 = vunpack.c.h.b16 %v23
  %v577 = vunpack.c.l.b16 %v24
  %v578 = vunpack.c.h.b16 %v24
  %v579 = vunpack.c.l.b16 %v25
  %v580 = vunpack.c.h.b16 %v25
  %v581 = vunpack.c.l.b16 %v26
  %v582 = vunpack.c.h.b16 %v26
  %v583 = vunpack.c.l.b16 %v27
  %v584 = vunpack.c.h.b16 %v27
  %v585 = vunpack.c.l.b16 %v28
  %v586 = vunpack.c.h.b16 %v28
  %v587 = vpack.c.b16 %v571, %v571
  %v588 = vpack.c.b16 %v572, %v572
  %v589 = vpack.c.b16 %v573, %v573
  %v590 = vpack.c.b16 %v574, %v574
  %v591 = vpack.c.b16 %v575, %v575
  %v592 = vpack.c.b16 %v576, %v576
  %v593 = vpack.c.b16 %v577, %v577
  %v594 = vpack.c.b16 %v578, %v578
  %v595 = vpack.c.b16 %v579, %v579
  %v596 = vpack.c.b16 %v580, %v580
  %v597 = vpack.c.b16 %v581, %v581
  %v598 = vpack.c.b16 %v582, %v582
  %v599 = vpack.c.b16 %v583, %v583
  %v600 = vpack.c.b16 %v584, %v584
  %v601 = vpack.c.b16 %v585, %v585
  %v602 = vpack.c.b16 %v586, %v586
  %v1131 = vunpack.c.l.b16 %v29
  %v1132 = vunpack.c.h.b16 %v29
  %v1133 = vunpack.c.l.b16 %v30
  %v1134 = vunpack.c.h.b16 %v30
  %v1135 = vunpack.c.l.b16 %v31
  %v1136 = vunpack.c.h.b16 %v31
  %v1137 = vunpack.c.l.b16 %v32
  %v1138 = vunpack.c.h.b16 %v32
  %v1139 = vunpack.c.l.b16 %v33
  %v1140 = vunpack.c.h.b16 %v33
  %v1141 = vunpack.c.l.b16 %v34
  %v1142 = vunpack.c.h.b16 %v34
  %v1143 = vunpack.c.l.b16 %v35
  %v1144 = vunpack.c.h.b16 %v35
  %v1145 = vunpack.c.l.b16 %v36
  %v1146 = vunpack.c.h.b16 %v36
  %v1147 = vunpack.c.l.b16 %v37
  %v1148 = vunpack.c.h.b16 %v37
  %v1149 = vunpack.c.l.b16 %v38
  %v1150 = vunpack.c.h.b16 %v38
  %v1151 = vunpack.c.l.b16 %v39
  %v1152 = vunpack.c.h.b16 %v39
  %v1153 = vunpack.c.l.b16 %v40
  %v1154 = vunpack.c.h.b16 %v40
  %v1155 = vunpack.c.l.b16 %v41
  %v1156 = vunpack.c.h.b16 %v41
  %v1157 = vunpack.c.l.b16 %v42
  %v1158 = vunpack.c.h.b16 %v42
  %v1159 = vunpack.c.l.b16 %v43
  %v1160 = vunpack.c.h.b16 %v43
  %v1161 = vunpack.c.l.b16 %v44
  %v1162 = vunpack.c.h.b16 %v44
  %v1163 = vunpack.c.l.b16 %v45
  %v1164 = vunpack.c.h.b16 %v45
  %v1165 = vunpack.c.l.b16 %v46
  %v1166 = vunpack.c.h.b16 %v46
  %v1167 = vunpack.c.l.b16 %v47
  %v1168 = vunpack.c.h.b16 %v47
  %v1169 = vunpack.c.l.b16 %v48
  %v1170 = vunpack.c.h.b16 %v48
  %v1171 = vunpack.c.l.b16 %v49
  %v1172 = vunpack.c.h.b16 %v49
  %v1173 = vunpack.c.l.b16 %v50
  %v1174 = vunpack.c.h.b16 %v50
  %v1175 = vunpack.c.l.b16 %v51
  %v1176 = vunpack.c.h.b16 %v51
  %v1177 = vunpack.c.l.b16 %v52
  %v1178 = vunpack.c.h.b16 %v52
  %v1179 = vunpack.c.l.b16 %v53
  %v1180 = vunpack.c.h.b16 %v53
  %v1181 = vunpack.c.l.b16 %v54
  %v1182 = vunpack.c.h.b16 %v54
  %v1183 = vunpack.c.l.b16 %v55
  %v1184 = vunpack.c.h.b16 %v55
  %v1185 = vunpack.c.l.b16 %v56
  %v1186 = vunpack.c.h.b16 %v56
  %v1187 = vunpack.c.l.b16 %v57
  %v1188 = vunpack.c.h.b16 %v57
  %v1189 = vunpack.c.l.b16 %v58
  %v1190 = vunpack.c.h.b16 %v58
  %v1191 = vunpack.c.l.b16 %v59
  %v1192 = vunpack.c.h.b16 %v59
  %v1193 = vunpack.c.l.b16 %v60
  %v1194 = vunpack.c.h.b16 %v60
  %v1195 = vunpack.c.l.b16 %v61
  %v1196 = vunpack.c.h.b16 %v61
  %v1197 = vunpack.c.l.b16 %v62
  %v1198 = vunpack.c.h.b16 %v62
  %v1199 = vunpack.c.l.b16 %v63
  %v1200 = vunpack.c.h.b16 %v63
  %v1201 = vunpack.c.l.b16 %v64
  %v1202 = vunpack.c.h.b16 %v64
  %v1203 = vunpack.c.l.b16 %v65
  %v1204 = vunpack.c.h.b16 %v65
  %v1205 = vunpack.c.l.b16 %v66
  %v1206 = vunpack.c.h.b16 %v66
  %v1207 = vunpack.c.l.b16 %v67
  %v1208 = vunpack.c.h.b16 %v67
  %v1209 = vunpack.c.l.b16 %v68
  %v1210 = vunpack.c.h.b16 %v68
  %v1211 = vunpack.c.l.b16 %v69
  %v1212 = vunpack.c.h.b16 %v69
  %v1213 = vunpack.c.l.b16 %v70
  %v1214 = vunpack.c.h.b16 %v70
  %v1215 = vunpack.c.l.b16 %v71
  %v1216 = vunpack.c.h.b16 %v71
  %v1217 = vunpack.c.l.b16 %v72
  %v1218 = vunpack.c.h.b16 %v72
  %v1219 = vunpack.c.l.b16 %v73
  %v1220 = vunpack.c.h.b16 %v73
  %v1221 = vunpack.c.l.b16 %v74
  %v1222 = vunpack.c.h.b16 %v74
  %v1223 = vunpack.c.l.b16 %v75
  %v1224 = vunpack.c.h.b16 %v75
  %v1225 = vunpack.c.l.b16 %v76
  %v1226 = vunpack.c.h.b16 %v76
  %v1227 = vunpack.c.l.b16 %v77
  %v1228 = vunpack.c.h.b16 %v77
  %v1229 = vunpack.c.l.b16 %v78
  %v1230 = vunpack.c.h.b16 %v78
  %v1231 = vunpack.c.l.b16 %v79
  %v1232 = vunpack.c.h.b16 %v79
  %v1233 = vunpack.c.l.b16 %v80
  %v1234 = vunpack.c.h.b16 %v80
  %v1235 = vunpack.c.l.b16 %v81
  %v1236 = vunpack.c.h.b16 %v81
  %v1237 = vunpack.c.l.b16 %v82
  %v1238 = vunpack.c.h.b16 %v82
  %v1239 = vunpack.c.l.b16 %v83
  %v1240 = vunpack.c.h.b16 %v83
  %v1241 = vunpack.c.l.b16 %v84
  %v1242 = vunpack.c.h.b16 %v84
  %v1243 = vunpack.c.l.b16 %v85
  %v1244 = vunpack.c.h.b16 %v85
  %v1245 = vunpack.c.l.b16 %v86
  %v1246 = vunpack.c.h.b16 %v86
  %v1247 = vunpack.c.l.b16 %v87
  %v1248 = vunpack.c.h.b16 %v87
  %v1249 = vunpack.c.l.b16 %v88
  %v1250 = vunpack.c.h.b16 %v88
  %v1251 = vunpack.c.l.b16 %v89
  %v1252 = vunpack.c.h.b16 %v89
  %v1253 = vunpack.c.l.b16 %v90
  %v1254 = vunpack.c.h.b16 %v90
  %v1255 = vunpack.c.l.b16 %v91
  %v1256 = vunpack.c.h.b16 %v91
  %v1257 = vunpack.c.l.b16 %v92
  %v1258 = vunpack.c.h.b16 %v92
  %v1259 = vunpack.c.l.b16 %v93
  %v1260 = vunpack.c.h.b16 %v93
  %v1261 = vunpack.c.l.b16 %v94
  %v1262 = vunpack.c.h.b16 %v94
  %v1263 = vunpack.c.l.b16 %v95
  %v1264 = vunpack.c.h.b16 %v95
  %v1265 = vunpack.c.l.b16 %v96
  %v1266 = vunpack.c.h.b16 %v96
  %v1267 = vunpack.c.l.b16 %v97
  %v1268 = vunpack.c.h.b16 %v97
  %v1269 = vunpack.c.l.b16 %v98
  %v1270 = vunpack.c.h.b16 %v98
  %v1271 = vunpack.c.l.b16 %v99
  %v1272 = vunpack.c.h.b16 %v99
  %v1273 = vunpack.c.l.b16 %v100
  %v1274 = vunpack.c.h.b16 %v100
  %v1275 = vunpack.c.l.b16 %v101
  %v1276 = vunpack.c.h.b16 %v101
  %v1277 = vunpack.c.l.b16 %v102
  %v1278 = vunpack.c.h.b16 %v102
  %v1279 = vunpack.c.l.b16 %v103
  %v1280 = vunpack.c.h.b16 %v103
  %v1281 = vunpack.c.l.b16 %v104
  %v1282 = vunpack.c.h.b16 %v104
  %v1283 = vunpack.c.l.b16 %v105
  %v1284 = vunpack.c.h.b16 %v105
  %v1285 = vunpack.c.l.b16 %v106
  %v1286 = vunpack.c.h.b16 %v106
  %v1287 = vunpack.c.l.b16 %v107
  %v1288 = vunpack.c.h.b16 %v107
  %v1289 = vunpack.c.l.b16 %v108
  %v1290 = vunpack.c.h.b16 %v108
  %v1291 = vunpack.c.l.b16 %v109
  %v1292 = vunpack.c.h.b16 %v109
  %v1293 = vunpack.c.l.b16 %v110
  %v1294 = vunpack.c.h.b16 %v110
  %v1295 = vunpack.c.l.b16 %v111
  %v1296 = vunpack.c.h.b16 %v111
  %v1297 = vunpack.c.l.b16 %v112
  %v1298 = vunpack.c.h.b16 %v112
  %v1299 = vunpack.c.l.b16 %v113
  %v1300 = vunpack.c.h.b16 %v113
  %v1301 = vunpack.c.l.b16 %v114
  %v1302 = vunpack.c.h.b16 %v114
  %v1303 = vunpack.c.l.b16 %v115
  %v1304 = vunpack.c.h.b16 %v115
  %v1305 = vunpack.c.l.b16 %v116
  %v1306 = vunpack.c.h.b16 %v116
  %v1307 = vunpack.c.l.b16 %v117
  %v1308 = vunpack.c.h.b16 %v117
  %v1309 = vunpack.c.l.b16 %v118
  %v1310 = vunpack.c.h.b16 %v118
  %v1311 = vunpack.c.l.b16 %v119
  %v1312 = vunpack.c.h.b16 %v119
  %v1313 = vunpack.c.l.b16 %v120
  %v1314 = vunpack.c.h.b16 %v120
  %v1315 = vunpack.c.l.b16 %v121
  %v1316 = vunpack.c.h.b16 %v121
  %v1317 = vunpack.c.l.b16 %v122
  %v1318 = vunpack.c.h.b16 %v122
  %v1319 = vunpack.c.l.b16 %v123
  %v1320 = vunpack.c.h.b16 %v123
  %v1321 = vunpack.c.l.b16 %v124
  %v1322 = vunpack.c.h.b16 %v124
  %v1323 = vunpack.c.l.b16 %v125
  %v1324 = vunpack.c.h.b16 %v125
  %v1325 = vunpack.c.l.b16 %v126
  %v1326 = vunpack.c.h.b16 %v126
  %v1327 = vunpack.c.l.b16 %v127
  %v1328 = vunpack.c.h.b16 %v127
  %v1329 = vunpack.c.l.b16 %v128
  %v1330 = vunpack.c.h.b16 %v128
  %v1331 = vunpack.c.l.b16 %v129
  %v1332 = vunpack.c.h.b16 %v129
  %v1333 = vunpack.c.l.b16 %v130
  %v1334 = vunpack.c.h.b16 %v130
  %v1335 = vunpack.c.l.b16 %v131
  %v1336 = vunpack.c.h.b16 %v131
  %v1337 = vunpack.c.l.b16 %v132
  %v1338 = vunpack.c.h.b16 %v132
  %v1339 = vunpack.c.l.b16 %v133
  %v1340 = vunpack.c.h.b16 %v133
  %v1341 = vunpack.c.l.b16 %v134
  %v1342 = vunpack.c.h.b16 %v134
  %v1343 = vunpack.c.l.b16 %v135
  %v1344 = vunpack.c.h.b16 %v135
  %v1345 = vunpack.c.l.b16 %v136
  %v1346 = vunpack.c.h.b16 %v136
  %v1347 = vunpack.c.l.b16 %v137
  %v1348 = vunpack.c.h.b16 %v137
  %v1349 = vunpack.c.l.b16 %v138
  %v1350 = vunpack.c.h.b16 %v138
  %v1351 = vunpack.c.l.b16 %v139
  %v1352 = vunpack.c.h.b16 %v139
  %v1353 = vunpack.c.l.b16 %v140
  %v1354 = vunpack.c.h.b16 %v140
  %v1355 = vunpack.c.l.b16 %v141
  %v1356 = vunpack.c.h.b16 %v141
  %v1357 = vunpack.c.l.b16 %v142
  %v1358 = vunpack.c.h.b16 %v142
  %v1359 = vunpack.c.l.b16 %v143
  %v1360 = vunpack.c.h.b16 %v143
  %v1361 = vunpack.c.l.b16 %v144
  %v1362 = vunpack.c.h.b16 %v144
  %v1363 = vunpack.c.l.b16 %v145
  %v1364 = vunpack.c.h.b16 %v145
  %v1365 = vunpack.c.l.b16 %v146
  %v1366 = vunpack.c.h.b16 %v146
  %v1367 = vunpack.c.l.b16 %v147
  %v1368 = vunpack.c.h.b16 %v147
  %v1369 = vunpack.c.l.b16 %v148
  %v1370 = vunpack.c.h.b16 %v148
  %v1371 = vunpack.c.l.b16 %v149
  %v1372 = vunpack.c.h.b16 %v149
  %v1373 = vunpack.c.l.b16 %v150
  %v1374 = vunpack.c.h.b16 %v150
  %v1375 = vunpack.c.l.b16 %v151
  %v1376 = vunpack.c.h.b16 %v151
  %v1377 = vunpack.c.l.b16 %v152
  %v1378 = vunpack.c.h.b16 %v152
  %v1379 = vunpack.c.l.b16 %v153
  %v1380 = vunpack.c.h.b16 %v153
  %v1381 = vunpack.c.l.b16 %v154
  %v1382 = vunpack.c.h.b16 %v154
  %v1383 = vunpack.c.l.b16 %v155
  %v1384 = vunpack.c.h.b16 %v155
  %v1385 = vunpack.c.l.b16 %v156
  %v1386 = vunpack.c.h.b16 %v156
  %v1387 = vunpack.c.l.b16 %v157
  %v1388 = vunpack.c.h.b16 %v157
  %v1389 = vunpack.c.l.b16 %v158
  %v1390 = vunpack.c.h.b16 %v158
  %v1391 = vunpack.c.l.b16 %v159
  %v1392 = vunpack.c.h.b16 %v159
  %v1393 = vunpack.c.l.b16 %v160
  %v1394 = vunpack.c.h.b16 %v160
  %v1395 = vunpack.c.l.b16 %v161
  %v1396 = vunpack.c.h.b16 %v161
  %v1397 = vunpack.c.l.b16 %v162
  %v1398 = vunpack.c.h.b16 %v162
  %v1399 = vunpack.c.l.b16 %v163
  %v1400 = vunpack.c.h.b16 %v163
  %v1401 = vunpack.c.l.b16 %v164
  %v1402 = vunpack.c.h.b16 %v164
  %v1403 = vunpack.c.l.b16 %v165
  %v1404 = vunpack.c.h.b16 %v165
  %v1405 = vunpack.c.l.b16 %v166
  %v1406 = vunpack.c.h.b16 %v166
  %v1407 = vunpack.c.l.b16 %v167
  %v1408 = vunpack.c.h.b16 %v167
  %v1409 = vunpack.c.l.b16 %v168
  %v1410 = vunpack.c.h.b16 %v168
  %v1411 = vunpack.c.l.b16 %v169
  %v1412 = vunpack.c.h.b16 %v169
  %v1413 = vunpack.c.l.b16 %v170
  %v1414 = vunpack.c.h.b16 %v170
  %v1415 = vunpack.c.l.b16 %v171
  %v1416 = vunpack.c.h.b16 %v171
  %v1417 = vunpack.c.l.b16 %v172
  %v1418 = vunpack.c.h.b16 %v172
  %v1419 = vunpack.c.l.b16 %v173
  %v1420 = vunpack.c.h.b16 %v173
  %v1421 = vunpack.c.l.b16 %v174
  %v1422 = vunpack.c.h.b16 %v174
  %v1423 = vunpack.c.l.b16 %v175
  %v1424 = vunpack.c.h.b16 %v175
  %v1425 = vunpack.c.l.b16 %v176
  %v1426 = vunpack.c.h.b16 %v176
  %v1427 = vunpack.c.l.b16 %v177
  %v1428 = vunpack.c.h.b16 %v177
  %v1429 = vunpack.c.l.b16 %v178
  %v1430 = vunpack.c.h.b16 %v178
  %v1431 = vunpack.c.l.b16 %v179
  %v1432 = vunpack.c.h.b16 %v179
  %v1433 = vunpack.c.l.b16 %v180
  %v1434 = vunpack.c.h.b16 %v180
  %v1435 = vunpack.c.l.b16 %v181
  %v1436 = vunpack.c.h.b16 %v181
  %v1437 = vunpack.c.l.b16 %v182
  %v1438 = vunpack.c.h.b16 %v182
  %v1439 = vunpack.c.l.b16 %v183
  %v1440 = vunpack.c.h.b16 %v183
  %v1441 = vunpack.c.l.b16 %v184
  %v1442 = vunpack.c.h.b16 %v184
  %v1443 = vunpack.c.l.b16 %v185
  %v1444 = vunpack.c.h.b16 %v185
  %v1445 = vunpack.c.l.b16 %v186
  %v1446 = vunpack.c.h.b16 %v186
  %v1447 = vunpack.c.l.b16 %v187
  %v1448 = vunpack.c.h.b16 %v187
  %v1449 = vunpack.c.l.b16 %v188
  %v1450 = vunpack.c.h.b16 %v188
  %v1451 = vunpack.c.l.b16 %v189
  %v1452 = vunpack.c.h.b16 %v189
  %v1453 = vunpack.c.l.b16 %v190
  %v1454 = vunpack.c.h.b16 %v190
  %v1455 = vunpack.c.l.b16 %v191
  %v1456 = vunpack.c.h.b16 %v191
  %v1457 = vunpack.c.l.b16 %v192
  %v1458 = vunpack.c.h.b16 %v192
  %v1459 = vunpack.c.l.b16 %v193
  %v1460 = vunpack.c.h.b16 %v193
  %v1461 = vunpack.c.l.b16 %v194
  %v1462 = vunpack.c.h.b16 %v194
  %v1463 = vunpack.c.l.b16 %v195
  %v1464 = vunpack.c.h.b16 %v195
  %v1465 = vunpack.c.l.b16 %v196
  %v1466 = vunpack.c.h.b16 %v196
  %v1467 = vunpack.c.l.b16 %v197
  %v1468 = vunpack.c.h.b16 %v197
  %v1469 = vunpack.c.l.b16 %v198
  %v1470 = vunpack.c.h.b16 %v198
  %v1471 = vunpack.c.l.b16 %v199
  %v1472 = vunpack.c.h.b16 %v199
  %v1473 = vunpack.c.l.b16 %v200
  %v1474 = vunpack.c.h.b16 %v200
  %v1475 = vunpack.c.l.b16 %v201
  %v1476 = vunpack.c.h.b16 %v201
  %v1477 = vunpack.c.l.b16 %v202
  %v1478 = vunpack.c.h.b16 %v202
  %v1479 = vunpack.c.l.b16 %v203
  %v1480 = vunpack.c.h.b16 %v203
  %v1481 = vunpack.c.l.b16 %v204
  %v1482 = vunpack.c.h.b16 %v204
  %v1483 = vunpack.c.l.b16 %v205
  %v1484 = vunpack.c.h.b16 %v205
  %v1485 = vunpack.c.l.b16 %v206
  %v1486 = vunpack.c.h.b16 %v206
  %v1487 = vunpack.c.l.b16 %v207
  %v1488 = vunpack.c.h.b16 %v207
  %v1489 = vunpack.c.l.b16 %v208
  %v1490 = vunpack.c.h.b16 %v208
  %v1491 = vunpack.c.l.b16 %v209
  %v1492 = vunpack.c.h.b16 %v209
  %v1493 = vunpack.c.l.b16 %v210
  %v1494 = vunpack.c.h.b16 %v210
  %v1495 = vunpack.c.l.b16 %v211
  %v1496 = vunpack.c.h.b16 %v211
  %v1497 = vunpack.c.l.b16 %v212
  %v1498 = vunpack.c.h.b16 %v212
  %v1499 = vunpack.c.l.b16 %v213
  %v1500 = vunpack.c.h.b16 %v213
  %v1501 = vunpack.c.l.b16 %v214
  %v1502 = vunpack.c.h.b16 %v214
  %v1503 = vunpack.c.l.b16 %v215
  %v1504 = vunpack.c.h.b16 %v215
  %v1505 = vunpack.c.l.b16 %v216
  %v1506 = vunpack.c.h.b16 %v216
  %v1507 = vunpack.c.l.b16 %v217
  %v1508 = vunpack.c.h.b16 %v217
  %v1509 = vunpack.c.l.b16 %v218
  %v1510 = vunpack.c.h.b16 %v218
  %v1511 = vunpack.c.l.b16 %v219
  %v1512 = vunpack.c.h.b16 %v219
  %v1513 = vunpack.c.l.b16 %v220
  %v1514 = vunpack.c.h.b16 %v220
  %v1515 = vunpack.c.l.b16 %v221
  %v1516 = vunpack.c.h.b16 %v221
  %v1517 = vunpack.c.l.b16 %v222
  %v1518 = vunpack.c.h.b16 %v222
  %v1519 = vunpack.c.l.b16 %v223
  %v1520 = vunpack.c.h.b16 %v223
  %v1521 = vunpack.c.l.b16 %v224
  %v1522 = vunpack.c.h.b16 %v224
  %v1523 = vunpack.c.l.b16 %v225
  %v1524 = vunpack.c.h.b16 %v225
  %v1525 = vunpack.c.l.b16 %v226
  %v1526 = vunpack.c.h.b16 %v226
  %v1527 = vunpack.c.l.b16 %v227
  %v1528 = vunpack.c.h.b16 %v227
  %v1529 = vunpack.c.l.b16 %v228
  %v1530 = vunpack.c.h.b16 %v228
  %v1531 = vunpack.c.l.b16 %v229
  %v1532 = vunpack.c.h.b16 %v229
  %v1533 = vunpack.c.l.b16 %v230
  %v1534 = vunpack.c.h.b16 %v230
  %v1535 = vunpack.c.l.b16 %v231
  %v1536 = vunpack.c.h.b16 %v231
  %v1537 = vunpack.c.l.b16 %v232
  %v1538 = vunpack.c.h.b16 %v232
  %v1539 = vunpack.c.l.b16 %v233
  %v1540 = vunpack.c.h.b16 %v233
  %v1541 = vunpack.c.l.b16 %v234
  %v1542 = vunpack.c.h.b16 %v234
  %v1543 = vunpack.c.l.b16 %v235
  %v1544 = vunpack.c.h.b16 %v235
  %v1545 = vunpack.c.l.b16 %v236
  %v1546 = vunpack.c.h.b16 %v236
  %v1547 = vunpack.c.l.b16 %v237
  %v1548 = vunpack.c.h.b16 %v237
  %v1549 = vunpack.c.l.b16 %v238
  %v1550 = vunpack.c.h.b16 %v238
  %v1551 = vunpack.c.l.b16 %v239
  %v1552 = vunpack.c.h.b16 %v239
  %v1553 = vunpack.c.l.b16 %v240
  %v1554 = vunpack.c.h.b16 %v240
  %v1555 = vunpack.c.l.b16 %v241
  %v1556 = vunpack.c.h.b16 %v241
  %v1557 = vunpack.c.l.b16 %v242
  %v1558 = vunpack.c.h.b16 %v242
  %v1559 = vunpack.c.l.b16 %v243
  %v1560 = vunpack.c.h.b16 %v243
  %v1561 = vunpack.c.l.b16 %v244
  %v1562 = vunpack.c.h.b16 %v244
  %v1563 = vunpack.c.l.b16 %v245
  %v1564 = vunpack.c.h.b16 %v245
  %v1565 = vunpack.c.l.b16 %v246
  %v1566 = vunpack.c.h.b16 %v246
  %v1567 = vunpack.c.l.b16 %v247
  %v1568 = vunpack.c.h.b16 %v247
  %v1569 = vunpack.c.l.b16 %v248
  %v1570 = vunpack.c.h.b16 %v248
  %v1571 = vunpack.c.l.b16 %v249
  %v1572 = vunpack.c.h.b16 %v249
  %v1573 = vunpack.c.l.b16 %v250
  %v1574 = vunpack.c.h.b16 %v250
  %v1575 = vunpack.c.l.b16 %v251
  %v1576 = vunpack.c.h.b16 %v251
  %v1577 = vunpack.c.l.b16 %v252
  %v1578 = vunpack.c.h.b16 %v252
  %v1579 = vunpack.c.l.b16 %v253
  %v1580 = vunpack.c.h.b16 %v253
  %v1581 = vunpack.c.l.b16 %v254
  %v1582 = vunpack.c.h.b16 %v254
  %v1583 = vunpack.c.l.b16 %v255
  %v1584 = vunpack.c.h.b16 %v255
  %v1585 = vunpack.c.l.b16 %v256
  %v1586 = vunpack.c.h.b16 %v256
  %v1587 = vunpack.c.l.b16 %v257
  %v1588 = vunpack.c.h.b16 %v257
  %v1589 = vunpack.c.l.b16 %v258
  %v1590 = vunpack.c.h.b16 %v258
  %v1591 = vunpack.c.l.b16 %v259
  %v1592 = vunpack.c.h.b16 %v259
  %v1593 = vunpack.c.l.b16 %v260
  %v1594 = vunpack.c.h.b16 %v260
  %v1595 = vunpack.c.l.b16 %v261
  %v1596 = vunpack.c.h.b16 %v261
  %v1597 = vunpack.c.l.b16 %v262
  %v1598 = vunpack.c.h.b16 %v262
  %v1599 = vunpack.c.l.b16 %v263
  %v1600 = vunpack.c.h.b16 %v263
  %v1601 = vunpack.c.l.b16 %v264
  %v1602 = vunpack.c.h.b16 %v264
  %v1603 = vunpack.c.l.b16 %v265
  %v1604 = vunpack.c.h.b16 %v265
  %v1605 = vunpack.c.l.b16 %v266
  %v1606 = vunpack.c.h.b16 %v266
  %v1607 = vunpack.c.l.b16 %v267
  %v1608 = vunpack.c.h.b16 %v267
  %v1609 = vunpack.c.l.b16 %v268
  %v1610 = vunpack.c.h.b16 %v268
  %v1611 = vunpack.c.l.b16 %v269
  %v1612 = vunpack.c.h.b16 %v269
  %v1613 = vunpack.c.l.b16 %v270
  %v1614 = vunpack.c.h.b16 %v270
  %v1615 = vunpack.c.l.b16 %v271
  %v1616 = vunpack.c.h.b16 %v271
  %v1617 = vunpack.c.l.b16 %v272
  %v1618 = vunpack.c.h.b16 %v272
  %v1619 = vunpack.c.l.b16 %v273
  %v1620 = vunpack.c.h.b16 %v273
  %v1621 = vunpack.c.l.b16 %v274
  %v1622 = vunpack.c.h.b16 %v274
  %v1623 = vunpack.c.l.b16 %v275
  %v1624 = vunpack.c.h.b16 %v275
  %v1625 = vunpack.c.l.b16 %v276
  %v1626 = vunpack.c.h.b16 %v276
  %v1627 = vunpack.c.l.b16 %v277
  %v1628 = vunpack.c.h.b16 %v277
  %v1629 = vunpack.c.l.b16 %v278
  %v1630 = vunpack.c.h.b16 %v278
  %v1631 = vunpack.c.l.b16 %v279
  %v1632 = vunpack.c.h.b16 %v279
  %v1633 = vunpack.c.l.b16 %v280
  %v1634 = vunpack.c.h.b16 %v280
  %v1635 = vunpack.c.l.b16 %v281
  %v1636 = vunpack.c.h.b16 %v281
  %v1637 = vunpack.c.l.b16 %v282
  %v1638 = vunpack.c.h.b16 %v282
  %v1639 = vunpack.c.l.b16 %v283
  %v1640 = vunpack.c.h.b16 %v283
  %v1641 = vunpack.c.l.b16 %v284
  %v1642 = vunpack.c.h.b16 %v284
  %v1643 = vunpack.c.l.b16 %v285
  %v1644 = vunpack.c.h.b16 %v285
  %v1645 = vunpack.c.l.b16 %v286
  %v1646 = vunpack.c.h.b16 %v286
  %v1647 = vunpack.c.l.b16 %v287
  %v1648 = vunpack.c.h.b16 %v287
  %v1649 = vunpack.c.l.b16 %v288
  %v1650 = vunpack.c.h.b16 %v288
  %v1651 = vunpack.c.l.b16 %v289
  %v1652 = vunpack.c.h.b16 %v289
  %v1653 = vunpack.c.l.b16 %v290
  %v1654 = vunpack.c.h.b16 %v290
  %v1655 = vunpack.c.l.b16 %v291
  %v1656 = vunpack.c.h.b16 %v291
  %v1657 = vunpack.c.l.b16 %v292
  %v1658 = vunpack.c.h.b16 %v292
  %v1659 = vunpack.c.l.b16 %v293
  %v1660 = vunpack.c.h.b16 %v293
  %v1661 = vunpack.c.l.b16 %v294
  %v1662 = vunpack.c.h.b16 %v294
  %v1663 = vunpack.c.l.b16 %v295
  %v1664 = vunpack.c.h.b16 %v295
  %v1665 = vunpack.c.l.b16 %v296
  %v1666 = vunpack.c.h.b16 %v296
  %v1667 = vunpack.c.l.b16 %v297
  %v1668 = vunpack.c.h.b16 %v297
  %v1669 = vunpack.c.l.b16 %v298
  %v1670 = vunpack.c.h.b16 %v298
  %v1671 = vunpack.c.l.b16 %v299
  %v1672 = vunpack.c.h.b16 %v299
  %v1673 = vunpack.c.l.b16 %v300
  %v1674 = vunpack.c.h.b16 %v300
  %v1675 = vunpack.c.l.b16 %v301
  %v1676 = vunpack.c.h.b16 %v301
  %v1677 = vunpack.c.l.b16 %v302
  %v1678 = vunpack.c.h.b16 %v302
  %v1679 = vunpack.c.l.b16 %v303
  %v1680 = vunpack.c.h.b16 %v303
  %v1681 = vunpack.c.l.b16 %v304
  %v1682 = vunpack.c.h.b16 %v304
  %v1683 = vunpack.c.l.b16 %v305
  %v1684 = vunpack.c.h.b16 %v305
  %v1685 = vunpack.c.l.b16 %v306
  %v1686 = vunpack.c.h.b16 %v306
  %v1687 = vunpack.c.l.b16 %v307
  %v1688 = vunpack.c.h.b16 %v307
  %v1689 = vunpack.c.l.b16 %v308
  %v1690 = vunpack.c.h.b16 %v308
  %v1691 = vunpack.c.l.b16 %v309
  %v1692 = vunpack.c.h.b16 %v309
  %v1693 = vunpack.c.l.b16 %v310
  %v1694 = vunpack.c.h.b16 %v310
  %v1695 = vunpack.c.l.b16 %v311
  %v1696 = vunpack.c.h.b16 %v311
  %v1697 = vunpack.c.l.b16 %v312
  %v1698 = vunpack.c.h.b16 %v312
  %v1699 = vunpack.c.l.b16 %v313
  %v1700 = vunpack.c.h.b16 %v313
  %v1701 = vunpack.c.l.b16 %v314
  %v1702 = vunpack.c.h.b16 %v314
  %v1703 = vunpack.c.l.b16 %v315
  %v1704 = vunpack.c.h.b16 %v315
  %v1705 = vunpack.c.l.b16 %v316
  %v1706 = vunpack.c.h.b16 %v316
  %v1707 = vunpack.c.l.b16 %v317
  %v1708 = vunpack.c.h.b16 %v317
  %v1709 = vunpack.c.l.b16 %v318
  %v1710 = vunpack.c.h.b16 %v318
  %v1711 = vunpack.c.l.b16 %v319
  %v1712 = vunpack.c.h.b16 %v319
  %v1713 = vunpack.c.l.b16 %v320
  %v1714 = vunpack.c.h.b16 %v320
  %v1715 = vunpack.c.l.b16 %v321
  %v1716 = vunpack.c.h.b16 %v321
  %v1717 = vunpack.c.l.b16 %v322
  %v1718 = vunpack.c.h.b16 %v322
  %v1719 = vunpack.c.l.b16 %v323
  %v1720 = vunpack.c.h.b16 %v323
  %v1721 = vunpack.c.l.b16 %v324
  %v1722 = vunpack.c.h.b16 %v324
  %v1723 = vunpack.c.l.b16 %v325
  %v1724 = vunpack.c.h.b16 %v325
  %v1725 = vunpack.c.l.b16 %v326
  %v1726 = vunpack.c.h.b16 %v326
  %v1727 = vunpack.c.l.b16 %v327
  %v1728 = vunpack.c.h.b16 %v327
  %v1729 = vunpack.c.l.b16 %v328
  %v1730 = vunpack.c.h.b16 %v328
  %v1731 = vunpack.c.l.b16 %v329
  %v1732 = vunpack.c.h.b16 %v329
  %v1733 = vunpack.c.l.b16 %v330
  %v1734 = vunpack.c.h.b16 %v330
  %v1735 = vunpack.c.l.b16 %v331
  %v1736 = vunpack.c.h.b16 %v331
  %v1737 = vunpack.c.l.b16 %v332
  %v1738 = vunpack.c.h.b16 %v332
  %v1739 = vunpack.c.l.b16 %v333
  %v1740 = vunpack.c.h.b16 %v333
  %v1741 = vunpack.c.l.b16 %v334
  %v1742 = vunpack.c.h.b16 %v334
  %v1743 = vunpack.c.l.b16 %v335
  %v1744 = vunpack.c.h.b16 %v335
  %v1745 = vunpack.c.l.b16 %v336
  %v1746 = vunpack.c.h.b16 %v336
  %v1747 = vunpack.c.l.b16 %v337
  %v1748 = vunpack.c.h.b16 %v337
  %v1749 = vunpack.c.l.b16 %v338
  %v1750 = vunpack.c.h.b16 %v338
  %v1751 = vunpack.c.l.b16 %v339
  %v1752 = vunpack.c.h.b16 %v339
  %v1753 = vunpack.c.l.b16 %v340
  %v1754 = vunpack.c.h.b16 %v340
  %v1755 = vunpack.c.l.b16 %v341
  %v1756 = vunpack.c.h.b16 %v341
  %v1757 = vunpack.c.l.b16 %v342
  %v1758 = vunpack.c.h.b16 %v342
  %v1759 = vunpack.c.l.b16 %v343
  %v1760 = vunpack.c.h.b16 %v343
  %v1761 = vunpack.c.l.b16 %v344
  %v1762 = vunpack.c.h.b16 %v344
  %v1763 = vunpack.c.l.b16 %v345
  %v1764 = vunpack.c.h.b16 %v345
  %v1765 = vunpack.c.l.b16 %v346
  %v1766 = vunpack.c.h.b16 %v346
  %v1767 = vunpack.c.l.b16 %v347
  %v1768 = vunpack.c.h.b16 %v347
  %v1769 = vunpack.c.l.b16 %v348
  %v1770 = vunpack.c.h.b16 %v348
  %v1771 = vunpack.c.l.b16 %v349
  %v1772 = vunpack.c.h.b16 %v349
  %v1773 = vunpack.c.l.b16 %v350
  %v1774 = vunpack.c.h.b16 %v350
  %v1775 = vunpack.c.l.b16 %v351
  %v1776 = vunpack.c.h.b16 %v351
  %v1777 = vunpack.c.l.b16 %v352
  %v1778 = vunpack.c.h.b16 %v352
  %v1779 = vunpack.c.l.b16 %v353
  %v1780 = vunpack.c.h.b16 %v353
  %v1781 = vunpack.c.l.b16 %v354
  %v1782 = vunpack.c.h.b16 %v354
  %v1783 = vunpack.c.l.b16 %v355
  %v1784 = vunpack.c.h.b16 %v355
  %v1785 = vunpack.c.l.b16 %v356
  %v1786 = vunpack.c.h.b16 %v356
  %v1787 = vunpack.c.l.b16 %v357
  %v1788 = vunpack.c.h.b16 %v357
  %v1789 = vunpack.c.l.b16 %v358
  %v1790 = vunpack.c.h.b16 %v358
  %v1791 = vunpack.c.l.b16 %v359
  %v1792 = vunpack.c.h.b16 %v359
  %v1793 = vunpack.c.l.b16 %v360
  %v1794 = vunpack.c.h.b16 %v360
  %v1795 = vunpack.c.l.b16 %v361
  %v1796 = vunpack.c.h.b16 %v361
  %v1797 = vunpack.c.l.b16 %v362
  %v1798 = vunpack.c.h.b16 %v362
  %v1799 = vunpack.c.l.b16 %v363
  %v1800 = vunpack.c.h.b16 %v363
  %v1801 = vunpack.c.l.b16 %v364
  %v1802 = vunpack.c.h.b16 %v364
  %v1803 = vunpack.c.l.b16 %v365
  %v1804 = vunpack.c.h.b16 %v365
  %v1805 = vunpack.c.l.b16 %v366
  %v1806 = vunpack.c.h.b16 %v366
  %v1807 = vunpack.c.l.b16 %v367
  %v1808 = vunpack.c.h.b16 %v367
  %v1809 = vunpack.c.l.b16 %v368
  %v1810 = vunpack.c.h.b16 %v368
  %v1811 = vunpack.c.l.b16 %v369
  %v1812 = vunpack.c.h.b16 %v369
  %v1813 = vunpack.c.l.b16 %v370
  %v1814 = vunpack.c.h.b16 %v370
  %v1815 = vunpack.c.l.b16 %v371
  %v1816 = vunpack.c.h.b16 %v371
  %v1817 = vunpack.c.l.b16 %v372
  %v1818 = vunpack.c.h.b16 %v372
  %v1819 = vunpack.c.l.b16 %v373
  %v1820 = vunpack.c.h.b16 %v373
  %v1821 = vunpack.c.l.b16 %v374
  %v1822 = vunpack.c.h.b16 %v374
  %v1823 = vunpack.c.l.b16 %v375
  %v1824 = vunpack.c.h.b16 %v375
  %v1825 = vunpack.c.l.b16 %v376
  %v1826 = vunpack.c.h.b16 %v376
  %v1827 = vunpack.c.l.b16 %v377
  %v1828 = vunpack.c.h.b16 %v377
  %v1829 = vunpack.c.l.b16 %v378
  %v1830 = vunpack.c.h.b16 %v378
  %v1831 = vunpack.c.l.b16 %v379
  %v1832 = vunpack.c.h.b16 %v379
  %v1833 = vunpack.c.l.b16 %v380
  %v1834 = vunpack.c.h.b16 %v380
  %v1835 = vunpack.c.l.b16 %v381
  %v1836 = vunpack.c.h.b16 %v381
  %v1837 = vunpack.c.l.b16 %v382
  %v1838 = vunpack.c.h.b16 %v382
  %v1839 = vunpack.c.l.b16 %v383
  %v1840 = vunpack.c.h.b16 %v383
  %v1841 = vunpack.c.l.b16 %v384
  %v1842 = vunpack.c.h.b16 %v384
  %v1843 = vunpack.c.l.b16 %v385
  %v1844 = vunpack.c.h.b16 %v385
  %v1845 = vunpack.c.l.b16 %v386
  %v1846 = vunpack.c.h.b16 %v386
  %v1847 = vunpack.c.l.b16 %v387
  %v1848 = vunpack.c.h.b16 %v387
  %v1849 = vunpack.c.l.b16 %v388
  %v1850 = vunpack.c.h.b16 %v388
  %v1851 = vunpack.c.l.b16 %v389
  %v1852 = vunpack.c.h.b16 %v389
  %v1853 = vunpack.c.l.b16 %v390
  %v1854 = vunpack.c.h.b16 %v390
  %v1855 = vunpack.c.l.b16 %v391
  %v1856 = vunpack.c.h.b16 %v391
  %v1857 = vunpack.c.l.b16 %v392
  %v1858 = vunpack.c.h.b16 %v392
  %v1859 = vunpack.c.l.b16 %v393
  %v1860 = vunpack.c.h.b16 %v393
  %v1861 = vunpack.c.l.b16 %v394
  %v1862 = vunpack.c.h.b16 %v394
  %v1863 = vunpack.c.l.b16 %v395
  %v1864 = vunpack.c.h.b16 %v395
  %v1865 = vunpack.c.l.b16 %v396
  %v1866 = vunpack.c.h.b16 %v396
  %v1867 = vunpack.c.l.b16 %v397
  %v1868 = vunpack.c.h.b16 %v397
  %v1869 = vunpack.c.l.b16 %v398
  %v1870 = vunpack.c.h.b16 %v398
  %v1871 = vunpack.c.l.b16 %v399
  %v1872 = vunpack.c.h.b16 %v399
  %v1873 = vunpack.c.l.b16 %v400
  %v1874 = vunpack.c.h.b16 %v400
  %v1875 = vunpack.c.l.b16 %v401
  %v1876 = vunpack.c.h.b16 %v401
  %v1877 = vunpack.c.l.b16 %v402
  %v1878 = vunpack.c.h.b16 %v402
  %v1879 = vunpack.c.l.b16 %v403
  %v1880 = vunpack.c.h.b16 %v403
  %v1881 = vunpack.c.l.b16 %v404
  %v1882 = vunpack.c.h.b16 %v404
  %v1883 = vunpack.c.l.b16 %v405
  %v1884 = vunpack.c.h.b16 %v405
  %v1885 = vunpack.c.l.b16 %v406
  %v1886 = vunpack.c.h.b16 %v406
  %v1887 = vunpack.c.l.b16 %v407
  %v1888 = vunpack.c.h.b16 %v407
  %v1889 = vunpack.c.l.b16 %v408
  %v1890 = vunpack.c.h.b16 %v408
  %v1891 = vunpack.c.l.b16 %v409
  %v1892 = vunpack.c.h.b16 %v409
  %v1893 = vunpack.c.l.b16 %v410
  %v1894 = vunpack.c.h.b16 %v410
  %v1895 = vunpack.c.l.b16 %v411
  %v1896 = vunpack.c.h.b16 %v411
  %v1897 = vunpack.c.l.b16 %v412
  %v1898 = vunpack.c.h.b16 %v412
  %v1899 = vunpack.c.l.b16 %v413
  %v1900 = vunpack.c.h.b16 %v413
  %v1901 = vunpack.c.l.b16 %v414
  %v1902 = vunpack.c.h.b16 %v414
  %v1903 = vunpack.c.l.b16 %v415
  %v1904 = vunpack.c.h.b16 %v415
  %v1905 = vunpack.c.l.b16 %v416
  %v1906 = vunpack.c.h.b16 %v416
  %v1907 = vunpack.c.l.b16 %v417
  %v1908 = vunpack.c.h.b16 %v417
  %v1909 = vunpack.c.l.b16 %v418
  %v1910 = vunpack.c.h.b16 %v418
  %v1911 = vunpack.c.l.b16 %v419
  %v1912 = vunpack.c.h.b16 %v419
  %v1913 = vunpack.c.l.b16 %v420
  %v1914 = vunpack.c.h.b16 %v420
  %v1915 = vunpack.c.l.b16 %v421
  %v1916 = vunpack.c.h.b16 %v421
  %v1917 = vunpack.c.l.b16 %v422
  %v1918 = vunpack.c.h.b16 %v422
  %v1919 = vunpack.c.l.b16 %v423
  %v1920 = vunpack.c.h.b16 %v423
  %v1921 = vunpack.c.l.b16 %v424
  %v1922 = vunpack.c.h.b16 %v424
  %v1923 = vunpack.c.l.b16 %v425
  %v1924 = vunpack.c.h.b16 %v425
  %v1925 = vunpack.c.l.b16 %v426
  %v1926 = vunpack.c.h.b16 %v426
  %v1927 = vunpack.c.l.b16 %v427
  %v1928 = vunpack.c.h.b16 %v427
  %v1929 = vunpack.c.l.b16 %v428
  %v1930 = vunpack.c.h.b16 %v428
  %v1931 = vunpack.c.l.b16 %v429
  %v1932 = vunpack.c.h.b16 %v429
  %v1933 = vunpack.c.l.b16 %v430
  %v1934 = vunpack.c.h.b16 %v430
  %v1935 = vunpack.c.l.b16 %v431
  %v1936 = vunpack.c.h.b16 %v431
  %v1937 = vunpack.c.l.b16 %v432
  %v1938 = vunpack.c.h.b16 %v432
  %v1939 = vunpack.c.l.b16 %v433
  %v1940 = vunpack.c.h.b16 %v433
  %v1941 = vunpack.c.l.b16 %v434
  %v1942 = vunpack.c.h.b16 %v434
  %v1943 = vunpack.c.l.b16 %v435
  %v1944 = vunpack.c.h.b16 %v435
  %v1945 = vunpack.c.l.b16 %v436
  %v1946 = vunpack.c.h.b16 %v436
  %v1947 = vunpack.c.l.b16 %v437
  %v1948 = vunpack.c.h.b16 %v437
  %v1949 = vunpack.c.l.b16 %v438
  %v1950 = vunpack.c.h.b16 %v438
  %v1951 = vunpack.c.l.b16 %v439
  %v1952 = vunpack.c.h.b16 %v439
  %v1953 = vunpack.c.l.b16 %v440
  %v1954 = vunpack.c.h.b16 %v440
  %v1955 = vunpack.c.l.b16 %v441
  %v1956 = vunpack.c.h.b16 %v441
  %v1957 = vunpack.c.l.b16 %v442
  %v1958 = vunpack.c.h.b16 %v442
  %v1959 = vunpack.c.l.b16 %v443
  %v1960 = vunpack.c.h.b16 %v443
  %v1961 = vunpack.c.l.b16 %v444
  %v1962 = vunpack.c.h.b16 %v444
  %v1963 = vunpack.c.l.b16 %v445
  %v1964 = vunpack.c.h.b16 %v445
  %v1965 = vunpack.c.l.b16 %v446
  %v1966 = vunpack.c.h.b16 %v446
  %v1967 = vunpack.c.l.b16 %v447
  %v1968 = vunpack.c.h.b16 %v447
  %v1969 = vunpack.c.l.b16 %v448
  %v1970 = vunpack.c.h.b16 %v448
  %v1971 = vunpack.c.l.b16 %v449
  %v1972 = vunpack.c.h.b16 %v449
  %v1973 = vunpack.c.l.b16 %v450
  %v1974 = vunpack.c.h.b16 %v450
  %v1975 = vunpack.c.l.b16 %v451
  %v1976 = vunpack.c.h.b16 %v451
  %v1977 = vunpack.c.l.b16 %v452
  %v1978 = vunpack.c.h.b16 %v452
  %v1979 = vunpack.c.l.b16 %v453
  %v1980 = vunpack.c.h.b16 %v453
  %v1981 = vunpack.c.l.b16 %v454
  %v1982 = vunpack.c.h.b16 %v454
  %v1983 = vunpack.c.l.b16 %v455
  %v1984 = vunpack.c.h.b16 %v455
  %v1985 = vunpack.c.l.b16 %v456
  %v1986 = vunpack.c.h.b16 %v456
  %v1987 = vunpack.c.l.b16 %v457
  %v1988 = vunpack.c.h.b16 %v457
  %v1989 = vunpack.c.l.b16 %v458
  %v1990 = vunpack.c.h.b16 %v458
  %v1991 = vunpack.c.l.b16 %v459
  %v1992 = vunpack.c.h.b16 %v459
  %v1993 = vunpack.c.l.b16 %v460
  %v1994 = vunpack.c.h.b16 %v460
  %v1995 = vunpack.c.l.b16 %v461
  %v1996 = vunpack.c.h.b16 %v461
  %v1997 = vunpack.c.l.b16 %v462
  %v1998 = vunpack.c.h.b16 %v462
  %v1999 = vunpack.c.l.b16 %v463
  %v2000 = vunpack.c.h.b16 %v463
  %v2001 = vunpack.c.l.b16 %v464
  %v2002 = vunpack.c.h.b16 %v464
  %v2003 = vunpack.c.l.b16 %v465
  %v2004 = vunpack.c.h.b16 %v465
  %v2005 = vunpack.c.l.b16 %v466
  %v2006 = vunpack.c.h.b16 %v466
  %v2007 = vunpack.c.l.b16 %v467
  %v2008 = vunpack.c.h.b16 %v467
  %v2009 = vunpack.c.l.b16 %v468
  %v2010 = vunpack.c.h.b16 %v468
  %v2011 = vunpack.c.l.b16 %v469
  %v2012 = vunpack.c.h.b16 %v469
  %v2013 = vunpack.c.l.b16 %v470
  %v2014 = vunpack.c.h.b16 %v470
  %v2015 = vunpack.c.l.b16 %v471
  %v2016 = vunpack.c.h.b16 %v471
  %v2017 = vunpack.c.l.b16 %v472
  %v2018 = vunpack.c.h.b16 %v472
  %v2019 = vunpack.c.l.b16 %v473
  %v2020 = vunpack.c.h.b16 %v473
  %v2021 = vunpack.c.l.b16 %v474
  %v2022 = vunpack.c.h.b16 %v474
  %v2023 = vunpack.c.l.b16 %v475
  %v2024 = vunpack.c.h.b16 %v475
  %v2025 = vunpack.c.l.b16 %v476
  %v2026 = vunpack.c.h.b16 %v476
  %v2027 = vunpack.c.l.b16 %v477
  %v2028 = vunpack.c.h.b16 %v477
  %v2029 = vunpack.c.l.b16 %v478
  %v2030 = vunpack.c.h.b16 %v478
  %v2031 = vunpack.c.l.b16 %v479
  %v2032 = vunpack.c.h.b16 %v479
  %v2033 = vunpack.c.l.b16 %v480
  %v2034 = vunpack.c.h.b16 %v480
  %v2035 = vunpack.c.l.b16 %v481
  %v2036 = vunpack.c.h.b16 %v481
  %v2037 = vunpack.c.l.b16 %v482
  %v2038 = vunpack.c.h.b16 %v482
  %v2039 = vunpack.c.l.b16 %v483
  %v2040 = vunpack.c.h.b16 %v483
  %v2041 = vunpack.c.l.b16 %v484
  %v2042 = vunpack.c.h.b16 %v484
  %v2043 = vunpack.c.l.b16 %v485
  %v2044 = vunpack.c.h.b16 %v485
  %v2045 = vunpack.c.l.b16 %v486
  %v2046 = vunpack.c.h.b16 %v486
  %v2047 = vunpack.c.l.b16 %v487
  %v2048 = vunpack.c.h.b16 %v487
  %v2049 = vunpack.c.l.b16 %v488
  %v2050 = vunpack.c.h.b16 %v488
  %v2051 = vunpack.c.l.b16 %v489
  %v2052 = vunpack.c.h.b16 %v489
  %v2053 = vunpack.c.l.b16 %v490
  %v2054 = vunpack.c.h.b16 %v490
  %v2055 = vunpack.c.l.b16 %v491
  %v2056 = vunpack.c.h.b16 %v491
  %v2057 = vunpack.c.l.b16 %v492
  %v2058 = vunpack.c.h.b16 %v492
  %v2059 = vunpack.c.l.b16 %v493
  %v2060 = vunpack.c.h.b16 %v493
  %v2061 = vunpack.c.l.b16 %v494
  %v2062 = vunpack.c.h.b16 %v494
  %v2063 = vunpack.c.l.b16 %v495
  %v2064 = vunpack.c.h.b16 %v495
  %v2065 = vunpack.c.l.b16 %v496
  %v2066 = vunpack.c.h.b16 %v496
  %v2067 = vunpack.c.l.b16 %v497
  %v2068 = vunpack.c.h.b16 %v497
  %v2069 = vunpack.c.l.b16 %v498
  %v2070 = vunpack.c.h.b16 %v498
  %v2071 = vunpack.c.l.b16 %v499
  %v2072 = vunpack.c.h.b16 %v499
  %v2073 = vunpack.c.l.b16 %v500
  %v2074 = vunpack.c.h.b16 %v500
  %v2075 = vunpack.c.l.b16 %v501
  %v2076 = vunpack.c.h.b16 %v501
  %v2077 = vunpack.c.l.b16 %v502
  %v2078 = vunpack.c.h.b16 %v502
  %v2079 = vunpack.c.l.b16 %v503
  %v2080 = vunpack.c.h.b16 %v503
  %v2081 = vunpack.c.l.b16 %v504
  %v2082 = vunpack.c.h.b16 %v504
  %v2083 = vunpack.c.l.b16 %v505
  %v2084 = vunpack.c.h.b16 %v505
  %v2085 = vunpack.c.l.b16 %v506
  %v2086 = vunpack.c.h.b16 %v506
  %v2087 = vunpack.c.l.b16 %v507
  %v2088 = vunpack.c.h.b16 %v507
  %v2089 = vunpack.c.l.b16 %v508
  %v2090 = vunpack.c.h.b16 %v508
  %v2091 = vunpack.c.l.b16 %v509
  %v2092 = vunpack.c.h.b16 %v509
  %v2093 = vunpack.c.l.b16 %v510
  %v2094 = vunpack.c.h.b16 %v510
  %v2095 = vunpack.c.l.b16 %v511
  %v2096 = vunpack.c.h.b16 %v511
  %v2097 = vunpack.c.l.b16 %v512
  %v2098 = vunpack.c.h.b16 %v512
  %v2099 = vunpack.c.l.b16 %v513
  %v2100 = vunpack.c.h.b16 %v513
  %v2101 = vunpack.c.l.b16 %v514
  %v2102 = vunpack.c.h.b16 %v514
  %v2103 = vunpack.c.l.b16 %v515
  %v2104 = vunpack.c.h.b16 %v515
  %v2105 = vunpack.c.l.b16 %v516
  %v2106 = vunpack.c.h.b16 %v516
  %v2107 = vunpack.c.l.b16 %v517
  %v2108 = vunpack.c.h.b16 %v517
  %v2109 = vunpack.c.l.b16 %v518
  %v2110 = vunpack.c.h.b16 %v518
  %v2111 = vunpack.c.l.b16 %v519
  %v2112 = vunpack.c.h.b16 %v519
  %v2113 = vunpack.c.l.b16 %v520
  %v2114 = vunpack.c.h.b16 %v520
  %v2115 = vunpack.c.l.b16 %v521
  %v2116 = vunpack.c.h.b16 %v521
  %v2117 = vunpack.c.l.b16 %v522
  %v2118 = vunpack.c.h.b16 %v522
  %v2119 = vunpack.c.l.b16 %v523
  %v2120 = vunpack.c.h.b16 %v523
  %v2121 = vunpack.c.l.b16 %v524
  %v2122 = vunpack.c.h.b16 %v524
  %v2123 = vunpack.c.l.b16 %v525
  %v2124 = vunpack.c.h.b16 %v525
  %v2125 = vunpack.c.l.b16 %v526
  %v2126 = vunpack.c.h.b16 %v526
  %v2127 = vunpack.c.l.b16 %v527
  %v2128 = vunpack.c.h.b16 %v527
  %v2129 = vunpack.c.l.b16 %v528
  %v2130 = vunpack.c.h.b16 %v528
  %v2131 = vunpack.c.l.b16 %v529
  %v2132 = vunpack.c.h.b16 %v529
  %v2133 = vunpack.c.l.b16 %v530
  %v2134 = vunpack.c.h.b16 %v530
  %v2135 = vunpack.c.l.b16 %v531
  %v2136 = vunpack.c.h.b16 %v531
  %v2137 = vunpack.c.l.b16 %v532
  %v2138 = vunpack.c.h.b16 %v532
  %v2139 = vunpack.c.l.b16 %v533
  %v2140 = vunpack.c.h.b16 %v533
  %v2141 = vunpack.c.l.b16 %v534
  %v2142 = vunpack.c.h.b16 %v534
  %v2143 = vunpack.c.l.b16 %v535
  %v2144 = vunpack.c.h.b16 %v535
  %v2145 = vunpack.c.l.b16 %v536
  %v2146 = vunpack.c.h.b16 %v536
  %v2147 = vunpack.c.l.b16 %v537
  %v2148 = vunpack.c.h.b16 %v537
  %v2149 = vunpack.c.l.b16 %v538
  %v2150 = vunpack.c.h.b16 %v538
  %v2151 = vunpack.c.l.b16 %v539
  %v2152 = vunpack.c.h.b16 %v539
  %v2153 = vunpack.c.l.b16 %v540
  %v2154 = vunpack.c.h.b16 %v540
  %v2155 = vpack.c.b16 %v1135, %v1131
  %v2156 = vpack.c.b16 %v1136, %v1132
  %v2157 = vpack.c.b16 %v1137, %v1133
  %v2158 = vpack.c.b16 %v1138, %v1134
  %v2159 = vpack.c.b16 %v1143, %v1139
  %v2160 = vpack.c.b16 %v1144, %v1140
  %v2161 = vpack.c.b16 %v1145, %v1141
  %v2162 = vpack.c.b16 %v1146, %v1142
  %v2163 = vpack.c.b16 %v1151, %v1147
  %v2164 = vpack.c.b16 %v1152, %v1148
  %v2165 = vpack.c.b16 %v1153, %v1149
  %v2166 = vpack.c.b16 %v1154, %v1150
  %v2167 = vpack.c.b16 %v1159, %v1155
  %v2168 = vpack.c.b16 %v1160, %v1156
  %v2169 = vpack.c.b16 %v1161, %v1157
  %v2170 = vpack.c.b16 %v1162, %v1158
  %v2171 = vpack.c.b16 %v1167, %v1163
  %v2172 = vpack.c.b16 %v1168, %v1164
  %v2173 = vpack.c.b16 %v1169, %v1165
  %v2174 = vpack.c.b16 %v1170, %v1166
  %v2175 = vpack.c.b16 %v1175, %v1171
  %v2176 = vpack.c.b16 %v1176, %v1172
  %v2177 = vpack.c.b16 %v1177, %v1173
  %v2178 = vpack.c.b16 %v1178, %v1174
  %v2179 = vpack.c.b16 %v1183, %v1179
  %v2180 = vpack.c.b16 %v1184, %v1180
  %v2181 = vpack.c.b16 %v1185, %v1181
  %v2182 = vpack.c.b16 %v1186, %v1182
  %v2183 = vpack.c.b16 %v1191, %v1187
  %v2184 = vpack.c.b16 %v1192, %v1188
  %v2185 = vpack.c.b16 %v1193, %v1189
  %v2186 = vpack.c.b16 %v1194, %v1190
  %v2187 = vpack.c.b16 %v1199, %v1195
  %v2188 = vpack.c.b16 %v1200, %v1196
  %v2189 = vpack.c.b16 %v1201, %v1197
  %v2190 = vpack.c.b16 %v1202, %v1198
  %v2191 = vpack.c.b16 %v1207, %v1203
  %v2192 = vpack.c.b16 %v1208, %v1204
  %v2193 = vpack.c.b16 %v1209, %v1205
  %v2194 = vpack.c.b16 %v1210, %v1206
  %v2195 = vpack.c.b16 %v1215, %v1211
  %v2196 = vpack.c.b16 %v1216, %v1212
  %v2197 = vpack.c.b16 %v1217, %v1213
  %v2198 = vpack.c.b16 %v1218, %v1214
  %v2199 = vpack.c.b16 %v1223, %v1219
  %v2200 = vpack.c.b16 %v1224, %v1220
  %v2201 = vpack.c.b16 %v1225, %v1221
  %v2202 = vpack.c.b16 %v1226, %v1222
  %v2203 = vpack.c.b16 %v1231, %v1227
  %v2204 = vpack.c.b16 %v1232, %v1228
  %v2205 = vpack.c.b16 %v1233, %v1229
  %v2206 = vpack.c.b16 %v1234, %v1230
  %v2207 = vpack.c.b16 %v1239, %v1235
  %v2208 = vpack.c.b16 %v1240, %v1236
  %v2209 = vpack.c.b16 %v1241, %v1237
  %v2210 = vpack.c.b16 %v1242, %v1238
  %v2211 = vpack.c.b16 %v1247, %v1243
  %v2212 = vpack.c.b16 %v1248, %v1244
  %v2213 = vpack.c.b16 %v1249, %v1245
  %v2214 = vpack.c.b16 %v1250, %v1246
  %v2215 = vpack.c.b16 %v1255, %v1251
  %v2216 = vpack.c.b16 %v1256, %v1252
  %v2217 = vpack.c.b16 %v1257, %v1253
  %v2218 = vpack.c.b16 %v1258, %v1254
  %v2219 = vpack.c.b16 %v1263, %v1259
  %v2220 = vpack.c.b16 %v1264, %v1260
  %v2221 = vpack.c.b16 %v1265, %v1261
  %v2222 = vpack.c.b16 %v1266, %v1262
  %v2223 = vpack.c.b16 %v1271, %v1267
  %v2224 = vpack.c.b16 %v1272, %v1268
  %v2225 = vpack.c.b16 %v1273, %v1269
  %v2226 = vpack.c.b16 %v1274, %v1270
  %v2227 = vpack.c.b16 %v1279, %v1275
  %v2228 = vpack.c.b16 %v1280, %v1276
  %v2229 = vpack.c.b16 %v1281, %v1277
  %v2230 = vpack.c.b16 %v1282, %v1278
  %v2231 = vpack.c.b16 %v1287, %v1283
  %v2232 = vpack.c.b16 %v1288, %v1284
  %v2233 = vpack.c.b16 %v1289, %v1285
  %v2234 = vpack.c.b16 %v1290, %v1286
  %v2235 = vpack.c.b16 %v1295, %v1291
  %v2236 = vpack.c.b16 %v1296, %v1292
  %v2237 = vpack.c.b16 %v1297, %v1293
  %v2238 = vpack.c.b16 %v1298, %v1294
  %v2239 = vpack.c.b16 %v1303, %v1299
  %v2240 = vpack.c.b16 %v1304, %v1300
  %v2241 = vpack.c.b16 %v1305, %v1301
  %v2242 = vpack.c.b16 %v1306, %v1302
  %v2243 = vpack.c.b16 %v1311, %v1307
  %v2244 = vpack.c.b16 %v1312, %v1308
  %v2245 = vpack.c.b16 %v1313, %v1309
  %v2246 = vpack.c.b16 %v1314, %v1310
  %v2247 = vpack.c.b16 %v1319, %v1315
  %v2248 = vpack.c.b16 %v1320, %v1316
  %v2249 = vpack.c.b16 %v1321, %v1317
  %v2250 = vpack.c.b16 %v1322, %v1318
  %v2251 = vpack.c.b16 %v1327, %v1323
  %v2252 = vpack.c.b16 %v1328, %v1324
  %v2253 = vpack.c.b16 %v1329, %v1325
  %v2254 = vpack.c.b16 %v1330, %v1326
  %v2255 = vpack.c.b16 %v1335, %v1331
  %v2256 = vpack.c.b16 %v1336, %v1332
  %v2257 = vpack.c.b16 %v1337, %v1333
  %v2258 = vpack.c.b16 %v1338, %v1334
  %v2259 = vpack.c.b16 %v1343, %v1339
  %v2260 = vpack.c.b16 %v1344, %v1340
  %v2261 = vpack.c.b16 %v1345, %v1341
  %v2262 = vpack.c.b16 %v1346, %v1342
  %v2263 = vpack.c.b16 %v1351, %v1347
  %v2264 = vpack.c.b16 %v1352, %v1348
  %v2265 = vpack.c.b16 %v1353, %v1349
  %v2266 = vpack.c.b16 %v1354, %v1350
  %v2267 = vpack.c.b16 %v1359, %v1355
  %v2268 = vpack.c.b16 %v1360, %v1356
  %v2269 = vpack.c.b16 %v1361, %v1357
  %v2270 = vpack.c.b16 %v1362, %v1358
  %v2271 = vpack.c.b16 %v1367, %v1363
  %v2272 = vpack.c.b16 %v1368, %v1364
  %v2273 = vpack.c.b16 %v1369, %v1365
  %v2274 = vpack.c.b16 %v1370, %v1366
  %v2275 = vpack.c.b16 %v1375, %v1371
  %v2276 = vpack.c.b16 %v1376, %v1372
  %v2277 = vpack.c.b16 %v1377, %v1373
  %v2278 = vpack.c.b16 %v1378, %v1374
  %v2279 = vpack.c.b16 %v1383, %v1379
  %v2280 = vpack.c.b16 %v1384, %v1380
  %v2281 = vpack.c.b16 %v1385, %v1381
  %v2282 = vpack.c.b16 %v1386, %v1382
  %v2283 = vpack.c.b16 %v1391, %v1387
  %v2284 = vpack.c.b16 %v1392, %v1388
  %v2285 = vpack.c.b16 %v1393, %v1389
  %v2286 = vpack.c.b16 %v1394, %v1390
  %v2287 = vpack.c.b16 %v1399, %v1395
  %v2288 = vpack.c.b16 %v1400, %v1396
  %v2289 = vpack.c.b16 %v1401, %v1397
  %v2290 = vpack.c.b16 %v1402, %v1398
  %v2291 = vpack.c.b16 %v1407, %v1403
  %v2292 = vpack.c.b16 %v1408, %v1404
  %v2293 = vpack.c.b16 %v1409, %v1405
  %v2294 = vpack.c.b16 %v1410, %v1406
  %v2295 = vpack.c.b16 %v1415, %v1411
  %v2296 = vpack.c.b16 %v1416, %v1412
  %v2297 = vpack.c.b16 %v1417, %v1413
  %v2298 = vpack.c.b16 %v1418, %v1414
  %v2299 = vpack.c.b16 %v1423, %v1419
  %v2300 = vpack.c.b16 %v1424, %v1420
  %v2301 = vpack.c.b16 %v1425, %v1421
  %v2302 = vpack.c.b16 %v1426, %v1422
  %v2303 = vpack.c.b16 %v1431, %v1427
  %v2304 = vpack.c.b16 %v1432, %v1428
  %v2305 = vpack.c.b16 %v1433, %v1429
  %v2306 = vpack.c.b16 %v1434, %v1430
  %v2307 = vpack.c.b16 %v1439, %v1435
  %v2308 = vpack.c.b16 %v1440, %v1436
  %v2309 = vpack.c.b16 %v1441, %v1437
  %v2310 = vpack.c.b16 %v1442, %v1438
  %v2311 = vpack.c.b16 %v1447, %v1443
  %v2312 = vpack.c.b16 %v1448, %v1444
  %v2313 = vpack.c.b16 %v1449, %v1445
  %v2314 = vpack.c.b16 %v1450, %v1446
  %v2315 = vpack.c.b16 %v1455, %v1451
  %v2316 = vpack.c.b16 %v1456, %v1452
  %v2317 = vpack.c.b16 %v1457, %v1453
  %v2318 = vpack.c.b16 %v1458, %v1454
  %v2319 = vpack.c.b16 %v1463, %v1459
  %v2320 = vpack.c.b16 %v1464, %v1460
  %v2321 = vpack.c.b16 %v1465, %v1461
  %v2322 = vpack.c.b16 %v1466, %v1462
  %v2323 = vpack.c.b16 %v1471, %v1467
  %v2324 = vpack.c.b16 %v1472, %v1468
  %v2325 = vpack.c.b16 %v1473, %v1469
  %v2326 = vpack.c.b16 %v1474, %v1470
  %v2327 = vpack.c.b16 %v1479, %v1475
  %v2328 = vpack.c.b16 %v1480, %v1476
  %v2329 = vpack.c.b16 %v1481, %v1477
  %v2330 = vpack.c.b16 %v1482, %v1478
  %v2331 = vpack.c.b16 %v1487, %v1483
  %v2332 = vpack.c.b16 %v1488, %v1484
  %v2333 = vpack.c.b16 %v1489, %v1485
  %v2334 = vpack.c.b16 %v1490, %v1486
  %v2335 = vpack.c.b16 %v1495, %v1491
  %v2336 = vpack.c.b16 %v1496, %v1492
  %v2337 = vpack.c.b16 %v1497, %v1493
  %v2338 = vpack.c.b16 %v1498, %v1494
  %v2339 = vpack.c.b16 %v1503, %v1499
  %v2340 = vpack.c.b16 %v1504, %v1500
  %v2341 = vpack.c.b16 %v1505, %v1501
  %v2342 = vpack.c.b16 %v1506, %v1502
  %v2343 = vpack.c.b16 %v1511, %v1507
  %v2344 = vpack.c.b16 %v1512, %v1508
  %v2345 = vpack.c.b16 %v1513, %v1509
  %v2346 = vpack.c.b16 %v1514, %v1510
  %v2347 = vpack.c.b16 %v1519, %v1515
  %v2348 = vpack.c.b16 %v1520, %v1516
  %v2349 = vpack.c.b16 %v1521, %v1517
  %v2350 = vpack.c.b16 %v1522, %v1518
  %v2351 = vpack.c.b16 %v1527, %v1523
  %v2352 = vpack.c.b16 %v1528, %v1524
  %v2353 = vpack.c.b16 %v1529, %v1525
  %v2354 = vpack.c.b16 %v1530, %v1526
  %v2355 = vpack.c.b16 %v1535, %v1531
  %v2356 = vpack.c.b16 %v1536, %v1532
  %v2357 = vpack.c.b16 %v1537, %v1533
  %v2358 = vpack.c.b16 %v1538, %v1534
  %v2359 = vpack.c.b16 %v1543, %v1539
  %v2360 = vpack.c.b16 %v1544, %v1540
  %v2361 = vpack.c.b16 %v1545, %v1541
  %v2362 = vpack.c.b16 %v1546, %v1542
  %v2363 = vpack.c.b16 %v1551, %v1547
  %v2364 = vpack.c.b16 %v1552, %v1548
  %v2365 = vpack.c.b16 %v1553, %v1549
  %v2366 = vpack.c.b16 %v1554, %v1550
  %v2367 = vpack.c.b16 %v1559, %v1555
  %v2368 = vpack.c.b16 %v1560, %v1556
  %v2369 = vpack.c.b16 %v1561, %v1557
  %v2370 = vpack.c.b16 %v1562, %v1558
  %v2371 = vpack.c.b16 %v1567, %v1563
  %v2372 = vpack.c.b16 %v1568, %v1564
  %v2373 = vpack.c.b16 %v1569, %v1565
  %v2374 = vpack.c.b16 %v1570, %v1566
  %v2375 = vpack.c.b16 %v1575, %v1571
  %v2376 = vpack.c.b16 %v1576, %v1572
  %v2377 = vpack.c.b16 %v1577, %v1573
  %v2378 = vpack.c.b16 %v1578, %v1574
  %v2379 = vpack.c.b16 %v1583, %v1579
  %v2380 = vpack.c.b16 %v1584, %v1580
  %v2381 = vpack.c.b16 %v1585, %v1581
  %v2382 = vpack.c.b16 %v1586, %v1582
  %v2383 = vpack.c.b16 %v1591, %v1587
  %v2384 = vpack.c.b16 %v1592, %v1588
  %v2385 = vpack.c.b16 %v1593, %v1589
  %v2386 = vpack.c.b16 %v1594, %v1590
  %v2387 = vpack.c.b16 %v1599, %v1595
  %v2388 = vpack.c.b16 %v1600, %v1596
  %v2389 = vpack.c.b16 %v1601, %v1597
  %v2390 = vpack.c.b16 %v1602, %v1598
  %v2391 = vpack.c.b16 %v1607, %v1603
  %v2392 = vpack.c.b16 %v1608, %v1604
  %v2393 = vpack.c.b16 %v1609, %v1605
  %v2394 = vpack.c.b16 %v1610, %v1606
  %v2395 = vpack.c.b16 %v1615, %v1611
  %v2396 = vpack.c.b16 %v1616, %v1612
  %v2397 = vpack.c.b16 %v1617, %v1613
  %v2398 = vpack.c.b16 %v1618, %v1614
  %v2399 = vpack.c.b16 %v1623, %v1619
  %v2400 = vpack.c.b16 %v1624, %v1620
  %v2401 = vpack.c.b16 %v1625, %v1621
  %v2402 = vpack.c.b16 %v1626, %v1622
  %v2403 = vpack.c.b16 %v1631, %v1627
  %v2404 = vpack.c.b16 %v1632, %v1628
  %v2405 = vpack.c.b16 %v1633, %v1629
  %v2406 = vpack.c.b16 %v1634, %v1630
  %v2407 = vpack.c.b16 %v1639, %v1635
  %v2408 = vpack.c.b16 %v1640, %v1636
  %v2409 = vpack.c.b16 %v1641, %v1637
  %v2410 = vpack.c.b16 %v1642, %v1638
  %v2411 = vpack.c.b16 %v1647, %v1643
  %v2412 = vpack.c.b16 %v1648, %v1644
  %v2413 = vpack.c.b16 %v1649, %v1645
  %v2414 = vpack.c.b16 %v1650, %v1646
  %v2415 = vpack.c.b16 %v1655, %v1651
  %v2416 = vpack.c.b16 %v1656, %v1652
  %v2417 = vpack.c.b16 %v1657, %v1653
  %v2418 = vpack.c.b16 %v1658, %v1654
  %v2419 = vpack.c.b16 %v1663, %v1659
  %v2420 = vpack.c.b16 %v1664, %v1660
  %v2421 = vpack.c.b16 %v1665, %v1661
  %v2422 = vpack.c.b16 %v1666, %v1662
  %v2423 = vpack.c.b16 %v1671, %v1667
  %v2424 = vpack.c.b16 %v1672, %v1668
  %v2425 = vpack.c.b16 %v1673, %v1669
  %v2426 = vpack.c.b16 %v1674, %v1670
  %v2427 = vpack.c.b16 %v1679, %v1675
  %v2428 = vpack.c.b16 %v1680, %v1676
  %v2429 = vpack.c.b16 %v1681, %v1677
  %v2430 = vpack.c.b16 %v1682, %v1678
  %v2431 = vpack.c.b16 %v1687, %v1683
  %v2432 = vpack.c.b16 %v1688, %v1684
  %v2433 = vpack.c.b16 %v1689, %v1685
  %v2434 = vpack.c.b16 %v1690, %v1686
  %v2435 = vpack.c.b16 %v1695, %v1691
  %v2436 = vpack.c.b16 %v1696, %v1692
  %v2437 = vpack.c.b16 %v1697, %v1693
  %v2438 = vpack.c.b16 %v1698, %v1694
  %v2439 = vpack.c.b16 %v1703, %v1699
  %v2440 = vpack.c.b16 %v1704, %v1700
  %v2441 = vpack.c.b16 %v1705, %v1701
  %v2442 = vpack.c.b16 %v1706, %v1702
  %v2443 = vpack.c.b16 %v1711, %v1707
  %v2444 = vpack.c.b16 %v1712, %v1708
  %v2445 = vpack.c.b16 %v1713, %v1709
  %v2446 = vpack.c.b16 %v1714, %v1710
  %v2447 = vpack.c.b16 %v1719, %v1715
  %v2448 = vpack.c.b16 %v1720, %v1716
  %v2449 = vpack.c.b16 %v1721, %v1717
  %v2450 = vpack.c.b16 %v1722, %v1718
  %v2451 = vpack.c.b16 %v1727, %v1723
  %v2452 = vpack.c.b16 %v1728, %v1724
  %v2453 = vpack.c.b16 %v1729, %v1725
  %v2454 = vpack.c.b16 %v1730, %v1726
  %v2455 = vpack.c.b16 %v1735, %v1731
  %v2456 = vpack.c.b16 %v1736, %v1732
  %v2457 = vpack.c.b16 %v1737, %v1733
  %v2458 = vpack.c.b16 %v1738, %v1734
  %v2459 = vpack.c.b16 %v1743, %v1739
  %v2460 = vpack.c.b16 %v1744, %v1740
  %v2461 = vpack.c.b16 %v1745, %v1741
  %v2462 = vpack.c.b16 %v1746, %v1742
  %v2463 = vpack.c.b16 %v1751, %v1747
  %v2464 = vpack.c.b16 %v1752, %v1748
  %v2465 = vpack.c.b16 %v1753, %v1749
  %v2466 = vpack.c.b16 %v1754, %v1750
  %v2467 = vpack.c.b16 %v1759, %v1755
  %v2468 = vpack.c.b16 %v1760, %v1756
  %v2469 = vpack.c.b16 %v1761, %v1757
  %v2470 = vpack.c.b16 %v1762, %v1758
  %v2471 = vpack.c.b16 %v1767, %v1763
  %v2472 = vpack.c.b16 %v1768, %v1764
  %v2473 = vpack.c.b16 %v1769, %v1765
  %v2474 = vpack.c.b16 %v1770, %v1766
  %v2475 = vpack.c.b16 %v1775, %v1771
  %v2476 = vpack.c.b16 %v1776, %v1772
  %v2477 = vpack.c.b16 %v1777, %v1773
  %v2478 = vpack.c.b16 %v1778, %v1774
  %v2479 = vpack.c.b16 %v1783, %v1779
  %v2480 = vpack.c.b16 %v1784, %v1780
  %v2481 = vpack.c.b16 %v1785, %v1781
  %v2482 = vpack.c.b16 %v1786, %v1782
  %v2483 = vpack.c.b16 %v1791, %v1787
  %v2484 = vpack.c.b16 %v1792, %v1788
  %v2485 = vpack.c.b16 %v1793, %v1789
  %v2486 = vpack.c.b16 %v1794, %v1790
  %v2487 = vpack.c.b16 %v1799, %v1795
  %v2488 = vpack.c.b16 %v1800, %v1796
  %v2489 = vpack.c.b16 %v1801, %v1797
  %v2490 = vpack.c.b16 %v1802, %v1798
  %v2491 = vpack.c.b16 %v1807, %v1803
  %v2492 = vpack.c.b16 %v1808, %v1804
  %v2493 = vpack.c.b16 %v1809, %v1805
  %v2494 = vpack.c.b16 %v1810, %v1806
  %v2495 = vpack.c.b16 %v1815, %v1811
  %v2496 = vpack.c.b16 %v1816, %v1812
  %v2497 = vpack.c.b16 %v1817, %v1813
  %v2498 = vpack.c.b16 %v1818, %v1814
  %v2499 = vpack.c.b16 %v1823, %v1819
  %v2500 = vpack.c.b16 %v1824, %v1820
  %v2501 = vpack.c.b16 %v1825, %v1821
  %v2502 = vpack.c.b16 %v1826, %v1822
  %v2503 = vpack.c.b16 %v1831, %v1827
  %v2504 = vpack.c.b16 %v1832, %v1828
  %v2505 = vpack.c.b16 %v1833, %v1829
  %v2506 = vpack.c.b16 %v1834, %v1830
  %v2507 = vpack.c.b16 %v1839, %v1835
  %v2508 = vpack.c.b16 %v1840, %v1836
  %v2509 = vpack.c.b16 %v1841, %v1837
  %v2510 = vpack.c.b16 %v1842, %v1838
  %v2511 = vpack.c.b16 %v1847, %v1843
  %v2512 = vpack.c.b16 %v1848, %v1844
  %v2513 = vpack.c.b16 %v1849, %v1845
  %v2514 = vpack.c.b16 %v1850, %v1846
  %v2515 = vpack.c.b16 %v1855, %v1851
  %v2516 = vpack.c.b16 %v1856, %v1852
  %v2517 = vpack.c.b16 %v1857, %v1853
  %v2518 = vpack.c.b16 %v1858, %v1854
  %v2519 = vpack.c.b16 %v1863, %v1859
  %v2520 = vpack.c.b16 %v1864, %v1860
  %v2521 = vpack.c.b16 %v1865, %v1861
  %v2522 = vpack.c.b16 %v1866, %v1862
  %v2523 = vpack.c.b16 %v1871, %v1867
  %v2524 = vpack.c.b16 %v1872, %v1868
  %v2525 = vpack.c.b16 %v1873, %v1869
  %v2526 = vpack.c.b16 %v1874, %v1870
  %v2527 = vpack.c.b16 %v1879, %v1875
  %v2528 = vpack.c.b16 %v1880, %v1876
  %v2529 = vpack.c.b16 %v1881, %v1877
  %v2530 = vpack.c.b16 %v1882, %v1878
  %v2531 = vpack.c.b16 %v1887, %v1883
  %v2532 = vpack.c.b16 %v1888, %v1884
  %v2533 = vpack.c.b16 %v1889, %v1885
  %v2534 = vpack.c.b16 %v1890, %v1886
  %v2535 = vpack.c.b16 %v1895, %v1891
  %v2536 = vpack.c.b16 %v1896, %v1892
  %v2537 = vpack.c.b16 %v1897, %v1893
  %v2538 = vpack.c.b16 %v1898, %v1894
  %v2539 = vpack.c.b16 %v1903, %v1899
  %v2540 = vpack.c.b16 %v1904, %v1900
  %v2541 = vpack.c.b16 %v1905, %v1901
  %v2542 = vpack.c.b16 %v1906, %v1902
  %v2543 = vpack.c.b16 %v1911, %v1907
  %v2544 = vpack.c.b16 %v1912, %v1908
  %v2545 = vpack.c.b16 %v1913, %v1909
  %v2546 = vpack.c.b16 %v1914, %v1910
  %v2547 = vpack.c.b16 %v1919, %v1915
  %v2548 = vpack.c.b16 %v1920, %v1916
  %v2549 = vpack.c.b16 %v1921, %v1917
  %v2550 = vpack.c.b16 %v1922, %v1918
  %v2551 = vpack.c.b16 %v1927, %v1923
  %v2552 = vpack.c.b16 %v1928, %v1924
  %v2553 = vpack.c.b16 %v1929, %v1925
  %v2554 = vpack.c.b16 %v1930, %v1926
  %v2555 = vpack.c.b16 %v1935, %v1931
  %v2556 = vpack.c.b16 %v1936, %v1932
  %v2557 = vpack.c.b16 %v1937, %v1933
  %v2558 = vpack.c.b16 %v1938, %v1934
  %v2559 = vpack.c.b16 %v1943, %v1939
  %v2560 = vpack.c.b16 %v1944, %v1940
  %v2561 = vpack.c.b16 %v1945, %v1941
  %v2562 = vpack.c.b16 %v1946, %v1942
  %v2563 = vpack.c.b16 %v1951, %v1947
  %v2564 = vpack.c.b16 %v1952, %v1948
  %v2565 = vpack.c.b16 %v1953, %v1949
  %v2566 = vpack.c.b16 %v1954, %v1950
  %v2567 = vpack.c.b16 %v1959, %v1955
  %v2568 = vpack.c.b16 %v1960, %v1956
  %v2569 = vpack.c.b16 %v1961, %v1957
  %v2570 = vpack.c.b16 %v1962, %v1958
  %v2571 = vpack.c.b16 %v1967, %v1963
  %v2572 = vpack.c.b16 %v1968, %v1964
  %v2573 = vpack.c.b16 %v1969, %v1965
  %v2574 = vpack.c.b16 %v1970, %v1966
  %v2575 = vpack.c.b16 %v1975, %v1971
  %v2576 = vpack.c.b16 %v1976, %v1972
  %v2577 = vpack.c.b16 %v1977, %v1973
  %v2578 = vpack.c.b16 %v1978, %v1974
  %v2579 = vpack.c.b16 %v1983, %v1979
  %v2580 = vpack.c.b16 %v1984, %v1980
  %v2581 = vpack.c.b16 %v1985, %v1981
  %v2582 = vpack.c.b16 %v1986, %v1982
  %v2583 = vpack.c.b16 %v1991, %v1987
  %v2584 = vpack.c.b16 %v1992, %v1988
  %v2585 = vpack.c.b16 %v1993, %v1989
  %v2586 = vpack.c.b16 %v1994, %v1990
  %v2587 = vpack.c.b16 %v1999, %v1995
  %v2588 = vpack.c.b16 %v2000, %v1996
  %v2589 = vpack.c.b16 %v2001, %v1997
  %v2590 = vpack.c.b16 %v2002, %v1998
  %v2591 = vpack.c.b16 %v2007, %v2003
  %v2592 = vpack.c.b16 %v2008, %v2004
  %v2593 = vpack.c.b16 %v2009, %v2005
  %v2594 = vpack.c.b16 %v2010, %v2006
  %v2595 = vpack.c.b16 %v2015, %v2011
  %v2596 = vpack.c.b16 %v2016, %v2012
  %v2597 = vpack.c.b16 %v2017, %v2013
  %v2598 = vpack.c.b16 %v2018, %v2014
  %v2599 = vpack.c.b16 %v2023, %v2019
  %v2600 = vpack.c.b16 %v2024, %v2020
  %v2601 = vpack.c.b16 %v2025, %v2021
  %v2602 = vpack.c.b16 %v2026, %v2022
  %v2603 = vpack.c.b16 %v2031, %v2027
  %v2604 = vpack.c.b16 %v2032, %v2028
  %v2605 = vpack.c.b16 %v2033, %v2029
  %v2606 = vpack.c.b16 %v2034, %v2030
  %v2607 = vpack.c.b16 %v2039, %v2035
  %v2608 = vpack.c.b16 %v2040, %v2036
  %v2609 = vpack.c.b16 %v2041, %v2037
  %v2610 = vpack.c.b16 %v2042, %v2038
  %v2611 = vpack.c.b16 %v2047, %v2043
  %v2612 = vpack.c.b16 %v2048, %v2044
  %v2613 = vpack.c.b16 %v2049, %v2045
  %v2614 = vpack.c.b16 %v2050, %v2046
  %v2615 = vpack.c.b16 %v2055, %v2051
  %v2616 = vpack.c.b16 %v2056, %v2052
  %v2617 = vpack.c.b16 %v2057, %v2053
  %v2618 = vpack.c.b16 %v2058, %v2054
  %v2619 = vpack.c.b16 %v2063, %v2059
  %v2620 = vpack.c.b16 %v2064, %v2060
  %v2621 = vpack.c.b16 %v2065, %v2061
  %v2622 = vpack.c.b16 %v2066, %v2062
  %v2623 = vpack.c.b16 %v2071, %v2067
  %v2624 = vpack.c.b16 %v2072, %v2068
  %v2625 = vpack.c.b16 %v2073, %v2069
  %v2626 = vpack.c.b16 %v2074, %v2070
  %v2627 = vpack.c.b16 %v2079, %v2075
  %v2628 = vpack.c.b16 %v2080, %v2076
  %v2629 = vpack.c.b16 %v2081, %v2077
  %v2630 = vpack.c.b16 %v2082, %v2078
  %v2631 = vpack.c.b16 %v2087, %v2083
  %v2632 = vpack.c.b16 %v2088, %v2084
  %v2633 = vpack.c.b16 %v2089, %v2085
  %v2634 = vpack.c.b16 %v2090, %v2086
  %v2635 = vpack.c.b16 %v2095, %v2091
  %v2636 = vpack.c.b16 %v2096, %v2092
  %v2637 = vpack.c.b16 %v2097, %v2093
  %v2638 = vpack.c.b16 %v2098, %v2094
  %v2639 = vpack.c.b16 %v2103, %v2099
  %v2640 = vpack.c.b16 %v2104, %v2100
  %v2641 = vpack.c.b16 %v2105, %v2101
  %v2642 = vpack.c.b16 %v2106, %v2102
  %v2643 = vpack.c.b16 %v2111, %v2107
  %v2644 = vpack.c.b16 %v2112, %v2108
  %v2645 = vpack.c.b16 %v2113, %v2109
  %v2646 = vpack.c.b16 %v2114, %v2110
  %v2647 = vpack.c.b16 %v2119, %v2115
  %v2648 = vpack.c.b16 %v2120, %v2116
  %v2649 = vpack.c.b16 %v2121, %v2117
  %v2650 = vpack.c.b16 %v2122, %v2118
  %v2651 = vpack.c.b16 %v2127, %v2123
  %v2652 = vpack.c.b16 %v2128, %v2124
  %v2653 = vpack.c.b16 %v2129, %v2125
  %v2654 = vpack.c.b16 %v2130, %v2126
  %v2655 = vpack.c.b16 %v2135, %v2131
  %v2656 = vpack.c.b16 %v2136, %v2132
  %v2657 = vpack.c.b16 %v2137, %v2133
  %v2658 = vpack.c.b16 %v2138, %v2134
  %v2659 = vpack.c.b16 %v2143, %v2139
  %v2660 = vpack.c.b16 %v2144, %v2140
  %v2661 = vpack.c.b16 %v2145, %v2141
  %v2662 = vpack.c.b16 %v2146, %v2142
  %v2663 = vpack.c.b16 %v2151, %v2147
  %v2664 = vpack.c.b16 %v2152, %v2148
  %v2665 = vpack.c.b16 %v2153, %v2149
  %v2666 = vpack.c.b16 %v2154, %v2150
  %3179 = vmatprep.subr.bf16.mxu0 %v2184
  %3180 = vmatpush1.bf16.msra.mxu0 %v2183
  %3181 = vmatprep.subr.bf16.mxu0 %v2180
  %3182 = vmatpush1.bf16.msra.mxu0 %v2179
  %3183 = vmatprep.subr.bf16.mxu0 %v2176
  %3184 = vmatpush1.bf16.msra.mxu0 %v2175
  %3185 = vmatprep.subr.bf16.mxu0 %v2172
  %3186 = vmatpush1.bf16.msra.mxu0 %v2171
  %3187 = vmatprep.subr.bf16.mxu0 %v2168
  %3188 = vmatpush1.bf16.msra.mxu0 %v2167
  %3189 = vmatprep.subr.bf16.mxu0 %v2164
  %3190 = vmatpush1.bf16.msra.mxu0 %v2163
  %3191 = vmatprep.subr.bf16.mxu0 %v2160
  %3192 = vmatpush1.bf16.msra.mxu0 %v2159
  %3193 = vmatprep.subr.bf16.mxu0 %v2156
  %3194 = vmatpush1.bf16.msra.mxu0 %v2155
  %3195 = vmatprep.subr.bf16.mxu0 %v2216
  %3196 = vmatpush2.bf16.msra.mxu0 %v2215
  %3197 = vmatprep.subr.bf16.mxu0 %v2212
  %3198 = vmatpush2.bf16.msra.mxu0 %v2211
  %3199 = vmatprep.subr.bf16.mxu0 %v2208
  %3200 = vmatpush2.bf16.msra.mxu0 %v2207
  %3201 = vmatprep.subr.bf16.mxu0 %v2204
  %3202 = vmatpush2.bf16.msra.mxu0 %v2203
  %3203 = vmatprep.subr.bf16.mxu0 %v2200
  %3204 = vmatpush2.bf16.msra.mxu0 %v2199
  %3205 = vmatprep.subr.bf16.mxu0 %v2196
  %3206 = vmatpush2.bf16.msra.mxu0 %v2195
  %3207 = vmatprep.subr.bf16.mxu0 %v2192
  %3208 = vmatpush2.bf16.msra.mxu0 %v2191
  %3209 = vmatprep.subr.bf16.mxu0 %v2188
  %3210 = vmatpush2.bf16.msra.mxu0 %v2187
  %3211 = vmatprep.mubr.bf16.mxu0 %v588
  %3212 = vmatmul.mubr.bf16.gmra.mxu0 %v587
  %v3213 = vpop.f32.mrf.mxu0
  %v3214 = vadd.f32 %v546, %v3213
  %v3215 = vpop.f32.mrf.mxu0
  %v3216 = vadd.f32 %v550, %v3215
  %v3217 = vpop.f32.mrf.mxu0
  %v3218 = vpop.f32.mrf.mxu0
  %3219 = vdwg.mxu0
  %3220 = vmatprep.subr.bf16.mxu0 %v2248
  %3221 = vmatpush1.bf16.msra.mxu0 %v2247
  %3222 = vmatprep.subr.bf16.mxu0 %v2244
  %3223 = vmatpush1.bf16.msra.mxu0 %v2243
  %3224 = vmatprep.subr.bf16.mxu0 %v2240
  %3225 = vmatpush1.bf16.msra.mxu0 %v2239
  %3226 = vmatprep.subr.bf16.mxu0 %v2236
  %3227 = vmatpush1.bf16.msra.mxu0 %v2235
  %3228 = vmatprep.subr.bf16.mxu0 %v2232
  %3229 = vmatpush1.bf16.msra.mxu0 %v2231
  %3230 = vmatprep.subr.bf16.mxu0 %v2228
  %3231 = vmatpush1.bf16.msra.mxu0 %v2227
  %3232 = vmatprep.subr.bf16.mxu0 %v2224
  %3233 = vmatpush1.bf16.msra.mxu0 %v2223
  %3234 = vmatprep.subr.bf16.mxu0 %v2220
  %3235 = vmatpush1.bf16.msra.mxu0 %v2219
  %3236 = vmatprep.subr.bf16.mxu0 %v2280
  %3237 = vmatpush2.bf16.msra.mxu0 %v2279
  %3238 = vmatprep.subr.bf16.mxu0 %v2276
  %3239 = vmatpush2.bf16.msra.mxu0 %v2275
  %3240 = vmatprep.subr.bf16.mxu0 %v2272
  %3241 = vmatpush2.bf16.msra.mxu0 %v2271
  %3242 = vmatprep.subr.bf16.mxu0 %v2268
  %3243 = vmatpush2.bf16.msra.mxu0 %v2267
  %3244 = vmatprep.subr.bf16.mxu0 %v2264
  %3245 = vmatpush2.bf16.msra.mxu0 %v2263
  %3246 = vmatprep.subr.bf16.mxu0 %v2260
  %3247 = vmatpush2.bf16.msra.mxu0 %v2259
  %3248 = vmatprep.subr.bf16.mxu0 %v2256
  %3249 = vmatpush2.bf16.msra.mxu0 %v2255
  %3250 = vmatprep.subr.bf16.mxu0 %v2252
  %3251 = vmatpush2.bf16.msra.mxu0 %v2251
  %3252 = vmatprep.mubr.bf16.mxu0 %v590
  %3253 = vmatmul.mubr.bf16.gmra.mxu0 %v589
  %v3254 = vpop.f32.mrf.mxu0
  %v3255 = vadd.f32 %v3214, %v3254
  %v3256 = vpop.f32.mrf.mxu0
  %v3257 = vadd.f32 %v3216, %v3256
  %v3258 = vpop.f32.mrf.mxu0
  %v3259 = vpop.f32.mrf.mxu0
  %3260 = vdwg.mxu0
  %3261 = vmatprep.subr.bf16.mxu0 %v2312
  %3262 = vmatpush1.bf16.msra.mxu0 %v2311
  %3263 = vmatprep.subr.bf16.mxu0 %v2308
  %3264 = vmatpush1.bf16.msra.mxu0 %v2307
  %3265 = vmatprep.subr.bf16.mxu0 %v2304
  %3266 = vmatpush1.bf16.msra.mxu0 %v2303
  %3267 = vmatprep.subr.bf16.mxu0 %v2300
  %3268 = vmatpush1.bf16.msra.mxu0 %v2299
  %3269 = vmatprep.subr.bf16.mxu0 %v2296
  %3270 = vmatpush1.bf16.msra.mxu0 %v2295
  %3271 = vmatprep.subr.bf16.mxu0 %v2292
  %3272 = vmatpush1.bf16.msra.mxu0 %v2291
  %3273 = vmatprep.subr.bf16.mxu0 %v2288
  %3274 = vmatpush1.bf16.msra.mxu0 %v2287
  %3275 = vmatprep.subr.bf16.mxu0 %v2284
  %3276 = vmatpush1.bf16.msra.mxu0 %v2283
  %3277 = vmatprep.subr.bf16.mxu0 %v2344
  %3278 = vmatpush2.bf16.msra.mxu0 %v2343
  %3279 = vmatprep.subr.bf16.mxu0 %v2340
  %3280 = vmatpush2.bf16.msra.mxu0 %v2339
  %3281 = vmatprep.subr.bf16.mxu0 %v2336
  %3282 = vmatpush2.bf16.msra.mxu0 %v2335
  %3283 = vmatprep.subr.bf16.mxu0 %v2332
  %3284 = vmatpush2.bf16.msra.mxu0 %v2331
  %3285 = vmatprep.subr.bf16.mxu0 %v2328
  %3286 = vmatpush2.bf16.msra.mxu0 %v2327
  %3287 = vmatprep.subr.bf16.mxu0 %v2324
  %3288 = vmatpush2.bf16.msra.mxu0 %v2323
  %3289 = vmatprep.subr.bf16.mxu0 %v2320
  %3290 = vmatpush2.bf16.msra.mxu0 %v2319
  %3291 = vmatprep.subr.bf16.mxu0 %v2316
  %3292 = vmatpush2.bf16.msra.mxu0 %v2315
  %3293 = vmatprep.mubr.bf16.mxu0 %v592
  %3294 = vmatmul.mubr.bf16.gmra.mxu0 %v591
  %v3295 = vpop.f32.mrf.mxu0
  %v3296 = vadd.f32 %v3255, %v3295
  %v3297 = vpop.f32.mrf.mxu0
  %v3298 = vadd.f32 %v3257, %v3297
  %v3299 = vpop.f32.mrf.mxu0
  %v3300 = vpop.f32.mrf.mxu0
  %3301 = vdwg.mxu0
  %3302 = vmatprep.subr.bf16.mxu0 %v2376
  %3303 = vmatpush1.bf16.msra.mxu0 %v2375
  %3304 = vmatprep.subr.bf16.mxu0 %v2372
  %3305 = vmatpush1.bf16.msra.mxu0 %v2371
  %3306 = vmatprep.subr.bf16.mxu0 %v2368
  %3307 = vmatpush1.bf16.msra.mxu0 %v2367
  %3308 = vmatprep.subr.bf16.mxu0 %v2364
  %3309 = vmatpush1.bf16.msra.mxu0 %v2363
  %3310 = vmatprep.subr.bf16.mxu0 %v2360
  %3311 = vmatpush1.bf16.msra.mxu0 %v2359
  %3312 = vmatprep.subr.bf16.mxu0 %v2356
  %3313 = vmatpush1.bf16.msra.mxu0 %v2355
  %3314 = vmatprep.subr.bf16.mxu0 %v2352
  %3315 = vmatpush1.bf16.msra.mxu0 %v2351
  %3316 = vmatprep.subr.bf16.mxu0 %v2348
  %3317 = vmatpush1.bf16.msra.mxu0 %v2347
  %3318 = vmatprep.subr.bf16.mxu0 %v2408
  %3319 = vmatpush2.bf16.msra.mxu0 %v2407
  %3320 = vmatprep.subr.bf16.mxu0 %v2404
  %3321 = vmatpush2.bf16.msra.mxu0 %v2403
  %3322 = vmatprep.subr.bf16.mxu0 %v2400
  %3323 = vmatpush2.bf16.msra.mxu0 %v2399
  %3324 = vmatprep.subr.bf16.mxu0 %v2396
  %3325 = vmatpush2.bf16.msra.mxu0 %v2395
  %3326 = vmatprep.subr.bf16.mxu0 %v2392
  %3327 = vmatpush2.bf16.msra.mxu0 %v2391
  %3328 = vmatprep.subr.bf16.mxu0 %v2388
  %3329 = vmatpush2.bf16.msra.mxu0 %v2387
  %3330 = vmatprep.subr.bf16.mxu0 %v2384
  %3331 = vmatpush2.bf16.msra.mxu0 %v2383
  %3332 = vmatprep.subr.bf16.mxu0 %v2380
  %3333 = vmatpush2.bf16.msra.mxu0 %v2379
  %3334 = vmatprep.mubr.bf16.mxu0 %v594
  %3335 = vmatmul.mubr.bf16.gmra.mxu0 %v593
  %v3336 = vpop.f32.mrf.mxu0
  %v3337 = vadd.f32 %v3296, %v3336
  %v3338 = vpop.f32.mrf.mxu0
  %v3339 = vadd.f32 %v3298, %v3338
  %v3340 = vpop.f32.mrf.mxu0
  %v3341 = vpop.f32.mrf.mxu0
  %3342 = vdwg.mxu0
  %3343 = vmatprep.subr.bf16.mxu0 %v2440
  %3344 = vmatpush1.bf16.msra.mxu0 %v2439
  %3345 = vmatprep.subr.bf16.mxu0 %v2436
  %3346 = vmatpush1.bf16.msra.mxu0 %v2435
  %3347 = vmatprep.subr.bf16.mxu0 %v2432
  %3348 = vmatpush1.bf16.msra.mxu0 %v2431
  %3349 = vmatprep.subr.bf16.mxu0 %v2428
  %3350 = vmatpush1.bf16.msra.mxu0 %v2427
  %3351 = vmatprep.subr.bf16.mxu0 %v2424
  %3352 = vmatpush1.bf16.msra.mxu0 %v2423
  %3353 = vmatprep.subr.bf16.mxu0 %v2420
  %3354 = vmatpush1.bf16.msra.mxu0 %v2419
  %3355 = vmatprep.subr.bf16.mxu0 %v2416
  %3356 = vmatpush1.bf16.msra.mxu0 %v2415
  %3357 = vmatprep.subr.bf16.mxu0 %v2412
  %3358 = vmatpush1.bf16.msra.mxu0 %v2411
  %3359 = vmatprep.subr.bf16.mxu0 %v2472
  %3360 = vmatpush2.bf16.msra.mxu0 %v2471
  %3361 = vmatprep.subr.bf16.mxu0 %v2468
  %3362 = vmatpush2.bf16.msra.mxu0 %v2467
  %3363 = vmatprep.subr.bf16.mxu0 %v2464
  %3364 = vmatpush2.bf16.msra.mxu0 %v2463
  %3365 = vmatprep.subr.bf16.mxu0 %v2460
  %3366 = vmatpush2.bf16.msra.mxu0 %v2459
  %3367 = vmatprep.subr.bf16.mxu0 %v2456
  %3368 = vmatpush2.bf16.msra.mxu0 %v2455
  %3369 = vmatprep.subr.bf16.mxu0 %v2452
  %3370 = vmatpush2.bf16.msra.mxu0 %v2451
  %3371 = vmatprep.subr.bf16.mxu0 %v2448
  %3372 = vmatpush2.bf16.msra.mxu0 %v2447
  %3373 = vmatprep.subr.bf16.mxu0 %v2444
  %3374 = vmatpush2.bf16.msra.mxu0 %v2443
  %3375 = vmatprep.mubr.bf16.mxu0 %v596
  %3376 = vmatmul.mubr.bf16.gmra.mxu0 %v595
  %v3377 = vpop.f32.mrf.mxu0
  %v3378 = vadd.f32 %v3337, %v3377
  %v3379 = vpop.f32.mrf.mxu0
  %v3380 = vadd.f32 %v3339, %v3379
  %v3381 = vpop.f32.mrf.mxu0
  %v3382 = vpop.f32.mrf.mxu0
  %3383 = vdwg.mxu0
  %3384 = vmatprep.subr.bf16.mxu0 %v2504
  %3385 = vmatpush1.bf16.msra.mxu0 %v2503
  %3386 = vmatprep.subr.bf16.mxu0 %v2500
  %3387 = vmatpush1.bf16.msra.mxu0 %v2499
  %3388 = vmatprep.subr.bf16.mxu0 %v2496
  %3389 = vmatpush1.bf16.msra.mxu0 %v2495
  %3390 = vmatprep.subr.bf16.mxu0 %v2492
  %3391 = vmatpush1.bf16.msra.mxu0 %v2491
  %3392 = vmatprep.subr.bf16.mxu0 %v2488
  %3393 = vmatpush1.bf16.msra.mxu0 %v2487
  %3394 = vmatprep.subr.bf16.mxu0 %v2484
  %3395 = vmatpush1.bf16.msra.mxu0 %v2483
  %3396 = vmatprep.subr.bf16.mxu0 %v2480
  %3397 = vmatpush1.bf16.msra.mxu0 %v2479
  %3398 = vmatprep.subr.bf16.mxu0 %v2476
  %3399 = vmatpush1.bf16.msra.mxu0 %v2475
  %3400 = vmatprep.subr.bf16.mxu0 %v2536
  %3401 = vmatpush2.bf16.msra.mxu0 %v2535
  %3402 = vmatprep.subr.bf16.mxu0 %v2532
  %3403 = vmatpush2.bf16.msra.mxu0 %v2531
  %3404 = vmatprep.subr.bf16.mxu0 %v2528
  %3405 = vmatpush2.bf16.msra.mxu0 %v2527
  %3406 = vmatprep.subr.bf16.mxu0 %v2524
  %3407 = vmatpush2.bf16.msra.mxu0 %v2523
  %3408 = vmatprep.subr.bf16.mxu0 %v2520
  %3409 = vmatpush2.bf16.msra.mxu0 %v2519
  %3410 = vmatprep.subr.bf16.mxu0 %v2516
  %3411 = vmatpush2.bf16.msra.mxu0 %v2515
  %3412 = vmatprep.subr.bf16.mxu0 %v2512
  %3413 = vmatpush2.bf16.msra.mxu0 %v2511
  %3414 = vmatprep.subr.bf16.mxu0 %v2508
  %3415 = vmatpush2.bf16.msra.mxu0 %v2507
  %3416 = vmatprep.mubr.bf16.mxu0 %v598
  %3417 = vmatmul.mubr.bf16.gmra.mxu0 %v597
  %v3418 = vpop.f32.mrf.mxu0
  %v3419 = vadd.f32 %v3378, %v3418
  %v3420 = vpop.f32.mrf.mxu0
  %v3421 = vadd.f32 %v3380, %v3420
  %v3422 = vpop.f32.mrf.mxu0
  %v3423 = vpop.f32.mrf.mxu0
  %3424 = vdwg.mxu0
  %3425 = vmatprep.subr.bf16.mxu0 %v2568
  %3426 = vmatpush1.bf16.msra.mxu0 %v2567
  %3427 = vmatprep.subr.bf16.mxu0 %v2564
  %3428 = vmatpush1.bf16.msra.mxu0 %v2563
  %3429 = vmatprep.subr.bf16.mxu0 %v2560
  %3430 = vmatpush1.bf16.msra.mxu0 %v2559
  %3431 = vmatprep.subr.bf16.mxu0 %v2556
  %3432 = vmatpush1.bf16.msra.mxu0 %v2555
  %3433 = vmatprep.subr.bf16.mxu0 %v2552
  %3434 = vmatpush1.bf16.msra.mxu0 %v2551
  %3435 = vmatprep.subr.bf16.mxu0 %v2548
  %3436 = vmatpush1.bf16.msra.mxu0 %v2547
  %3437 = vmatprep.subr.bf16.mxu0 %v2544
  %3438 = vmatpush1.bf16.msra.mxu0 %v2543
  %3439 = vmatprep.subr.bf16.mxu0 %v2540
  %3440 = vmatpush1.bf16.msra.mxu0 %v2539
  %3441 = vmatprep.subr.bf16.mxu0 %v2600
  %3442 = vmatpush2.bf16.msra.mxu0 %v2599
  %3443 = vmatprep.subr.bf16.mxu0 %v2596
  %3444 = vmatpush2.bf16.msra.mxu0 %v2595
  %3445 = vmatprep.subr.bf16.mxu0 %v2592
  %3446 = vmatpush2.bf16.msra.mxu0 %v2591
  %3447 = vmatprep.subr.bf16.mxu0 %v2588
  %3448 = vmatpush2.bf16.msra.mxu0 %v2587
  %3449 = vmatprep.subr.bf16.mxu0 %v2584
  %3450 = vmatpush2.bf16.msra.mxu0 %v2583
  %3451 = vmatprep.subr.bf16.mxu0 %v2580
  %3452 = vmatpush2.bf16.msra.mxu0 %v2579
  %3453 = vmatprep.subr.bf16.mxu0 %v2576
  %3454 = vmatpush2.bf16.msra.mxu0 %v2575
  %3455 = vmatprep.subr.bf16.mxu0 %v2572
  %3456 = vmatpush2.bf16.msra.mxu0 %v2571
  %3457 = vmatprep.mubr.bf16.mxu0 %v600
  %3458 = vmatmul.mubr.bf16.gmra.mxu0 %v599
  %v3459 = vpop.f32.mrf.mxu0
  %v3460 = vadd.f32 %v3419, %v3459
  %v3461 = vpop.f32.mrf.mxu0
  %v3462 = vadd.f32 %v3421, %v3461
  %v3463 = vpop.f32.mrf.mxu0
  %v3464 = vpop.f32.mrf.mxu0
  %3465 = vdwg.mxu0
  %3466 = vmatprep.subr.bf16.mxu0 %v2632
  %3467 = vmatpush1.bf16.msra.mxu0 %v2631
  %3468 = vmatprep.subr.bf16.mxu0 %v2628
  %3469 = vmatpush1.bf16.msra.mxu0 %v2627
  %3470 = vmatprep.subr.bf16.mxu0 %v2624
  %3471 = vmatpush1.bf16.msra.mxu0 %v2623
  %3472 = vmatprep.subr.bf16.mxu0 %v2620
  %3473 = vmatpush1.bf16.msra.mxu0 %v2619
  %3474 = vmatprep.subr.bf16.mxu0 %v2616
  %3475 = vmatpush1.bf16.msra.mxu0 %v2615
  %3476 = vmatprep.subr.bf16.mxu0 %v2612
  %3477 = vmatpush1.bf16.msra.mxu0 %v2611
  %3478 = vmatprep.subr.bf16.mxu0 %v2608
  %3479 = vmatpush1.bf16.msra.mxu0 %v2607
  %3480 = vmatprep.subr.bf16.mxu0 %v2604
  %3481 = vmatpush1.bf16.msra.mxu0 %v2603
  %3482 = vmatprep.subr.bf16.mxu0 %v2664
  %3483 = vmatpush2.bf16.msra.mxu0 %v2663
  %3484 = vmatprep.subr.bf16.mxu0 %v2660
  %3485 = vmatpush2.bf16.msra.mxu0 %v2659
  %3486 = vmatprep.subr.bf16.mxu0 %v2656
  %3487 = vmatpush2.bf16.msra.mxu0 %v2655
  %3488 = vmatprep.subr.bf16.mxu0 %v2652
  %3489 = vmatpush2.bf16.msra.mxu0 %v2651
  %3490 = vmatprep.subr.bf16.mxu0 %v2648
  %3491 = vmatpush2.bf16.msra.mxu0 %v2647
  %3492 = vmatprep.subr.bf16.mxu0 %v2644
  %3493 = vmatpush2.bf16.msra.mxu0 %v2643
  %3494 = vmatprep.subr.bf16.mxu0 %v2640
  %3495 = vmatpush2.bf16.msra.mxu0 %v2639
  %3496 = vmatprep.subr.bf16.mxu0 %v2636
  %3497 = vmatpush2.bf16.msra.mxu0 %v2635
  %3498 = vmatprep.mubr.bf16.mxu0 %v602
  %3499 = vmatmul.mubr.bf16.gmra.mxu0 %v601
  %v3500 = vpop.f32.mrf.mxu0
  %v3501 = vadd.f32 %v3460, %v3500
  %v3502 = vpop.f32.mrf.mxu0
  %v3503 = vadd.f32 %v3462, %v3502
  %v3504 = vpop.f32.mrf.mxu0
  %v3505 = vpop.f32.mrf.mxu0
  %3506 = vdwg.mxu0
  %3507 = vmatprep.subr.bf16.mxu0 %v2186
  %3508 = vmatpush1.bf16.msra.mxu0 %v2185
  %3509 = vmatprep.subr.bf16.mxu0 %v2182
  %3510 = vmatpush1.bf16.msra.mxu0 %v2181
  %3511 = vmatprep.subr.bf16.mxu0 %v2178
  %3512 = vmatpush1.bf16.msra.mxu0 %v2177
  %3513 = vmatprep.subr.bf16.mxu0 %v2174
  %3514 = vmatpush1.bf16.msra.mxu0 %v2173
  %3515 = vmatprep.subr.bf16.mxu0 %v2170
  %3516 = vmatpush1.bf16.msra.mxu0 %v2169
  %3517 = vmatprep.subr.bf16.mxu0 %v2166
  %3518 = vmatpush1.bf16.msra.mxu0 %v2165
  %3519 = vmatprep.subr.bf16.mxu0 %v2162
  %3520 = vmatpush1.bf16.msra.mxu0 %v2161
  %3521 = vmatprep.subr.bf16.mxu0 %v2158
  %3522 = vmatpush1.bf16.msra.mxu0 %v2157
  %3523 = vmatprep.subr.bf16.mxu0 %v2218
  %3524 = vmatpush2.bf16.msra.mxu0 %v2217
  %3525 = vmatprep.subr.bf16.mxu0 %v2214
  %3526 = vmatpush2.bf16.msra.mxu0 %v2213
  %3527 = vmatprep.subr.bf16.mxu0 %v2210
  %3528 = vmatpush2.bf16.msra.mxu0 %v2209
  %3529 = vmatprep.subr.bf16.mxu0 %v2206
  %3530 = vmatpush2.bf16.msra.mxu0 %v2205
  %3531 = vmatprep.subr.bf16.mxu0 %v2202
  %3532 = vmatpush2.bf16.msra.mxu0 %v2201
  %3533 = vmatprep.subr.bf16.mxu0 %v2198
  %3534 = vmatpush2.bf16.msra.mxu0 %v2197
  %3535 = vmatprep.subr.bf16.mxu0 %v2194
  %3536 = vmatpush2.bf16.msra.mxu0 %v2193
  %3537 = vmatprep.subr.bf16.mxu0 %v2190
  %3538 = vmatpush2.bf16.msra.mxu0 %v2189
  %3539 = vmatprep.mubr.bf16.mxu0 %v588
  %3540 = vmatmul.mubr.bf16.gmra.mxu0 %v587
  %v3541 = vpop.f32.mrf.mxu0
  %v3542 = vadd.f32 %v554, %v3541
  %v3543 = vpop.f32.mrf.mxu0
  %v3544 = vadd.f32 %v558, %v3543
  %v3545 = vpop.f32.mrf.mxu0
  %v3546 = vpop.f32.mrf.mxu0
  %3547 = vdwg.mxu0
  %3548 = vmatprep.subr.bf16.mxu0 %v2250
  %3549 = vmatpush1.bf16.msra.mxu0 %v2249
  %3550 = vmatprep.subr.bf16.mxu0 %v2246
  %3551 = vmatpush1.bf16.msra.mxu0 %v2245
  %3552 = vmatprep.subr.bf16.mxu0 %v2242
  %3553 = vmatpush1.bf16.msra.mxu0 %v2241
  %3554 = vmatprep.subr.bf16.mxu0 %v2238
  %3555 = vmatpush1.bf16.msra.mxu0 %v2237
  %3556 = vmatprep.subr.bf16.mxu0 %v2234
  %3557 = vmatpush1.bf16.msra.mxu0 %v2233
  %3558 = vmatprep.subr.bf16.mxu0 %v2230
  %3559 = vmatpush1.bf16.msra.mxu0 %v2229
  %3560 = vmatprep.subr.bf16.mxu0 %v2226
  %3561 = vmatpush1.bf16.msra.mxu0 %v2225
  %3562 = vmatprep.subr.bf16.mxu0 %v2222
  %3563 = vmatpush1.bf16.msra.mxu0 %v2221
  %3564 = vmatprep.subr.bf16.mxu0 %v2282
  %3565 = vmatpush2.bf16.msra.mxu0 %v2281
  %3566 = vmatprep.subr.bf16.mxu0 %v2278
  %3567 = vmatpush2.bf16.msra.mxu0 %v2277
  %3568 = vmatprep.subr.bf16.mxu0 %v2274
  %3569 = vmatpush2.bf16.msra.mxu0 %v2273
  %3570 = vmatprep.subr.bf16.mxu0 %v2270
  %3571 = vmatpush2.bf16.msra.mxu0 %v2269
  %3572 = vmatprep.subr.bf16.mxu0 %v2266
  %3573 = vmatpush2.bf16.msra.mxu0 %v2265
  %3574 = vmatprep.subr.bf16.mxu0 %v2262
  %3575 = vmatpush2.bf16.msra.mxu0 %v2261
  %3576 = vmatprep.subr.bf16.mxu0 %v2258
  %3577 = vmatpush2.bf16.msra.mxu0 %v2257
  %3578 = vmatprep.subr.bf16.mxu0 %v2254
  %3579 = vmatpush2.bf16.msra.mxu0 %v2253
  %3580 = vmatprep.mubr.bf16.mxu0 %v590
  %3581 = vmatmul.mubr.bf16.gmra.mxu0 %v589
  %v3582 = vpop.f32.mrf.mxu0
  %v3583 = vadd.f32 %v3542, %v3582
  %v3584 = vpop.f32.mrf.mxu0
  %v3585 = vadd.f32 %v3544, %v3584
  %v3586 = vpop.f32.mrf.mxu0
  %v3587 = vpop.f32.mrf.mxu0
  %3588 = vdwg.mxu0
  %3589 = vmatprep.subr.bf16.mxu0 %v2314
  %3590 = vmatpush1.bf16.msra.mxu0 %v2313
  %3591 = vmatprep.subr.bf16.mxu0 %v2310
  %3592 = vmatpush1.bf16.msra.mxu0 %v2309
  %3593 = vmatprep.subr.bf16.mxu0 %v2306
  %3594 = vmatpush1.bf16.msra.mxu0 %v2305
  %3595 = vmatprep.subr.bf16.mxu0 %v2302
  %3596 = vmatpush1.bf16.msra.mxu0 %v2301
  %3597 = vmatprep.subr.bf16.mxu0 %v2298
  %3598 = vmatpush1.bf16.msra.mxu0 %v2297
  %3599 = vmatprep.subr.bf16.mxu0 %v2294
  %3600 = vmatpush1.bf16.msra.mxu0 %v2293
  %3601 = vmatprep.subr.bf16.mxu0 %v2290
  %3602 = vmatpush1.bf16.msra.mxu0 %v2289
  %3603 = vmatprep.subr.bf16.mxu0 %v2286
  %3604 = vmatpush1.bf16.msra.mxu0 %v2285
  %3605 = vmatprep.subr.bf16.mxu0 %v2346
  %3606 = vmatpush2.bf16.msra.mxu0 %v2345
  %3607 = vmatprep.subr.bf16.mxu0 %v2342
  %3608 = vmatpush2.bf16.msra.mxu0 %v2341
  %3609 = vmatprep.subr.bf16.mxu0 %v2338
  %3610 = vmatpush2.bf16.msra.mxu0 %v2337
  %3611 = vmatprep.subr.bf16.mxu0 %v2334
  %3612 = vmatpush2.bf16.msra.mxu0 %v2333
  %3613 = vmatprep.subr.bf16.mxu0 %v2330
  %3614 = vmatpush2.bf16.msra.mxu0 %v2329
  %3615 = vmatprep.subr.bf16.mxu0 %v2326
  %3616 = vmatpush2.bf16.msra.mxu0 %v2325
  %3617 = vmatprep.subr.bf16.mxu0 %v2322
  %3618 = vmatpush2.bf16.msra.mxu0 %v2321
  %3619 = vmatprep.subr.bf16.mxu0 %v2318
  %3620 = vmatpush2.bf16.msra.mxu0 %v2317
  %3621 = vmatprep.mubr.bf16.mxu0 %v592
  %3622 = vmatmul.mubr.bf16.gmra.mxu0 %v591
  %v3623 = vpop.f32.mrf.mxu0
  %v3624 = vadd.f32 %v3583, %v3623
  %v3625 = vpop.f32.mrf.mxu0
  %v3626 = vadd.f32 %v3585, %v3625
  %v3627 = vpop.f32.mrf.mxu0
  %v3628 = vpop.f32.mrf.mxu0
  %3629 = vdwg.mxu0
  %3630 = vmatprep.subr.bf16.mxu0 %v2378
  %3631 = vmatpush1.bf16.msra.mxu0 %v2377
  %3632 = vmatprep.subr.bf16.mxu0 %v2374
  %3633 = vmatpush1.bf16.msra.mxu0 %v2373
  %3634 = vmatprep.subr.bf16.mxu0 %v2370
  %3635 = vmatpush1.bf16.msra.mxu0 %v2369
  %3636 = vmatprep.subr.bf16.mxu0 %v2366
  %3637 = vmatpush1.bf16.msra.mxu0 %v2365
  %3638 = vmatprep.subr.bf16.mxu0 %v2362
  %3639 = vmatpush1.bf16.msra.mxu0 %v2361
  %3640 = vmatprep.subr.bf16.mxu0 %v2358
  %3641 = vmatpush1.bf16.msra.mxu0 %v2357
  %3642 = vmatprep.subr.bf16.mxu0 %v2354
  %3643 = vmatpush1.bf16.msra.mxu0 %v2353
  %3644 = vmatprep.subr.bf16.mxu0 %v2350
  %3645 = vmatpush1.bf16.msra.mxu0 %v2349
  %3646 = vmatprep.subr.bf16.mxu0 %v2410
  %3647 = vmatpush2.bf16.msra.mxu0 %v2409
  %3648 = vmatprep.subr.bf16.mxu0 %v2406
  %3649 = vmatpush2.bf16.msra.mxu0 %v2405
  %3650 = vmatprep.subr.bf16.mxu0 %v2402
  %3651 = vmatpush2.bf16.msra.mxu0 %v2401
  %3652 = vmatprep.subr.bf16.mxu0 %v2398
  %3653 = vmatpush2.bf16.msra.mxu0 %v2397
  %3654 = vmatprep.subr.bf16.mxu0 %v2394
  %3655 = vmatpush2.bf16.msra.mxu0 %v2393
  %3656 = vmatprep.subr.bf16.mxu0 %v2390
  %3657 = vmatpush2.bf16.msra.mxu0 %v2389
  %3658 = vmatprep.subr.bf16.mxu0 %v2386
  %3659 = vmatpush2.bf16.msra.mxu0 %v2385
  %3660 = vmatprep.subr.bf16.mxu0 %v2382
  %3661 = vmatpush2.bf16.msra.mxu0 %v2381
  %3662 = vmatprep.mubr.bf16.mxu0 %v594
  %3663 = vmatmul.mubr.bf16.gmra.mxu0 %v593
  %v3664 = vpop.f32.mrf.mxu0
  %v3665 = vadd.f32 %v3624, %v3664
  %v3666 = vpop.f32.mrf.mxu0
  %v3667 = vadd.f32 %v3626, %v3666
  %v3668 = vpop.f32.mrf.mxu0
  %v3669 = vpop.f32.mrf.mxu0
  %3670 = vdwg.mxu0
  %3671 = vmatprep.subr.bf16.mxu0 %v2442
  %3672 = vmatpush1.bf16.msra.mxu0 %v2441
  %3673 = vmatprep.subr.bf16.mxu0 %v2438
  %3674 = vmatpush1.bf16.msra.mxu0 %v2437
  %3675 = vmatprep.subr.bf16.mxu0 %v2434
  %3676 = vmatpush1.bf16.msra.mxu0 %v2433
  %3677 = vmatprep.subr.bf16.mxu0 %v2430
  %3678 = vmatpush1.bf16.msra.mxu0 %v2429
  %3679 = vmatprep.subr.bf16.mxu0 %v2426
  %3680 = vmatpush1.bf16.msra.mxu0 %v2425
  %3681 = vmatprep.subr.bf16.mxu0 %v2422
  %3682 = vmatpush1.bf16.msra.mxu0 %v2421
  %3683 = vmatprep.subr.bf16.mxu0 %v2418
  %3684 = vmatpush1.bf16.msra.mxu0 %v2417
  %3685 = vmatprep.subr.bf16.mxu0 %v2414
  %3686 = vmatpush1.bf16.msra.mxu0 %v2413
  %3687 = vmatprep.subr.bf16.mxu0 %v2474
  %3688 = vmatpush2.bf16.msra.mxu0 %v2473
  %3689 = vmatprep.subr.bf16.mxu0 %v2470
  %3690 = vmatpush2.bf16.msra.mxu0 %v2469
  %3691 = vmatprep.subr.bf16.mxu0 %v2466
  %3692 = vmatpush2.bf16.msra.mxu0 %v2465
  %3693 = vmatprep.subr.bf16.mxu0 %v2462
  %3694 = vmatpush2.bf16.msra.mxu0 %v2461
  %3695 = vmatprep.subr.bf16.mxu0 %v2458
  %3696 = vmatpush2.bf16.msra.mxu0 %v2457
  %3697 = vmatprep.subr.bf16.mxu0 %v2454
  %3698 = vmatpush2.bf16.msra.mxu0 %v2453
  %3699 = vmatprep.subr.bf16.mxu0 %v2450
  %3700 = vmatpush2.bf16.msra.mxu0 %v2449
  %3701 = vmatprep.subr.bf16.mxu0 %v2446
  %3702 = vmatpush2.bf16.msra.mxu0 %v2445
  %3703 = vmatprep.mubr.bf16.mxu0 %v596
  %3704 = vmatmul.mubr.bf16.gmra.mxu0 %v595
  %v3705 = vpop.f32.mrf.mxu0
  %v3706 = vadd.f32 %v3665, %v3705
  %v3707 = vpop.f32.mrf.mxu0
  %v3708 = vadd.f32 %v3667, %v3707
  %v3709 = vpop.f32.mrf.mxu0
  %v3710 = vpop.f32.mrf.mxu0
  %3711 = vdwg.mxu0
  %3712 = vmatprep.subr.bf16.mxu0 %v2506
  %3713 = vmatpush1.bf16.msra.mxu0 %v2505
  %3714 = vmatprep.subr.bf16.mxu0 %v2502
  %3715 = vmatpush1.bf16.msra.mxu0 %v2501
  %3716 = vmatprep.subr.bf16.mxu0 %v2498
  %3717 = vmatpush1.bf16.msra.mxu0 %v2497
  %3718 = vmatprep.subr.bf16.mxu0 %v2494
  %3719 = vmatpush1.bf16.msra.mxu0 %v2493
  %3720 = vmatprep.subr.bf16.mxu0 %v2490
  %3721 = vmatpush1.bf16.msra.mxu0 %v2489
  %3722 = vmatprep.subr.bf16.mxu0 %v2486
  %3723 = vmatpush1.bf16.msra.mxu0 %v2485
  %3724 = vmatprep.subr.bf16.mxu0 %v2482
  %3725 = vmatpush1.bf16.msra.mxu0 %v2481
  %3726 = vmatprep.subr.bf16.mxu0 %v2478
  %3727 = vmatpush1.bf16.msra.mxu0 %v2477
  %3728 = vmatprep.subr.bf16.mxu0 %v2538
  %3729 = vmatpush2.bf16.msra.mxu0 %v2537
  %3730 = vmatprep.subr.bf16.mxu0 %v2534
  %3731 = vmatpush2.bf16.msra.mxu0 %v2533
  %3732 = vmatprep.subr.bf16.mxu0 %v2530
  %3733 = vmatpush2.bf16.msra.mxu0 %v2529
  %3734 = vmatprep.subr.bf16.mxu0 %v2526
  %3735 = vmatpush2.bf16.msra.mxu0 %v2525
  %3736 = vmatprep.subr.bf16.mxu0 %v2522
  %3737 = vmatpush2.bf16.msra.mxu0 %v2521
  %3738 = vmatprep.subr.bf16.mxu0 %v2518
  %3739 = vmatpush2.bf16.msra.mxu0 %v2517
  %3740 = vmatprep.subr.bf16.mxu0 %v2514
  %3741 = vmatpush2.bf16.msra.mxu0 %v2513
  %3742 = vmatprep.subr.bf16.mxu0 %v2510
  %3743 = vmatpush2.bf16.msra.mxu0 %v2509
  %3744 = vmatprep.mubr.bf16.mxu0 %v598
  %3745 = vmatmul.mubr.bf16.gmra.mxu0 %v597
  %v3746 = vpop.f32.mrf.mxu0
  %v3747 = vadd.f32 %v3706, %v3746
  %v3748 = vpop.f32.mrf.mxu0
  %v3749 = vadd.f32 %v3708, %v3748
  %v3750 = vpop.f32.mrf.mxu0
  %v3751 = vpop.f32.mrf.mxu0
  %3752 = vdwg.mxu0
  %3753 = vmatprep.subr.bf16.mxu0 %v2570
  %3754 = vmatpush1.bf16.msra.mxu0 %v2569
  %3755 = vmatprep.subr.bf16.mxu0 %v2566
  %3756 = vmatpush1.bf16.msra.mxu0 %v2565
  %3757 = vmatprep.subr.bf16.mxu0 %v2562
  %3758 = vmatpush1.bf16.msra.mxu0 %v2561
  %3759 = vmatprep.subr.bf16.mxu0 %v2558
  %3760 = vmatpush1.bf16.msra.mxu0 %v2557
  %3761 = vmatprep.subr.bf16.mxu0 %v2554
  %3762 = vmatpush1.bf16.msra.mxu0 %v2553
  %3763 = vmatprep.subr.bf16.mxu0 %v2550
  %3764 = vmatpush1.bf16.msra.mxu0 %v2549
  %3765 = vmatprep.subr.bf16.mxu0 %v2546
  %3766 = vmatpush1.bf16.msra.mxu0 %v2545
  %3767 = vmatprep.subr.bf16.mxu0 %v2542
  %3768 = vmatpush1.bf16.msra.mxu0 %v2541
  %3769 = vmatprep.subr.bf16.mxu0 %v2602
  %3770 = vmatpush2.bf16.msra.mxu0 %v2601
  %3771 = vmatprep.subr.bf16.mxu0 %v2598
  %3772 = vmatpush2.bf16.msra.mxu0 %v2597
  %3773 = vmatprep.subr.bf16.mxu0 %v2594
  %3774 = vmatpush2.bf16.msra.mxu0 %v2593
  %3775 = vmatprep.subr.bf16.mxu0 %v2590
  %3776 = vmatpush2.bf16.msra.mxu0 %v2589
  %3777 = vmatprep.subr.bf16.mxu0 %v2586
  %3778 = vmatpush2.bf16.msra.mxu0 %v2585
  %3779 = vmatprep.subr.bf16.mxu0 %v2582
  %3780 = vmatpush2.bf16.msra.mxu0 %v2581
  %3781 = vmatprep.subr.bf16.mxu0 %v2578
  %3782 = vmatpush2.bf16.msra.mxu0 %v2577
  %3783 = vmatprep.subr.bf16.mxu0 %v2574
  %3784 = vmatpush2.bf16.msra.mxu0 %v2573
  %3785 = vmatprep.mubr.bf16.mxu0 %v600
  %3786 = vmatmul.mubr.bf16.gmra.mxu0 %v599
  %v3787 = vpop.f32.mrf.mxu0
  %v3788 = vadd.f32 %v3747, %v3787
  %v3789 = vpop.f32.mrf.mxu0
  %v3790 = vadd.f32 %v3749, %v3789
  %v3791 = vpop.f32.mrf.mxu0
  %v3792 = vpop.f32.mrf.mxu0
  %3793 = vdwg.mxu0
  %3794 = vmatprep.subr.bf16.mxu0 %v2634
  %3795 = vmatpush1.bf16.msra.mxu0 %v2633
  %3796 = vmatprep.subr.bf16.mxu0 %v2630
  %3797 = vmatpush1.bf16.msra.mxu0 %v2629
  %3798 = vmatprep.subr.bf16.mxu0 %v2626
  %3799 = vmatpush1.bf16.msra.mxu0 %v2625
  %3800 = vmatprep.subr.bf16.mxu0 %v2622
  %3801 = vmatpush1.bf16.msra.mxu0 %v2621
  %3802 = vmatprep.subr.bf16.mxu0 %v2618
  %3803 = vmatpush1.bf16.msra.mxu0 %v2617
  %3804 = vmatprep.subr.bf16.mxu0 %v2614
  %3805 = vmatpush1.bf16.msra.mxu0 %v2613
  %3806 = vmatprep.subr.bf16.mxu0 %v2610
  %3807 = vmatpush1.bf16.msra.mxu0 %v2609
  %3808 = vmatprep.subr.bf16.mxu0 %v2606
  %3809 = vmatpush1.bf16.msra.mxu0 %v2605
  %3810 = vmatprep.subr.bf16.mxu0 %v2666
  %3811 = vmatpush2.bf16.msra.mxu0 %v2665
  %3812 = vmatprep.subr.bf16.mxu0 %v2662
  %3813 = vmatpush2.bf16.msra.mxu0 %v2661
  %3814 = vmatprep.subr.bf16.mxu0 %v2658
  %3815 = vmatpush2.bf16.msra.mxu0 %v2657
  %3816 = vmatprep.subr.bf16.mxu0 %v2654
  %3817 = vmatpush2.bf16.msra.mxu0 %v2653
  %3818 = vmatprep.subr.bf16.mxu0 %v2650
  %3819 = vmatpush2.bf16.msra.mxu0 %v2649
  %3820 = vmatprep.subr.bf16.mxu0 %v2646
  %3821 = vmatpush2.bf16.msra.mxu0 %v2645
  %3822 = vmatprep.subr.bf16.mxu0 %v2642
  %3823 = vmatpush2.bf16.msra.mxu0 %v2641
  %3824 = vmatprep.subr.bf16.mxu0 %v2638
  %3825 = vmatpush2.bf16.msra.mxu0 %v2637
  %3826 = vmatprep.mubr.bf16.mxu0 %v602
  %3827 = vmatmul.mubr.bf16.gmra.mxu0 %v601
  %v3828 = vpop.f32.mrf.mxu0
  %v3829 = vadd.f32 %v3788, %v3828
  %v3830 = vpop.f32.mrf.mxu0
  %v3831 = vadd.f32 %v3790, %v3830
  %v3832 = vpop.f32.mrf.mxu0
  %v3833 = vpop.f32.mrf.mxu0
  %3834 = vdwg.mxu0
  %v3835 = vmax.f32 %v3501, 0.0
  %v3836 = vmax.f32 %v3503, 0.0
  %v3837 = vmax.f32 %v3829, 0.0
  %v3838 = vmax.f32 %v3831, 0.0
  %v3839 = vpack.c.bf16 %v3835, %v3835
  %v3840 = vpack.c.bf16 %v3836, %v3836
  %v3841 = vpack.c.bf16 %v3837, %v3837
  %v3842 = vpack.c.bf16 %v3838, %v3838
  %v3843 = vld [vmem:[%s3] sm:$0xf]
  %v3844 = vld [vmem:[%s3 + $0x4] sm:$0xf]
  %v3845 = vld [vmem:[%s3 + $0x8] sm:$0xf]
  %v3846 = vld [vmem:[%s3 + $0xc] sm:$0xf]
  %v3847 = vld [vmem:[%s3 + $0x10] sm:$0xf]
  %v3848 = vld [vmem:[%s3 + $0x14] sm:$0xf]
  %v3849 = vld [vmem:[%s3 + $0x18] sm:$0xf]
  %v3850 = vld [vmem:[%s3 + $0x1c] sm:$0xf]
  %v3851 = vld [vmem:[%s3 + $0x20] sm:$0xf]
  %v3852 = vld [vmem:[%s3 + $0x24] sm:$0xf]
  %v3853 = vld [vmem:[%s3 + $0x28] sm:$0xf]
  %v3854 = vld [vmem:[%s3 + $0x2c] sm:$0xf]
  %v3855 = vld [vmem:[%s3 + $0x30] sm:$0xf]
  %v3856 = vld [vmem:[%s3 + $0x34] sm:$0xf]
  %v3857 = vld [vmem:[%s3 + $0x38] sm:$0xf]
  %v3858 = vld [vmem:[%s3 + $0x3c] sm:$0xf]
  %v3859 = vld [vmem:[%s3 + $0x40] sm:$0xf]
  %v3860 = vld [vmem:[%s3 + $0x44] sm:$0xf]
  %v3861 = vld [vmem:[%s3 + $0x48] sm:$0xf]
  %v3862 = vld [vmem:[%s3 + $0x4c] sm:$0xf]
  %v3863 = vld [vmem:[%s3 + $0x50] sm:$0xf]
  %v3864 = vld [vmem:[%s3 + $0x54] sm:$0xf]
  %v3865 = vld [vmem:[%s3 + $0x58] sm:$0xf]
  %v3866 = vld [vmem:[%s3 + $0x5c] sm:$0xf]
  %v3867 = vld [vmem:[%s3 + $0x60] sm:$0xf]
  %v3868 = vld [vmem:[%s3 + $0x64] sm:$0xf]
  %v3869 = vld [vmem:[%s3 + $0x68] sm:$0xf]
  %v3870 = vld [vmem:[%s3 + $0x6c] sm:$0xf]
  %v3871 = vld [vmem:[%s3 + $0x70] sm:$0xf]
  %v3872 = vld [vmem:[%s3 + $0x74] sm:$0xf]
  %v3873 = vld [vmem:[%s3 + $0x78] sm:$0xf]
  %v3874 = vld [vmem:[%s3 + $0x7c] sm:$0xf]
  %v3875 = vld [vmem:[%s3 + $0x80] sm:$0xf]
  %v3876 = vld [vmem:[%s3 + $0x84] sm:$0xf]
  %v3877 = vld [vmem:[%s3 + $0x88] sm:$0xf]
  %v3878 = vld [vmem:[%s3 + $0x8c] sm:$0xf]
  %v3879 = vld [vmem:[%s3 + $0x90] sm:$0xf]
  %v3880 = vld [vmem:[%s3 + $0x94] sm:$0xf]
  %v3881 = vld [vmem:[%s3 + $0x98] sm:$0xf]
  %v3882 = vld [vmem:[%s3 + $0x9c] sm:$0xf]
  %v3883 = vld [vmem:[%s3 + $0xa0] sm:$0xf]
  %v3884 = vld [vmem:[%s3 + $0xa4] sm:$0xf]
  %v3885 = vld [vmem:[%s3 + $0xa8] sm:$0xf]
  %v3886 = vld [vmem:[%s3 + $0xac] sm:$0xf]
  %v3887 = vld [vmem:[%s3 + $0xb0] sm:$0xf]
  %v3888 = vld [vmem:[%s3 + $0xb4] sm:$0xf]
  %v3889 = vld [vmem:[%s3 + $0xb8] sm:$0xf]
  %v3890 = vld [vmem:[%s3 + $0xbc] sm:$0xf]
  %v3891 = vld [vmem:[%s3 + $0xc0] sm:$0xf]
  %v3892 = vld [vmem:[%s3 + $0xc4] sm:$0xf]
  %v3893 = vld [vmem:[%s3 + $0xc8] sm:$0xf]
  %v3894 = vld [vmem:[%s3 + $0xcc] sm:$0xf]
  %v3895 = vld [vmem:[%s3 + $0xd0] sm:$0xf]
  %v3896 = vld [vmem:[%s3 + $0xd4] sm:$0xf]
  %v3897 = vld [vmem:[%s3 + $0xd8] sm:$0xf]
  %v3898 = vld [vmem:[%s3 + $0xdc] sm:$0xf]
  %v3899 = vld [vmem:[%s3 + $0xe0] sm:$0xf]
  %v3900 = vld [vmem:[%s3 + $0xe4] sm:$0xf]
  %v3901 = vld [vmem:[%s3 + $0xe8] sm:$0xf]
  %v3902 = vld [vmem:[%s3 + $0xec] sm:$0xf]
  %v3903 = vld [vmem:[%s3 + $0xf0] sm:$0xf]
  %v3904 = vld [vmem:[%s3 + $0xf4] sm:$0xf]
  %v3905 = vld [vmem:[%s3 + $0xf8] sm:$0xf]
  %v3906 = vld [vmem:[%s3 + $0xfc] sm:$0xf]
  %v3907 = vld [vmem:[%s4] sm:$0x1]
  %v3909 = vlaneseq
  %v3910 = vshrl.u32 %v3909, 7
  %v3911 = vsub.s32 0, %v3910
  %v3912 = vrot.slane %v3907, %v3911
  %v3978 = vunpack.c.l.b16 %v3843
  %v3979 = vunpack.c.l.b16 %v3844
  %v3980 = vunpack.c.l.b16 %v3845
  %v3981 = vunpack.c.l.b16 %v3846
  %v3982 = vunpack.c.l.b16 %v3847
  %v3983 = vunpack.c.l.b16 %v3848
  %v3984 = vunpack.c.l.b16 %v3849
  %v3985 = vunpack.c.l.b16 %v3850
  %v3986 = vunpack.c.l.b16 %v3851
  %v3987 = vunpack.c.l.b16 %v3852
  %v3988 = vunpack.c.l.b16 %v3853
  %v3989 = vunpack.c.l.b16 %v3854
  %v3990 = vunpack.c.l.b16 %v3855
  %v3991 = vunpack.c.l.b16 %v3856
  %v3992 = vunpack.c.l.b16 %v3857
  %v3993 = vunpack.c.l.b16 %v3858
  %v3994 = vunpack.c.l.b16 %v3859
  %v3995 = vunpack.c.l.b16 %v3860
  %v3996 = vunpack.c.l.b16 %v3861
  %v3997 = vunpack.c.l.b16 %v3862
  %v3998 = vunpack.c.l.b16 %v3863
  %v3999 = vunpack.c.l.b16 %v3864
  %v4000 = vunpack.c.l.b16 %v3865
  %v4001 = vunpack.c.l.b16 %v3866
  %v4002 = vunpack.c.l.b16 %v3867
  %v4003 = vunpack.c.l.b16 %v3868
  %v4004 = vunpack.c.l.b16 %v3869
  %v4005 = vunpack.c.l.b16 %v3870
  %v4006 = vunpack.c.l.b16 %v3871
  %v4007 = vunpack.c.l.b16 %v3872
  %v4008 = vunpack.c.l.b16 %v3873
  %v4009 = vunpack.c.l.b16 %v3874
  %v4010 = vunpack.c.l.b16 %v3875
  %v4011 = vunpack.c.l.b16 %v3876
  %v4012 = vunpack.c.l.b16 %v3877
  %v4013 = vunpack.c.l.b16 %v3878
  %v4014 = vunpack.c.l.b16 %v3879
  %v4015 = vunpack.c.l.b16 %v3880
  %v4016 = vunpack.c.l.b16 %v3881
  %v4017 = vunpack.c.l.b16 %v3882
  %v4018 = vunpack.c.l.b16 %v3883
  %v4019 = vunpack.c.l.b16 %v3884
  %v4020 = vunpack.c.l.b16 %v3885
  %v4021 = vunpack.c.l.b16 %v3886
  %v4022 = vunpack.c.l.b16 %v3887
  %v4023 = vunpack.c.l.b16 %v3888
  %v4024 = vunpack.c.l.b16 %v3889
  %v4025 = vunpack.c.l.b16 %v3890
  %v4026 = vunpack.c.l.b16 %v3891
  %v4027 = vunpack.c.l.b16 %v3892
  %v4028 = vunpack.c.l.b16 %v3893
  %v4029 = vunpack.c.l.b16 %v3894
  %v4030 = vunpack.c.l.b16 %v3895
  %v4031 = vunpack.c.l.b16 %v3896
  %v4032 = vunpack.c.l.b16 %v3897
  %v4033 = vunpack.c.l.b16 %v3898
  %v4034 = vunpack.c.l.b16 %v3899
  %v4035 = vunpack.c.l.b16 %v3900
  %v4036 = vunpack.c.l.b16 %v3901
  %v4037 = vunpack.c.l.b16 %v3902
  %v4038 = vunpack.c.l.b16 %v3903
  %v4039 = vunpack.c.l.b16 %v3904
  %v4040 = vunpack.c.l.b16 %v3905
  %v4041 = vunpack.c.l.b16 %v3906
  %v4042 = vpack.c.b16 %v3979, %v3978
  %v4043 = vpack.c.b16 %v3981, %v3980
  %v4044 = vpack.c.b16 %v3983, %v3982
  %v4045 = vpack.c.b16 %v3985, %v3984
  %v4046 = vpack.c.b16 %v3987, %v3986
  %v4047 = vpack.c.b16 %v3989, %v3988
  %v4048 = vpack.c.b16 %v3991, %v3990
  %v4049 = vpack.c.b16 %v3993, %v3992
  %v4050 = vpack.c.b16 %v3995, %v3994
  %v4051 = vpack.c.b16 %v3997, %v3996
  %v4052 = vpack.c.b16 %v3999, %v3998
  %v4053 = vpack.c.b16 %v4001, %v4000
  %v4054 = vpack.c.b16 %v4003, %v4002
  %v4055 = vpack.c.b16 %v4005, %v4004
  %v4056 = vpack.c.b16 %v4007, %v4006
  %v4057 = vpack.c.b16 %v4009, %v4008
  %v4058 = vpack.c.b16 %v4011, %v4010
  %v4059 = vpack.c.b16 %v4013, %v4012
  %v4060 = vpack.c.b16 %v4015, %v4014
  %v4061 = vpack.c.b16 %v4017, %v4016
  %v4062 = vpack.c.b16 %v4019, %v4018
  %v4063 = vpack.c.b16 %v4021, %v4020
  %v4064 = vpack.c.b16 %v4023, %v4022
  %v4065 = vpack.c.b16 %v4025, %v4024
  %v4066 = vpack.c.b16 %v4027, %v4026
  %v4067 = vpack.c.b16 %v4029, %v4028
  %v4068 = vpack.c.b16 %v4031, %v4030
  %v4069 = vpack.c.b16 %v4033, %v4032
  %v4070 = vpack.c.b16 %v4035, %v4034
  %v4071 = vpack.c.b16 %v4037, %v4036
  %v4072 = vpack.c.b16 %v4039, %v4038
  %v4073 = vpack.c.b16 %v4041, %v4040
  %4106 = vmatprep.subr.bf16.mxu0 0
  %4107 = vmatpush1.bf16.msra.mxu0 %v4049
  %4108 = vmatprep.subr.bf16.mxu0 0
  %4109 = vmatpush1.bf16.msra.mxu0 %v4048
  %4110 = vmatprep.subr.bf16.mxu0 0
  %4111 = vmatpush1.bf16.msra.mxu0 %v4047
  %4112 = vmatprep.subr.bf16.mxu0 0
  %4113 = vmatpush1.bf16.msra.mxu0 %v4046
  %4114 = vmatprep.subr.bf16.mxu0 0
  %4115 = vmatpush1.bf16.msra.mxu0 %v4045
  %4116 = vmatprep.subr.bf16.mxu0 0
  %4117 = vmatpush1.bf16.msra.mxu0 %v4044
  %4118 = vmatprep.subr.bf16.mxu0 0
  %4119 = vmatpush1.bf16.msra.mxu0 %v4043
  %4120 = vmatprep.subr.bf16.mxu0 0
  %4121 = vmatpush1.bf16.msra.mxu0 %v4042
  %4122 = vmatprep.subr.bf16.mxu0 0
  %4123 = vmatpush2.bf16.msra.mxu0 %v4057
  %4124 = vmatprep.subr.bf16.mxu0 0
  %4125 = vmatpush2.bf16.msra.mxu0 %v4056
  %4126 = vmatprep.subr.bf16.mxu0 0
  %4127 = vmatpush2.bf16.msra.mxu0 %v4055
  %4128 = vmatprep.subr.bf16.mxu0 0
  %4129 = vmatpush2.bf16.msra.mxu0 %v4054
  %4130 = vmatprep.subr.bf16.mxu0 0
  %4131 = vmatpush2.bf16.msra.mxu0 %v4053
  %4132 = vmatprep.subr.bf16.mxu0 0
  %4133 = vmatpush2.bf16.msra.mxu0 %v4052
  %4134 = vmatprep.subr.bf16.mxu0 0
  %4135 = vmatpush2.bf16.msra.mxu0 %v4051
  %4136 = vmatprep.subr.bf16.mxu0 0
  %4137 = vmatpush2.bf16.msra.mxu0 %v4050
  %4138 = vmatprep.mubr.bf16.mxu0 %v3840
  %4139 = vmatmul.mubr.bf16.gmra.mxu0 %v3839
  %v4140 = vpop.f32.mrf.mxu0
  %v4141 = vadd.f32 %v3912, %v4140
  %v4142 = vpop.f32.mrf.mxu0
  %v4143 = vpop.f32.mrf.mxu0
  %v4144 = vpop.f32.mrf.mxu0
  %4145 = vdwg.mxu0
  %4146 = vmatprep.subr.bf16.mxu0 0
  %4147 = vmatpush1.bf16.msra.mxu0 %v4065
  %4148 = vmatprep.subr.bf16.mxu0 0
  %4149 = vmatpush1.bf16.msra.mxu0 %v4064
  %4150 = vmatprep.subr.bf16.mxu0 0
  %4151 = vmatpush1.bf16.msra.mxu0 %v4063
  %4152 = vmatprep.subr.bf16.mxu0 0
  %4153 = vmatpush1.bf16.msra.mxu0 %v4062
  %4154 = vmatprep.subr.bf16.mxu0 0
  %4155 = vmatpush1.bf16.msra.mxu0 %v4061
  %4156 = vmatprep.subr.bf16.mxu0 0
  %4157 = vmatpush1.bf16.msra.mxu0 %v4060
  %4158 = vmatprep.subr.bf16.mxu0 0
  %4159 = vmatpush1.bf16.msra.mxu0 %v4059
  %4160 = vmatprep.subr.bf16.mxu0 0
  %4161 = vmatpush1.bf16.msra.mxu0 %v4058
  %4162 = vmatprep.subr.bf16.mxu0 0
  %4163 = vmatpush2.bf16.msra.mxu0 %v4073
  %4164 = vmatprep.subr.bf16.mxu0 0
  %4165 = vmatpush2.bf16.msra.mxu0 %v4072
  %4166 = vmatprep.subr.bf16.mxu0 0
  %4167 = vmatpush2.bf16.msra.mxu0 %v4071
  %4168 = vmatprep.subr.bf16.mxu0 0
  %4169 = vmatpush2.bf16.msra.mxu0 %v4070
  %4170 = vmatprep.subr.bf16.mxu0 0
  %4171 = vmatpush2.bf16.msra.mxu0 %v4069
  %4172 = vmatprep.subr.bf16.mxu0 0
  %4173 = vmatpush2.bf16.msra.mxu0 %v4068
  %4174 = vmatprep.subr.bf16.mxu0 0
  %4175 = vmatpush2.bf16.msra.mxu0 %v4067
  %4176 = vmatprep.subr.bf16.mxu0 0
  %4177 = vmatpush2.bf16.msra.mxu0 %v4066
  %4178 = vmatprep.mubr.bf16.mxu0 %v3842
  %4179 = vmatmul.mubr.bf16.gmra.mxu0 %v3841
  %v4180 = vpop.f32.mrf.mxu0
  %v4181 = vadd.f32 %v4141, %v4180
  %v4182 = vpop.f32.mrf.mxu0
  %v4183 = vpop.f32.mrf.mxu0
  %v4184 = vpop.f32.mrf.mxu0
  %4185 = vdwg.mxu0
  %vm4186 = vcmask 80896
  %4187 = vst.msk [vmem:[%s5] sm:$0xff] %vm4186, %v4181
  // Predicated region
  $region22: #{forward.7} parent=0 // pred_check
    _
  $region23: #{forward.7} parent=0 // pred_check_branch
    %4189 = sbr.rel (0) target = $region25
  $region24: #{forward.7} parent=0 // pred_region
    _
  $region25: #{forward.7} parent=0 // pred_fallthru
    _
  // Predicated region
  $region26: #{forward.7} parent=0 // pred_check
    _
  $region27: #{forward.7} parent=0 // pred_check_branch
    %4191 = sbr.rel (0) target = $region29
  $region28: #{forward.7} parent=0 // pred_region
    _
  $region29: #{forward.7} parent=0 // pred_fallthru
    _

</llo_original>
